<compile_context>
chip_gen: v6e
topology: v6e:2x2x1
jax: 0.10.0
libtpu: 0.0.40
codegen_flags: <defaults>
</compile_context>

<pallas_src>
import functools

import jax
import jax.numpy as jnp
from jax.experimental import pallas as pl
from jax.experimental.pallas import tpu as pltpu

BN_EPS = 1e-5
_LANE = 128


def _vector_layout(hidden_dims, action_dim):
    """Static, 128-lane-aligned layout of the packed (1, total) vector buffer."""
    offsets = {}
    off = 0

    def alloc(n):
        nonlocal off
        o = off
        off += ((n + _LANE - 1) // _LANE) * _LANE
        return o

    for i, hdim in enumerate(hidden_dims):
        offsets[("gamma", i)] = alloc(hdim)
        offsets[("beta", i)] = alloc(hdim)
    if action_dim == 1:
        offsets["w_out"] = alloc(hidden_dims[-1])
    offsets["b_out"] = alloc(action_dim)
    return offsets, off


def _make_actor_kernel(hidden_dims, action_dim, action_bound):
    num_hidden = len(hidden_dims)
    offsets, _ = _vector_layout(tuple(hidden_dims), action_dim)
    n_w = num_hidden + (0 if action_dim == 1 else 1)

    def kernel(*refs):
        # refs = (x, W_hbm[0..n_w-1], vec, out, W_vmem[0..n_w-1], sems)
        x_ref = refs[0]
        w_hbm = refs[1:1 + n_w]
        vec_ref = refs[1 + n_w]
        out_ref = refs[2 + n_w]
        w_bufs = refs[3 + n_w:3 + 2 * n_w]
        sems = refs[3 + 2 * n_w]

        # Issue every weight HBM->VMEM DMA immediately.  The DMA engine works
        # through them in issue order, so W0 lands first and later layers'
        # weights stream in behind the per-layer dot + BatchNorm compute.
        copies = []
        for i in range(n_w):
            cp = pltpu.make_async_copy(w_hbm[i], w_bufs[i], sems.at[i])
            cp.start()
            copies.append(cp)

        # Activations arrive already in the weight dtype (bf16 fast path).
        h = x_ref[...]

        for i, hdim in enumerate(hidden_dims):
            copies[i].wait()  # block only on the weight this layer needs
            # Linear on the MXU; operand dtype follows the stored weight dtype
            # (f32 or bf16), accumulation is always f32.  Hidden bias omitted:
            # exactly cancelled by the BN mean subtraction.
            z = jnp.dot(h.astype(w_bufs[i].dtype), w_bufs[i][...],
                        preferred_element_type=jnp.float32)
            # BatchNorm1d, training mode (batch mean / biased batch var), f32.
            mean = jnp.mean(z, axis=0, keepdims=True)
            centered = z - mean
            var = jnp.mean(centered * centered, axis=0, keepdims=True)
            go = offsets[("gamma", i)]
            bo = offsets[("beta", i)]
            gamma = vec_ref[:, go:go + hdim]   # per-layer static ref slices:
            beta = vec_ref[:, bo:bo + hdim]    # short live ranges, no pad lanes
            scale = gamma * jax.lax.rsqrt(var + BN_EPS)  # gamma folded in
            h = jnp.maximum(centered * scale + beta, 0.0)  # ReLU

        b_out = vec_ref[:, offsets["b_out"]:offsets["b_out"] + action_dim]
        if action_dim == 1:
            # Final 1-column layer as VPU multiply + lane reduce, not MXU.
            wo = offsets["w_out"]
            w_row = vec_ref[:, wo:wo + hidden_dims[-1]]        # (1, K)
            z = jnp.sum(h * w_row, axis=-1, keepdims=True)      # (B, 1)
        else:
            copies[-1].wait()
            w_last = w_bufs[-1]
            z = jnp.dot(h.astype(w_last.dtype), w_last[...],
                        preferred_element_type=jnp.float32)

        out = jnp.tanh(z + b_out)
        if action_bound != 1.0:  # static: skip the multiply when bound == 1
            out = out * jnp.float32(action_bound)
        out_ref[...] = out.astype(out_ref.dtype)

    return kernel


def init_actor_params(key, state_dim, hidden_dims, action_dim):
    """Mirrors Actor._init_weights: xavier_uniform weights, bias=0.01, BN gamma=1,
    beta=0.  Weights stored as (in_dim, out_dim) so the kernel computes x @ W."""
    layers = []
    in_dim = state_dim
    dims = list(hidden_dims) + [action_dim]
    for i, out_dim in enumerate(dims):
        key, wkey = jax.random.split(key)
        bound = (6.0 / (in_dim + out_dim)) ** 0.5
        layer = {
            "w": jax.random.uniform(wkey, (in_dim, out_dim), jnp.float32, -bound, bound),
            "b": jnp.full((out_dim,), 0.01, jnp.float32),
        }
        if i < len(hidden_dims):
            layer["gamma"] = jnp.ones((out_dim,), jnp.float32)
            layer["beta"] = jnp.zeros((out_dim,), jnp.float32)
        layers.append(layer)
        in_dim = out_dim
    return layers


def pack_actor_params(layers, hidden_dims, action_dim, weight_dtype=jnp.bfloat16):
    """Pack torch-style params into (weights tuple, lane-dense f32 vector buffer).

    Hidden-layer biases are not shipped: they are exactly cancelled by the
    BatchNorm mean subtraction.  Weight matrices are cast to `weight_dtype`
    (bf16 default: native MXU operand dtype, half the weight DMA bytes)."""
    offsets, total = _vector_layout(tuple(hidden_dims), action_dim)
    vec = jnp.zeros((1, total), jnp.float32)
    weights = []
    for i, hdim in enumerate(hidden_dims):
        weights.append(layers[i]["w"].astype(weight_dtype))
        go = offsets[("gamma", i)]
        bo = offsets[("beta", i)]
        vec = vec.at[0, go:go + hdim].set(layers[i]["gamma"])
        vec = vec.at[0, bo:bo + hdim].set(layers[i]["beta"])
    last = layers[-1]
    if action_dim == 1:
        wo = offsets["w_out"]
        vec = vec.at[0, wo:wo + hidden_dims[-1]].set(last["w"][:, 0])
    else:
        weights.append(last["w"].astype(weight_dtype))
    bo = offsets["b_out"]
    vec = vec.at[0, bo:bo + action_dim].set(last["b"])
    return tuple(weights), vec


@functools.partial(jax.jit, static_argnames=("hidden_dims", "action_dim", "action_bound"))
def actor_forward(state, weights, vec, *, hidden_dims, action_dim, action_bound):
    batch = state.shape[0]
    n_w = len(weights)
    # bf16 fast path: ship the input in the weight dtype (halves input DMA and
    # removes the in-kernel cast before the first dot).
    state = state.astype(weights[0].dtype)

    kernel = _make_actor_kernel(hidden_dims, action_dim, action_bound)
    inputs = (state, *weights, vec)

    in_specs = ([pl.BlockSpec(memory_space=pltpu.MemorySpace.VMEM)]       # state
                + [pl.BlockSpec(memory_space=pl.ANY)] * n_w               # weights stay in HBM
                + [pl.BlockSpec(memory_space=pltpu.MemorySpace.VMEM)])    # packed vector
    scratch_shapes = ([pltpu.VMEM(w.shape, w.dtype) for w in weights]
                      + [pltpu.SemaphoreType.DMA((n_w,))])

    # Advisory cost hint so XLA can overlap this sub-microsecond call.
    n_params = sum(int(w.size) for w in weights)
    if action_dim == 1:
        n_params += hidden_dims[-1] * action_dim
    flops = 2 * batch * n_params
    bytes_accessed = (int(state.size) * state.dtype.itemsize
                      + sum(int(w.size) * w.dtype.itemsize for w in weights)
                      + int(vec.size) * vec.dtype.itemsize
                      + batch * action_dim * 4)
    transcendentals = batch * action_dim + sum(hidden_dims)

    return pl.pallas_call(
        kernel,
        out_shape=jax.ShapeDtypeStruct((batch, action_dim), jnp.float32),
        in_specs=in_specs,
        out_specs=pl.BlockSpec(memory_space=pltpu.MemorySpace.VMEM),
        scratch_shapes=scratch_shapes,
        cost_estimate=pl.CostEstimate(flops=flops,
                                      transcendentals=transcendentals,
                                      bytes_accessed=bytes_accessed),
    )(*inputs)


def actor_reference(state, layers, action_bound):
    """Pure-JAX reference mirroring the PyTorch module exactly (biases included)."""
    h = state
    for layer in layers[:-1]:
        h = h @ layer["w"] + layer["b"]
        mean = jnp.mean(h, axis=0, keepdims=True)
        var = jnp.mean((h - mean) ** 2, axis=0, keepdims=True)
        h = (h - mean) / jnp.sqrt(var + BN_EPS)
        h = jnp.maximum(h * layer["gamma"] + layer["beta"], 0.0)
    last = layers[-1]
    return jnp.tanh(h @ last["w"] + last["b"]) * action_bound


if __name__ == "__main__":
    # Module defaults: state_dim=128, hidden=[400,400,300,300], action_dim=1.
    # batch=256: BatchNorm stats are whole-batch, and 256 rows fill the MXU
    # M-dim (one pallas_call per BN-coupled minibatch).
    batch = 256
    state_dim = 128
    hidden_dims = (400, 400, 300, 300)
    action_dim = 1
    action_bound = 1.0

    key = jax.random.PRNGKey(0)
    key, xkey = jax.random.split(key)
    state = jax.random.normal(xkey, (batch, state_dim), jnp.float32)
    layers = init_actor_params(key, state_dim, hidden_dims, action_dim)

    ref = actor_reference(state, layers, action_bound)

    # 1) f32-operand path: tight parity with the PyTorch forward.
    w_f32, vec_f32 = pack_actor_params(layers, hidden_dims, action_dim, jnp.float32)
    out_f32 = actor_forward(
        state, w_f32, vec_f32,
        hidden_dims=hidden_dims, action_dim=action_dim, action_bound=action_bound,
    )
    out_f32 = jax.block_until_ready(out_f32)
    assert out_f32.shape == (batch, action_dim)
    assert jnp.allclose(out_f32, ref, atol=1e-4, rtol=1e-4), "f32 kernel mismatch vs reference"

    # 2) bf16 weights + bf16 input DMA (default fast path: native MXU operand
    #    dtype on v5e/v6e/v7x, half the DMA bytes); BN renormalizes in f32.
    w_bf16, vec_bf16 = pack_actor_params(layers, hidden_dims, action_dim, jnp.bfloat16)
    out_bf16 = actor_forward(
        state, w_bf16, vec_bf16,
        hidden_dims=hidden_dims, action_dim=action_dim, action_bound=action_bound,
    )
    out_bf16 = jax.block_until_ready(out_bf16)
    assert out_bf16.shape == (batch, action_dim)
    assert jnp.allclose(out_bf16, ref, atol=5e-2), "bf16 kernel drifted too far from reference"

    print("KERNEL_OK")
</pallas_src>

<mosaic_0001>
module attributes {stable_mosaic.version = 11 : i64} {
  func.func @kernel(%arg0: memref<256x128xf32, #tpu.memory_space<vmem>>, %arg1: memref<128x400xf32, #tpu.memory_space<any>>, %arg2: memref<400x400xf32, #tpu.memory_space<any>>, %arg3: memref<400x300xf32, #tpu.memory_space<any>>, %arg4: memref<300x300xf32, #tpu.memory_space<any>>, %arg5: memref<1x4096xf32, #tpu.memory_space<vmem>>, %arg6: memref<256x1xf32, #tpu.memory_space<vmem>>, %arg7: memref<128x400xf32, #tpu.memory_space<vmem>>, %arg8: memref<400x400xf32, #tpu.memory_space<vmem>>, %arg9: memref<400x300xf32, #tpu.memory_space<vmem>>, %arg10: memref<300x300xf32, #tpu.memory_space<vmem>>, %arg11: memref<4x!tpu.dma_semaphore, #tpu.memory_space<semaphore_mem>>) attributes {dimension_semantics = [], scalar_prefetch = 0 : i64, scratch_operands = 5 : i64, tpu.core_type = #tpu.core_type<tc>} {
    %c0_i32 = arith.constant 0 : i32
    %0 = tpu.memref_slice %arg11[%c0_i32] : memref<4x!tpu.dma_semaphore, #tpu.memory_space<semaphore_mem>> -> memref<1x!tpu.dma_semaphore, #tpu.memory_space<semaphore_mem>>
    %1 = tpu.memref_squeeze %0 : memref<1x!tpu.dma_semaphore, #tpu.memory_space<semaphore_mem>> -> memref<!tpu.dma_semaphore, #tpu.memory_space<semaphore_mem>>
    tpu.enqueue_dma source(%arg1 : memref<128x400xf32, #tpu.memory_space<any>>) target(%arg7 : memref<128x400xf32, #tpu.memory_space<vmem>>) target_semaphore(%1 : memref<!tpu.dma_semaphore, #tpu.memory_space<semaphore_mem>>)
    %c1_i32 = arith.constant 1 : i32
    %2 = tpu.memref_slice %arg11[%c1_i32] : memref<4x!tpu.dma_semaphore, #tpu.memory_space<semaphore_mem>> -> memref<1x!tpu.dma_semaphore, #tpu.memory_space<semaphore_mem>>
    %3 = tpu.memref_squeeze %2 : memref<1x!tpu.dma_semaphore, #tpu.memory_space<semaphore_mem>> -> memref<!tpu.dma_semaphore, #tpu.memory_space<semaphore_mem>>
    tpu.enqueue_dma source(%arg2 : memref<400x400xf32, #tpu.memory_space<any>>) target(%arg8 : memref<400x400xf32, #tpu.memory_space<vmem>>) target_semaphore(%3 : memref<!tpu.dma_semaphore, #tpu.memory_space<semaphore_mem>>)
    %c2_i32 = arith.constant 2 : i32
    %4 = tpu.memref_slice %arg11[%c2_i32] : memref<4x!tpu.dma_semaphore, #tpu.memory_space<semaphore_mem>> -> memref<1x!tpu.dma_semaphore, #tpu.memory_space<semaphore_mem>>
    %5 = tpu.memref_squeeze %4 : memref<1x!tpu.dma_semaphore, #tpu.memory_space<semaphore_mem>> -> memref<!tpu.dma_semaphore, #tpu.memory_space<semaphore_mem>>
    tpu.enqueue_dma source(%arg3 : memref<400x300xf32, #tpu.memory_space<any>>) target(%arg9 : memref<400x300xf32, #tpu.memory_space<vmem>>) target_semaphore(%5 : memref<!tpu.dma_semaphore, #tpu.memory_space<semaphore_mem>>)
    %c3_i32 = arith.constant 3 : i32
    %6 = tpu.memref_slice %arg11[%c3_i32] : memref<4x!tpu.dma_semaphore, #tpu.memory_space<semaphore_mem>> -> memref<1x!tpu.dma_semaphore, #tpu.memory_space<semaphore_mem>>
    %7 = tpu.memref_squeeze %6 : memref<1x!tpu.dma_semaphore, #tpu.memory_space<semaphore_mem>> -> memref<!tpu.dma_semaphore, #tpu.memory_space<semaphore_mem>>
    tpu.enqueue_dma source(%arg4 : memref<300x300xf32, #tpu.memory_space<any>>) target(%arg10 : memref<300x300xf32, #tpu.memory_space<vmem>>) target_semaphore(%7 : memref<!tpu.dma_semaphore, #tpu.memory_space<semaphore_mem>>)
    %c0 = arith.constant 0 : index
    %c0_0 = arith.constant 0 : index
    %8 = vector.load %arg0[%c0, %c0_0] : memref<256x128xf32, #tpu.memory_space<vmem>>, vector<256x128xf32>
    %c0_i32_1 = arith.constant 0 : i32
    %9 = tpu.memref_slice %arg11[%c0_i32_1] : memref<4x!tpu.dma_semaphore, #tpu.memory_space<semaphore_mem>> -> memref<1x!tpu.dma_semaphore, #tpu.memory_space<semaphore_mem>>
    %10 = tpu.memref_squeeze %9 : memref<1x!tpu.dma_semaphore, #tpu.memory_space<semaphore_mem>> -> memref<!tpu.dma_semaphore, #tpu.memory_space<semaphore_mem>>
    tpu.wait_dma2 semaphore(%10 : memref<!tpu.dma_semaphore, #tpu.memory_space<semaphore_mem>>) src(%arg1 : memref<128x400xf32, #tpu.memory_space<any>>) dst(%arg7 : memref<128x400xf32, #tpu.memory_space<vmem>>)
    %c0_2 = arith.constant 0 : index
    %c0_3 = arith.constant 0 : index
    %11 = vector.load %arg7[%c0_2, %c0_3] : memref<128x400xf32, #tpu.memory_space<vmem>>, vector<128x400xf32>
    %cst = arith.constant dense<0.000000e+00> : vector<256x400xf32>
    %12 = tpu.matmul %8, %11, %cst {dimension_numbers = #tpu.dot_dimension_numbers<[1], [0], [0], [1], [0, 0, 1, 1], [], []>} : vector<256x128xf32>, vector<128x400xf32>, vector<256x400xf32> -> vector<256x400xf32>
    %cst_4 = arith.constant dense<0.000000e+00> : vector<400xf32>
    %13 = vector.multi_reduction <add>, %12, %cst_4 [0] : vector<256x400xf32> to vector<400xf32>
    %14 = vector.shape_cast %13 : vector<400xf32> to vector<1x400xf32>
    %cst_5 = arith.constant 2.560000e+02 : f32
    %15 = vector.broadcast %cst_5 : f32 to vector<1x400xf32>
    %16 = arith.divf %14, %15 : vector<1x400xf32>
    %17 = vector.broadcast %16 : vector<1x400xf32> to vector<256x400xf32>
    %18 = arith.subf %12, %17 : vector<256x400xf32>
    %19 = arith.mulf %18, %18 : vector<256x400xf32>
    %cst_6 = arith.constant dense<0.000000e+00> : vector<400xf32>
    %20 = vector.multi_reduction <add>, %19, %cst_6 [0] : vector<256x400xf32> to vector<400xf32>
    %21 = vector.shape_cast %20 : vector<400xf32> to vector<1x400xf32>
    %cst_7 = arith.constant 2.560000e+02 : f32
    %22 = vector.broadcast %cst_7 : f32 to vector<1x400xf32>
    %23 = arith.divf %21, %22 : vector<1x400xf32>
    %c0_8 = arith.constant 0 : index
    %c0_9 = arith.constant 0 : index
    %24 = vector.load %arg5[%c0_8, %c0_9] : memref<1x4096xf32, #tpu.memory_space<vmem>>, vector<1x400xf32>
    %c0_10 = arith.constant 0 : index
    %c512 = arith.constant 512 : index
    %25 = vector.load %arg5[%c0_10, %c512] : memref<1x4096xf32, #tpu.memory_space<vmem>>, vector<1x400xf32>
    %cst_11 = arith.constant 9.99999974E-6 : f32
    %26 = vector.broadcast %cst_11 : f32 to vector<1x400xf32>
    %27 = arith.addf %23, %26 : vector<1x400xf32>
    %28 = math.rsqrt %27 : vector<1x400xf32>
    %29 = arith.mulf %24, %28 : vector<1x400xf32>
    %30 = vector.broadcast %29 : vector<1x400xf32> to vector<256x400xf32>
    %31 = arith.mulf %18, %30 : vector<256x400xf32>
    %32 = vector.broadcast %25 : vector<1x400xf32> to vector<256x400xf32>
    %33 = arith.addf %31, %32 : vector<256x400xf32>
    %cst_12 = arith.constant 0.000000e+00 : f32
    %34 = vector.broadcast %cst_12 : f32 to vector<256x400xf32>
    %35 = arith.maximumf %33, %34 : vector<256x400xf32>
    %c1_i32_13 = arith.constant 1 : i32
    %36 = tpu.memref_slice %arg11[%c1_i32_13] : memref<4x!tpu.dma_semaphore, #tpu.memory_space<semaphore_mem>> -> memref<1x!tpu.dma_semaphore, #tpu.memory_space<semaphore_mem>>
    %37 = tpu.memref_squeeze %36 : memref<1x!tpu.dma_semaphore, #tpu.memory_space<semaphore_mem>> -> memref<!tpu.dma_semaphore, #tpu.memory_space<semaphore_mem>>
    tpu.wait_dma2 semaphore(%37 : memref<!tpu.dma_semaphore, #tpu.memory_space<semaphore_mem>>) src(%arg2 : memref<400x400xf32, #tpu.memory_space<any>>) dst(%arg8 : memref<400x400xf32, #tpu.memory_space<vmem>>)
    %c0_14 = arith.constant 0 : index
    %c0_15 = arith.constant 0 : index
    %38 = vector.load %arg8[%c0_14, %c0_15] : memref<400x400xf32, #tpu.memory_space<vmem>>, vector<400x400xf32>
    %cst_16 = arith.constant dense<0.000000e+00> : vector<256x400xf32>
    %39 = tpu.matmul %35, %38, %cst_16 {dimension_numbers = #tpu.dot_dimension_numbers<[1], [0], [0], [1], [0, 0, 1, 1], [], []>} : vector<256x400xf32>, vector<400x400xf32>, vector<256x400xf32> -> vector<256x400xf32>
    %cst_17 = arith.constant dense<0.000000e+00> : vector<400xf32>
    %40 = vector.multi_reduction <add>, %39, %cst_17 [0] : vector<256x400xf32> to vector<400xf32>
    %41 = vector.shape_cast %40 : vector<400xf32> to vector<1x400xf32>
    %cst_18 = arith.constant 2.560000e+02 : f32
    %42 = vector.broadcast %cst_18 : f32 to vector<1x400xf32>
    %43 = arith.divf %41, %42 : vector<1x400xf32>
    %44 = vector.broadcast %43 : vector<1x400xf32> to vector<256x400xf32>
    %45 = arith.subf %39, %44 : vector<256x400xf32>
    %46 = arith.mulf %45, %45 : vector<256x400xf32>
    %cst_19 = arith.constant dense<0.000000e+00> : vector<400xf32>
    %47 = vector.multi_reduction <add>, %46, %cst_19 [0] : vector<256x400xf32> to vector<400xf32>
    %48 = vector.shape_cast %47 : vector<400xf32> to vector<1x400xf32>
    %cst_20 = arith.constant 2.560000e+02 : f32
    %49 = vector.broadcast %cst_20 : f32 to vector<1x400xf32>
    %50 = arith.divf %48, %49 : vector<1x400xf32>
    %c0_21 = arith.constant 0 : index
    %c1024 = arith.constant 1024 : index
    %51 = vector.load %arg5[%c0_21, %c1024] : memref<1x4096xf32, #tpu.memory_space<vmem>>, vector<1x400xf32>
    %c0_22 = arith.constant 0 : index
    %c1536 = arith.constant 1536 : index
    %52 = vector.load %arg5[%c0_22, %c1536] : memref<1x4096xf32, #tpu.memory_space<vmem>>, vector<1x400xf32>
    %cst_23 = arith.constant 9.99999974E-6 : f32
    %53 = vector.broadcast %cst_23 : f32 to vector<1x400xf32>
    %54 = arith.addf %50, %53 : vector<1x400xf32>
    %55 = math.rsqrt %54 : vector<1x400xf32>
    %56 = arith.mulf %51, %55 : vector<1x400xf32>
    %57 = vector.broadcast %56 : vector<1x400xf32> to vector<256x400xf32>
    %58 = arith.mulf %45, %57 : vector<256x400xf32>
    %59 = vector.broadcast %52 : vector<1x400xf32> to vector<256x400xf32>
    %60 = arith.addf %58, %59 : vector<256x400xf32>
    %cst_24 = arith.constant 0.000000e+00 : f32
    %61 = vector.broadcast %cst_24 : f32 to vector<256x400xf32>
    %62 = arith.maximumf %60, %61 : vector<256x400xf32>
    %c2_i32_25 = arith.constant 2 : i32
    %63 = tpu.memref_slice %arg11[%c2_i32_25] : memref<4x!tpu.dma_semaphore, #tpu.memory_space<semaphore_mem>> -> memref<1x!tpu.dma_semaphore, #tpu.memory_space<semaphore_mem>>
    %64 = tpu.memref_squeeze %63 : memref<1x!tpu.dma_semaphore, #tpu.memory_space<semaphore_mem>> -> memref<!tpu.dma_semaphore, #tpu.memory_space<semaphore_mem>>
    tpu.wait_dma2 semaphore(%64 : memref<!tpu.dma_semaphore, #tpu.memory_space<semaphore_mem>>) src(%arg3 : memref<400x300xf32, #tpu.memory_space<any>>) dst(%arg9 : memref<400x300xf32, #tpu.memory_space<vmem>>)
    %c0_26 = arith.constant 0 : index
    %c0_27 = arith.constant 0 : index
    %65 = vector.load %arg9[%c0_26, %c0_27] : memref<400x300xf32, #tpu.memory_space<vmem>>, vector<400x300xf32>
    %cst_28 = arith.constant dense<0.000000e+00> : vector<256x300xf32>
    %66 = tpu.matmul %62, %65, %cst_28 {dimension_numbers = #tpu.dot_dimension_numbers<[1], [0], [0], [1], [0, 0, 1, 1], [], []>} : vector<256x400xf32>, vector<400x300xf32>, vector<256x300xf32> -> vector<256x300xf32>
    %cst_29 = arith.constant dense<0.000000e+00> : vector<300xf32>
    %67 = vector.multi_reduction <add>, %66, %cst_29 [0] : vector<256x300xf32> to vector<300xf32>
    %68 = vector.shape_cast %67 : vector<300xf32> to vector<1x300xf32>
    %cst_30 = arith.constant 2.560000e+02 : f32
    %69 = vector.broadcast %cst_30 : f32 to vector<1x300xf32>
    %70 = arith.divf %68, %69 : vector<1x300xf32>
    %71 = vector.broadcast %70 : vector<1x300xf32> to vector<256x300xf32>
    %72 = arith.subf %66, %71 : vector<256x300xf32>
    %73 = arith.mulf %72, %72 : vector<256x300xf32>
    %cst_31 = arith.constant dense<0.000000e+00> : vector<300xf32>
    %74 = vector.multi_reduction <add>, %73, %cst_31 [0] : vector<256x300xf32> to vector<300xf32>
    %75 = vector.shape_cast %74 : vector<300xf32> to vector<1x300xf32>
    %cst_32 = arith.constant 2.560000e+02 : f32
    %76 = vector.broadcast %cst_32 : f32 to vector<1x300xf32>
    %77 = arith.divf %75, %76 : vector<1x300xf32>
    %c0_33 = arith.constant 0 : index
    %c2048 = arith.constant 2048 : index
    %78 = vector.load %arg5[%c0_33, %c2048] : memref<1x4096xf32, #tpu.memory_space<vmem>>, vector<1x300xf32>
    %c0_34 = arith.constant 0 : index
    %c2432 = arith.constant 2432 : index
    %79 = vector.load %arg5[%c0_34, %c2432] : memref<1x4096xf32, #tpu.memory_space<vmem>>, vector<1x300xf32>
    %cst_35 = arith.constant 9.99999974E-6 : f32
    %80 = vector.broadcast %cst_35 : f32 to vector<1x300xf32>
    %81 = arith.addf %77, %80 : vector<1x300xf32>
    %82 = math.rsqrt %81 : vector<1x300xf32>
    %83 = arith.mulf %78, %82 : vector<1x300xf32>
    %84 = vector.broadcast %83 : vector<1x300xf32> to vector<256x300xf32>
    %85 = arith.mulf %72, %84 : vector<256x300xf32>
    %86 = vector.broadcast %79 : vector<1x300xf32> to vector<256x300xf32>
    %87 = arith.addf %85, %86 : vector<256x300xf32>
    %cst_36 = arith.constant 0.000000e+00 : f32
    %88 = vector.broadcast %cst_36 : f32 to vector<256x300xf32>
    %89 = arith.maximumf %87, %88 : vector<256x300xf32>
    %c3_i32_37 = arith.constant 3 : i32
    %90 = tpu.memref_slice %arg11[%c3_i32_37] : memref<4x!tpu.dma_semaphore, #tpu.memory_space<semaphore_mem>> -> memref<1x!tpu.dma_semaphore, #tpu.memory_space<semaphore_mem>>
    %91 = tpu.memref_squeeze %90 : memref<1x!tpu.dma_semaphore, #tpu.memory_space<semaphore_mem>> -> memref<!tpu.dma_semaphore, #tpu.memory_space<semaphore_mem>>
    tpu.wait_dma2 semaphore(%91 : memref<!tpu.dma_semaphore, #tpu.memory_space<semaphore_mem>>) src(%arg4 : memref<300x300xf32, #tpu.memory_space<any>>) dst(%arg10 : memref<300x300xf32, #tpu.memory_space<vmem>>)
    %c0_38 = arith.constant 0 : index
    %c0_39 = arith.constant 0 : index
    %92 = vector.load %arg10[%c0_38, %c0_39] : memref<300x300xf32, #tpu.memory_space<vmem>>, vector<300x300xf32>
    %cst_40 = arith.constant dense<0.000000e+00> : vector<256x300xf32>
    %93 = tpu.matmul %89, %92, %cst_40 {dimension_numbers = #tpu.dot_dimension_numbers<[1], [0], [0], [1], [0, 0, 1, 1], [], []>} : vector<256x300xf32>, vector<300x300xf32>, vector<256x300xf32> -> vector<256x300xf32>
    %cst_41 = arith.constant dense<0.000000e+00> : vector<300xf32>
    %94 = vector.multi_reduction <add>, %93, %cst_41 [0] : vector<256x300xf32> to vector<300xf32>
    %95 = vector.shape_cast %94 : vector<300xf32> to vector<1x300xf32>
    %cst_42 = arith.constant 2.560000e+02 : f32
    %96 = vector.broadcast %cst_42 : f32 to vector<1x300xf32>
    %97 = arith.divf %95, %96 : vector<1x300xf32>
    %98 = vector.broadcast %97 : vector<1x300xf32> to vector<256x300xf32>
    %99 = arith.subf %93, %98 : vector<256x300xf32>
    %100 = arith.mulf %99, %99 : vector<256x300xf32>
    %cst_43 = arith.constant dense<0.000000e+00> : vector<300xf32>
    %101 = vector.multi_reduction <add>, %100, %cst_43 [0] : vector<256x300xf32> to vector<300xf32>
    %102 = vector.shape_cast %101 : vector<300xf32> to vector<1x300xf32>
    %cst_44 = arith.constant 2.560000e+02 : f32
    %103 = vector.broadcast %cst_44 : f32 to vector<1x300xf32>
    %104 = arith.divf %102, %103 : vector<1x300xf32>
    %c0_45 = arith.constant 0 : index
    %c2816 = arith.constant 2816 : index
    %105 = vector.load %arg5[%c0_45, %c2816] : memref<1x4096xf32, #tpu.memory_space<vmem>>, vector<1x300xf32>
    %c0_46 = arith.constant 0 : index
    %c3200 = arith.constant 3200 : index
    %106 = vector.load %arg5[%c0_46, %c3200] : memref<1x4096xf32, #tpu.memory_space<vmem>>, vector<1x300xf32>
    %cst_47 = arith.constant 9.99999974E-6 : f32
    %107 = vector.broadcast %cst_47 : f32 to vector<1x300xf32>
    %108 = arith.addf %104, %107 : vector<1x300xf32>
    %109 = math.rsqrt %108 : vector<1x300xf32>
    %110 = arith.mulf %105, %109 : vector<1x300xf32>
    %111 = vector.broadcast %110 : vector<1x300xf32> to vector<256x300xf32>
    %112 = arith.mulf %99, %111 : vector<256x300xf32>
    %113 = vector.broadcast %106 : vector<1x300xf32> to vector<256x300xf32>
    %114 = arith.addf %112, %113 : vector<256x300xf32>
    %cst_48 = arith.constant 0.000000e+00 : f32
    %115 = vector.broadcast %cst_48 : f32 to vector<256x300xf32>
    %116 = arith.maximumf %114, %115 : vector<256x300xf32>
    %c0_49 = arith.constant 0 : index
    %c3968 = arith.constant 3968 : index
    %117 = vector.load %arg5[%c0_49, %c3968] : memref<1x4096xf32, #tpu.memory_space<vmem>>, vector<1x1xf32>
    %c0_50 = arith.constant 0 : index
    %c3584 = arith.constant 3584 : index
    %118 = vector.load %arg5[%c0_50, %c3584] : memref<1x4096xf32, #tpu.memory_space<vmem>>, vector<1x300xf32>
    %119 = vector.broadcast %118 : vector<1x300xf32> to vector<256x300xf32>
    %120 = arith.mulf %116, %119 : vector<256x300xf32>
    %cst_51 = arith.constant dense<0.000000e+00> : vector<256xf32>
    %121 = vector.multi_reduction <add>, %120, %cst_51 [1] : vector<256x300xf32> to vector<256xf32>
    %122 = vector.shape_cast %121 : vector<256xf32> to vector<256x1xf32>
    %123 = vector.broadcast %117 : vector<1x1xf32> to vector<256x1xf32>
    %124 = arith.addf %122, %123 : vector<256x1xf32>
    %125 = math.tanh %124 : vector<256x1xf32>
    %c0_52 = arith.constant 0 : index
    %c0_53 = arith.constant 0 : index
    %126 = vector.load %arg6[%c0_52, %c0_53] : memref<256x1xf32, #tpu.memory_space<vmem>>, vector<256x1xf32>
    tpu.vector_store %arg6[%c0_52, %c0_53], %125 {strides = array<i32>} : memref<256x1xf32, #tpu.memory_space<vmem>>, vector<256x1xf32>,
    return
  }
}

</mosaic_0001>

<llo_original>
// kernel: actor_forward.1
$region0: #{actor_forward.1}
  #allocation0 [shape = 'u32[]', space=smem, size = 0x4, offset = 0x4, fixed_abs, tag = 'smem constant byte address 0x4 - core index']
  #allocation1 [shape = 'u32[144,128]{1,0:T(1,128)}', space=vmem, size = 0x12000, scoped, tag = 'internal scratch']
  #allocation2 [shape = 'f32[128,400]{1,0:T(8,128)}', space=vmem, size = 0x40000, scoped, tag = 'scratch operand']
  #allocation3 [shape = 'f32[400,400]{1,0:T(8,128)}', space=vmem, size = 0xc8000, scoped, tag = 'scratch operand']
  #allocation4 [shape = 'f32[400,300]{1,0:T(8,128)}', space=vmem, size = 0x96000, scoped, tag = 'scratch operand']
  #allocation5 [shape = 'f32[300,300]{1,0:T(8,128)}', space=vmem, size = 0x72000, scoped, tag = 'scratch operand']
  #allocation6 [shape = 's32[4]{0}', space=sflag, size = 0x10, scoped, tag = 'scratch operand']
  #allocation11 [shape = 's32[]', space=sflag, size = 0x4, offset = 0, fixed_abs, tag = 'sflag constant byte address 0x0 - dummy sync flag']
  #allocation12 [shape = 's32[]', space=sflag, size = 0x4, offset = 0, fixed_abs, tag = 'sflag constant byte address 0x0 - dummy sync flag']
  #allocation13 [shape = 's32[]', space=sflag, size = 0x4, offset = 0, fixed_abs, tag = 'sflag constant byte address 0x0 - dummy sync flag']
  #allocation14 [shape = 'u32[]', space=smem, size = 0x4, offset = 0x44, fixed_abs, tag = 'smem constant byte address 0x44 - assertion arg 0']
  #allocation15 [shape = 'u32[]', space=smem, size = 0x4, offset = 0x48, fixed_abs, tag = 'smem constant byte address 0x48 - assertion arg 1']
  #allocation16 [shape = 's32[]', space=sflag, size = 0x4, offset = 0, fixed_abs, tag = 'sflag constant byte address 0x0 - dummy sync flag']
  #allocation17 [shape = 's32[]', space=sflag, size = 0x4, offset = 0, fixed_abs, tag = 'sflag constant byte address 0x0 - dummy sync flag']
  #allocation18 [shape = 's32[]', space=sflag, size = 0x4, offset = 0, fixed_abs, tag = 'sflag constant byte address 0x0 - dummy sync flag']
  %s0 = inlined_call_operand.hbm [shape: f32[256,128], index: 0, kind: input, shape index: {}]
  %s1 = inlined_call_operand.vmem [shape: f32[128,400], index: 1, kind: input, shape index: {}]
  %s2 = inlined_call_operand.hbm [shape: f32[400,400], index: 2, kind: input, shape index: {}]
  %s3 = inlined_call_operand.hbm [shape: f32[400,300], index: 3, kind: input, shape index: {}]
  %s4 = inlined_call_operand.vmem [shape: f32[300,300], index: 4, kind: input, shape index: {}]
  %s5 = inlined_call_operand.hbm [shape: f32[1,4096], index: 5, kind: input, shape index: {}]
  %s6 = inlined_call_operand.vmem [shape: f32[256,1], index: 6, kind: output, shape index: {}]
  %s7 = sld [smem:[#allocation0]]
  $region102: #{actor_forward.1} parent=0
    _
  %s9 = ssub.s32 1, %s7
  %s10 = scalar_select 0, %s9, %s7
  $region1: #{actor_forward.1} parent=0
    #allocation7 [shape = 'u8[131072]{0}', space=vmem, size = 0x20000, scoped, tag = 'input window, operand 0, single buffered']
    #allocation8 [shape = 's32[1]{0}', space=sflag, size = 0x4, scoped, tag = 'scoped memory for actor_forward.1']
    #allocation9 [shape = 'u8[16384]{0}', space=vmem, size = 0x4000, scoped, tag = 'input window, operand 5, single buffered']
    #allocation10 [shape = 's32[1]{0}', space=sflag, size = 0x4, scoped, tag = 'scoped memory for actor_forward.1']
    %11 = vsyncpa [#allocation8], 0
    %12 = vsyncpa [#allocation10], 0
    // Predicated region
    $region2: #{actor_forward.1} parent=1 // pred_check
      _
    $region3: #{actor_forward.1} parent=1 // pred_check_branch
      %14 = sbr.rel (0) target = $region5
    $region4: #{actor_forward.1} parent=1 // pred_region
      %s16 = ssub.s32 4096, 4096
      %17 = vsyncadd [#allocation8], %s16
      %s18 = sshll.u32 [#allocation7], 4
      %s19 = int_to_ptr.vmem [resolvable:$true] %s18
      %24 = dma.hbm_to_vmem [thread:$0]  %s0, 4096, %s19, [#allocation8], 128, 128, 8
    $region5: #{actor_forward.1} parent=1 // pred_fallthru
      _
    // Predicated region
    $region6: #{actor_forward.1} parent=1 // pred_check
      _
    $region7: #{actor_forward.1} parent=1 // pred_check_branch
      %26 = sbr.rel (0) target = $region9
    $region8: #{actor_forward.1} parent=1 // pred_region
      %s28 = ssub.s32 512, 512
      %29 = vsyncadd [#allocation10], %s28
      %s31 = sshll.u32 [#allocation9], 4
      %s32 = int_to_ptr.vmem [resolvable:$true] %s31
      %34 = dma.hbm_to_vmem [thread:$0]  %s5, 512, %s32, [#allocation10]
    $region9: #{actor_forward.1} parent=1 // pred_fallthru
      _
    // Predicated region
    $region10: #{actor_forward.1} parent=1 // pred_check
      _
    $region11: #{actor_forward.1} parent=1 // pred_check_branch
      %36 = sbr.rel (0) target = $region13
    $region12: #{actor_forward.1} parent=1 // pred_region
      %37 = dma.done [#allocation8], 4096
    $region13: #{actor_forward.1} parent=1 // pred_fallthru
      _
    // Predicated region
    $region14: #{actor_forward.1} parent=1 // pred_check
      _
    $region15: #{actor_forward.1} parent=1 // pred_check_branch
      %39 = sbr.rel (0) target = $region17
    $region16: #{actor_forward.1} parent=1 // pred_region
      %40 = dma.done [#allocation10], 512
    $region17: #{actor_forward.1} parent=1 // pred_fallthru
      _
    %p42 = scmp.lt.u32.totalorder 512, 8
    %p43 = pneg %p42
    // Predicated region
    $region18: #{actor_forward.1} parent=1 // pred_check
      _
    $region19: #{actor_forward.1} parent=1 // pred_check_branch
      %45 = sbr.rel (%p42) target = $region21
    $region20: #{actor_forward.1} parent=1 // pred_region
      %s61 = sand.u32 512, 7
      %p62 = scmp.eq.s32.totalorder %s61, 0
      // Predicated region
      $region33: #{actor_forward.1} parent=20 // pred_check
        %p63 = pneg %p62
      $region34: #{actor_forward.1} parent=20 // pred_check_branch
        %65 = sbr.rel (%p63) target = $region36
      $region35: #{actor_forward.1} parent=20 // pred_region
        loop: start=0, step=1, limit=1
        $region37: #{actor_forward.1} parent=35 // loop_pre_header
          _
        $region38: #{actor_forward.1} parent=35 // loop_header
          %s67 = sphi 0, %s71
          %p68 = scmp.ge.s32.totalorder %s67, 1
          %s72 = sphi %s1, %s1
          %s73 = sphi [#allocation2], [#allocation2]
        $region39: #{actor_forward.1} parent=35 // loop_header_branch
          %70 = sbr.rel (%p68) target = $region43
        $region40: #{actor_forward.1} parent=35 // loop_body
          %v74 = vld [vmem:[%s72] sm:$0xff]
          %75 = vst [vmem:[%s73] sm:$0xff] %v74
          %v76 = vld [vmem:[%s72 + $0x8] sm:$0xff]
          %77 = vst [vmem:[%s73 + $0x8] sm:$0xff] %v76
          %v78 = vld [vmem:[%s72 + $0x10] sm:$0xff]
          %79 = vst [vmem:[%s73 + $0x10] sm:$0xff] %v78
          %v80 = vld [vmem:[%s72 + $0x18] sm:$0xff]
          %81 = vst [vmem:[%s73 + $0x18] sm:$0xff] %v80
          %v82 = vld [vmem:[%s72 + $0x20] sm:$0xff]
          %83 = vst [vmem:[%s73 + $0x20] sm:$0xff] %v82
          %v84 = vld [vmem:[%s72 + $0x28] sm:$0xff]
          %85 = vst [vmem:[%s73 + $0x28] sm:$0xff] %v84
          %v86 = vld [vmem:[%s72 + $0x30] sm:$0xff]
          %87 = vst [vmem:[%s73 + $0x30] sm:$0xff] %v86
          %v88 = vld [vmem:[%s72 + $0x38] sm:$0xff]
          %89 = vst [vmem:[%s73 + $0x38] sm:$0xff] %v88
          %v90 = vld [vmem:[%s72 + $0x40] sm:$0xff]
          %91 = vst [vmem:[%s73 + $0x40] sm:$0xff] %v90
          %v92 = vld [vmem:[%s72 + $0x48] sm:$0xff]
          %93 = vst [vmem:[%s73 + $0x48] sm:$0xff] %v92
          %v94 = vld [vmem:[%s72 + $0x50] sm:$0xff]
          %95 = vst [vmem:[%s73 + $0x50] sm:$0xff] %v94
          %v96 = vld [vmem:[%s72 + $0x58] sm:$0xff]
          %97 = vst [vmem:[%s73 + $0x58] sm:$0xff] %v96
          %v98 = vld [vmem:[%s72 + $0x60] sm:$0xff]
          %99 = vst [vmem:[%s73 + $0x60] sm:$0xff] %v98
          %v100 = vld [vmem:[%s72 + $0x68] sm:$0xff]
          %101 = vst [vmem:[%s73 + $0x68] sm:$0xff] %v100
          %v102 = vld [vmem:[%s72 + $0x70] sm:$0xff]
          %103 = vst [vmem:[%s73 + $0x70] sm:$0xff] %v102
          %v104 = vld [vmem:[%s72 + $0x78] sm:$0xff]
          %105 = vst [vmem:[%s73 + $0x78] sm:$0xff] %v104
          %v106 = vld [vmem:[%s72 + $0x80] sm:$0xff]
          %107 = vst [vmem:[%s73 + $0x80] sm:$0xff] %v106
          %v108 = vld [vmem:[%s72 + $0x88] sm:$0xff]
          %109 = vst [vmem:[%s73 + $0x88] sm:$0xff] %v108
          %v110 = vld [vmem:[%s72 + $0x90] sm:$0xff]
          %111 = vst [vmem:[%s73 + $0x90] sm:$0xff] %v110
          %v112 = vld [vmem:[%s72 + $0x98] sm:$0xff]
          %113 = vst [vmem:[%s73 + $0x98] sm:$0xff] %v112
          %v114 = vld [vmem:[%s72 + $0xa0] sm:$0xff]
          %115 = vst [vmem:[%s73 + $0xa0] sm:$0xff] %v114
          %v116 = vld [vmem:[%s72 + $0xa8] sm:$0xff]
          %117 = vst [vmem:[%s73 + $0xa8] sm:$0xff] %v116
          %v118 = vld [vmem:[%s72 + $0xb0] sm:$0xff]
          %119 = vst [vmem:[%s73 + $0xb0] sm:$0xff] %v118
          %v120 = vld [vmem:[%s72 + $0xb8] sm:$0xff]
          %121 = vst [vmem:[%s73 + $0xb8] sm:$0xff] %v120
          %v122 = vld [vmem:[%s72 + $0xc0] sm:$0xff]
          %123 = vst [vmem:[%s73 + $0xc0] sm:$0xff] %v122
          %v124 = vld [vmem:[%s72 + $0xc8] sm:$0xff]
          %125 = vst [vmem:[%s73 + $0xc8] sm:$0xff] %v124
          %v126 = vld [vmem:[%s72 + $0xd0] sm:$0xff]
          %127 = vst [vmem:[%s73 + $0xd0] sm:$0xff] %v126
          %v128 = vld [vmem:[%s72 + $0xd8] sm:$0xff]
          %129 = vst [vmem:[%s73 + $0xd8] sm:$0xff] %v128
          %v130 = vld [vmem:[%s72 + $0xe0] sm:$0xff]
          %131 = vst [vmem:[%s73 + $0xe0] sm:$0xff] %v130
          %v132 = vld [vmem:[%s72 + $0xe8] sm:$0xff]
          %133 = vst [vmem:[%s73 + $0xe8] sm:$0xff] %v132
          %v134 = vld [vmem:[%s72 + $0xf0] sm:$0xff]
          %135 = vst [vmem:[%s73 + $0xf0] sm:$0xff] %v134
          %v136 = vld [vmem:[%s72 + $0xf8] sm:$0xff]
          %137 = vst [vmem:[%s73 + $0xf8] sm:$0xff] %v136
          %v138 = vld [vmem:[%s72 + $0x100] sm:$0xff]
          %139 = vst [vmem:[%s73 + $0x100] sm:$0xff] %v138
          %v140 = vld [vmem:[%s72 + $0x108] sm:$0xff]
          %141 = vst [vmem:[%s73 + $0x108] sm:$0xff] %v140
          %v142 = vld [vmem:[%s72 + $0x110] sm:$0xff]
          %143 = vst [vmem:[%s73 + $0x110] sm:$0xff] %v142
          %v144 = vld [vmem:[%s72 + $0x118] sm:$0xff]
          %145 = vst [vmem:[%s73 + $0x118] sm:$0xff] %v144
          %v146 = vld [vmem:[%s72 + $0x120] sm:$0xff]
          %147 = vst [vmem:[%s73 + $0x120] sm:$0xff] %v146
          %v148 = vld [vmem:[%s72 + $0x128] sm:$0xff]
          %149 = vst [vmem:[%s73 + $0x128] sm:$0xff] %v148
          %v150 = vld [vmem:[%s72 + $0x130] sm:$0xff]
          %151 = vst [vmem:[%s73 + $0x130] sm:$0xff] %v150
          %v152 = vld [vmem:[%s72 + $0x138] sm:$0xff]
          %153 = vst [vmem:[%s73 + $0x138] sm:$0xff] %v152
          %v154 = vld [vmem:[%s72 + $0x140] sm:$0xff]
          %155 = vst [vmem:[%s73 + $0x140] sm:$0xff] %v154
          %v156 = vld [vmem:[%s72 + $0x148] sm:$0xff]
          %157 = vst [vmem:[%s73 + $0x148] sm:$0xff] %v156
          %v158 = vld [vmem:[%s72 + $0x150] sm:$0xff]
          %159 = vst [vmem:[%s73 + $0x150] sm:$0xff] %v158
          %v160 = vld [vmem:[%s72 + $0x158] sm:$0xff]
          %161 = vst [vmem:[%s73 + $0x158] sm:$0xff] %v160
          %v162 = vld [vmem:[%s72 + $0x160] sm:$0xff]
          %163 = vst [vmem:[%s73 + $0x160] sm:$0xff] %v162
          %v164 = vld [vmem:[%s72 + $0x168] sm:$0xff]
          %165 = vst [vmem:[%s73 + $0x168] sm:$0xff] %v164
          %v166 = vld [vmem:[%s72 + $0x170] sm:$0xff]
          %167 = vst [vmem:[%s73 + $0x170] sm:$0xff] %v166
          %v168 = vld [vmem:[%s72 + $0x178] sm:$0xff]
          %169 = vst [vmem:[%s73 + $0x178] sm:$0xff] %v168
          %v170 = vld [vmem:[%s72 + $0x180] sm:$0xff]
          %171 = vst [vmem:[%s73 + $0x180] sm:$0xff] %v170
          %v172 = vld [vmem:[%s72 + $0x188] sm:$0xff]
          %173 = vst [vmem:[%s73 + $0x188] sm:$0xff] %v172
          %v174 = vld [vmem:[%s72 + $0x190] sm:$0xff]
          %175 = vst [vmem:[%s73 + $0x190] sm:$0xff] %v174
          %v176 = vld [vmem:[%s72 + $0x198] sm:$0xff]
          %177 = vst [vmem:[%s73 + $0x198] sm:$0xff] %v176
          %v178 = vld [vmem:[%s72 + $0x1a0] sm:$0xff]
          %179 = vst [vmem:[%s73 + $0x1a0] sm:$0xff] %v178
          %v180 = vld [vmem:[%s72 + $0x1a8] sm:$0xff]
          %181 = vst [vmem:[%s73 + $0x1a8] sm:$0xff] %v180
          %v182 = vld [vmem:[%s72 + $0x1b0] sm:$0xff]
          %183 = vst [vmem:[%s73 + $0x1b0] sm:$0xff] %v182
          %v184 = vld [vmem:[%s72 + $0x1b8] sm:$0xff]
          %185 = vst [vmem:[%s73 + $0x1b8] sm:$0xff] %v184
          %v186 = vld [vmem:[%s72 + $0x1c0] sm:$0xff]
          %187 = vst [vmem:[%s73 + $0x1c0] sm:$0xff] %v186
          %v188 = vld [vmem:[%s72 + $0x1c8] sm:$0xff]
          %189 = vst [vmem:[%s73 + $0x1c8] sm:$0xff] %v188
          %v190 = vld [vmem:[%s72 + $0x1d0] sm:$0xff]
          %191 = vst [vmem:[%s73 + $0x1d0] sm:$0xff] %v190
          %v192 = vld [vmem:[%s72 + $0x1d8] sm:$0xff]
          %193 = vst [vmem:[%s73 + $0x1d8] sm:$0xff] %v192
          %v194 = vld [vmem:[%s72 + $0x1e0] sm:$0xff]
          %195 = vst [vmem:[%s73 + $0x1e0] sm:$0xff] %v194
          %v196 = vld [vmem:[%s72 + $0x1e8] sm:$0xff]
          %197 = vst [vmem:[%s73 + $0x1e8] sm:$0xff] %v196
          %v198 = vld [vmem:[%s72 + $0x1f0] sm:$0xff]
          %199 = vst [vmem:[%s73 + $0x1f0] sm:$0xff] %v198
          %v200 = vld [vmem:[%s72 + $0x1f8] sm:$0xff]
          %201 = vst [vmem:[%s73 + $0x1f8] sm:$0xff] %v200
        $region41: #{actor_forward.1} parent=35 // loop_footer
          %s71 = sadd.s32 1, %s67
        $region42: #{actor_forward.1} parent=35 // loop_footer_branch
          %66 = sbr.rel target = $region38
        $region43: #{actor_forward.1} parent=35 // loop_exit
          _
      $region36: #{actor_forward.1} parent=20 // pred_fallthru
        _
      %p202 = pneg %p62
      // Predicated region
      $region44: #{actor_forward.1} parent=20 // pred_check
        _
      $region45: #{actor_forward.1} parent=20 // pred_check_branch
        %204 = sbr.rel (%p62) target = $region47
      $region46: #{actor_forward.1} parent=20 // pred_region
        %s205 = sand.u32 512, 7
      $region47: #{actor_forward.1} parent=20 // pred_fallthru
        _
    $region21: #{actor_forward.1} parent=1 // pred_fallthru
      _
    // Predicated region
    $region22: #{actor_forward.1} parent=1 // pred_check
      %p46 = pneg %p42
    $region23: #{actor_forward.1} parent=1 // pred_check_branch
      %48 = sbr.rel (%p46) target = $region25
    $region24: #{actor_forward.1} parent=1 // pred_region
      %s49 = sshll.u32 1, 512
      %s50 = ssub.s32 %s49, 1
      loop: start=0, step=1, limit=1
      $region26: #{actor_forward.1} parent=24 // loop_pre_header
        _
      $region27: #{actor_forward.1} parent=24 // loop_header
        %s52 = sphi 0, %s56
        %p53 = scmp.ge.s32.totalorder %s52, 1
        %s57 = sphi %s1, %s1
        %s58 = sphi [#allocation2], [#allocation2]
      $region28: #{actor_forward.1} parent=24 // loop_header_branch
        %55 = sbr.rel (%p53) target = $region32
      $region29: #{actor_forward.1} parent=24 // loop_body
        %v59 = vld [vmem:[%s57] sm:%s50]
        %60 = vst [vmem:[%s58] sm:%s50] %v59
      $region30: #{actor_forward.1} parent=24 // loop_footer
        %s56 = sadd.s32 1, %s52
      $region31: #{actor_forward.1} parent=24 // loop_footer_branch
        %51 = sbr.rel target = $region27
      $region32: #{actor_forward.1} parent=24 // loop_exit
        _
    $region25: #{actor_forward.1} parent=1 // pred_fallthru
      _
    // Predicated region
    $region48: #{actor_forward.1} parent=1 // pred_check
      _
    $region49: #{actor_forward.1} parent=1 // pred_check_branch
      %208 = sbr.rel (0) target = $region51
    $region50: #{actor_forward.1} parent=1 // pred_region
      %209 = vsyncadd [#allocation6], 8192
    $region51: #{actor_forward.1} parent=1 // pred_fallthru
      _
    %s210 = scalar_lea.sflag [#allocation6], 1
    // Predicated region
    $region52: #{actor_forward.1} parent=1 // pred_check
      _
    $region53: #{actor_forward.1} parent=1 // pred_check_branch
      %212 = sbr.rel target = $region55
    $region54: #{actor_forward.1} parent=1 // pred_region
      %213 = sst [smem:[#allocation14]] [#allocation13]
      %214 = sst [smem:[#allocation15]] [#allocation12]
    $region55: #{actor_forward.1} parent=1 // pred_fallthru
      _
    %216 = shalt.err (0)
    %s218 = sshll.u32 [#allocation3], 4
    %s219 = int_to_ptr.vmem [resolvable:$true] %s218
    %221 = dma.hbm_to_vmem [thread:$0]  %s2, 25600, %s219, %s210
    %s222 = scalar_lea.sflag [#allocation6], 2
    // Predicated region
    $region56: #{actor_forward.1} parent=1 // pred_check
      _
    $region57: #{actor_forward.1} parent=1 // pred_check_branch
      %224 = sbr.rel target = $region59
    $region58: #{actor_forward.1} parent=1 // pred_region
      %225 = sst [smem:[#allocation14]] [#allocation17]
      %226 = sst [smem:[#allocation15]] [#allocation16]
    $region59: #{actor_forward.1} parent=1 // pred_fallthru
      _
    %228 = shalt.err (0)
    %s230 = sshll.u32 [#allocation4], 4
    %s231 = int_to_ptr.vmem [resolvable:$true] %s230
    %233 = dma.hbm_to_vmem [thread:$0]  %s3, 19200, %s231, %s222
    %s234 = scalar_lea.sflag [#allocation6], 3
    %p236 = scmp.lt.u32.totalorder 912, 8
    %p237 = pneg %p236
    // Predicated region
    $region60: #{actor_forward.1} parent=1 // pred_check
      _
    $region61: #{actor_forward.1} parent=1 // pred_check_branch
      %239 = sbr.rel (%p236) target = $region63
    $region62: #{actor_forward.1} parent=1 // pred_region
      %s255 = sand.u32 912, 7
      %p256 = scmp.eq.s32.totalorder %s255, 0
      // Predicated region
      $region75: #{actor_forward.1} parent=62 // pred_check
        %p257 = pneg %p256
      $region76: #{actor_forward.1} parent=62 // pred_check_branch
        %259 = sbr.rel (%p257) target = $region78
      $region77: #{actor_forward.1} parent=62 // pred_region
        loop: start=0, step=1, limit=1
        $region79: #{actor_forward.1} parent=77 // loop_pre_header
          _
        $region80: #{actor_forward.1} parent=77 // loop_header
          %s261 = sphi 0, %s265
          %p262 = scmp.ge.s32.totalorder %s261, 1
          %s266 = sphi %s4, %s4
          %s267 = sphi [#allocation5], [#allocation5]
        $region81: #{actor_forward.1} parent=77 // loop_header_branch
          %264 = sbr.rel (%p262) target = $region85
        $region82: #{actor_forward.1} parent=77 // loop_body
          %v268 = vld [vmem:[%s266] sm:$0xff]
          %269 = vst [vmem:[%s267] sm:$0xff] %v268
          %v270 = vld [vmem:[%s266 + $0x8] sm:$0xff]
          %271 = vst [vmem:[%s267 + $0x8] sm:$0xff] %v270
          %v272 = vld [vmem:[%s266 + $0x10] sm:$0xff]
          %273 = vst [vmem:[%s267 + $0x10] sm:$0xff] %v272
          %v274 = vld [vmem:[%s266 + $0x18] sm:$0xff]
          %275 = vst [vmem:[%s267 + $0x18] sm:$0xff] %v274
          %v276 = vld [vmem:[%s266 + $0x20] sm:$0xff]
          %277 = vst [vmem:[%s267 + $0x20] sm:$0xff] %v276
          %v278 = vld [vmem:[%s266 + $0x28] sm:$0xff]
          %279 = vst [vmem:[%s267 + $0x28] sm:$0xff] %v278
          %v280 = vld [vmem:[%s266 + $0x30] sm:$0xff]
          %281 = vst [vmem:[%s267 + $0x30] sm:$0xff] %v280
          %v282 = vld [vmem:[%s266 + $0x38] sm:$0xff]
          %283 = vst [vmem:[%s267 + $0x38] sm:$0xff] %v282
          %v284 = vld [vmem:[%s266 + $0x40] sm:$0xff]
          %285 = vst [vmem:[%s267 + $0x40] sm:$0xff] %v284
          %v286 = vld [vmem:[%s266 + $0x48] sm:$0xff]
          %287 = vst [vmem:[%s267 + $0x48] sm:$0xff] %v286
          %v288 = vld [vmem:[%s266 + $0x50] sm:$0xff]
          %289 = vst [vmem:[%s267 + $0x50] sm:$0xff] %v288
          %v290 = vld [vmem:[%s266 + $0x58] sm:$0xff]
          %291 = vst [vmem:[%s267 + $0x58] sm:$0xff] %v290
          %v292 = vld [vmem:[%s266 + $0x60] sm:$0xff]
          %293 = vst [vmem:[%s267 + $0x60] sm:$0xff] %v292
          %v294 = vld [vmem:[%s266 + $0x68] sm:$0xff]
          %295 = vst [vmem:[%s267 + $0x68] sm:$0xff] %v294
          %v296 = vld [vmem:[%s266 + $0x70] sm:$0xff]
          %297 = vst [vmem:[%s267 + $0x70] sm:$0xff] %v296
          %v298 = vld [vmem:[%s266 + $0x78] sm:$0xff]
          %299 = vst [vmem:[%s267 + $0x78] sm:$0xff] %v298
          %v300 = vld [vmem:[%s266 + $0x80] sm:$0xff]
          %301 = vst [vmem:[%s267 + $0x80] sm:$0xff] %v300
          %v302 = vld [vmem:[%s266 + $0x88] sm:$0xff]
          %303 = vst [vmem:[%s267 + $0x88] sm:$0xff] %v302
          %v304 = vld [vmem:[%s266 + $0x90] sm:$0xff]
          %305 = vst [vmem:[%s267 + $0x90] sm:$0xff] %v304
          %v306 = vld [vmem:[%s266 + $0x98] sm:$0xff]
          %307 = vst [vmem:[%s267 + $0x98] sm:$0xff] %v306
          %v308 = vld [vmem:[%s266 + $0xa0] sm:$0xff]
          %309 = vst [vmem:[%s267 + $0xa0] sm:$0xff] %v308
          %v310 = vld [vmem:[%s266 + $0xa8] sm:$0xff]
          %311 = vst [vmem:[%s267 + $0xa8] sm:$0xff] %v310
          %v312 = vld [vmem:[%s266 + $0xb0] sm:$0xff]
          %313 = vst [vmem:[%s267 + $0xb0] sm:$0xff] %v312
          %v314 = vld [vmem:[%s266 + $0xb8] sm:$0xff]
          %315 = vst [vmem:[%s267 + $0xb8] sm:$0xff] %v314
          %v316 = vld [vmem:[%s266 + $0xc0] sm:$0xff]
          %317 = vst [vmem:[%s267 + $0xc0] sm:$0xff] %v316
          %v318 = vld [vmem:[%s266 + $0xc8] sm:$0xff]
          %319 = vst [vmem:[%s267 + $0xc8] sm:$0xff] %v318
          %v320 = vld [vmem:[%s266 + $0xd0] sm:$0xff]
          %321 = vst [vmem:[%s267 + $0xd0] sm:$0xff] %v320
          %v322 = vld [vmem:[%s266 + $0xd8] sm:$0xff]
          %323 = vst [vmem:[%s267 + $0xd8] sm:$0xff] %v322
          %v324 = vld [vmem:[%s266 + $0xe0] sm:$0xff]
          %325 = vst [vmem:[%s267 + $0xe0] sm:$0xff] %v324
          %v326 = vld [vmem:[%s266 + $0xe8] sm:$0xff]
          %327 = vst [vmem:[%s267 + $0xe8] sm:$0xff] %v326
          %v328 = vld [vmem:[%s266 + $0xf0] sm:$0xff]
          %329 = vst [vmem:[%s267 + $0xf0] sm:$0xff] %v328
          %v330 = vld [vmem:[%s266 + $0xf8] sm:$0xff]
          %331 = vst [vmem:[%s267 + $0xf8] sm:$0xff] %v330
          %v332 = vld [vmem:[%s266 + $0x100] sm:$0xff]
          %333 = vst [vmem:[%s267 + $0x100] sm:$0xff] %v332
          %v334 = vld [vmem:[%s266 + $0x108] sm:$0xff]
          %335 = vst [vmem:[%s267 + $0x108] sm:$0xff] %v334
          %v336 = vld [vmem:[%s266 + $0x110] sm:$0xff]
          %337 = vst [vmem:[%s267 + $0x110] sm:$0xff] %v336
          %v338 = vld [vmem:[%s266 + $0x118] sm:$0xff]
          %339 = vst [vmem:[%s267 + $0x118] sm:$0xff] %v338
          %v340 = vld [vmem:[%s266 + $0x120] sm:$0xff]
          %341 = vst [vmem:[%s267 + $0x120] sm:$0xff] %v340
          %v342 = vld [vmem:[%s266 + $0x128] sm:$0xff]
          %343 = vst [vmem:[%s267 + $0x128] sm:$0xff] %v342
          %v344 = vld [vmem:[%s266 + $0x130] sm:$0xff]
          %345 = vst [vmem:[%s267 + $0x130] sm:$0xff] %v344
          %v346 = vld [vmem:[%s266 + $0x138] sm:$0xff]
          %347 = vst [vmem:[%s267 + $0x138] sm:$0xff] %v346
          %v348 = vld [vmem:[%s266 + $0x140] sm:$0xff]
          %349 = vst [vmem:[%s267 + $0x140] sm:$0xff] %v348
          %v350 = vld [vmem:[%s266 + $0x148] sm:$0xff]
          %351 = vst [vmem:[%s267 + $0x148] sm:$0xff] %v350
          %v352 = vld [vmem:[%s266 + $0x150] sm:$0xff]
          %353 = vst [vmem:[%s267 + $0x150] sm:$0xff] %v352
          %v354 = vld [vmem:[%s266 + $0x158] sm:$0xff]
          %355 = vst [vmem:[%s267 + $0x158] sm:$0xff] %v354
          %v356 = vld [vmem:[%s266 + $0x160] sm:$0xff]
          %357 = vst [vmem:[%s267 + $0x160] sm:$0xff] %v356
          %v358 = vld [vmem:[%s266 + $0x168] sm:$0xff]
          %359 = vst [vmem:[%s267 + $0x168] sm:$0xff] %v358
          %v360 = vld [vmem:[%s266 + $0x170] sm:$0xff]
          %361 = vst [vmem:[%s267 + $0x170] sm:$0xff] %v360
          %v362 = vld [vmem:[%s266 + $0x178] sm:$0xff]
          %363 = vst [vmem:[%s267 + $0x178] sm:$0xff] %v362
          %v364 = vld [vmem:[%s266 + $0x180] sm:$0xff]
          %365 = vst [vmem:[%s267 + $0x180] sm:$0xff] %v364
          %v366 = vld [vmem:[%s266 + $0x188] sm:$0xff]
          %367 = vst [vmem:[%s267 + $0x188] sm:$0xff] %v366
          %v368 = vld [vmem:[%s266 + $0x190] sm:$0xff]
          %369 = vst [vmem:[%s267 + $0x190] sm:$0xff] %v368
          %v370 = vld [vmem:[%s266 + $0x198] sm:$0xff]
          %371 = vst [vmem:[%s267 + $0x198] sm:$0xff] %v370
          %v372 = vld [vmem:[%s266 + $0x1a0] sm:$0xff]
          %373 = vst [vmem:[%s267 + $0x1a0] sm:$0xff] %v372
          %v374 = vld [vmem:[%s266 + $0x1a8] sm:$0xff]
          %375 = vst [vmem:[%s267 + $0x1a8] sm:$0xff] %v374
          %v376 = vld [vmem:[%s266 + $0x1b0] sm:$0xff]
          %377 = vst [vmem:[%s267 + $0x1b0] sm:$0xff] %v376
          %v378 = vld [vmem:[%s266 + $0x1b8] sm:$0xff]
          %379 = vst [vmem:[%s267 + $0x1b8] sm:$0xff] %v378
          %v380 = vld [vmem:[%s266 + $0x1c0] sm:$0xff]
          %381 = vst [vmem:[%s267 + $0x1c0] sm:$0xff] %v380
          %v382 = vld [vmem:[%s266 + $0x1c8] sm:$0xff]
          %383 = vst [vmem:[%s267 + $0x1c8] sm:$0xff] %v382
          %v384 = vld [vmem:[%s266 + $0x1d0] sm:$0xff]
          %385 = vst [vmem:[%s267 + $0x1d0] sm:$0xff] %v384
          %v386 = vld [vmem:[%s266 + $0x1d8] sm:$0xff]
          %387 = vst [vmem:[%s267 + $0x1d8] sm:$0xff] %v386
          %v388 = vld [vmem:[%s266 + $0x1e0] sm:$0xff]
          %389 = vst [vmem:[%s267 + $0x1e0] sm:$0xff] %v388
          %v390 = vld [vmem:[%s266 + $0x1e8] sm:$0xff]
          %391 = vst [vmem:[%s267 + $0x1e8] sm:$0xff] %v390
          %v392 = vld [vmem:[%s266 + $0x1f0] sm:$0xff]
          %393 = vst [vmem:[%s267 + $0x1f0] sm:$0xff] %v392
          %v394 = vld [vmem:[%s266 + $0x1f8] sm:$0xff]
          %395 = vst [vmem:[%s267 + $0x1f8] sm:$0xff] %v394
          %v396 = vld [vmem:[%s266 + $0x200] sm:$0xff]
          %397 = vst [vmem:[%s267 + $0x200] sm:$0xff] %v396
          %v398 = vld [vmem:[%s266 + $0x208] sm:$0xff]
          %399 = vst [vmem:[%s267 + $0x208] sm:$0xff] %v398
          %v400 = vld [vmem:[%s266 + $0x210] sm:$0xff]
          %401 = vst [vmem:[%s267 + $0x210] sm:$0xff] %v400
          %v402 = vld [vmem:[%s266 + $0x218] sm:$0xff]
          %403 = vst [vmem:[%s267 + $0x218] sm:$0xff] %v402
          %v404 = vld [vmem:[%s266 + $0x220] sm:$0xff]
          %405 = vst [vmem:[%s267 + $0x220] sm:$0xff] %v404
          %v406 = vld [vmem:[%s266 + $0x228] sm:$0xff]
          %407 = vst [vmem:[%s267 + $0x228] sm:$0xff] %v406
          %v408 = vld [vmem:[%s266 + $0x230] sm:$0xff]
          %409 = vst [vmem:[%s267 + $0x230] sm:$0xff] %v408
          %v410 = vld [vmem:[%s266 + $0x238] sm:$0xff]
          %411 = vst [vmem:[%s267 + $0x238] sm:$0xff] %v410
          %v412 = vld [vmem:[%s266 + $0x240] sm:$0xff]
          %413 = vst [vmem:[%s267 + $0x240] sm:$0xff] %v412
          %v414 = vld [vmem:[%s266 + $0x248] sm:$0xff]
          %415 = vst [vmem:[%s267 + $0x248] sm:$0xff] %v414
          %v416 = vld [vmem:[%s266 + $0x250] sm:$0xff]
          %417 = vst [vmem:[%s267 + $0x250] sm:$0xff] %v416
          %v418 = vld [vmem:[%s266 + $0x258] sm:$0xff]
          %419 = vst [vmem:[%s267 + $0x258] sm:$0xff] %v418
          %v420 = vld [vmem:[%s266 + $0x260] sm:$0xff]
          %421 = vst [vmem:[%s267 + $0x260] sm:$0xff] %v420
          %v422 = vld [vmem:[%s266 + $0x268] sm:$0xff]
          %423 = vst [vmem:[%s267 + $0x268] sm:$0xff] %v422
          %v424 = vld [vmem:[%s266 + $0x270] sm:$0xff]
          %425 = vst [vmem:[%s267 + $0x270] sm:$0xff] %v424
          %v426 = vld [vmem:[%s266 + $0x278] sm:$0xff]
          %427 = vst [vmem:[%s267 + $0x278] sm:$0xff] %v426
          %v428 = vld [vmem:[%s266 + $0x280] sm:$0xff]
          %429 = vst [vmem:[%s267 + $0x280] sm:$0xff] %v428
          %v430 = vld [vmem:[%s266 + $0x288] sm:$0xff]
          %431 = vst [vmem:[%s267 + $0x288] sm:$0xff] %v430
          %v432 = vld [vmem:[%s266 + $0x290] sm:$0xff]
          %433 = vst [vmem:[%s267 + $0x290] sm:$0xff] %v432
          %v434 = vld [vmem:[%s266 + $0x298] sm:$0xff]
          %435 = vst [vmem:[%s267 + $0x298] sm:$0xff] %v434
          %v436 = vld [vmem:[%s266 + $0x2a0] sm:$0xff]
          %437 = vst [vmem:[%s267 + $0x2a0] sm:$0xff] %v436
          %v438 = vld [vmem:[%s266 + $0x2a8] sm:$0xff]
          %439 = vst [vmem:[%s267 + $0x2a8] sm:$0xff] %v438
          %v440 = vld [vmem:[%s266 + $0x2b0] sm:$0xff]
          %441 = vst [vmem:[%s267 + $0x2b0] sm:$0xff] %v440
          %v442 = vld [vmem:[%s266 + $0x2b8] sm:$0xff]
          %443 = vst [vmem:[%s267 + $0x2b8] sm:$0xff] %v442
          %v444 = vld [vmem:[%s266 + $0x2c0] sm:$0xff]
          %445 = vst [vmem:[%s267 + $0x2c0] sm:$0xff] %v444
          %v446 = vld [vmem:[%s266 + $0x2c8] sm:$0xff]
          %447 = vst [vmem:[%s267 + $0x2c8] sm:$0xff] %v446
          %v448 = vld [vmem:[%s266 + $0x2d0] sm:$0xff]
          %449 = vst [vmem:[%s267 + $0x2d0] sm:$0xff] %v448
          %v450 = vld [vmem:[%s266 + $0x2d8] sm:$0xff]
          %451 = vst [vmem:[%s267 + $0x2d8] sm:$0xff] %v450
          %v452 = vld [vmem:[%s266 + $0x2e0] sm:$0xff]
          %453 = vst [vmem:[%s267 + $0x2e0] sm:$0xff] %v452
          %v454 = vld [vmem:[%s266 + $0x2e8] sm:$0xff]
          %455 = vst [vmem:[%s267 + $0x2e8] sm:$0xff] %v454
          %v456 = vld [vmem:[%s266 + $0x2f0] sm:$0xff]
          %457 = vst [vmem:[%s267 + $0x2f0] sm:$0xff] %v456
          %v458 = vld [vmem:[%s266 + $0x2f8] sm:$0xff]
          %459 = vst [vmem:[%s267 + $0x2f8] sm:$0xff] %v458
          %v460 = vld [vmem:[%s266 + $0x300] sm:$0xff]
          %461 = vst [vmem:[%s267 + $0x300] sm:$0xff] %v460
          %v462 = vld [vmem:[%s266 + $0x308] sm:$0xff]
          %463 = vst [vmem:[%s267 + $0x308] sm:$0xff] %v462
          %v464 = vld [vmem:[%s266 + $0x310] sm:$0xff]
          %465 = vst [vmem:[%s267 + $0x310] sm:$0xff] %v464
          %v466 = vld [vmem:[%s266 + $0x318] sm:$0xff]
          %467 = vst [vmem:[%s267 + $0x318] sm:$0xff] %v466
          %v468 = vld [vmem:[%s266 + $0x320] sm:$0xff]
          %469 = vst [vmem:[%s267 + $0x320] sm:$0xff] %v468
          %v470 = vld [vmem:[%s266 + $0x328] sm:$0xff]
          %471 = vst [vmem:[%s267 + $0x328] sm:$0xff] %v470
          %v472 = vld [vmem:[%s266 + $0x330] sm:$0xff]
          %473 = vst [vmem:[%s267 + $0x330] sm:$0xff] %v472
          %v474 = vld [vmem:[%s266 + $0x338] sm:$0xff]
          %475 = vst [vmem:[%s267 + $0x338] sm:$0xff] %v474
          %v476 = vld [vmem:[%s266 + $0x340] sm:$0xff]
          %477 = vst [vmem:[%s267 + $0x340] sm:$0xff] %v476
          %v478 = vld [vmem:[%s266 + $0x348] sm:$0xff]
          %479 = vst [vmem:[%s267 + $0x348] sm:$0xff] %v478
          %v480 = vld [vmem:[%s266 + $0x350] sm:$0xff]
          %481 = vst [vmem:[%s267 + $0x350] sm:$0xff] %v480
          %v482 = vld [vmem:[%s266 + $0x358] sm:$0xff]
          %483 = vst [vmem:[%s267 + $0x358] sm:$0xff] %v482
          %v484 = vld [vmem:[%s266 + $0x360] sm:$0xff]
          %485 = vst [vmem:[%s267 + $0x360] sm:$0xff] %v484
          %v486 = vld [vmem:[%s266 + $0x368] sm:$0xff]
          %487 = vst [vmem:[%s267 + $0x368] sm:$0xff] %v486
          %v488 = vld [vmem:[%s266 + $0x370] sm:$0xff]
          %489 = vst [vmem:[%s267 + $0x370] sm:$0xff] %v488
          %v490 = vld [vmem:[%s266 + $0x378] sm:$0xff]
          %491 = vst [vmem:[%s267 + $0x378] sm:$0xff] %v490
          %v492 = vld [vmem:[%s266 + $0x380] sm:$0xff]
          %493 = vst [vmem:[%s267 + $0x380] sm:$0xff] %v492
          %v494 = vld [vmem:[%s266 + $0x388] sm:$0xff]
          %495 = vst [vmem:[%s267 + $0x388] sm:$0xff] %v494
        $region83: #{actor_forward.1} parent=77 // loop_footer
          %s265 = sadd.s32 1, %s261
        $region84: #{actor_forward.1} parent=77 // loop_footer_branch
          %260 = sbr.rel target = $region80
        $region85: #{actor_forward.1} parent=77 // loop_exit
          _
      $region78: #{actor_forward.1} parent=62 // pred_fallthru
        _
      %p496 = pneg %p256
      // Predicated region
      $region86: #{actor_forward.1} parent=62 // pred_check
        _
      $region87: #{actor_forward.1} parent=62 // pred_check_branch
        %498 = sbr.rel (%p256) target = $region89
      $region88: #{actor_forward.1} parent=62 // pred_region
        %s499 = sand.u32 912, 7
      $region89: #{actor_forward.1} parent=62 // pred_fallthru
        _
    $region63: #{actor_forward.1} parent=1 // pred_fallthru
      _
    // Predicated region
    $region64: #{actor_forward.1} parent=1 // pred_check
      %p240 = pneg %p236
    $region65: #{actor_forward.1} parent=1 // pred_check_branch
      %242 = sbr.rel (%p240) target = $region67
    $region66: #{actor_forward.1} parent=1 // pred_region
      %s243 = sshll.u32 1, 912
      %s244 = ssub.s32 %s243, 1
      loop: start=0, step=1, limit=1
      $region68: #{actor_forward.1} parent=66 // loop_pre_header
        _
      $region69: #{actor_forward.1} parent=66 // loop_header
        %s246 = sphi 0, %s250
        %p247 = scmp.ge.s32.totalorder %s246, 1
        %s251 = sphi %s4, %s4
        %s252 = sphi [#allocation5], [#allocation5]
      $region70: #{actor_forward.1} parent=66 // loop_header_branch
        %249 = sbr.rel (%p247) target = $region74
      $region71: #{actor_forward.1} parent=66 // loop_body
        %v253 = vld [vmem:[%s251] sm:%s244]
        %254 = vst [vmem:[%s252] sm:%s244] %v253
      $region72: #{actor_forward.1} parent=66 // loop_footer
        %s250 = sadd.s32 1, %s246
      $region73: #{actor_forward.1} parent=66 // loop_footer_branch
        %245 = sbr.rel target = $region69
      $region74: #{actor_forward.1} parent=66 // loop_exit
        _
    $region67: #{actor_forward.1} parent=1 // pred_fallthru
      _
    // Predicated region
    $region90: #{actor_forward.1} parent=1 // pred_check
      _
    $region91: #{actor_forward.1} parent=1 // pred_check_branch
      %502 = sbr.rel (0) target = $region93
    $region92: #{actor_forward.1} parent=1 // pred_region
      %503 = vsyncadd %s234, 14592
    $region93: #{actor_forward.1} parent=1 // pred_fallthru
      _
    %v504 = vld [vmem:[#allocation7] sm:$0xff]
    %v505 = vld [vmem:[#allocation7 + $0x8] sm:$0xff]
    %v506 = vld [vmem:[#allocation7 + $0x10] sm:$0xff]
    %v507 = vld [vmem:[#allocation7 + $0x18] sm:$0xff]
    %v508 = vld [vmem:[#allocation7 + $0x20] sm:$0xff]
    %v509 = vld [vmem:[#allocation7 + $0x28] sm:$0xff]
    %v510 = vld [vmem:[#allocation7 + $0x30] sm:$0xff]
    %v511 = vld [vmem:[#allocation7 + $0x38] sm:$0xff]
    %v512 = vld [vmem:[#allocation7 + $0x40] sm:$0xff]
    %v513 = vld [vmem:[#allocation7 + $0x48] sm:$0xff]
    %v514 = vld [vmem:[#allocation7 + $0x50] sm:$0xff]
    %v515 = vld [vmem:[#allocation7 + $0x58] sm:$0xff]
    %v516 = vld [vmem:[#allocation7 + $0x60] sm:$0xff]
    %v517 = vld [vmem:[#allocation7 + $0x68] sm:$0xff]
    %v518 = vld [vmem:[#allocation7 + $0x70] sm:$0xff]
    %v519 = vld [vmem:[#allocation7 + $0x78] sm:$0xff]
    %v520 = vld [vmem:[#allocation7 + $0x80] sm:$0xff]
    %v521 = vld [vmem:[#allocation7 + $0x88] sm:$0xff]
    %v522 = vld [vmem:[#allocation7 + $0x90] sm:$0xff]
    %v523 = vld [vmem:[#allocation7 + $0x98] sm:$0xff]
    %v524 = vld [vmem:[#allocation7 + $0xa0] sm:$0xff]
    %v525 = vld [vmem:[#allocation7 + $0xa8] sm:$0xff]
    %v526 = vld [vmem:[#allocation7 + $0xb0] sm:$0xff]
    %v527 = vld [vmem:[#allocation7 + $0xb8] sm:$0xff]
    %v528 = vld [vmem:[#allocation7 + $0xc0] sm:$0xff]
    %v529 = vld [vmem:[#allocation7 + $0xc8] sm:$0xff]
    %v530 = vld [vmem:[#allocation7 + $0xd0] sm:$0xff]
    %v531 = vld [vmem:[#allocation7 + $0xd8] sm:$0xff]
    %v532 = vld [vmem:[#allocation7 + $0xe0] sm:$0xff]
    %v533 = vld [vmem:[#allocation7 + $0xe8] sm:$0xff]
    %v534 = vld [vmem:[#allocation7 + $0xf0] sm:$0xff]
    %v535 = vld [vmem:[#allocation7 + $0xf8] sm:$0xff]
    %s536 = smul.u32 8, 16
    %s537 = smul.u32 %s536, 4
    %s538 = sshll.u32 %s537, 4
    %539 = dma.done [#allocation6], %s538
    %v540 = vld [vmem:[#allocation2] sm:$0xff]
    %v541 = vld [vmem:[#allocation2 + $0x8] sm:$0xff]
    %v542 = vld [vmem:[#allocation2 + $0x10] sm:$0xff]
    %v543 = vld [vmem:[#allocation2 + $0x18] sm:$0xff]
    %v544 = vld [vmem:[#allocation2 + $0x20] sm:$0xff]
    %v545 = vld [vmem:[#allocation2 + $0x28] sm:$0xff]
    %v546 = vld [vmem:[#allocation2 + $0x30] sm:$0xff]
    %v547 = vld [vmem:[#allocation2 + $0x38] sm:$0xff]
    %v548 = vld [vmem:[#allocation2 + $0x40] sm:$0xff]
    %v549 = vld [vmem:[#allocation2 + $0x48] sm:$0xff]
    %v550 = vld [vmem:[#allocation2 + $0x50] sm:$0xff]
    %v551 = vld [vmem:[#allocation2 + $0x58] sm:$0xff]
    %v552 = vld [vmem:[#allocation2 + $0x60] sm:$0xff]
    %v553 = vld [vmem:[#allocation2 + $0x68] sm:$0xff]
    %v554 = vld [vmem:[#allocation2 + $0x70] sm:$0xff]
    %v555 = vld [vmem:[#allocation2 + $0x78] sm:$0xff]
    %v556 = vld [vmem:[#allocation2 + $0x80] sm:$0xff]
    %v557 = vld [vmem:[#allocation2 + $0x88] sm:$0xff]
    %v558 = vld [vmem:[#allocation2 + $0x90] sm:$0xff]
    %v559 = vld [vmem:[#allocation2 + $0x98] sm:$0xff]
    %v560 = vld [vmem:[#allocation2 + $0xa0] sm:$0xff]
    %v561 = vld [vmem:[#allocation2 + $0xa8] sm:$0xff]
    %v562 = vld [vmem:[#allocation2 + $0xb0] sm:$0xff]
    %v563 = vld [vmem:[#allocation2 + $0xb8] sm:$0xff]
    %v564 = vld [vmem:[#allocation2 + $0xc0] sm:$0xff]
    %v565 = vld [vmem:[#allocation2 + $0xc8] sm:$0xff]
    %v566 = vld [vmem:[#allocation2 + $0xd0] sm:$0xff]
    %v567 = vld [vmem:[#allocation2 + $0xd8] sm:$0xff]
    %v568 = vld [vmem:[#allocation2 + $0xe0] sm:$0xff]
    %v569 = vld [vmem:[#allocation2 + $0xe8] sm:$0xff]
    %v570 = vld [vmem:[#allocation2 + $0xf0] sm:$0xff]
    %v571 = vld [vmem:[#allocation2 + $0xf8] sm:$0xff]
    %v572 = vld [vmem:[#allocation2 + $0x100] sm:$0xff]
    %v573 = vld [vmem:[#allocation2 + $0x108] sm:$0xff]
    %v574 = vld [vmem:[#allocation2 + $0x110] sm:$0xff]
    %v575 = vld [vmem:[#allocation2 + $0x118] sm:$0xff]
    %v576 = vld [vmem:[#allocation2 + $0x120] sm:$0xff]
    %v577 = vld [vmem:[#allocation2 + $0x128] sm:$0xff]
    %v578 = vld [vmem:[#allocation2 + $0x130] sm:$0xff]
    %v579 = vld [vmem:[#allocation2 + $0x138] sm:$0xff]
    %v580 = vld [vmem:[#allocation2 + $0x140] sm:$0xff]
    %v581 = vld [vmem:[#allocation2 + $0x148] sm:$0xff]
    %v582 = vld [vmem:[#allocation2 + $0x150] sm:$0xff]
    %v583 = vld [vmem:[#allocation2 + $0x158] sm:$0xff]
    %v584 = vld [vmem:[#allocation2 + $0x160] sm:$0xff]
    %v585 = vld [vmem:[#allocation2 + $0x168] sm:$0xff]
    %v586 = vld [vmem:[#allocation2 + $0x170] sm:$0xff]
    %v587 = vld [vmem:[#allocation2 + $0x178] sm:$0xff]
    %v588 = vld [vmem:[#allocation2 + $0x180] sm:$0xff]
    %v589 = vld [vmem:[#allocation2 + $0x188] sm:$0xff]
    %v590 = vld [vmem:[#allocation2 + $0x190] sm:$0xff]
    %v591 = vld [vmem:[#allocation2 + $0x198] sm:$0xff]
    %v592 = vld [vmem:[#allocation2 + $0x1a0] sm:$0xff]
    %v593 = vld [vmem:[#allocation2 + $0x1a8] sm:$0xff]
    %v594 = vld [vmem:[#allocation2 + $0x1b0] sm:$0xff]
    %v595 = vld [vmem:[#allocation2 + $0x1b8] sm:$0xff]
    %v596 = vld [vmem:[#allocation2 + $0x1c0] sm:$0xff]
    %v597 = vld [vmem:[#allocation2 + $0x1c8] sm:$0xff]
    %v598 = vld [vmem:[#allocation2 + $0x1d0] sm:$0xff]
    %v599 = vld [vmem:[#allocation2 + $0x1d8] sm:$0xff]
    %v600 = vld [vmem:[#allocation2 + $0x1e0] sm:$0xff]
    %v601 = vld [vmem:[#allocation2 + $0x1e8] sm:$0xff]
    %v602 = vld [vmem:[#allocation2 + $0x1f0] sm:$0xff]
    %v603 = vld [vmem:[#allocation2 + $0x1f8] sm:$0xff]
    %604 = vmatprep.subr.mxu0 %v601
    %605 = vmatpush1.msra.mxu0 %v600
    %606 = vmatprep.subr.mxu0 %v597
    %607 = vmatpush1.msra.mxu0 %v596
    %608 = vmatprep.subr.mxu0 %v593
    %609 = vmatpush1.msra.mxu0 %v592
    %610 = vmatprep.subr.mxu0 %v589
    %611 = vmatpush1.msra.mxu0 %v588
    %612 = vmatprep.subr.mxu0 %v585
    %613 = vmatpush1.msra.mxu0 %v584
    %614 = vmatprep.subr.mxu0 %v581
    %615 = vmatpush1.msra.mxu0 %v580
    %616 = vmatprep.subr.mxu0 %v577
    %617 = vmatpush1.msra.mxu0 %v576
    %618 = vmatprep.subr.mxu0 %v573
    %619 = vmatpush1.msra.mxu0 %v572
    %620 = vmatprep.subr.mxu0 %v569
    %621 = vmatpush1.msra.mxu0 %v568
    %622 = vmatprep.subr.mxu0 %v565
    %623 = vmatpush1.msra.mxu0 %v564
    %624 = vmatprep.subr.mxu0 %v561
    %625 = vmatpush1.msra.mxu0 %v560
    %626 = vmatprep.subr.mxu0 %v557
    %627 = vmatpush1.msra.mxu0 %v556
    %628 = vmatprep.subr.mxu0 %v553
    %629 = vmatpush1.msra.mxu0 %v552
    %630 = vmatprep.subr.mxu0 %v549
    %631 = vmatpush1.msra.mxu0 %v548
    %632 = vmatprep.subr.mxu0 %v545
    %633 = vmatpush1.msra.mxu0 %v544
    %634 = vmatprep.subr.mxu0 %v541
    %635 = vmatpush1.msra.mxu0 %v540
    %636 = vmatprep.subr.mxu0 0.0
    %637 = vmatpush2.msra.mxu0 0.0
    %638 = vmatprep.subr.mxu0 0.0
    %639 = vmatpush2.msra.mxu0 0.0
    %640 = vmatprep.subr.mxu0 0.0
    %641 = vmatpush2.msra.mxu0 0.0
    %642 = vmatprep.subr.mxu0 0.0
    %643 = vmatpush2.msra.mxu0 0.0
    %644 = vmatprep.subr.mxu0 0.0
    %645 = vmatpush2.msra.mxu0 0.0
    %646 = vmatprep.subr.mxu0 0.0
    %647 = vmatpush2.msra.mxu0 0.0
    %648 = vmatprep.subr.mxu0 0.0
    %649 = vmatpush2.msra.mxu0 0.0
    %650 = vmatprep.subr.mxu0 0.0
    %651 = vmatpush2.msra.mxu0 0.0
    %652 = vmatprep.subr.mxu0 0.0
    %653 = vmatpush2.msra.mxu0 0.0
    %654 = vmatprep.subr.mxu0 0.0
    %655 = vmatpush2.msra.mxu0 0.0
    %656 = vmatprep.subr.mxu0 0.0
    %657 = vmatpush2.msra.mxu0 0.0
    %658 = vmatprep.subr.mxu0 0.0
    %659 = vmatpush2.msra.mxu0 0.0
    %660 = vmatprep.subr.mxu0 0.0
    %661 = vmatpush2.msra.mxu0 0.0
    %662 = vmatprep.subr.mxu0 0.0
    %663 = vmatpush2.msra.mxu0 0.0
    %664 = vmatprep.subr.mxu0 0.0
    %665 = vmatpush2.msra.mxu0 0.0
    %666 = vmatprep.subr.mxu0 0.0
    %667 = vmatpush2.msra.mxu0 0.0
    %668 = vmatprep.mubr.f32.mxu0 0.0
    %669 = vmatmul.mubr.f32.gmra.mxu0 %v504
    %v670 = vpop.f32.mrf.mxu0
    %v671 = vadd.f32 0.0, %v670
    %v672 = vpop.f32.mrf.mxu0
    %v673 = vadd.f32 0.0, %v672
    %674 = vmatprep.mubr.f32.mxu0 0.0
    %675 = vmatmul.mubr.f32.gmra.mxu0 %v505
    %v676 = vpop.f32.mrf.mxu0
    %v677 = vadd.f32 0.0, %v676
    %v678 = vpop.f32.mrf.mxu0
    %v679 = vadd.f32 0.0, %v678
    %680 = vmatprep.mubr.f32.mxu0 0.0
    %681 = vmatmul.mubr.f32.gmra.mxu0 %v506
    %v682 = vpop.f32.mrf.mxu0
    %v683 = vadd.f32 0.0, %v682
    %v684 = vpop.f32.mrf.mxu0
    %v685 = vadd.f32 0.0, %v684
    %686 = vmatprep.mubr.f32.mxu0 0.0
    %687 = vmatmul.mubr.f32.gmra.mxu0 %v507
    %v688 = vpop.f32.mrf.mxu0
    %v689 = vadd.f32 0.0, %v688
    %v690 = vpop.f32.mrf.mxu0
    %v691 = vadd.f32 0.0, %v690
    %692 = vmatprep.mubr.f32.mxu0 0.0
    %693 = vmatmul.mubr.f32.gmra.mxu0 %v508
    %v694 = vpop.f32.mrf.mxu0
    %v695 = vadd.f32 0.0, %v694
    %v696 = vpop.f32.mrf.mxu0
    %v697 = vadd.f32 0.0, %v696
    %698 = vmatprep.mubr.f32.mxu0 0.0
    %699 = vmatmul.mubr.f32.gmra.mxu0 %v509
    %v700 = vpop.f32.mrf.mxu0
    %v701 = vadd.f32 0.0, %v700
    %v702 = vpop.f32.mrf.mxu0
    %v703 = vadd.f32 0.0, %v702
    %704 = vmatprep.mubr.f32.mxu0 0.0
    %705 = vmatmul.mubr.f32.gmra.mxu0 %v510
    %v706 = vpop.f32.mrf.mxu0
    %v707 = vadd.f32 0.0, %v706
    %v708 = vpop.f32.mrf.mxu0
    %v709 = vadd.f32 0.0, %v708
    %710 = vmatprep.mubr.f32.mxu0 0.0
    %711 = vmatmul.mubr.f32.gmra.mxu0 %v511
    %v712 = vpop.f32.mrf.mxu0
    %v713 = vadd.f32 0.0, %v712
    %v714 = vpop.f32.mrf.mxu0
    %v715 = vadd.f32 0.0, %v714
    %716 = vmatprep.mubr.f32.mxu0 0.0
    %717 = vmatmul.mubr.f32.gmra.mxu0 %v512
    %v718 = vpop.f32.mrf.mxu0
    %v719 = vadd.f32 0.0, %v718
    %v720 = vpop.f32.mrf.mxu0
    %v721 = vadd.f32 0.0, %v720
    %722 = vmatprep.mubr.f32.mxu0 0.0
    %723 = vmatmul.mubr.f32.gmra.mxu0 %v513
    %v724 = vpop.f32.mrf.mxu0
    %v725 = vadd.f32 0.0, %v724
    %v726 = vpop.f32.mrf.mxu0
    %v727 = vadd.f32 0.0, %v726
    %728 = vmatprep.mubr.f32.mxu0 0.0
    %729 = vmatmul.mubr.f32.gmra.mxu0 %v514
    %v730 = vpop.f32.mrf.mxu0
    %v731 = vadd.f32 0.0, %v730
    %v732 = vpop.f32.mrf.mxu0
    %v733 = vadd.f32 0.0, %v732
    %734 = vmatprep.mubr.f32.mxu0 0.0
    %735 = vmatmul.mubr.f32.gmra.mxu0 %v515
    %v736 = vpop.f32.mrf.mxu0
    %v737 = vadd.f32 0.0, %v736
    %v738 = vpop.f32.mrf.mxu0
    %v739 = vadd.f32 0.0, %v738
    %740 = vmatprep.mubr.f32.mxu0 0.0
    %741 = vmatmul.mubr.f32.gmra.mxu0 %v516
    %v742 = vpop.f32.mrf.mxu0
    %v743 = vadd.f32 0.0, %v742
    %v744 = vpop.f32.mrf.mxu0
    %v745 = vadd.f32 0.0, %v744
    %746 = vmatprep.mubr.f32.mxu0 0.0
    %747 = vmatmul.mubr.f32.gmra.mxu0 %v517
    %v748 = vpop.f32.mrf.mxu0
    %v749 = vadd.f32 0.0, %v748
    %v750 = vpop.f32.mrf.mxu0
    %v751 = vadd.f32 0.0, %v750
    %752 = vmatprep.mubr.f32.mxu0 0.0
    %753 = vmatmul.mubr.f32.gmra.mxu0 %v518
    %v754 = vpop.f32.mrf.mxu0
    %v755 = vadd.f32 0.0, %v754
    %v756 = vpop.f32.mrf.mxu0
    %v757 = vadd.f32 0.0, %v756
    %758 = vmatprep.mubr.f32.mxu0 0.0
    %759 = vmatmul.mubr.f32.gmra.mxu0 %v519
    %v760 = vpop.f32.mrf.mxu0
    %v761 = vadd.f32 0.0, %v760
    %v762 = vpop.f32.mrf.mxu0
    %v763 = vadd.f32 0.0, %v762
    %764 = vmatprep.mubr.f32.mxu0 0.0
    %765 = vmatmul.mubr.f32.gmra.mxu0 %v520
    %v766 = vpop.f32.mrf.mxu0
    %v767 = vadd.f32 0.0, %v766
    %v768 = vpop.f32.mrf.mxu0
    %v769 = vadd.f32 0.0, %v768
    %770 = vmatprep.mubr.f32.mxu0 0.0
    %771 = vmatmul.mubr.f32.gmra.mxu0 %v521
    %v772 = vpop.f32.mrf.mxu0
    %v773 = vadd.f32 0.0, %v772
    %v774 = vpop.f32.mrf.mxu0
    %v775 = vadd.f32 0.0, %v774
    %776 = vmatprep.mubr.f32.mxu0 0.0
    %777 = vmatmul.mubr.f32.gmra.mxu0 %v522
    %v778 = vpop.f32.mrf.mxu0
    %v779 = vadd.f32 0.0, %v778
    %v780 = vpop.f32.mrf.mxu0
    %v781 = vadd.f32 0.0, %v780
    %782 = vmatprep.mubr.f32.mxu0 0.0
    %783 = vmatmul.mubr.f32.gmra.mxu0 %v523
    %v784 = vpop.f32.mrf.mxu0
    %v785 = vadd.f32 0.0, %v784
    %v786 = vpop.f32.mrf.mxu0
    %v787 = vadd.f32 0.0, %v786
    %788 = vmatprep.mubr.f32.mxu0 0.0
    %789 = vmatmul.mubr.f32.gmra.mxu0 %v524
    %v790 = vpop.f32.mrf.mxu0
    %v791 = vadd.f32 0.0, %v790
    %v792 = vpop.f32.mrf.mxu0
    %v793 = vadd.f32 0.0, %v792
    %794 = vmatprep.mubr.f32.mxu0 0.0
    %795 = vmatmul.mubr.f32.gmra.mxu0 %v525
    %v796 = vpop.f32.mrf.mxu0
    %v797 = vadd.f32 0.0, %v796
    %v798 = vpop.f32.mrf.mxu0
    %v799 = vadd.f32 0.0, %v798
    %800 = vmatprep.mubr.f32.mxu0 0.0
    %801 = vmatmul.mubr.f32.gmra.mxu0 %v526
    %v802 = vpop.f32.mrf.mxu0
    %v803 = vadd.f32 0.0, %v802
    %v804 = vpop.f32.mrf.mxu0
    %v805 = vadd.f32 0.0, %v804
    %806 = vmatprep.mubr.f32.mxu0 0.0
    %807 = vmatmul.mubr.f32.gmra.mxu0 %v527
    %v808 = vpop.f32.mrf.mxu0
    %v809 = vadd.f32 0.0, %v808
    %v810 = vpop.f32.mrf.mxu0
    %v811 = vadd.f32 0.0, %v810
    %812 = vmatprep.mubr.f32.mxu0 0.0
    %813 = vmatmul.mubr.f32.gmra.mxu0 %v528
    %v814 = vpop.f32.mrf.mxu0
    %v815 = vadd.f32 0.0, %v814
    %v816 = vpop.f32.mrf.mxu0
    %v817 = vadd.f32 0.0, %v816
    %818 = vmatprep.mubr.f32.mxu0 0.0
    %819 = vmatmul.mubr.f32.gmra.mxu0 %v529
    %v820 = vpop.f32.mrf.mxu0
    %v821 = vadd.f32 0.0, %v820
    %v822 = vpop.f32.mrf.mxu0
    %v823 = vadd.f32 0.0, %v822
    %824 = vmatprep.mubr.f32.mxu0 0.0
    %825 = vmatmul.mubr.f32.gmra.mxu0 %v530
    %v826 = vpop.f32.mrf.mxu0
    %v827 = vadd.f32 0.0, %v826
    %v828 = vpop.f32.mrf.mxu0
    %v829 = vadd.f32 0.0, %v828
    %830 = vmatprep.mubr.f32.mxu0 0.0
    %831 = vmatmul.mubr.f32.gmra.mxu0 %v531
    %v832 = vpop.f32.mrf.mxu0
    %v833 = vadd.f32 0.0, %v832
    %v834 = vpop.f32.mrf.mxu0
    %v835 = vadd.f32 0.0, %v834
    %836 = vmatprep.mubr.f32.mxu0 0.0
    %837 = vmatmul.mubr.f32.gmra.mxu0 %v532
    %v838 = vpop.f32.mrf.mxu0
    %v839 = vadd.f32 0.0, %v838
    %v840 = vpop.f32.mrf.mxu0
    %v841 = vadd.f32 0.0, %v840
    %842 = vmatprep.mubr.f32.mxu0 0.0
    %843 = vmatmul.mubr.f32.gmra.mxu0 %v533
    %v844 = vpop.f32.mrf.mxu0
    %v845 = vadd.f32 0.0, %v844
    %v846 = vpop.f32.mrf.mxu0
    %v847 = vadd.f32 0.0, %v846
    %848 = vmatprep.mubr.f32.mxu0 0.0
    %849 = vmatmul.mubr.f32.gmra.mxu0 %v534
    %v850 = vpop.f32.mrf.mxu0
    %v851 = vadd.f32 0.0, %v850
    %v852 = vpop.f32.mrf.mxu0
    %v853 = vadd.f32 0.0, %v852
    %854 = vmatprep.mubr.f32.mxu0 0.0
    %855 = vmatmul.mubr.f32.gmra.mxu0 %v535
    %v856 = vpop.f32.mrf.mxu0
    %v857 = vadd.f32 0.0, %v856
    %v858 = vpop.f32.mrf.mxu0
    %v859 = vadd.f32 0.0, %v858
    %860 = vdwg.mxu0
    %861 = vmatprep.subr.mxu0 %v603
    %862 = vmatpush1.msra.mxu0 %v602
    %863 = vmatprep.subr.mxu0 %v599
    %864 = vmatpush1.msra.mxu0 %v598
    %865 = vmatprep.subr.mxu0 %v595
    %866 = vmatpush1.msra.mxu0 %v594
    %867 = vmatprep.subr.mxu0 %v591
    %868 = vmatpush1.msra.mxu0 %v590
    %869 = vmatprep.subr.mxu0 %v587
    %870 = vmatpush1.msra.mxu0 %v586
    %871 = vmatprep.subr.mxu0 %v583
    %872 = vmatpush1.msra.mxu0 %v582
    %873 = vmatprep.subr.mxu0 %v579
    %874 = vmatpush1.msra.mxu0 %v578
    %875 = vmatprep.subr.mxu0 %v575
    %876 = vmatpush1.msra.mxu0 %v574
    %877 = vmatprep.subr.mxu0 %v571
    %878 = vmatpush1.msra.mxu0 %v570
    %879 = vmatprep.subr.mxu0 %v567
    %880 = vmatpush1.msra.mxu0 %v566
    %881 = vmatprep.subr.mxu0 %v563
    %882 = vmatpush1.msra.mxu0 %v562
    %883 = vmatprep.subr.mxu0 %v559
    %884 = vmatpush1.msra.mxu0 %v558
    %885 = vmatprep.subr.mxu0 %v555
    %886 = vmatpush1.msra.mxu0 %v554
    %887 = vmatprep.subr.mxu0 %v551
    %888 = vmatpush1.msra.mxu0 %v550
    %889 = vmatprep.subr.mxu0 %v547
    %890 = vmatpush1.msra.mxu0 %v546
    %891 = vmatprep.subr.mxu0 %v543
    %892 = vmatpush1.msra.mxu0 %v542
    %893 = vmatprep.subr.mxu0 0.0
    %894 = vmatpush2.msra.mxu0 0.0
    %895 = vmatprep.subr.mxu0 0.0
    %896 = vmatpush2.msra.mxu0 0.0
    %897 = vmatprep.subr.mxu0 0.0
    %898 = vmatpush2.msra.mxu0 0.0
    %899 = vmatprep.subr.mxu0 0.0
    %900 = vmatpush2.msra.mxu0 0.0
    %901 = vmatprep.subr.mxu0 0.0
    %902 = vmatpush2.msra.mxu0 0.0
    %903 = vmatprep.subr.mxu0 0.0
    %904 = vmatpush2.msra.mxu0 0.0
    %905 = vmatprep.subr.mxu0 0.0
    %906 = vmatpush2.msra.mxu0 0.0
    %907 = vmatprep.subr.mxu0 0.0
    %908 = vmatpush2.msra.mxu0 0.0
    %909 = vmatprep.subr.mxu0 0.0
    %910 = vmatpush2.msra.mxu0 0.0
    %911 = vmatprep.subr.mxu0 0.0
    %912 = vmatpush2.msra.mxu0 0.0
    %913 = vmatprep.subr.mxu0 0.0
    %914 = vmatpush2.msra.mxu0 0.0
    %915 = vmatprep.subr.mxu0 0.0
    %916 = vmatpush2.msra.mxu0 0.0
    %917 = vmatprep.subr.mxu0 0.0
    %918 = vmatpush2.msra.mxu0 0.0
    %919 = vmatprep.subr.mxu0 0.0
    %920 = vmatpush2.msra.mxu0 0.0
    %921 = vmatprep.subr.mxu0 0.0
    %922 = vmatpush2.msra.mxu0 0.0
    %923 = vmatprep.subr.mxu0 0.0
    %924 = vmatpush2.msra.mxu0 0.0
    %925 = vmatprep.mubr.f32.mxu0 0.0
    %926 = vmatmul.mubr.f32.gmra.mxu0 %v504
    %v927 = vpop.f32.mrf.mxu0
    %v928 = vadd.f32 0.0, %v927
    %v929 = vpop.f32.mrf.mxu0
    %v930 = vadd.f32 0.0, %v929
    %931 = vmatprep.mubr.f32.mxu0 0.0
    %932 = vmatmul.mubr.f32.gmra.mxu0 %v505
    %v933 = vpop.f32.mrf.mxu0
    %v934 = vadd.f32 0.0, %v933
    %v935 = vpop.f32.mrf.mxu0
    %v936 = vadd.f32 0.0, %v935
    %937 = vmatprep.mubr.f32.mxu0 0.0
    %938 = vmatmul.mubr.f32.gmra.mxu0 %v506
    %v939 = vpop.f32.mrf.mxu0
    %v940 = vadd.f32 0.0, %v939
    %v941 = vpop.f32.mrf.mxu0
    %v942 = vadd.f32 0.0, %v941
    %943 = vmatprep.mubr.f32.mxu0 0.0
    %944 = vmatmul.mubr.f32.gmra.mxu0 %v507
    %v945 = vpop.f32.mrf.mxu0
    %v946 = vadd.f32 0.0, %v945
    %v947 = vpop.f32.mrf.mxu0
    %v948 = vadd.f32 0.0, %v947
    %949 = vmatprep.mubr.f32.mxu0 0.0
    %950 = vmatmul.mubr.f32.gmra.mxu0 %v508
    %v951 = vpop.f32.mrf.mxu0
    %v952 = vadd.f32 0.0, %v951
    %v953 = vpop.f32.mrf.mxu0
    %v954 = vadd.f32 0.0, %v953
    %955 = vmatprep.mubr.f32.mxu0 0.0
    %956 = vmatmul.mubr.f32.gmra.mxu0 %v509
    %v957 = vpop.f32.mrf.mxu0
    %v958 = vadd.f32 0.0, %v957
    %v959 = vpop.f32.mrf.mxu0
    %v960 = vadd.f32 0.0, %v959
    %961 = vmatprep.mubr.f32.mxu0 0.0
    %962 = vmatmul.mubr.f32.gmra.mxu0 %v510
    %v963 = vpop.f32.mrf.mxu0
    %v964 = vadd.f32 0.0, %v963
    %v965 = vpop.f32.mrf.mxu0
    %v966 = vadd.f32 0.0, %v965
    %967 = vmatprep.mubr.f32.mxu0 0.0
    %968 = vmatmul.mubr.f32.gmra.mxu0 %v511
    %v969 = vpop.f32.mrf.mxu0
    %v970 = vadd.f32 0.0, %v969
    %v971 = vpop.f32.mrf.mxu0
    %v972 = vadd.f32 0.0, %v971
    %973 = vmatprep.mubr.f32.mxu0 0.0
    %974 = vmatmul.mubr.f32.gmra.mxu0 %v512
    %v975 = vpop.f32.mrf.mxu0
    %v976 = vadd.f32 0.0, %v975
    %v977 = vpop.f32.mrf.mxu0
    %v978 = vadd.f32 0.0, %v977
    %979 = vmatprep.mubr.f32.mxu0 0.0
    %980 = vmatmul.mubr.f32.gmra.mxu0 %v513
    %v981 = vpop.f32.mrf.mxu0
    %v982 = vadd.f32 0.0, %v981
    %v983 = vpop.f32.mrf.mxu0
    %v984 = vadd.f32 0.0, %v983
    %985 = vmatprep.mubr.f32.mxu0 0.0
    %986 = vmatmul.mubr.f32.gmra.mxu0 %v514
    %v987 = vpop.f32.mrf.mxu0
    %v988 = vadd.f32 0.0, %v987
    %v989 = vpop.f32.mrf.mxu0
    %v990 = vadd.f32 0.0, %v989
    %991 = vmatprep.mubr.f32.mxu0 0.0
    %992 = vmatmul.mubr.f32.gmra.mxu0 %v515
    %v993 = vpop.f32.mrf.mxu0
    %v994 = vadd.f32 0.0, %v993
    %v995 = vpop.f32.mrf.mxu0
    %v996 = vadd.f32 0.0, %v995
    %997 = vmatprep.mubr.f32.mxu0 0.0
    %998 = vmatmul.mubr.f32.gmra.mxu0 %v516
    %v999 = vpop.f32.mrf.mxu0
    %v1000 = vadd.f32 0.0, %v999
    %v1001 = vpop.f32.mrf.mxu0
    %v1002 = vadd.f32 0.0, %v1001
    %1003 = vmatprep.mubr.f32.mxu0 0.0
    %1004 = vmatmul.mubr.f32.gmra.mxu0 %v517
    %v1005 = vpop.f32.mrf.mxu0
    %v1006 = vadd.f32 0.0, %v1005
    %v1007 = vpop.f32.mrf.mxu0
    %v1008 = vadd.f32 0.0, %v1007
    %1009 = vmatprep.mubr.f32.mxu0 0.0
    %1010 = vmatmul.mubr.f32.gmra.mxu0 %v518
    %v1011 = vpop.f32.mrf.mxu0
    %v1012 = vadd.f32 0.0, %v1011
    %v1013 = vpop.f32.mrf.mxu0
    %v1014 = vadd.f32 0.0, %v1013
    %1015 = vmatprep.mubr.f32.mxu0 0.0
    %1016 = vmatmul.mubr.f32.gmra.mxu0 %v519
    %v1017 = vpop.f32.mrf.mxu0
    %v1018 = vadd.f32 0.0, %v1017
    %v1019 = vpop.f32.mrf.mxu0
    %v1020 = vadd.f32 0.0, %v1019
    %1021 = vmatprep.mubr.f32.mxu0 0.0
    %1022 = vmatmul.mubr.f32.gmra.mxu0 %v520
    %v1023 = vpop.f32.mrf.mxu0
    %v1024 = vadd.f32 0.0, %v1023
    %v1025 = vpop.f32.mrf.mxu0
    %v1026 = vadd.f32 0.0, %v1025
    %1027 = vmatprep.mubr.f32.mxu0 0.0
    %1028 = vmatmul.mubr.f32.gmra.mxu0 %v521
    %v1029 = vpop.f32.mrf.mxu0
    %v1030 = vadd.f32 0.0, %v1029
    %v1031 = vpop.f32.mrf.mxu0
    %v1032 = vadd.f32 0.0, %v1031
    %1033 = vmatprep.mubr.f32.mxu0 0.0
    %1034 = vmatmul.mubr.f32.gmra.mxu0 %v522
    %v1035 = vpop.f32.mrf.mxu0
    %v1036 = vadd.f32 0.0, %v1035
    %v1037 = vpop.f32.mrf.mxu0
    %v1038 = vadd.f32 0.0, %v1037
    %1039 = vmatprep.mubr.f32.mxu0 0.0
    %1040 = vmatmul.mubr.f32.gmra.mxu0 %v523
    %v1041 = vpop.f32.mrf.mxu0
    %v1042 = vadd.f32 0.0, %v1041
    %v1043 = vpop.f32.mrf.mxu0
    %v1044 = vadd.f32 0.0, %v1043
    %1045 = vmatprep.mubr.f32.mxu0 0.0
    %1046 = vmatmul.mubr.f32.gmra.mxu0 %v524
    %v1047 = vpop.f32.mrf.mxu0
    %v1048 = vadd.f32 0.0, %v1047
    %v1049 = vpop.f32.mrf.mxu0
    %v1050 = vadd.f32 0.0, %v1049
    %1051 = vmatprep.mubr.f32.mxu0 0.0
    %1052 = vmatmul.mubr.f32.gmra.mxu0 %v525
    %v1053 = vpop.f32.mrf.mxu0
    %v1054 = vadd.f32 0.0, %v1053
    %v1055 = vpop.f32.mrf.mxu0
    %v1056 = vadd.f32 0.0, %v1055
    %1057 = vmatprep.mubr.f32.mxu0 0.0
    %1058 = vmatmul.mubr.f32.gmra.mxu0 %v526
    %v1059 = vpop.f32.mrf.mxu0
    %v1060 = vadd.f32 0.0, %v1059
    %v1061 = vpop.f32.mrf.mxu0
    %v1062 = vadd.f32 0.0, %v1061
    %1063 = vmatprep.mubr.f32.mxu0 0.0
    %1064 = vmatmul.mubr.f32.gmra.mxu0 %v527
    %v1065 = vpop.f32.mrf.mxu0
    %v1066 = vadd.f32 0.0, %v1065
    %v1067 = vpop.f32.mrf.mxu0
    %v1068 = vadd.f32 0.0, %v1067
    %1069 = vmatprep.mubr.f32.mxu0 0.0
    %1070 = vmatmul.mubr.f32.gmra.mxu0 %v528
    %v1071 = vpop.f32.mrf.mxu0
    %v1072 = vadd.f32 0.0, %v1071
    %v1073 = vpop.f32.mrf.mxu0
    %v1074 = vadd.f32 0.0, %v1073
    %1075 = vmatprep.mubr.f32.mxu0 0.0
    %1076 = vmatmul.mubr.f32.gmra.mxu0 %v529
    %v1077 = vpop.f32.mrf.mxu0
    %v1078 = vadd.f32 0.0, %v1077
    %v1079 = vpop.f32.mrf.mxu0
    %v1080 = vadd.f32 0.0, %v1079
    %1081 = vmatprep.mubr.f32.mxu0 0.0
    %1082 = vmatmul.mubr.f32.gmra.mxu0 %v530
    %v1083 = vpop.f32.mrf.mxu0
    %v1084 = vadd.f32 0.0, %v1083
    %v1085 = vpop.f32.mrf.mxu0
    %v1086 = vadd.f32 0.0, %v1085
    %1087 = vmatprep.mubr.f32.mxu0 0.0
    %1088 = vmatmul.mubr.f32.gmra.mxu0 %v531
    %v1089 = vpop.f32.mrf.mxu0
    %v1090 = vadd.f32 0.0, %v1089
    %v1091 = vpop.f32.mrf.mxu0
    %v1092 = vadd.f32 0.0, %v1091
    %1093 = vmatprep.mubr.f32.mxu0 0.0
    %1094 = vmatmul.mubr.f32.gmra.mxu0 %v532
    %v1095 = vpop.f32.mrf.mxu0
    %v1096 = vadd.f32 0.0, %v1095
    %v1097 = vpop.f32.mrf.mxu0
    %v1098 = vadd.f32 0.0, %v1097
    %1099 = vmatprep.mubr.f32.mxu0 0.0
    %1100 = vmatmul.mubr.f32.gmra.mxu0 %v533
    %v1101 = vpop.f32.mrf.mxu0
    %v1102 = vadd.f32 0.0, %v1101
    %v1103 = vpop.f32.mrf.mxu0
    %v1104 = vadd.f32 0.0, %v1103
    %1105 = vmatprep.mubr.f32.mxu0 0.0
    %1106 = vmatmul.mubr.f32.gmra.mxu0 %v534
    %v1107 = vpop.f32.mrf.mxu0
    %v1108 = vadd.f32 0.0, %v1107
    %v1109 = vpop.f32.mrf.mxu0
    %v1110 = vadd.f32 0.0, %v1109
    %1111 = vmatprep.mubr.f32.mxu0 0.0
    %1112 = vmatmul.mubr.f32.gmra.mxu0 %v535
    %v1113 = vpop.f32.mrf.mxu0
    %v1114 = vadd.f32 0.0, %v1113
    %v1115 = vpop.f32.mrf.mxu0
    %v1116 = vadd.f32 0.0, %v1115
    %1117 = vdwg.mxu0
    %v1118 = vadd.f32 %v671, %v677
    %v1119 = vadd.f32 %v1118, %v683
    %v1120 = vadd.f32 %v1119, %v689
    %v1121 = vadd.f32 %v1120, %v695
    %v1122 = vadd.f32 %v1121, %v701
    %v1123 = vadd.f32 %v1122, %v707
    %v1124 = vadd.f32 %v1123, %v713
    %v1125 = vadd.f32 %v1124, %v719
    %v1126 = vadd.f32 %v1125, %v725
    %v1127 = vadd.f32 %v1126, %v731
    %v1128 = vadd.f32 %v1127, %v737
    %v1129 = vadd.f32 %v1128, %v743
    %v1130 = vadd.f32 %v1129, %v749
    %v1131 = vadd.f32 %v1130, %v755
    %v1132 = vadd.f32 %v1131, %v761
    %v1133 = vadd.f32 %v1132, %v767
    %v1134 = vadd.f32 %v1133, %v773
    %v1135 = vadd.f32 %v1134, %v779
    %v1136 = vadd.f32 %v1135, %v785
    %v1137 = vadd.f32 %v1136, %v791
    %v1138 = vadd.f32 %v1137, %v797
    %v1139 = vadd.f32 %v1138, %v803
    %v1140 = vadd.f32 %v1139, %v809
    %v1141 = vadd.f32 %v1140, %v815
    %v1142 = vadd.f32 %v1141, %v821
    %v1143 = vadd.f32 %v1142, %v827
    %v1144 = vadd.f32 %v1143, %v833
    %v1145 = vadd.f32 %v1144, %v839
    %v1146 = vadd.f32 %v1145, %v845
    %v1147 = vadd.f32 %v1146, %v851
    %v1148 = vadd.f32 %v1147, %v857
    %v1149 = vrot.slane %v1148, 4
    %v1150 = vadd.f32 %v1148, %v1149
    %v1151 = vrot.slane %v1150, 2
    %v1152 = vadd.f32 %v1150, %v1151
    %v1153 = vrot.slane %v1152, 1
    %v1154 = vadd.f32 %v1152, %v1153
    %v1155 = vadd.f32 %v673, %v679
    %v1156 = vadd.f32 %v1155, %v685
    %v1157 = vadd.f32 %v1156, %v691
    %v1158 = vadd.f32 %v1157, %v697
    %v1159 = vadd.f32 %v1158, %v703
    %v1160 = vadd.f32 %v1159, %v709
    %v1161 = vadd.f32 %v1160, %v715
    %v1162 = vadd.f32 %v1161, %v721
    %v1163 = vadd.f32 %v1162, %v727
    %v1164 = vadd.f32 %v1163, %v733
    %v1165 = vadd.f32 %v1164, %v739
    %v1166 = vadd.f32 %v1165, %v745
    %v1167 = vadd.f32 %v1166, %v751
    %v1168 = vadd.f32 %v1167, %v757
    %v1169 = vadd.f32 %v1168, %v763
    %v1170 = vadd.f32 %v1169, %v769
    %v1171 = vadd.f32 %v1170, %v775
    %v1172 = vadd.f32 %v1171, %v781
    %v1173 = vadd.f32 %v1172, %v787
    %v1174 = vadd.f32 %v1173, %v793
    %v1175 = vadd.f32 %v1174, %v799
    %v1176 = vadd.f32 %v1175, %v805
    %v1177 = vadd.f32 %v1176, %v811
    %v1178 = vadd.f32 %v1177, %v817
    %v1179 = vadd.f32 %v1178, %v823
    %v1180 = vadd.f32 %v1179, %v829
    %v1181 = vadd.f32 %v1180, %v835
    %v1182 = vadd.f32 %v1181, %v841
    %v1183 = vadd.f32 %v1182, %v847
    %v1184 = vadd.f32 %v1183, %v853
    %v1185 = vadd.f32 %v1184, %v859
    %v1186 = vrot.slane %v1185, 4
    %v1187 = vadd.f32 %v1185, %v1186
    %v1188 = vrot.slane %v1187, 2
    %v1189 = vadd.f32 %v1187, %v1188
    %v1190 = vrot.slane %v1189, 1
    %v1191 = vadd.f32 %v1189, %v1190
    %v1192 = vadd.f32 %v928, %v934
    %v1193 = vadd.f32 %v1192, %v940
    %v1194 = vadd.f32 %v1193, %v946
    %v1195 = vadd.f32 %v1194, %v952
    %v1196 = vadd.f32 %v1195, %v958
    %v1197 = vadd.f32 %v1196, %v964
    %v1198 = vadd.f32 %v1197, %v970
    %v1199 = vadd.f32 %v1198, %v976
    %v1200 = vadd.f32 %v1199, %v982
    %v1201 = vadd.f32 %v1200, %v988
    %v1202 = vadd.f32 %v1201, %v994
    %v1203 = vadd.f32 %v1202, %v1000
    %v1204 = vadd.f32 %v1203, %v1006
    %v1205 = vadd.f32 %v1204, %v1012
    %v1206 = vadd.f32 %v1205, %v1018
    %v1207 = vadd.f32 %v1206, %v1024
    %v1208 = vadd.f32 %v1207, %v1030
    %v1209 = vadd.f32 %v1208, %v1036
    %v1210 = vadd.f32 %v1209, %v1042
    %v1211 = vadd.f32 %v1210, %v1048
    %v1212 = vadd.f32 %v1211, %v1054
    %v1213 = vadd.f32 %v1212, %v1060
    %v1214 = vadd.f32 %v1213, %v1066
    %v1215 = vadd.f32 %v1214, %v1072
    %v1216 = vadd.f32 %v1215, %v1078
    %v1217 = vadd.f32 %v1216, %v1084
    %v1218 = vadd.f32 %v1217, %v1090
    %v1219 = vadd.f32 %v1218, %v1096
    %v1220 = vadd.f32 %v1219, %v1102
    %v1221 = vadd.f32 %v1220, %v1108
    %v1222 = vadd.f32 %v1221, %v1114
    %v1223 = vrot.slane %v1222, 4
    %v1224 = vadd.f32 %v1222, %v1223
    %v1225 = vrot.slane %v1224, 2
    %v1226 = vadd.f32 %v1224, %v1225
    %v1227 = vrot.slane %v1226, 1
    %v1228 = vadd.f32 %v1226, %v1227
    %vm1229 = vcmask 130048
    %v1230 = vsel %vm1229, %v930, 0.0
    %v1231 = vsel %vm1229, %v936, 0.0
    %v1232 = vadd.f32 %v1230, %v1231
    %v1233 = vsel %vm1229, %v942, 0.0
    %v1234 = vadd.f32 %v1232, %v1233
    %v1235 = vsel %vm1229, %v948, 0.0
    %v1236 = vadd.f32 %v1234, %v1235
    %v1237 = vsel %vm1229, %v954, 0.0
    %v1238 = vadd.f32 %v1236, %v1237
    %v1239 = vsel %vm1229, %v960, 0.0
    %v1240 = vadd.f32 %v1238, %v1239
    %v1241 = vsel %vm1229, %v966, 0.0
    %v1242 = vadd.f32 %v1240, %v1241
    %v1243 = vsel %vm1229, %v972, 0.0
    %v1244 = vadd.f32 %v1242, %v1243
    %v1245 = vsel %vm1229, %v978, 0.0
    %v1246 = vadd.f32 %v1244, %v1245
    %v1247 = vsel %vm1229, %v984, 0.0
    %v1248 = vadd.f32 %v1246, %v1247
    %v1249 = vsel %vm1229, %v990, 0.0
    %v1250 = vadd.f32 %v1248, %v1249
    %v1251 = vsel %vm1229, %v996, 0.0
    %v1252 = vadd.f32 %v1250, %v1251
    %v1253 = vsel %vm1229, %v1002, 0.0
    %v1254 = vadd.f32 %v1252, %v1253
    %v1255 = vsel %vm1229, %v1008, 0.0
    %v1256 = vadd.f32 %v1254, %v1255
    %v1257 = vsel %vm1229, %v1014, 0.0
    %v1258 = vadd.f32 %v1256, %v1257
    %v1259 = vsel %vm1229, %v1020, 0.0
    %v1260 = vadd.f32 %v1258, %v1259
    %v1261 = vsel %vm1229, %v1026, 0.0
    %v1262 = vadd.f32 %v1260, %v1261
    %v1263 = vsel %vm1229, %v1032, 0.0
    %v1264 = vadd.f32 %v1262, %v1263
    %v1265 = vsel %vm1229, %v1038, 0.0
    %v1266 = vadd.f32 %v1264, %v1265
    %v1267 = vsel %vm1229, %v1044, 0.0
    %v1268 = vadd.f32 %v1266, %v1267
    %v1269 = vsel %vm1229, %v1050, 0.0
    %v1270 = vadd.f32 %v1268, %v1269
    %v1271 = vsel %vm1229, %v1056, 0.0
    %v1272 = vadd.f32 %v1270, %v1271
    %v1273 = vsel %vm1229, %v1062, 0.0
    %v1274 = vadd.f32 %v1272, %v1273
    %v1275 = vsel %vm1229, %v1068, 0.0
    %v1276 = vadd.f32 %v1274, %v1275
    %v1277 = vsel %vm1229, %v1074, 0.0
    %v1278 = vadd.f32 %v1276, %v1277
    %v1279 = vsel %vm1229, %v1080, 0.0
    %v1280 = vadd.f32 %v1278, %v1279
    %v1281 = vsel %vm1229, %v1086, 0.0
    %v1282 = vadd.f32 %v1280, %v1281
    %v1283 = vsel %vm1229, %v1092, 0.0
    %v1284 = vadd.f32 %v1282, %v1283
    %v1285 = vsel %vm1229, %v1098, 0.0
    %v1286 = vadd.f32 %v1284, %v1285
    %v1287 = vsel %vm1229, %v1104, 0.0
    %v1288 = vadd.f32 %v1286, %v1287
    %v1289 = vsel %vm1229, %v1110, 0.0
    %v1290 = vadd.f32 %v1288, %v1289
    %v1291 = vsel %vm1229, %v1116, 0.0
    %v1292 = vadd.f32 %v1290, %v1291
    %v1293 = vrot.slane %v1292, 4
    %v1294 = vadd.f32 %v1292, %v1293
    %v1295 = vrot.slane %v1294, 2
    %v1296 = vadd.f32 %v1294, %v1295
    %v1297 = vrot.slane %v1296, 1
    %v1298 = vadd.f32 %v1296, %v1297
    %v1299 = vrcp.pop 256.0
    %v1300 = vmul.f32 %v1154, %v1299
    %v1301 = vmul.f32 %v1191, %v1299
    %v1302 = vmul.f32 %v1228, %v1299
    %v1303 = vmul.f32 %v1298, %v1299
    %v1304 = vsub.f32 %v671, %v1300
    %v1305 = vsub.f32 %v673, %v1301
    %v1306 = vsub.f32 %v928, %v1302
    %v1307 = vsub.f32 %v930, %v1303
    %v1308 = vsub.f32 %v677, %v1300
    %v1309 = vsub.f32 %v679, %v1301
    %v1310 = vsub.f32 %v934, %v1302
    %v1311 = vsub.f32 %v936, %v1303
    %v1312 = vsub.f32 %v683, %v1300
    %v1313 = vsub.f32 %v685, %v1301
    %v1314 = vsub.f32 %v940, %v1302
    %v1315 = vsub.f32 %v942, %v1303
    %v1316 = vsub.f32 %v689, %v1300
    %v1317 = vsub.f32 %v691, %v1301
    %v1318 = vsub.f32 %v946, %v1302
    %v1319 = vsub.f32 %v948, %v1303
    %v1320 = vsub.f32 %v695, %v1300
    %v1321 = vsub.f32 %v697, %v1301
    %v1322 = vsub.f32 %v952, %v1302
    %v1323 = vsub.f32 %v954, %v1303
    %v1324 = vsub.f32 %v701, %v1300
    %v1325 = vsub.f32 %v703, %v1301
    %v1326 = vsub.f32 %v958, %v1302
    %v1327 = vsub.f32 %v960, %v1303
    %v1328 = vsub.f32 %v707, %v1300
    %v1329 = vsub.f32 %v709, %v1301
    %v1330 = vsub.f32 %v964, %v1302
    %v1331 = vsub.f32 %v966, %v1303
    %v1332 = vsub.f32 %v713, %v1300
    %v1333 = vsub.f32 %v715, %v1301
    %v1334 = vsub.f32 %v970, %v1302
    %v1335 = vsub.f32 %v972, %v1303
    %v1336 = vsub.f32 %v719, %v1300
    %v1337 = vsub.f32 %v721, %v1301
    %v1338 = vsub.f32 %v976, %v1302
    %v1339 = vsub.f32 %v978, %v1303
    %v1340 = vsub.f32 %v725, %v1300
    %v1341 = vsub.f32 %v727, %v1301
    %v1342 = vsub.f32 %v982, %v1302
    %v1343 = vsub.f32 %v984, %v1303
    %v1344 = vsub.f32 %v731, %v1300
    %v1345 = vsub.f32 %v733, %v1301
    %v1346 = vsub.f32 %v988, %v1302
    %v1347 = vsub.f32 %v990, %v1303
    %v1348 = vsub.f32 %v737, %v1300
    %v1349 = vsub.f32 %v739, %v1301
    %v1350 = vsub.f32 %v994, %v1302
    %v1351 = vsub.f32 %v996, %v1303
    %v1352 = vsub.f32 %v743, %v1300
    %v1353 = vsub.f32 %v745, %v1301
    %v1354 = vsub.f32 %v1000, %v1302
    %v1355 = vsub.f32 %v1002, %v1303
    %v1356 = vsub.f32 %v749, %v1300
    %v1357 = vsub.f32 %v751, %v1301
    %v1358 = vsub.f32 %v1006, %v1302
    %v1359 = vsub.f32 %v1008, %v1303
    %v1360 = vsub.f32 %v755, %v1300
    %v1361 = vsub.f32 %v757, %v1301
    %v1362 = vsub.f32 %v1012, %v1302
    %v1363 = vsub.f32 %v1014, %v1303
    %v1364 = vsub.f32 %v761, %v1300
    %v1365 = vsub.f32 %v763, %v1301
    %v1366 = vsub.f32 %v1018, %v1302
    %v1367 = vsub.f32 %v1020, %v1303
    %v1368 = vsub.f32 %v767, %v1300
    %v1369 = vsub.f32 %v769, %v1301
    %v1370 = vsub.f32 %v1024, %v1302
    %v1371 = vsub.f32 %v1026, %v1303
    %v1372 = vsub.f32 %v773, %v1300
    %v1373 = vsub.f32 %v775, %v1301
    %v1374 = vsub.f32 %v1030, %v1302
    %v1375 = vsub.f32 %v1032, %v1303
    %v1376 = vsub.f32 %v779, %v1300
    %v1377 = vsub.f32 %v781, %v1301
    %v1378 = vsub.f32 %v1036, %v1302
    %v1379 = vsub.f32 %v1038, %v1303
    %v1380 = vsub.f32 %v785, %v1300
    %v1381 = vsub.f32 %v787, %v1301
    %v1382 = vsub.f32 %v1042, %v1302
    %v1383 = vsub.f32 %v1044, %v1303
    %v1384 = vsub.f32 %v791, %v1300
    %v1385 = vsub.f32 %v793, %v1301
    %v1386 = vsub.f32 %v1048, %v1302
    %v1387 = vsub.f32 %v1050, %v1303
    %v1388 = vsub.f32 %v797, %v1300
    %v1389 = vsub.f32 %v799, %v1301
    %v1390 = vsub.f32 %v1054, %v1302
    %v1391 = vsub.f32 %v1056, %v1303
    %v1392 = vsub.f32 %v803, %v1300
    %v1393 = vsub.f32 %v805, %v1301
    %v1394 = vsub.f32 %v1060, %v1302
    %v1395 = vsub.f32 %v1062, %v1303
    %v1396 = vsub.f32 %v809, %v1300
    %v1397 = vsub.f32 %v811, %v1301
    %v1398 = vsub.f32 %v1066, %v1302
    %v1399 = vsub.f32 %v1068, %v1303
    %v1400 = vsub.f32 %v815, %v1300
    %v1401 = vsub.f32 %v817, %v1301
    %v1402 = vsub.f32 %v1072, %v1302
    %v1403 = vsub.f32 %v1074, %v1303
    %v1404 = vsub.f32 %v821, %v1300
    %v1405 = vsub.f32 %v823, %v1301
    %v1406 = vsub.f32 %v1078, %v1302
    %v1407 = vsub.f32 %v1080, %v1303
    %v1408 = vsub.f32 %v827, %v1300
    %v1409 = vsub.f32 %v829, %v1301
    %v1410 = vsub.f32 %v1084, %v1302
    %v1411 = vsub.f32 %v1086, %v1303
    %v1412 = vsub.f32 %v833, %v1300
    %v1413 = vsub.f32 %v835, %v1301
    %v1414 = vsub.f32 %v1090, %v1302
    %v1415 = vsub.f32 %v1092, %v1303
    %v1416 = vsub.f32 %v839, %v1300
    %v1417 = vsub.f32 %v841, %v1301
    %v1418 = vsub.f32 %v1096, %v1302
    %v1419 = vsub.f32 %v1098, %v1303
    %v1420 = vsub.f32 %v845, %v1300
    %v1421 = vsub.f32 %v847, %v1301
    %v1422 = vsub.f32 %v1102, %v1302
    %v1423 = vsub.f32 %v1104, %v1303
    %v1424 = vsub.f32 %v851, %v1300
    %v1425 = vsub.f32 %v853, %v1301
    %v1426 = vsub.f32 %v1108, %v1302
    %v1427 = vsub.f32 %v1110, %v1303
    %v1428 = vsub.f32 %v857, %v1300
    %v1429 = vsub.f32 %v859, %v1301
    %v1430 = vsub.f32 %v1114, %v1302
    %v1431 = vsub.f32 %v1116, %v1303
    %v1432 = vmul.f32 %v1304, %v1304
    %v1433 = vmul.f32 %v1305, %v1305
    %v1434 = vmul.f32 %v1306, %v1306
    %v1435 = vmul.f32 %v1307, %v1307
    %v1436 = vmul.f32 %v1308, %v1308
    %v1437 = vmul.f32 %v1309, %v1309
    %v1438 = vmul.f32 %v1310, %v1310
    %v1439 = vmul.f32 %v1311, %v1311
    %v1440 = vmul.f32 %v1312, %v1312
    %v1441 = vmul.f32 %v1313, %v1313
    %v1442 = vmul.f32 %v1314, %v1314
    %v1443 = vmul.f32 %v1315, %v1315
    %v1444 = vmul.f32 %v1316, %v1316
    %v1445 = vmul.f32 %v1317, %v1317
    %v1446 = vmul.f32 %v1318, %v1318
    %v1447 = vmul.f32 %v1319, %v1319
    %v1448 = vmul.f32 %v1320, %v1320
    %v1449 = vmul.f32 %v1321, %v1321
    %v1450 = vmul.f32 %v1322, %v1322
    %v1451 = vmul.f32 %v1323, %v1323
    %v1452 = vmul.f32 %v1324, %v1324
    %v1453 = vmul.f32 %v1325, %v1325
    %v1454 = vmul.f32 %v1326, %v1326
    %v1455 = vmul.f32 %v1327, %v1327
    %v1456 = vmul.f32 %v1328, %v1328
    %v1457 = vmul.f32 %v1329, %v1329
    %v1458 = vmul.f32 %v1330, %v1330
    %v1459 = vmul.f32 %v1331, %v1331
    %v1460 = vmul.f32 %v1332, %v1332
    %v1461 = vmul.f32 %v1333, %v1333
    %v1462 = vmul.f32 %v1334, %v1334
    %v1463 = vmul.f32 %v1335, %v1335
    %v1464 = vmul.f32 %v1336, %v1336
    %v1465 = vmul.f32 %v1337, %v1337
    %v1466 = vmul.f32 %v1338, %v1338
    %v1467 = vmul.f32 %v1339, %v1339
    %v1468 = vmul.f32 %v1340, %v1340
    %v1469 = vmul.f32 %v1341, %v1341
    %v1470 = vmul.f32 %v1342, %v1342
    %v1471 = vmul.f32 %v1343, %v1343
    %v1472 = vmul.f32 %v1344, %v1344
    %v1473 = vmul.f32 %v1345, %v1345
    %v1474 = vmul.f32 %v1346, %v1346
    %v1475 = vmul.f32 %v1347, %v1347
    %v1476 = vmul.f32 %v1348, %v1348
    %v1477 = vmul.f32 %v1349, %v1349
    %v1478 = vmul.f32 %v1350, %v1350
    %v1479 = vmul.f32 %v1351, %v1351
    %v1480 = vmul.f32 %v1352, %v1352
    %v1481 = vmul.f32 %v1353, %v1353
    %v1482 = vmul.f32 %v1354, %v1354
    %v1483 = vmul.f32 %v1355, %v1355
    %v1484 = vmul.f32 %v1356, %v1356
    %v1485 = vmul.f32 %v1357, %v1357
    %v1486 = vmul.f32 %v1358, %v1358
    %v1487 = vmul.f32 %v1359, %v1359
    %v1488 = vmul.f32 %v1360, %v1360
    %v1489 = vmul.f32 %v1361, %v1361
    %v1490 = vmul.f32 %v1362, %v1362
    %v1491 = vmul.f32 %v1363, %v1363
    %v1492 = vmul.f32 %v1364, %v1364
    %v1493 = vmul.f32 %v1365, %v1365
    %v1494 = vmul.f32 %v1366, %v1366
    %v1495 = vmul.f32 %v1367, %v1367
    %v1496 = vmul.f32 %v1368, %v1368
    %v1497 = vmul.f32 %v1369, %v1369
    %v1498 = vmul.f32 %v1370, %v1370
    %v1499 = vmul.f32 %v1371, %v1371
    %v1500 = vmul.f32 %v1372, %v1372
    %v1501 = vmul.f32 %v1373, %v1373
    %v1502 = vmul.f32 %v1374, %v1374
    %v1503 = vmul.f32 %v1375, %v1375
    %v1504 = vmul.f32 %v1376, %v1376
    %v1505 = vmul.f32 %v1377, %v1377
    %v1506 = vmul.f32 %v1378, %v1378
    %v1507 = vmul.f32 %v1379, %v1379
    %v1508 = vmul.f32 %v1380, %v1380
    %v1509 = vmul.f32 %v1381, %v1381
    %v1510 = vmul.f32 %v1382, %v1382
    %v1511 = vmul.f32 %v1383, %v1383
    %v1512 = vmul.f32 %v1384, %v1384
    %v1513 = vmul.f32 %v1385, %v1385
    %v1514 = vmul.f32 %v1386, %v1386
    %v1515 = vmul.f32 %v1387, %v1387
    %v1516 = vmul.f32 %v1388, %v1388
    %v1517 = vmul.f32 %v1389, %v1389
    %v1518 = vmul.f32 %v1390, %v1390
    %v1519 = vmul.f32 %v1391, %v1391
    %v1520 = vmul.f32 %v1392, %v1392
    %v1521 = vmul.f32 %v1393, %v1393
    %v1522 = vmul.f32 %v1394, %v1394
    %v1523 = vmul.f32 %v1395, %v1395
    %v1524 = vmul.f32 %v1396, %v1396
    %v1525 = vmul.f32 %v1397, %v1397
    %v1526 = vmul.f32 %v1398, %v1398
    %v1527 = vmul.f32 %v1399, %v1399
    %v1528 = vmul.f32 %v1400, %v1400
    %v1529 = vmul.f32 %v1401, %v1401
    %v1530 = vmul.f32 %v1402, %v1402
    %v1531 = vmul.f32 %v1403, %v1403
    %v1532 = vmul.f32 %v1404, %v1404
    %v1533 = vmul.f32 %v1405, %v1405
    %v1534 = vmul.f32 %v1406, %v1406
    %v1535 = vmul.f32 %v1407, %v1407
    %v1536 = vmul.f32 %v1408, %v1408
    %v1537 = vmul.f32 %v1409, %v1409
    %v1538 = vmul.f32 %v1410, %v1410
    %v1539 = vmul.f32 %v1411, %v1411
    %v1540 = vmul.f32 %v1412, %v1412
    %v1541 = vmul.f32 %v1413, %v1413
    %v1542 = vmul.f32 %v1414, %v1414
    %v1543 = vmul.f32 %v1415, %v1415
    %v1544 = vmul.f32 %v1416, %v1416
    %v1545 = vmul.f32 %v1417, %v1417
    %v1546 = vmul.f32 %v1418, %v1418
    %v1547 = vmul.f32 %v1419, %v1419
    %v1548 = vmul.f32 %v1420, %v1420
    %v1549 = vmul.f32 %v1421, %v1421
    %v1550 = vmul.f32 %v1422, %v1422
    %v1551 = vmul.f32 %v1423, %v1423
    %v1552 = vmul.f32 %v1424, %v1424
    %v1553 = vmul.f32 %v1425, %v1425
    %v1554 = vmul.f32 %v1426, %v1426
    %v1555 = vmul.f32 %v1427, %v1427
    %v1556 = vmul.f32 %v1428, %v1428
    %v1557 = vmul.f32 %v1429, %v1429
    %v1558 = vmul.f32 %v1430, %v1430
    %v1559 = vmul.f32 %v1431, %v1431
    %v1560 = vadd.f32 %v1432, %v1436
    %v1561 = vadd.f32 %v1560, %v1440
    %v1562 = vadd.f32 %v1561, %v1444
    %v1563 = vadd.f32 %v1562, %v1448
    %v1564 = vadd.f32 %v1563, %v1452
    %v1565 = vadd.f32 %v1564, %v1456
    %v1566 = vadd.f32 %v1565, %v1460
    %v1567 = vadd.f32 %v1566, %v1464
    %v1568 = vadd.f32 %v1567, %v1468
    %v1569 = vadd.f32 %v1568, %v1472
    %v1570 = vadd.f32 %v1569, %v1476
    %v1571 = vadd.f32 %v1570, %v1480
    %v1572 = vadd.f32 %v1571, %v1484
    %v1573 = vadd.f32 %v1572, %v1488
    %v1574 = vadd.f32 %v1573, %v1492
    %v1575 = vadd.f32 %v1574, %v1496
    %v1576 = vadd.f32 %v1575, %v1500
    %v1577 = vadd.f32 %v1576, %v1504
    %v1578 = vadd.f32 %v1577, %v1508
    %v1579 = vadd.f32 %v1578, %v1512
    %v1580 = vadd.f32 %v1579, %v1516
    %v1581 = vadd.f32 %v1580, %v1520
    %v1582 = vadd.f32 %v1581, %v1524
    %v1583 = vadd.f32 %v1582, %v1528
    %v1584 = vadd.f32 %v1583, %v1532
    %v1585 = vadd.f32 %v1584, %v1536
    %v1586 = vadd.f32 %v1585, %v1540
    %v1587 = vadd.f32 %v1586, %v1544
    %v1588 = vadd.f32 %v1587, %v1548
    %v1589 = vadd.f32 %v1588, %v1552
    %v1590 = vadd.f32 %v1589, %v1556
    %v1591 = vrot.slane %v1590, 4
    %v1592 = vadd.f32 %v1590, %v1591
    %v1593 = vrot.slane %v1592, 2
    %v1594 = vadd.f32 %v1592, %v1593
    %v1595 = vrot.slane %v1594, 1
    %v1596 = vadd.f32 %v1594, %v1595
    %v1597 = vadd.f32 %v1433, %v1437
    %v1598 = vadd.f32 %v1597, %v1441
    %v1599 = vadd.f32 %v1598, %v1445
    %v1600 = vadd.f32 %v1599, %v1449
    %v1601 = vadd.f32 %v1600, %v1453
    %v1602 = vadd.f32 %v1601, %v1457
    %v1603 = vadd.f32 %v1602, %v1461
    %v1604 = vadd.f32 %v1603, %v1465
    %v1605 = vadd.f32 %v1604, %v1469
    %v1606 = vadd.f32 %v1605, %v1473
    %v1607 = vadd.f32 %v1606, %v1477
    %v1608 = vadd.f32 %v1607, %v1481
    %v1609 = vadd.f32 %v1608, %v1485
    %v1610 = vadd.f32 %v1609, %v1489
    %v1611 = vadd.f32 %v1610, %v1493
    %v1612 = vadd.f32 %v1611, %v1497
    %v1613 = vadd.f32 %v1612, %v1501
    %v1614 = vadd.f32 %v1613, %v1505
    %v1615 = vadd.f32 %v1614, %v1509
    %v1616 = vadd.f32 %v1615, %v1513
    %v1617 = vadd.f32 %v1616, %v1517
    %v1618 = vadd.f32 %v1617, %v1521
    %v1619 = vadd.f32 %v1618, %v1525
    %v1620 = vadd.f32 %v1619, %v1529
    %v1621 = vadd.f32 %v1620, %v1533
    %v1622 = vadd.f32 %v1621, %v1537
    %v1623 = vadd.f32 %v1622, %v1541
    %v1624 = vadd.f32 %v1623, %v1545
    %v1625 = vadd.f32 %v1624, %v1549
    %v1626 = vadd.f32 %v1625, %v1553
    %v1627 = vadd.f32 %v1626, %v1557
    %v1628 = vrot.slane %v1627, 4
    %v1629 = vadd.f32 %v1627, %v1628
    %v1630 = vrot.slane %v1629, 2
    %v1631 = vadd.f32 %v1629, %v1630
    %v1632 = vrot.slane %v1631, 1
    %v1633 = vadd.f32 %v1631, %v1632
    %v1634 = vadd.f32 %v1434, %v1438
    %v1635 = vadd.f32 %v1634, %v1442
    %v1636 = vadd.f32 %v1635, %v1446
    %v1637 = vadd.f32 %v1636, %v1450
    %v1638 = vadd.f32 %v1637, %v1454
    %v1639 = vadd.f32 %v1638, %v1458
    %v1640 = vadd.f32 %v1639, %v1462
    %v1641 = vadd.f32 %v1640, %v1466
    %v1642 = vadd.f32 %v1641, %v1470
    %v1643 = vadd.f32 %v1642, %v1474
    %v1644 = vadd.f32 %v1643, %v1478
    %v1645 = vadd.f32 %v1644, %v1482
    %v1646 = vadd.f32 %v1645, %v1486
    %v1647 = vadd.f32 %v1646, %v1490
    %v1648 = vadd.f32 %v1647, %v1494
    %v1649 = vadd.f32 %v1648, %v1498
    %v1650 = vadd.f32 %v1649, %v1502
    %v1651 = vadd.f32 %v1650, %v1506
    %v1652 = vadd.f32 %v1651, %v1510
    %v1653 = vadd.f32 %v1652, %v1514
    %v1654 = vadd.f32 %v1653, %v1518
    %v1655 = vadd.f32 %v1654, %v1522
    %v1656 = vadd.f32 %v1655, %v1526
    %v1657 = vadd.f32 %v1656, %v1530
    %v1658 = vadd.f32 %v1657, %v1534
    %v1659 = vadd.f32 %v1658, %v1538
    %v1660 = vadd.f32 %v1659, %v1542
    %v1661 = vadd.f32 %v1660, %v1546
    %v1662 = vadd.f32 %v1661, %v1550
    %v1663 = vadd.f32 %v1662, %v1554
    %v1664 = vadd.f32 %v1663, %v1558
    %v1665 = vrot.slane %v1664, 4
    %v1666 = vadd.f32 %v1664, %v1665
    %v1667 = vrot.slane %v1666, 2
    %v1668 = vadd.f32 %v1666, %v1667
    %v1669 = vrot.slane %v1668, 1
    %v1670 = vadd.f32 %v1668, %v1669
    %v1671 = vsel %vm1229, %v1435, 0.0
    %v1672 = vsel %vm1229, %v1439, 0.0
    %v1673 = vadd.f32 %v1671, %v1672
    %v1674 = vsel %vm1229, %v1443, 0.0
    %v1675 = vadd.f32 %v1673, %v1674
    %v1676 = vsel %vm1229, %v1447, 0.0
    %v1677 = vadd.f32 %v1675, %v1676
    %v1678 = vsel %vm1229, %v1451, 0.0
    %v1679 = vadd.f32 %v1677, %v1678
    %v1680 = vsel %vm1229, %v1455, 0.0
    %v1681 = vadd.f32 %v1679, %v1680
    %v1682 = vsel %vm1229, %v1459, 0.0
    %v1683 = vadd.f32 %v1681, %v1682
    %v1684 = vsel %vm1229, %v1463, 0.0
    %v1685 = vadd.f32 %v1683, %v1684
    %v1686 = vsel %vm1229, %v1467, 0.0
    %v1687 = vadd.f32 %v1685, %v1686
    %v1688 = vsel %vm1229, %v1471, 0.0
    %v1689 = vadd.f32 %v1687, %v1688
    %v1690 = vsel %vm1229, %v1475, 0.0
    %v1691 = vadd.f32 %v1689, %v1690
    %v1692 = vsel %vm1229, %v1479, 0.0
    %v1693 = vadd.f32 %v1691, %v1692
    %v1694 = vsel %vm1229, %v1483, 0.0
    %v1695 = vadd.f32 %v1693, %v1694
    %v1696 = vsel %vm1229, %v1487, 0.0
    %v1697 = vadd.f32 %v1695, %v1696
    %v1698 = vsel %vm1229, %v1491, 0.0
    %v1699 = vadd.f32 %v1697, %v1698
    %v1700 = vsel %vm1229, %v1495, 0.0
    %v1701 = vadd.f32 %v1699, %v1700
    %v1702 = vsel %vm1229, %v1499, 0.0
    %v1703 = vadd.f32 %v1701, %v1702
    %v1704 = vsel %vm1229, %v1503, 0.0
    %v1705 = vadd.f32 %v1703, %v1704
    %v1706 = vsel %vm1229, %v1507, 0.0
    %v1707 = vadd.f32 %v1705, %v1706
    %v1708 = vsel %vm1229, %v1511, 0.0
    %v1709 = vadd.f32 %v1707, %v1708
    %v1710 = vsel %vm1229, %v1515, 0.0
    %v1711 = vadd.f32 %v1709, %v1710
    %v1712 = vsel %vm1229, %v1519, 0.0
    %v1713 = vadd.f32 %v1711, %v1712
    %v1714 = vsel %vm1229, %v1523, 0.0
    %v1715 = vadd.f32 %v1713, %v1714
    %v1716 = vsel %vm1229, %v1527, 0.0
    %v1717 = vadd.f32 %v1715, %v1716
    %v1718 = vsel %vm1229, %v1531, 0.0
    %v1719 = vadd.f32 %v1717, %v1718
    %v1720 = vsel %vm1229, %v1535, 0.0
    %v1721 = vadd.f32 %v1719, %v1720
    %v1722 = vsel %vm1229, %v1539, 0.0
    %v1723 = vadd.f32 %v1721, %v1722
    %v1724 = vsel %vm1229, %v1543, 0.0
    %v1725 = vadd.f32 %v1723, %v1724
    %v1726 = vsel %vm1229, %v1547, 0.0
    %v1727 = vadd.f32 %v1725, %v1726
    %v1728 = vsel %vm1229, %v1551, 0.0
    %v1729 = vadd.f32 %v1727, %v1728
    %v1730 = vsel %vm1229, %v1555, 0.0
    %v1731 = vadd.f32 %v1729, %v1730
    %v1732 = vsel %vm1229, %v1559, 0.0
    %v1733 = vadd.f32 %v1731, %v1732
    %v1734 = vrot.slane %v1733, 4
    %v1735 = vadd.f32 %v1733, %v1734
    %v1736 = vrot.slane %v1735, 2
    %v1737 = vadd.f32 %v1735, %v1736
    %v1738 = vrot.slane %v1737, 1
    %v1739 = vadd.f32 %v1737, %v1738
    %v1740 = vmul.f32 %v1596, %v1299
    %v1741 = vmul.f32 %v1633, %v1299
    %v1742 = vmul.f32 %v1670, %v1299
    %v1743 = vmul.f32 %v1739, %v1299
    %v1744 = vld [vmem:[#allocation9] sm:$0xf]
    %v1745 = vld [vmem:[#allocation9 + $0x4] sm:$0xf]
    %v1746 = vadd.f32 %v1740, 1e-05
    %v1747 = vadd.f32 %v1741, 1e-05
    %v1748 = vadd.f32 %v1742, 1e-05
    %v1749 = vadd.f32 %v1743, 1e-05
    %v1750 = vrsqrt.pop %v1746
    %v1751 = vrsqrt.pop %v1747
    %v1752 = vrsqrt.pop %v1748
    %v1753 = vrsqrt.pop %v1749
    %v1758 = vcombine.low %v1750, %v1751
    %v1759 = vcombine.low %v1752, %v1753
    %v1761 = vunpack.c.l.s4 1966171168
    %v1762 = vunpack.c.0.s8 %v1761
    %v1763 = vlaneseq
    %v1764 = vshrl.u32 %v1763, 7
    %v1765 = vsub.s32 %v1762, %v1764
    %v1766 = vrot.slane %v1758, %v1765
    %v1768 = vunpack.c.l.s4 1966171168
    %v1769 = vunpack.c.0.s8 %v1768
    %v1770 = vlaneseq
    %v1771 = vshrl.u32 %v1770, 7
    %v1772 = vsub.s32 %v1769, %v1771
    %v1773 = vrot.slane %v1759, %v1772
    %v1774 = vcombine.low %v1766, %v1773
    %v1776 = vunpack.c.l.s4 1966171168
    %v1777 = vunpack.c.0.s8 %v1776
    %v1778 = vlaneseq
    %v1779 = vshrl.u32 %v1778, 7
    %v1780 = vsub.s32 %v1777, %v1779
    %v1781 = vrot.slane %v1774, %v1780
    %v1783 = vmul.f32 %v1744, %v1781
    %v1785 = vlaneseq
    %v1786 = vshrl.u32 %v1785, 7
    %v1787 = vsub.s32 0, %v1786
    %v1788 = vrot.slane %v1783, %v1787
    %v1789 = vlaneseq
    %v1790 = vshrl.u32 %v1789, 7
    %v1791 = vsub.s32 1, %v1790
    %v1792 = vrot.slane %v1783, %v1791
    %v1793 = vlaneseq
    %v1794 = vshrl.u32 %v1793, 7
    %v1795 = vsub.s32 2, %v1794
    %v1796 = vrot.slane %v1783, %v1795
    %v1797 = vlaneseq
    %v1798 = vshrl.u32 %v1797, 7
    %v1799 = vsub.s32 3, %v1798
    %v1800 = vrot.slane %v1783, %v1799
    %v1805 = vmul.f32 %v1304, %v1788
    %v1806 = vmul.f32 %v1305, %v1792
    %v1807 = vmul.f32 %v1306, %v1796
    %v1808 = vmul.f32 %v1307, %v1800
    %v1809 = vmul.f32 %v1308, %v1788
    %v1810 = vmul.f32 %v1309, %v1792
    %v1811 = vmul.f32 %v1310, %v1796
    %v1812 = vmul.f32 %v1311, %v1800
    %v1813 = vmul.f32 %v1312, %v1788
    %v1814 = vmul.f32 %v1313, %v1792
    %v1815 = vmul.f32 %v1314, %v1796
    %v1816 = vmul.f32 %v1315, %v1800
    %v1817 = vmul.f32 %v1316, %v1788
    %v1818 = vmul.f32 %v1317, %v1792
    %v1819 = vmul.f32 %v1318, %v1796
    %v1820 = vmul.f32 %v1319, %v1800
    %v1821 = vmul.f32 %v1320, %v1788
    %v1822 = vmul.f32 %v1321, %v1792
    %v1823 = vmul.f32 %v1322, %v1796
    %v1824 = vmul.f32 %v1323, %v1800
    %v1825 = vmul.f32 %v1324, %v1788
    %v1826 = vmul.f32 %v1325, %v1792
    %v1827 = vmul.f32 %v1326, %v1796
    %v1828 = vmul.f32 %v1327, %v1800
    %v1829 = vmul.f32 %v1328, %v1788
    %v1830 = vmul.f32 %v1329, %v1792
    %v1831 = vmul.f32 %v1330, %v1796
    %v1832 = vmul.f32 %v1331, %v1800
    %v1833 = vmul.f32 %v1332, %v1788
    %v1834 = vmul.f32 %v1333, %v1792
    %v1835 = vmul.f32 %v1334, %v1796
    %v1836 = vmul.f32 %v1335, %v1800
    %v1837 = vmul.f32 %v1336, %v1788
    %v1838 = vmul.f32 %v1337, %v1792
    %v1839 = vmul.f32 %v1338, %v1796
    %v1840 = vmul.f32 %v1339, %v1800
    %v1841 = vmul.f32 %v1340, %v1788
    %v1842 = vmul.f32 %v1341, %v1792
    %v1843 = vmul.f32 %v1342, %v1796
    %v1844 = vmul.f32 %v1343, %v1800
    %v1845 = vmul.f32 %v1344, %v1788
    %v1846 = vmul.f32 %v1345, %v1792
    %v1847 = vmul.f32 %v1346, %v1796
    %v1848 = vmul.f32 %v1347, %v1800
    %v1849 = vmul.f32 %v1348, %v1788
    %v1850 = vmul.f32 %v1349, %v1792
    %v1851 = vmul.f32 %v1350, %v1796
    %v1852 = vmul.f32 %v1351, %v1800
    %v1853 = vmul.f32 %v1352, %v1788
    %v1854 = vmul.f32 %v1353, %v1792
    %v1855 = vmul.f32 %v1354, %v1796
    %v1856 = vmul.f32 %v1355, %v1800
    %v1857 = vmul.f32 %v1356, %v1788
    %v1858 = vmul.f32 %v1357, %v1792
    %v1859 = vmul.f32 %v1358, %v1796
    %v1860 = vmul.f32 %v1359, %v1800
    %v1861 = vmul.f32 %v1360, %v1788
    %v1862 = vmul.f32 %v1361, %v1792
    %v1863 = vmul.f32 %v1362, %v1796
    %v1864 = vmul.f32 %v1363, %v1800
    %v1865 = vmul.f32 %v1364, %v1788
    %v1866 = vmul.f32 %v1365, %v1792
    %v1867 = vmul.f32 %v1366, %v1796
    %v1868 = vmul.f32 %v1367, %v1800
    %v1869 = vmul.f32 %v1368, %v1788
    %v1870 = vmul.f32 %v1369, %v1792
    %v1871 = vmul.f32 %v1370, %v1796
    %v1872 = vmul.f32 %v1371, %v1800
    %v1873 = vmul.f32 %v1372, %v1788
    %v1874 = vmul.f32 %v1373, %v1792
    %v1875 = vmul.f32 %v1374, %v1796
    %v1876 = vmul.f32 %v1375, %v1800
    %v1877 = vmul.f32 %v1376, %v1788
    %v1878 = vmul.f32 %v1377, %v1792
    %v1879 = vmul.f32 %v1378, %v1796
    %v1880 = vmul.f32 %v1379, %v1800
    %v1881 = vmul.f32 %v1380, %v1788
    %v1882 = vmul.f32 %v1381, %v1792
    %v1883 = vmul.f32 %v1382, %v1796
    %v1884 = vmul.f32 %v1383, %v1800
    %v1885 = vmul.f32 %v1384, %v1788
    %v1886 = vmul.f32 %v1385, %v1792
    %v1887 = vmul.f32 %v1386, %v1796
    %v1888 = vmul.f32 %v1387, %v1800
    %v1889 = vmul.f32 %v1388, %v1788
    %v1890 = vmul.f32 %v1389, %v1792
    %v1891 = vmul.f32 %v1390, %v1796
    %v1892 = vmul.f32 %v1391, %v1800
    %v1893 = vmul.f32 %v1392, %v1788
    %v1894 = vmul.f32 %v1393, %v1792
    %v1895 = vmul.f32 %v1394, %v1796
    %v1896 = vmul.f32 %v1395, %v1800
    %v1897 = vmul.f32 %v1396, %v1788
    %v1898 = vmul.f32 %v1397, %v1792
    %v1899 = vmul.f32 %v1398, %v1796
    %v1900 = vmul.f32 %v1399, %v1800
    %v1901 = vmul.f32 %v1400, %v1788
    %v1902 = vmul.f32 %v1401, %v1792
    %v1903 = vmul.f32 %v1402, %v1796
    %v1904 = vmul.f32 %v1403, %v1800
    %v1905 = vmul.f32 %v1404, %v1788
    %v1906 = vmul.f32 %v1405, %v1792
    %v1907 = vmul.f32 %v1406, %v1796
    %v1908 = vmul.f32 %v1407, %v1800
    %v1909 = vmul.f32 %v1408, %v1788
    %v1910 = vmul.f32 %v1409, %v1792
    %v1911 = vmul.f32 %v1410, %v1796
    %v1912 = vmul.f32 %v1411, %v1800
    %v1913 = vmul.f32 %v1412, %v1788
    %v1914 = vmul.f32 %v1413, %v1792
    %v1915 = vmul.f32 %v1414, %v1796
    %v1916 = vmul.f32 %v1415, %v1800
    %v1917 = vmul.f32 %v1416, %v1788
    %v1918 = vmul.f32 %v1417, %v1792
    %v1919 = vmul.f32 %v1418, %v1796
    %v1920 = vmul.f32 %v1419, %v1800
    %v1921 = vmul.f32 %v1420, %v1788
    %v1922 = vmul.f32 %v1421, %v1792
    %v1923 = vmul.f32 %v1422, %v1796
    %v1924 = vmul.f32 %v1423, %v1800
    %v1925 = vmul.f32 %v1424, %v1788
    %v1926 = vmul.f32 %v1425, %v1792
    %v1927 = vmul.f32 %v1426, %v1796
    %v1928 = vmul.f32 %v1427, %v1800
    %v1929 = vmul.f32 %v1428, %v1788
    %v1930 = vmul.f32 %v1429, %v1792
    %v1931 = vmul.f32 %v1430, %v1796
    %v1932 = vmul.f32 %v1431, %v1800
    %v1934 = vlaneseq
    %v1935 = vshrl.u32 %v1934, 7
    %v1936 = vsub.s32 0, %v1935
    %v1937 = vrot.slane %v1745, %v1936
    %v1938 = vlaneseq
    %v1939 = vshrl.u32 %v1938, 7
    %v1940 = vsub.s32 1, %v1939
    %v1941 = vrot.slane %v1745, %v1940
    %v1942 = vlaneseq
    %v1943 = vshrl.u32 %v1942, 7
    %v1944 = vsub.s32 2, %v1943
    %v1945 = vrot.slane %v1745, %v1944
    %v1946 = vlaneseq
    %v1947 = vshrl.u32 %v1946, 7
    %v1948 = vsub.s32 3, %v1947
    %v1949 = vrot.slane %v1745, %v1948
    %v1954 = vadd.f32 %v1805, %v1937
    %v1955 = vadd.f32 %v1806, %v1941
    %v1956 = vadd.f32 %v1807, %v1945
    %v1957 = vadd.f32 %v1808, %v1949
    %v1958 = vadd.f32 %v1809, %v1937
    %v1959 = vadd.f32 %v1810, %v1941
    %v1960 = vadd.f32 %v1811, %v1945
    %v1961 = vadd.f32 %v1812, %v1949
    %v1962 = vadd.f32 %v1813, %v1937
    %v1963 = vadd.f32 %v1814, %v1941
    %v1964 = vadd.f32 %v1815, %v1945
    %v1965 = vadd.f32 %v1816, %v1949
    %v1966 = vadd.f32 %v1817, %v1937
    %v1967 = vadd.f32 %v1818, %v1941
    %v1968 = vadd.f32 %v1819, %v1945
    %v1969 = vadd.f32 %v1820, %v1949
    %v1970 = vadd.f32 %v1821, %v1937
    %v1971 = vadd.f32 %v1822, %v1941
    %v1972 = vadd.f32 %v1823, %v1945
    %v1973 = vadd.f32 %v1824, %v1949
    %v1974 = vadd.f32 %v1825, %v1937
    %v1975 = vadd.f32 %v1826, %v1941
    %v1976 = vadd.f32 %v1827, %v1945
    %v1977 = vadd.f32 %v1828, %v1949
    %v1978 = vadd.f32 %v1829, %v1937
    %v1979 = vadd.f32 %v1830, %v1941
    %v1980 = vadd.f32 %v1831, %v1945
    %v1981 = vadd.f32 %v1832, %v1949
    %v1982 = vadd.f32 %v1833, %v1937
    %v1983 = vadd.f32 %v1834, %v1941
    %v1984 = vadd.f32 %v1835, %v1945
    %v1985 = vadd.f32 %v1836, %v1949
    %v1986 = vadd.f32 %v1837, %v1937
    %v1987 = vadd.f32 %v1838, %v1941
    %v1988 = vadd.f32 %v1839, %v1945
    %v1989 = vadd.f32 %v1840, %v1949
    %v1990 = vadd.f32 %v1841, %v1937
    %v1991 = vadd.f32 %v1842, %v1941
    %v1992 = vadd.f32 %v1843, %v1945
    %v1993 = vadd.f32 %v1844, %v1949
    %v1994 = vadd.f32 %v1845, %v1937
    %v1995 = vadd.f32 %v1846, %v1941
    %v1996 = vadd.f32 %v1847, %v1945
    %v1997 = vadd.f32 %v1848, %v1949
    %v1998 = vadd.f32 %v1849, %v1937
    %v1999 = vadd.f32 %v1850, %v1941
    %v2000 = vadd.f32 %v1851, %v1945
    %v2001 = vadd.f32 %v1852, %v1949
    %v2002 = vadd.f32 %v1853, %v1937
    %v2003 = vadd.f32 %v1854, %v1941
    %v2004 = vadd.f32 %v1855, %v1945
    %v2005 = vadd.f32 %v1856, %v1949
    %v2006 = vadd.f32 %v1857, %v1937
    %v2007 = vadd.f32 %v1858, %v1941
    %v2008 = vadd.f32 %v1859, %v1945
    %v2009 = vadd.f32 %v1860, %v1949
    %v2010 = vadd.f32 %v1861, %v1937
    %v2011 = vadd.f32 %v1862, %v1941
    %v2012 = vadd.f32 %v1863, %v1945
    %v2013 = vadd.f32 %v1864, %v1949
    %v2014 = vadd.f32 %v1865, %v1937
    %v2015 = vadd.f32 %v1866, %v1941
    %v2016 = vadd.f32 %v1867, %v1945
    %v2017 = vadd.f32 %v1868, %v1949
    %v2018 = vadd.f32 %v1869, %v1937
    %v2019 = vadd.f32 %v1870, %v1941
    %v2020 = vadd.f32 %v1871, %v1945
    %v2021 = vadd.f32 %v1872, %v1949
    %v2022 = vadd.f32 %v1873, %v1937
    %v2023 = vadd.f32 %v1874, %v1941
    %v2024 = vadd.f32 %v1875, %v1945
    %v2025 = vadd.f32 %v1876, %v1949
    %v2026 = vadd.f32 %v1877, %v1937
    %v2027 = vadd.f32 %v1878, %v1941
    %v2028 = vadd.f32 %v1879, %v1945
    %v2029 = vadd.f32 %v1880, %v1949
    %v2030 = vadd.f32 %v1881, %v1937
    %v2031 = vadd.f32 %v1882, %v1941
    %v2032 = vadd.f32 %v1883, %v1945
    %v2033 = vadd.f32 %v1884, %v1949
    %v2034 = vadd.f32 %v1885, %v1937
    %v2035 = vadd.f32 %v1886, %v1941
    %v2036 = vadd.f32 %v1887, %v1945
    %v2037 = vadd.f32 %v1888, %v1949
    %v2038 = vadd.f32 %v1889, %v1937
    %v2039 = vadd.f32 %v1890, %v1941
    %v2040 = vadd.f32 %v1891, %v1945
    %v2041 = vadd.f32 %v1892, %v1949
    %v2042 = vadd.f32 %v1893, %v1937
    %v2043 = vadd.f32 %v1894, %v1941
    %v2044 = vadd.f32 %v1895, %v1945
    %v2045 = vadd.f32 %v1896, %v1949
    %v2046 = vadd.f32 %v1897, %v1937
    %v2047 = vadd.f32 %v1898, %v1941
    %v2048 = vadd.f32 %v1899, %v1945
    %v2049 = vadd.f32 %v1900, %v1949
    %v2050 = vadd.f32 %v1901, %v1937
    %v2051 = vadd.f32 %v1902, %v1941
    %v2052 = vadd.f32 %v1903, %v1945
    %v2053 = vadd.f32 %v1904, %v1949
    %v2054 = vadd.f32 %v1905, %v1937
    %v2055 = vadd.f32 %v1906, %v1941
    %v2056 = vadd.f32 %v1907, %v1945
    %v2057 = vadd.f32 %v1908, %v1949
    %v2058 = vadd.f32 %v1909, %v1937
    %v2059 = vadd.f32 %v1910, %v1941
    %v2060 = vadd.f32 %v1911, %v1945
    %v2061 = vadd.f32 %v1912, %v1949
    %v2062 = vadd.f32 %v1913, %v1937
    %v2063 = vadd.f32 %v1914, %v1941
    %v2064 = vadd.f32 %v1915, %v1945
    %v2065 = vadd.f32 %v1916, %v1949
    %v2066 = vadd.f32 %v1917, %v1937
    %v2067 = vadd.f32 %v1918, %v1941
    %v2068 = vadd.f32 %v1919, %v1945
    %v2069 = vadd.f32 %v1920, %v1949
    %v2070 = vadd.f32 %v1921, %v1937
    %v2071 = vadd.f32 %v1922, %v1941
    %v2072 = vadd.f32 %v1923, %v1945
    %v2073 = vadd.f32 %v1924, %v1949
    %v2074 = vadd.f32 %v1925, %v1937
    %v2075 = vadd.f32 %v1926, %v1941
    %v2076 = vadd.f32 %v1927, %v1945
    %v2077 = vadd.f32 %v1928, %v1949
    %v2078 = vadd.f32 %v1929, %v1937
    %v2079 = vadd.f32 %v1930, %v1941
    %v2080 = vadd.f32 %v1931, %v1945
    %v2081 = vadd.f32 %v1932, %v1949
    %v2082 = vmax.f32 %v1954, 0.0
    %v2083 = vmax.f32 %v1955, 0.0
    %v2084 = vmax.f32 %v1956, 0.0
    %v2085 = vmax.f32 %v1957, 0.0
    %v2086 = vmax.f32 %v1958, 0.0
    %v2087 = vmax.f32 %v1959, 0.0
    %v2088 = vmax.f32 %v1960, 0.0
    %v2089 = vmax.f32 %v1961, 0.0
    %v2090 = vmax.f32 %v1962, 0.0
    %v2091 = vmax.f32 %v1963, 0.0
    %v2092 = vmax.f32 %v1964, 0.0
    %v2093 = vmax.f32 %v1965, 0.0
    %v2094 = vmax.f32 %v1966, 0.0
    %v2095 = vmax.f32 %v1967, 0.0
    %v2096 = vmax.f32 %v1968, 0.0
    %v2097 = vmax.f32 %v1969, 0.0
    %v2098 = vmax.f32 %v1970, 0.0
    %v2099 = vmax.f32 %v1971, 0.0
    %v2100 = vmax.f32 %v1972, 0.0
    %v2101 = vmax.f32 %v1973, 0.0
    %v2102 = vmax.f32 %v1974, 0.0
    %v2103 = vmax.f32 %v1975, 0.0
    %v2104 = vmax.f32 %v1976, 0.0
    %v2105 = vmax.f32 %v1977, 0.0
    %v2106 = vmax.f32 %v1978, 0.0
    %v2107 = vmax.f32 %v1979, 0.0
    %v2108 = vmax.f32 %v1980, 0.0
    %v2109 = vmax.f32 %v1981, 0.0
    %v2110 = vmax.f32 %v1982, 0.0
    %v2111 = vmax.f32 %v1983, 0.0
    %v2112 = vmax.f32 %v1984, 0.0
    %v2113 = vmax.f32 %v1985, 0.0
    %v2114 = vmax.f32 %v1986, 0.0
    %v2115 = vmax.f32 %v1987, 0.0
    %v2116 = vmax.f32 %v1988, 0.0
    %v2117 = vmax.f32 %v1989, 0.0
    %v2118 = vmax.f32 %v1990, 0.0
    %v2119 = vmax.f32 %v1991, 0.0
    %v2120 = vmax.f32 %v1992, 0.0
    %v2121 = vmax.f32 %v1993, 0.0
    %v2122 = vmax.f32 %v1994, 0.0
    %v2123 = vmax.f32 %v1995, 0.0
    %v2124 = vmax.f32 %v1996, 0.0
    %v2125 = vmax.f32 %v1997, 0.0
    %v2126 = vmax.f32 %v1998, 0.0
    %v2127 = vmax.f32 %v1999, 0.0
    %v2128 = vmax.f32 %v2000, 0.0
    %v2129 = vmax.f32 %v2001, 0.0
    %v2130 = vmax.f32 %v2002, 0.0
    %v2131 = vmax.f32 %v2003, 0.0
    %v2132 = vmax.f32 %v2004, 0.0
    %v2133 = vmax.f32 %v2005, 0.0
    %v2134 = vmax.f32 %v2006, 0.0
    %v2135 = vmax.f32 %v2007, 0.0
    %v2136 = vmax.f32 %v2008, 0.0
    %v2137 = vmax.f32 %v2009, 0.0
    %v2138 = vmax.f32 %v2010, 0.0
    %v2139 = vmax.f32 %v2011, 0.0
    %v2140 = vmax.f32 %v2012, 0.0
    %v2141 = vmax.f32 %v2013, 0.0
    %v2142 = vmax.f32 %v2014, 0.0
    %v2143 = vmax.f32 %v2015, 0.0
    %v2144 = vmax.f32 %v2016, 0.0
    %v2145 = vmax.f32 %v2017, 0.0
    %v2146 = vmax.f32 %v2018, 0.0
    %v2147 = vmax.f32 %v2019, 0.0
    %v2148 = vmax.f32 %v2020, 0.0
    %v2149 = vmax.f32 %v2021, 0.0
    %v2150 = vmax.f32 %v2022, 0.0
    %v2151 = vmax.f32 %v2023, 0.0
    %v2152 = vmax.f32 %v2024, 0.0
    %v2153 = vmax.f32 %v2025, 0.0
    %v2154 = vmax.f32 %v2026, 0.0
    %v2155 = vmax.f32 %v2027, 0.0
    %v2156 = vmax.f32 %v2028, 0.0
    %v2157 = vmax.f32 %v2029, 0.0
    %v2158 = vmax.f32 %v2030, 0.0
    %v2159 = vmax.f32 %v2031, 0.0
    %v2160 = vmax.f32 %v2032, 0.0
    %v2161 = vmax.f32 %v2033, 0.0
    %v2162 = vmax.f32 %v2034, 0.0
    %v2163 = vmax.f32 %v2035, 0.0
    %v2164 = vmax.f32 %v2036, 0.0
    %v2165 = vmax.f32 %v2037, 0.0
    %v2166 = vmax.f32 %v2038, 0.0
    %v2167 = vmax.f32 %v2039, 0.0
    %v2168 = vmax.f32 %v2040, 0.0
    %v2169 = vmax.f32 %v2041, 0.0
    %v2170 = vmax.f32 %v2042, 0.0
    %v2171 = vmax.f32 %v2043, 0.0
    %v2172 = vmax.f32 %v2044, 0.0
    %v2173 = vmax.f32 %v2045, 0.0
    %v2174 = vmax.f32 %v2046, 0.0
    %v2175 = vmax.f32 %v2047, 0.0
    %v2176 = vmax.f32 %v2048, 0.0
    %v2177 = vmax.f32 %v2049, 0.0
    %v2178 = vmax.f32 %v2050, 0.0
    %v2179 = vmax.f32 %v2051, 0.0
    %v2180 = vmax.f32 %v2052, 0.0
    %v2181 = vmax.f32 %v2053, 0.0
    %v2182 = vmax.f32 %v2054, 0.0
    %v2183 = vmax.f32 %v2055, 0.0
    %v2184 = vmax.f32 %v2056, 0.0
    %v2185 = vmax.f32 %v2057, 0.0
    %v2186 = vmax.f32 %v2058, 0.0
    %v2187 = vmax.f32 %v2059, 0.0
    %v2188 = vmax.f32 %v2060, 0.0
    %v2189 = vmax.f32 %v2061, 0.0
    %v2190 = vmax.f32 %v2062, 0.0
    %v2191 = vmax.f32 %v2063, 0.0
    %v2192 = vmax.f32 %v2064, 0.0
    %v2193 = vmax.f32 %v2065, 0.0
    %v2194 = vmax.f32 %v2066, 0.0
    %v2195 = vmax.f32 %v2067, 0.0
    %v2196 = vmax.f32 %v2068, 0.0
    %v2197 = vmax.f32 %v2069, 0.0
    %v2198 = vmax.f32 %v2070, 0.0
    %v2199 = vmax.f32 %v2071, 0.0
    %v2200 = vmax.f32 %v2072, 0.0
    %v2201 = vmax.f32 %v2073, 0.0
    %v2202 = vmax.f32 %v2074, 0.0
    %v2203 = vmax.f32 %v2075, 0.0
    %v2204 = vmax.f32 %v2076, 0.0
    %v2205 = vmax.f32 %v2077, 0.0
    %v2206 = vmax.f32 %v2078, 0.0
    %v2207 = vmax.f32 %v2079, 0.0
    %v2208 = vmax.f32 %v2080, 0.0
    %v2209 = vmax.f32 %v2081, 0.0
    %s2210 = smul.u32 8, 50
    %s2211 = smul.u32 %s2210, 4
    %s2212 = sshll.u32 %s2211, 4
    %2213 = dma.done %s210, %s2212
    %v2214 = vld [vmem:[#allocation3] sm:$0xff]
    %v2215 = vld [vmem:[#allocation3 + $0x8] sm:$0xff]
    %v2216 = vld [vmem:[#allocation3 + $0x10] sm:$0xff]
    %v2217 = vld [vmem:[#allocation3 + $0x18] sm:$0xff]
    %v2218 = vld [vmem:[#allocation3 + $0x20] sm:$0xff]
    %v2219 = vld [vmem:[#allocation3 + $0x28] sm:$0xff]
    %v2220 = vld [vmem:[#allocation3 + $0x30] sm:$0xff]
    %v2221 = vld [vmem:[#allocation3 + $0x38] sm:$0xff]
    %v2222 = vld [vmem:[#allocation3 + $0x40] sm:$0xff]
    %v2223 = vld [vmem:[#allocation3 + $0x48] sm:$0xff]
    %v2224 = vld [vmem:[#allocation3 + $0x50] sm:$0xff]
    %v2225 = vld [vmem:[#allocation3 + $0x58] sm:$0xff]
    %v2226 = vld [vmem:[#allocation3 + $0x60] sm:$0xff]
    %v2227 = vld [vmem:[#allocation3 + $0x68] sm:$0xff]
    %v2228 = vld [vmem:[#allocation3 + $0x70] sm:$0xff]
    %v2229 = vld [vmem:[#allocation3 + $0x78] sm:$0xff]
    %v2230 = vld [vmem:[#allocation3 + $0x80] sm:$0xff]
    %v2231 = vld [vmem:[#allocation3 + $0x88] sm:$0xff]
    %v2232 = vld [vmem:[#allocation3 + $0x90] sm:$0xff]
    %v2233 = vld [vmem:[#allocation3 + $0x98] sm:$0xff]
    %v2234 = vld [vmem:[#allocation3 + $0xa0] sm:$0xff]
    %v2235 = vld [vmem:[#allocation3 + $0xa8] sm:$0xff]
    %v2236 = vld [vmem:[#allocation3 + $0xb0] sm:$0xff]
    %v2237 = vld [vmem:[#allocation3 + $0xb8] sm:$0xff]
    %v2238 = vld [vmem:[#allocation3 + $0xc0] sm:$0xff]
    %v2239 = vld [vmem:[#allocation3 + $0xc8] sm:$0xff]
    %v2240 = vld [vmem:[#allocation3 + $0xd0] sm:$0xff]
    %v2241 = vld [vmem:[#allocation3 + $0xd8] sm:$0xff]
    %v2242 = vld [vmem:[#allocation3 + $0xe0] sm:$0xff]
    %v2243 = vld [vmem:[#allocation3 + $0xe8] sm:$0xff]
    %v2244 = vld [vmem:[#allocation3 + $0xf0] sm:$0xff]
    %v2245 = vld [vmem:[#allocation3 + $0xf8] sm:$0xff]
    %v2246 = vld [vmem:[#allocation3 + $0x100] sm:$0xff]
    %v2247 = vld [vmem:[#allocation3 + $0x108] sm:$0xff]
    %v2248 = vld [vmem:[#allocation3 + $0x110] sm:$0xff]
    %v2249 = vld [vmem:[#allocation3 + $0x118] sm:$0xff]
    %v2250 = vld [vmem:[#allocation3 + $0x120] sm:$0xff]
    %v2251 = vld [vmem:[#allocation3 + $0x128] sm:$0xff]
    %v2252 = vld [vmem:[#allocation3 + $0x130] sm:$0xff]
    %v2253 = vld [vmem:[#allocation3 + $0x138] sm:$0xff]
    %v2254 = vld [vmem:[#allocation3 + $0x140] sm:$0xff]
    %v2255 = vld [vmem:[#allocation3 + $0x148] sm:$0xff]
    %v2256 = vld [vmem:[#allocation3 + $0x150] sm:$0xff]
    %v2257 = vld [vmem:[#allocation3 + $0x158] sm:$0xff]
    %v2258 = vld [vmem:[#allocation3 + $0x160] sm:$0xff]
    %v2259 = vld [vmem:[#allocation3 + $0x168] sm:$0xff]
    %v2260 = vld [vmem:[#allocation3 + $0x170] sm:$0xff]
    %v2261 = vld [vmem:[#allocation3 + $0x178] sm:$0xff]
    %v2262 = vld [vmem:[#allocation3 + $0x180] sm:$0xff]
    %v2263 = vld [vmem:[#allocation3 + $0x188] sm:$0xff]
    %v2264 = vld [vmem:[#allocation3 + $0x190] sm:$0xff]
    %v2265 = vld [vmem:[#allocation3 + $0x198] sm:$0xff]
    %v2266 = vld [vmem:[#allocation3 + $0x1a0] sm:$0xff]
    %v2267 = vld [vmem:[#allocation3 + $0x1a8] sm:$0xff]
    %v2268 = vld [vmem:[#allocation3 + $0x1b0] sm:$0xff]
    %v2269 = vld [vmem:[#allocation3 + $0x1b8] sm:$0xff]
    %v2270 = vld [vmem:[#allocation3 + $0x1c0] sm:$0xff]
    %v2271 = vld [vmem:[#allocation3 + $0x1c8] sm:$0xff]
    %v2272 = vld [vmem:[#allocation3 + $0x1d0] sm:$0xff]
    %v2273 = vld [vmem:[#allocation3 + $0x1d8] sm:$0xff]
    %v2274 = vld [vmem:[#allocation3 + $0x1e0] sm:$0xff]
    %v2275 = vld [vmem:[#allocation3 + $0x1e8] sm:$0xff]
    %v2276 = vld [vmem:[#allocation3 + $0x1f0] sm:$0xff]
    %v2277 = vld [vmem:[#allocation3 + $0x1f8] sm:$0xff]
    %v2278 = vld [vmem:[#allocation3 + $0x200] sm:$0xff]
    %v2279 = vld [vmem:[#allocation3 + $0x208] sm:$0xff]
    %v2280 = vld [vmem:[#allocation3 + $0x210] sm:$0xff]
    %v2281 = vld [vmem:[#allocation3 + $0x218] sm:$0xff]
    %v2282 = vld [vmem:[#allocation3 + $0x220] sm:$0xff]
    %v2283 = vld [vmem:[#allocation3 + $0x228] sm:$0xff]
    %v2284 = vld [vmem:[#allocation3 + $0x230] sm:$0xff]
    %v2285 = vld [vmem:[#allocation3 + $0x238] sm:$0xff]
    %v2286 = vld [vmem:[#allocation3 + $0x240] sm:$0xff]
    %v2287 = vld [vmem:[#allocation3 + $0x248] sm:$0xff]
    %v2288 = vld [vmem:[#allocation3 + $0x250] sm:$0xff]
    %v2289 = vld [vmem:[#allocation3 + $0x258] sm:$0xff]
    %v2290 = vld [vmem:[#allocation3 + $0x260] sm:$0xff]
    %v2291 = vld [vmem:[#allocation3 + $0x268] sm:$0xff]
    %v2292 = vld [vmem:[#allocation3 + $0x270] sm:$0xff]
    %v2293 = vld [vmem:[#allocation3 + $0x278] sm:$0xff]
    %v2294 = vld [vmem:[#allocation3 + $0x280] sm:$0xff]
    %v2295 = vld [vmem:[#allocation3 + $0x288] sm:$0xff]
    %v2296 = vld [vmem:[#allocation3 + $0x290] sm:$0xff]
    %v2297 = vld [vmem:[#allocation3 + $0x298] sm:$0xff]
    %v2298 = vld [vmem:[#allocation3 + $0x2a0] sm:$0xff]
    %v2299 = vld [vmem:[#allocation3 + $0x2a8] sm:$0xff]
    %v2300 = vld [vmem:[#allocation3 + $0x2b0] sm:$0xff]
    %v2301 = vld [vmem:[#allocation3 + $0x2b8] sm:$0xff]
    %v2302 = vld [vmem:[#allocation3 + $0x2c0] sm:$0xff]
    %v2303 = vld [vmem:[#allocation3 + $0x2c8] sm:$0xff]
    %v2304 = vld [vmem:[#allocation3 + $0x2d0] sm:$0xff]
    %v2305 = vld [vmem:[#allocation3 + $0x2d8] sm:$0xff]
    %v2306 = vld [vmem:[#allocation3 + $0x2e0] sm:$0xff]
    %v2307 = vld [vmem:[#allocation3 + $0x2e8] sm:$0xff]
    %v2308 = vld [vmem:[#allocation3 + $0x2f0] sm:$0xff]
    %v2309 = vld [vmem:[#allocation3 + $0x2f8] sm:$0xff]
    %v2310 = vld [vmem:[#allocation3 + $0x300] sm:$0xff]
    %v2311 = vld [vmem:[#allocation3 + $0x308] sm:$0xff]
    %v2312 = vld [vmem:[#allocation3 + $0x310] sm:$0xff]
    %v2313 = vld [vmem:[#allocation3 + $0x318] sm:$0xff]
    %v2314 = vld [vmem:[#allocation3 + $0x320] sm:$0xff]
    %v2315 = vld [vmem:[#allocation3 + $0x328] sm:$0xff]
    %v2316 = vld [vmem:[#allocation3 + $0x330] sm:$0xff]
    %v2317 = vld [vmem:[#allocation3 + $0x338] sm:$0xff]
    %v2318 = vld [vmem:[#allocation3 + $0x340] sm:$0xff]
    %v2319 = vld [vmem:[#allocation3 + $0x348] sm:$0xff]
    %v2320 = vld [vmem:[#allocation3 + $0x350] sm:$0xff]
    %v2321 = vld [vmem:[#allocation3 + $0x358] sm:$0xff]
    %v2322 = vld [vmem:[#allocation3 + $0x360] sm:$0xff]
    %v2323 = vld [vmem:[#allocation3 + $0x368] sm:$0xff]
    %v2324 = vld [vmem:[#allocation3 + $0x370] sm:$0xff]
    %v2325 = vld [vmem:[#allocation3 + $0x378] sm:$0xff]
    %v2326 = vld [vmem:[#allocation3 + $0x380] sm:$0xff]
    %v2327 = vld [vmem:[#allocation3 + $0x388] sm:$0xff]
    %v2328 = vld [vmem:[#allocation3 + $0x390] sm:$0xff]
    %v2329 = vld [vmem:[#allocation3 + $0x398] sm:$0xff]
    %v2330 = vld [vmem:[#allocation3 + $0x3a0] sm:$0xff]
    %v2331 = vld [vmem:[#allocation3 + $0x3a8] sm:$0xff]
    %v2332 = vld [vmem:[#allocation3 + $0x3b0] sm:$0xff]
    %v2333 = vld [vmem:[#allocation3 + $0x3b8] sm:$0xff]
    %v2334 = vld [vmem:[#allocation3 + $0x3c0] sm:$0xff]
    %v2335 = vld [vmem:[#allocation3 + $0x3c8] sm:$0xff]
    %v2336 = vld [vmem:[#allocation3 + $0x3d0] sm:$0xff]
    %v2337 = vld [vmem:[#allocation3 + $0x3d8] sm:$0xff]
    %v2338 = vld [vmem:[#allocation3 + $0x3e0] sm:$0xff]
    %v2339 = vld [vmem:[#allocation3 + $0x3e8] sm:$0xff]
    %v2340 = vld [vmem:[#allocation3 + $0x3f0] sm:$0xff]
    %v2341 = vld [vmem:[#allocation3 + $0x3f8] sm:$0xff]
    %v2342 = vld [vmem:[#allocation3 + $0x400] sm:$0xff]
    %v2343 = vld [vmem:[#allocation3 + $0x408] sm:$0xff]
    %v2344 = vld [vmem:[#allocation3 + $0x410] sm:$0xff]
    %v2345 = vld [vmem:[#allocation3 + $0x418] sm:$0xff]
    %v2346 = vld [vmem:[#allocation3 + $0x420] sm:$0xff]
    %v2347 = vld [vmem:[#allocation3 + $0x428] sm:$0xff]
    %v2348 = vld [vmem:[#allocation3 + $0x430] sm:$0xff]
    %v2349 = vld [vmem:[#allocation3 + $0x438] sm:$0xff]
    %v2350 = vld [vmem:[#allocation3 + $0x440] sm:$0xff]
    %v2351 = vld [vmem:[#allocation3 + $0x448] sm:$0xff]
    %v2352 = vld [vmem:[#allocation3 + $0x450] sm:$0xff]
    %v2353 = vld [vmem:[#allocation3 + $0x458] sm:$0xff]
    %v2354 = vld [vmem:[#allocation3 + $0x460] sm:$0xff]
    %v2355 = vld [vmem:[#allocation3 + $0x468] sm:$0xff]
    %v2356 = vld [vmem:[#allocation3 + $0x470] sm:$0xff]
    %v2357 = vld [vmem:[#allocation3 + $0x478] sm:$0xff]
    %v2358 = vld [vmem:[#allocation3 + $0x480] sm:$0xff]
    %v2359 = vld [vmem:[#allocation3 + $0x488] sm:$0xff]
    %v2360 = vld [vmem:[#allocation3 + $0x490] sm:$0xff]
    %v2361 = vld [vmem:[#allocation3 + $0x498] sm:$0xff]
    %v2362 = vld [vmem:[#allocation3 + $0x4a0] sm:$0xff]
    %v2363 = vld [vmem:[#allocation3 + $0x4a8] sm:$0xff]
    %v2364 = vld [vmem:[#allocation3 + $0x4b0] sm:$0xff]
    %v2365 = vld [vmem:[#allocation3 + $0x4b8] sm:$0xff]
    %v2366 = vld [vmem:[#allocation3 + $0x4c0] sm:$0xff]
    %v2367 = vld [vmem:[#allocation3 + $0x4c8] sm:$0xff]
    %v2368 = vld [vmem:[#allocation3 + $0x4d0] sm:$0xff]
    %v2369 = vld [vmem:[#allocation3 + $0x4d8] sm:$0xff]
    %v2370 = vld [vmem:[#allocation3 + $0x4e0] sm:$0xff]
    %v2371 = vld [vmem:[#allocation3 + $0x4e8] sm:$0xff]
    %v2372 = vld [vmem:[#allocation3 + $0x4f0] sm:$0xff]
    %v2373 = vld [vmem:[#allocation3 + $0x4f8] sm:$0xff]
    %v2374 = vld [vmem:[#allocation3 + $0x500] sm:$0xff]
    %v2375 = vld [vmem:[#allocation3 + $0x508] sm:$0xff]
    %v2376 = vld [vmem:[#allocation3 + $0x510] sm:$0xff]
    %v2377 = vld [vmem:[#allocation3 + $0x518] sm:$0xff]
    %v2378 = vld [vmem:[#allocation3 + $0x520] sm:$0xff]
    %v2379 = vld [vmem:[#allocation3 + $0x528] sm:$0xff]
    %v2380 = vld [vmem:[#allocation3 + $0x530] sm:$0xff]
    %v2381 = vld [vmem:[#allocation3 + $0x538] sm:$0xff]
    %v2382 = vld [vmem:[#allocation3 + $0x540] sm:$0xff]
    %v2383 = vld [vmem:[#allocation3 + $0x548] sm:$0xff]
    %v2384 = vld [vmem:[#allocation3 + $0x550] sm:$0xff]
    %v2385 = vld [vmem:[#allocation3 + $0x558] sm:$0xff]
    %v2386 = vld [vmem:[#allocation3 + $0x560] sm:$0xff]
    %v2387 = vld [vmem:[#allocation3 + $0x568] sm:$0xff]
    %v2388 = vld [vmem:[#allocation3 + $0x570] sm:$0xff]
    %v2389 = vld [vmem:[#allocation3 + $0x578] sm:$0xff]
    %v2390 = vld [vmem:[#allocation3 + $0x580] sm:$0xff]
    %v2391 = vld [vmem:[#allocation3 + $0x588] sm:$0xff]
    %v2392 = vld [vmem:[#allocation3 + $0x590] sm:$0xff]
    %v2393 = vld [vmem:[#allocation3 + $0x598] sm:$0xff]
    %v2394 = vld [vmem:[#allocation3 + $0x5a0] sm:$0xff]
    %v2395 = vld [vmem:[#allocation3 + $0x5a8] sm:$0xff]
    %v2396 = vld [vmem:[#allocation3 + $0x5b0] sm:$0xff]
    %v2397 = vld [vmem:[#allocation3 + $0x5b8] sm:$0xff]
    %v2398 = vld [vmem:[#allocation3 + $0x5c0] sm:$0xff]
    %v2399 = vld [vmem:[#allocation3 + $0x5c8] sm:$0xff]
    %v2400 = vld [vmem:[#allocation3 + $0x5d0] sm:$0xff]
    %v2401 = vld [vmem:[#allocation3 + $0x5d8] sm:$0xff]
    %v2402 = vld [vmem:[#allocation3 + $0x5e0] sm:$0xff]
    %v2403 = vld [vmem:[#allocation3 + $0x5e8] sm:$0xff]
    %v2404 = vld [vmem:[#allocation3 + $0x5f0] sm:$0xff]
    %v2405 = vld [vmem:[#allocation3 + $0x5f8] sm:$0xff]
    %v2406 = vld [vmem:[#allocation3 + $0x600] sm:$0xff]
    %v2407 = vld [vmem:[#allocation3 + $0x608] sm:$0xff]
    %v2408 = vld [vmem:[#allocation3 + $0x610] sm:$0xff]
    %v2409 = vld [vmem:[#allocation3 + $0x618] sm:$0xff]
    %v2410 = vld [vmem:[#allocation3 + $0x620] sm:$0xff]
    %v2411 = vld [vmem:[#allocation3 + $0x628] sm:$0xff]
    %v2412 = vld [vmem:[#allocation3 + $0x630] sm:$0xff]
    %v2413 = vld [vmem:[#allocation3 + $0x638] sm:$0xff]
    %v2415 = vsel %vm1229, %v2085, 0
    %v2418 = vsel %vm1229, %v2089, 0
    %v2421 = vsel %vm1229, %v2093, 0
    %v2424 = vsel %vm1229, %v2097, 0
    %v2427 = vsel %vm1229, %v2101, 0
    %v2430 = vsel %vm1229, %v2105, 0
    %v2433 = vsel %vm1229, %v2109, 0
    %v2436 = vsel %vm1229, %v2113, 0
    %v2439 = vsel %vm1229, %v2117, 0
    %v2442 = vsel %vm1229, %v2121, 0
    %v2445 = vsel %vm1229, %v2125, 0
    %v2448 = vsel %vm1229, %v2129, 0
    %v2451 = vsel %vm1229, %v2133, 0
    %v2454 = vsel %vm1229, %v2137, 0
    %v2457 = vsel %vm1229, %v2141, 0
    %v2460 = vsel %vm1229, %v2145, 0
    %v2463 = vsel %vm1229, %v2149, 0
    %v2466 = vsel %vm1229, %v2153, 0
    %v2469 = vsel %vm1229, %v2157, 0
    %v2472 = vsel %vm1229, %v2161, 0
    %v2475 = vsel %vm1229, %v2165, 0
    %v2478 = vsel %vm1229, %v2169, 0
    %v2481 = vsel %vm1229, %v2173, 0
    %v2484 = vsel %vm1229, %v2177, 0
    %v2487 = vsel %vm1229, %v2181, 0
    %v2490 = vsel %vm1229, %v2185, 0
    %v2493 = vsel %vm1229, %v2189, 0
    %v2496 = vsel %vm1229, %v2193, 0
    %v2499 = vsel %vm1229, %v2197, 0
    %v2502 = vsel %vm1229, %v2201, 0
    %v2505 = vsel %vm1229, %v2205, 0
    %v2508 = vsel %vm1229, %v2209, 0
    %2510 = vmatprep.subr.mxu0 %v2275
    %2511 = vmatpush1.msra.mxu0 %v2274
    %2512 = vmatprep.subr.mxu0 %v2271
    %2513 = vmatpush1.msra.mxu0 %v2270
    %2514 = vmatprep.subr.mxu0 %v2267
    %2515 = vmatpush1.msra.mxu0 %v2266
    %2516 = vmatprep.subr.mxu0 %v2263
    %2517 = vmatpush1.msra.mxu0 %v2262
    %2518 = vmatprep.subr.mxu0 %v2259
    %2519 = vmatpush1.msra.mxu0 %v2258
    %2520 = vmatprep.subr.mxu0 %v2255
    %2521 = vmatpush1.msra.mxu0 %v2254
    %2522 = vmatprep.subr.mxu0 %v2251
    %2523 = vmatpush1.msra.mxu0 %v2250
    %2524 = vmatprep.subr.mxu0 %v2247
    %2525 = vmatpush1.msra.mxu0 %v2246
    %2526 = vmatprep.subr.mxu0 %v2243
    %2527 = vmatpush1.msra.mxu0 %v2242
    %2528 = vmatprep.subr.mxu0 %v2239
    %2529 = vmatpush1.msra.mxu0 %v2238
    %2530 = vmatprep.subr.mxu0 %v2235
    %2531 = vmatpush1.msra.mxu0 %v2234
    %2532 = vmatprep.subr.mxu0 %v2231
    %2533 = vmatpush1.msra.mxu0 %v2230
    %2534 = vmatprep.subr.mxu0 %v2227
    %2535 = vmatpush1.msra.mxu0 %v2226
    %2536 = vmatprep.subr.mxu0 %v2223
    %2537 = vmatpush1.msra.mxu0 %v2222
    %2538 = vmatprep.subr.mxu0 %v2219
    %2539 = vmatpush1.msra.mxu0 %v2218
    %2540 = vmatprep.subr.mxu0 %v2215
    %2541 = vmatpush1.msra.mxu0 %v2214
    %2542 = vmatprep.subr.mxu0 %v2339
    %2543 = vmatpush2.msra.mxu0 %v2338
    %2544 = vmatprep.subr.mxu0 %v2335
    %2545 = vmatpush2.msra.mxu0 %v2334
    %2546 = vmatprep.subr.mxu0 %v2331
    %2547 = vmatpush2.msra.mxu0 %v2330
    %2548 = vmatprep.subr.mxu0 %v2327
    %2549 = vmatpush2.msra.mxu0 %v2326
    %2550 = vmatprep.subr.mxu0 %v2323
    %2551 = vmatpush2.msra.mxu0 %v2322
    %2552 = vmatprep.subr.mxu0 %v2319
    %2553 = vmatpush2.msra.mxu0 %v2318
    %2554 = vmatprep.subr.mxu0 %v2315
    %2555 = vmatpush2.msra.mxu0 %v2314
    %2556 = vmatprep.subr.mxu0 %v2311
    %2557 = vmatpush2.msra.mxu0 %v2310
    %2558 = vmatprep.subr.mxu0 %v2307
    %2559 = vmatpush2.msra.mxu0 %v2306
    %2560 = vmatprep.subr.mxu0 %v2303
    %2561 = vmatpush2.msra.mxu0 %v2302
    %2562 = vmatprep.subr.mxu0 %v2299
    %2563 = vmatpush2.msra.mxu0 %v2298
    %2564 = vmatprep.subr.mxu0 %v2295
    %2565 = vmatpush2.msra.mxu0 %v2294
    %2566 = vmatprep.subr.mxu0 %v2291
    %2567 = vmatpush2.msra.mxu0 %v2290
    %2568 = vmatprep.subr.mxu0 %v2287
    %2569 = vmatpush2.msra.mxu0 %v2286
    %2570 = vmatprep.subr.mxu0 %v2283
    %2571 = vmatpush2.msra.mxu0 %v2282
    %2572 = vmatprep.subr.mxu0 %v2279
    %2573 = vmatpush2.msra.mxu0 %v2278
    %2574 = vmatprep.mubr.f32.mxu0 %v2083
    %2575 = vmatmul.mubr.f32.gmra.mxu0 %v2082
    %v2576 = vpop.f32.mrf.mxu0
    %v2577 = vadd.f32 0.0, %v2576
    %v2578 = vpop.f32.mrf.mxu0
    %v2579 = vadd.f32 0.0, %v2578
    %2580 = vmatprep.mubr.f32.mxu0 %v2087
    %2581 = vmatmul.mubr.f32.gmra.mxu0 %v2086
    %v2582 = vpop.f32.mrf.mxu0
    %v2583 = vadd.f32 0.0, %v2582
    %v2584 = vpop.f32.mrf.mxu0
    %v2585 = vadd.f32 0.0, %v2584
    %2586 = vmatprep.mubr.f32.mxu0 %v2091
    %2587 = vmatmul.mubr.f32.gmra.mxu0 %v2090
    %v2588 = vpop.f32.mrf.mxu0
    %v2589 = vadd.f32 0.0, %v2588
    %v2590 = vpop.f32.mrf.mxu0
    %v2591 = vadd.f32 0.0, %v2590
    %2592 = vmatprep.mubr.f32.mxu0 %v2095
    %2593 = vmatmul.mubr.f32.gmra.mxu0 %v2094
    %v2594 = vpop.f32.mrf.mxu0
    %v2595 = vadd.f32 0.0, %v2594
    %v2596 = vpop.f32.mrf.mxu0
    %v2597 = vadd.f32 0.0, %v2596
    %2598 = vmatprep.mubr.f32.mxu0 %v2099
    %2599 = vmatmul.mubr.f32.gmra.mxu0 %v2098
    %v2600 = vpop.f32.mrf.mxu0
    %v2601 = vadd.f32 0.0, %v2600
    %v2602 = vpop.f32.mrf.mxu0
    %v2603 = vadd.f32 0.0, %v2602
    %2604 = vmatprep.mubr.f32.mxu0 %v2103
    %2605 = vmatmul.mubr.f32.gmra.mxu0 %v2102
    %v2606 = vpop.f32.mrf.mxu0
    %v2607 = vadd.f32 0.0, %v2606
    %v2608 = vpop.f32.mrf.mxu0
    %v2609 = vadd.f32 0.0, %v2608
    %2610 = vmatprep.mubr.f32.mxu0 %v2107
    %2611 = vmatmul.mubr.f32.gmra.mxu0 %v2106
    %v2612 = vpop.f32.mrf.mxu0
    %v2613 = vadd.f32 0.0, %v2612
    %v2614 = vpop.f32.mrf.mxu0
    %v2615 = vadd.f32 0.0, %v2614
    %2616 = vmatprep.mubr.f32.mxu0 %v2111
    %2617 = vmatmul.mubr.f32.gmra.mxu0 %v2110
    %v2618 = vpop.f32.mrf.mxu0
    %v2619 = vadd.f32 0.0, %v2618
    %v2620 = vpop.f32.mrf.mxu0
    %v2621 = vadd.f32 0.0, %v2620
    %2622 = vmatprep.mubr.f32.mxu0 %v2115
    %2623 = vmatmul.mubr.f32.gmra.mxu0 %v2114
    %v2624 = vpop.f32.mrf.mxu0
    %v2625 = vadd.f32 0.0, %v2624
    %v2626 = vpop.f32.mrf.mxu0
    %v2627 = vadd.f32 0.0, %v2626
    %2628 = vmatprep.mubr.f32.mxu0 %v2119
    %2629 = vmatmul.mubr.f32.gmra.mxu0 %v2118
    %v2630 = vpop.f32.mrf.mxu0
    %v2631 = vadd.f32 0.0, %v2630
    %v2632 = vpop.f32.mrf.mxu0
    %v2633 = vadd.f32 0.0, %v2632
    %2634 = vmatprep.mubr.f32.mxu0 %v2123
    %2635 = vmatmul.mubr.f32.gmra.mxu0 %v2122
    %v2636 = vpop.f32.mrf.mxu0
    %v2637 = vadd.f32 0.0, %v2636
    %v2638 = vpop.f32.mrf.mxu0
    %v2639 = vadd.f32 0.0, %v2638
    %2640 = vmatprep.mubr.f32.mxu0 %v2127
    %2641 = vmatmul.mubr.f32.gmra.mxu0 %v2126
    %v2642 = vpop.f32.mrf.mxu0
    %v2643 = vadd.f32 0.0, %v2642
    %v2644 = vpop.f32.mrf.mxu0
    %v2645 = vadd.f32 0.0, %v2644
    %2646 = vmatprep.mubr.f32.mxu0 %v2131
    %2647 = vmatmul.mubr.f32.gmra.mxu0 %v2130
    %v2648 = vpop.f32.mrf.mxu0
    %v2649 = vadd.f32 0.0, %v2648
    %v2650 = vpop.f32.mrf.mxu0
    %v2651 = vadd.f32 0.0, %v2650
    %2652 = vmatprep.mubr.f32.mxu0 %v2135
    %2653 = vmatmul.mubr.f32.gmra.mxu0 %v2134
    %v2654 = vpop.f32.mrf.mxu0
    %v2655 = vadd.f32 0.0, %v2654
    %v2656 = vpop.f32.mrf.mxu0
    %v2657 = vadd.f32 0.0, %v2656
    %2658 = vmatprep.mubr.f32.mxu0 %v2139
    %2659 = vmatmul.mubr.f32.gmra.mxu0 %v2138
    %v2660 = vpop.f32.mrf.mxu0
    %v2661 = vadd.f32 0.0, %v2660
    %v2662 = vpop.f32.mrf.mxu0
    %v2663 = vadd.f32 0.0, %v2662
    %2664 = vmatprep.mubr.f32.mxu0 %v2143
    %2665 = vmatmul.mubr.f32.gmra.mxu0 %v2142
    %v2666 = vpop.f32.mrf.mxu0
    %v2667 = vadd.f32 0.0, %v2666
    %v2668 = vpop.f32.mrf.mxu0
    %v2669 = vadd.f32 0.0, %v2668
    %2670 = vmatprep.mubr.f32.mxu0 %v2147
    %2671 = vmatmul.mubr.f32.gmra.mxu0 %v2146
    %v2672 = vpop.f32.mrf.mxu0
    %v2673 = vadd.f32 0.0, %v2672
    %v2674 = vpop.f32.mrf.mxu0
    %v2675 = vadd.f32 0.0, %v2674
    %2676 = vmatprep.mubr.f32.mxu0 %v2151
    %2677 = vmatmul.mubr.f32.gmra.mxu0 %v2150
    %v2678 = vpop.f32.mrf.mxu0
    %v2679 = vadd.f32 0.0, %v2678
    %v2680 = vpop.f32.mrf.mxu0
    %v2681 = vadd.f32 0.0, %v2680
    %2682 = vmatprep.mubr.f32.mxu0 %v2155
    %2683 = vmatmul.mubr.f32.gmra.mxu0 %v2154
    %v2684 = vpop.f32.mrf.mxu0
    %v2685 = vadd.f32 0.0, %v2684
    %v2686 = vpop.f32.mrf.mxu0
    %v2687 = vadd.f32 0.0, %v2686
    %2688 = vmatprep.mubr.f32.mxu0 %v2159
    %2689 = vmatmul.mubr.f32.gmra.mxu0 %v2158
    %v2690 = vpop.f32.mrf.mxu0
    %v2691 = vadd.f32 0.0, %v2690
    %v2692 = vpop.f32.mrf.mxu0
    %v2693 = vadd.f32 0.0, %v2692
    %2694 = vmatprep.mubr.f32.mxu0 %v2163
    %2695 = vmatmul.mubr.f32.gmra.mxu0 %v2162
    %v2696 = vpop.f32.mrf.mxu0
    %v2697 = vadd.f32 0.0, %v2696
    %v2698 = vpop.f32.mrf.mxu0
    %v2699 = vadd.f32 0.0, %v2698
    %2700 = vmatprep.mubr.f32.mxu0 %v2167
    %2701 = vmatmul.mubr.f32.gmra.mxu0 %v2166
    %v2702 = vpop.f32.mrf.mxu0
    %v2703 = vadd.f32 0.0, %v2702
    %v2704 = vpop.f32.mrf.mxu0
    %v2705 = vadd.f32 0.0, %v2704
    %2706 = vmatprep.mubr.f32.mxu0 %v2171
    %2707 = vmatmul.mubr.f32.gmra.mxu0 %v2170
    %v2708 = vpop.f32.mrf.mxu0
    %v2709 = vadd.f32 0.0, %v2708
    %v2710 = vpop.f32.mrf.mxu0
    %v2711 = vadd.f32 0.0, %v2710
    %2712 = vmatprep.mubr.f32.mxu0 %v2175
    %2713 = vmatmul.mubr.f32.gmra.mxu0 %v2174
    %v2714 = vpop.f32.mrf.mxu0
    %v2715 = vadd.f32 0.0, %v2714
    %v2716 = vpop.f32.mrf.mxu0
    %v2717 = vadd.f32 0.0, %v2716
    %2718 = vmatprep.mubr.f32.mxu0 %v2179
    %2719 = vmatmul.mubr.f32.gmra.mxu0 %v2178
    %v2720 = vpop.f32.mrf.mxu0
    %v2721 = vadd.f32 0.0, %v2720
    %v2722 = vpop.f32.mrf.mxu0
    %v2723 = vadd.f32 0.0, %v2722
    %2724 = vmatprep.mubr.f32.mxu0 %v2183
    %2725 = vmatmul.mubr.f32.gmra.mxu0 %v2182
    %v2726 = vpop.f32.mrf.mxu0
    %v2727 = vadd.f32 0.0, %v2726
    %v2728 = vpop.f32.mrf.mxu0
    %v2729 = vadd.f32 0.0, %v2728
    %2730 = vmatprep.mubr.f32.mxu0 %v2187
    %2731 = vmatmul.mubr.f32.gmra.mxu0 %v2186
    %v2732 = vpop.f32.mrf.mxu0
    %v2733 = vadd.f32 0.0, %v2732
    %v2734 = vpop.f32.mrf.mxu0
    %v2735 = vadd.f32 0.0, %v2734
    %2736 = vmatprep.mubr.f32.mxu0 %v2191
    %2737 = vmatmul.mubr.f32.gmra.mxu0 %v2190
    %v2738 = vpop.f32.mrf.mxu0
    %v2739 = vadd.f32 0.0, %v2738
    %v2740 = vpop.f32.mrf.mxu0
    %v2741 = vadd.f32 0.0, %v2740
    %2742 = vmatprep.mubr.f32.mxu0 %v2195
    %2743 = vmatmul.mubr.f32.gmra.mxu0 %v2194
    %v2744 = vpop.f32.mrf.mxu0
    %v2745 = vadd.f32 0.0, %v2744
    %v2746 = vpop.f32.mrf.mxu0
    %v2747 = vadd.f32 0.0, %v2746
    %2748 = vmatprep.mubr.f32.mxu0 %v2199
    %2749 = vmatmul.mubr.f32.gmra.mxu0 %v2198
    %v2750 = vpop.f32.mrf.mxu0
    %v2751 = vadd.f32 0.0, %v2750
    %v2752 = vpop.f32.mrf.mxu0
    %v2753 = vadd.f32 0.0, %v2752
    %2754 = vmatprep.mubr.f32.mxu0 %v2203
    %2755 = vmatmul.mubr.f32.gmra.mxu0 %v2202
    %v2756 = vpop.f32.mrf.mxu0
    %v2757 = vadd.f32 0.0, %v2756
    %v2758 = vpop.f32.mrf.mxu0
    %v2759 = vadd.f32 0.0, %v2758
    %2760 = vmatprep.mubr.f32.mxu0 %v2207
    %2761 = vmatmul.mubr.f32.gmra.mxu0 %v2206
    %v2762 = vpop.f32.mrf.mxu0
    %v2763 = vadd.f32 0.0, %v2762
    %v2764 = vpop.f32.mrf.mxu0
    %v2765 = vadd.f32 0.0, %v2764
    %2766 = vdwg.mxu0
    %2767 = vmatprep.subr.mxu0 %v2403
    %2768 = vmatpush1.msra.mxu0 %v2402
    %2769 = vmatprep.subr.mxu0 %v2399
    %2770 = vmatpush1.msra.mxu0 %v2398
    %2771 = vmatprep.subr.mxu0 %v2395
    %2772 = vmatpush1.msra.mxu0 %v2394
    %2773 = vmatprep.subr.mxu0 %v2391
    %2774 = vmatpush1.msra.mxu0 %v2390
    %2775 = vmatprep.subr.mxu0 %v2387
    %2776 = vmatpush1.msra.mxu0 %v2386
    %2777 = vmatprep.subr.mxu0 %v2383
    %2778 = vmatpush1.msra.mxu0 %v2382
    %2779 = vmatprep.subr.mxu0 %v2379
    %2780 = vmatpush1.msra.mxu0 %v2378
    %2781 = vmatprep.subr.mxu0 %v2375
    %2782 = vmatpush1.msra.mxu0 %v2374
    %2783 = vmatprep.subr.mxu0 %v2371
    %2784 = vmatpush1.msra.mxu0 %v2370
    %2785 = vmatprep.subr.mxu0 %v2367
    %2786 = vmatpush1.msra.mxu0 %v2366
    %2787 = vmatprep.subr.mxu0 %v2363
    %2788 = vmatpush1.msra.mxu0 %v2362
    %2789 = vmatprep.subr.mxu0 %v2359
    %2790 = vmatpush1.msra.mxu0 %v2358
    %2791 = vmatprep.subr.mxu0 %v2355
    %2792 = vmatpush1.msra.mxu0 %v2354
    %2793 = vmatprep.subr.mxu0 %v2351
    %2794 = vmatpush1.msra.mxu0 %v2350
    %2795 = vmatprep.subr.mxu0 %v2347
    %2796 = vmatpush1.msra.mxu0 %v2346
    %2797 = vmatprep.subr.mxu0 %v2343
    %2798 = vmatpush1.msra.mxu0 %v2342
    %2799 = vmatprep.subr.mxu0 0.0
    %2800 = vmatpush2.msra.mxu0 0.0
    %2801 = vmatprep.subr.mxu0 0.0
    %2802 = vmatpush2.msra.mxu0 0.0
    %2803 = vmatprep.subr.mxu0 0.0
    %2804 = vmatpush2.msra.mxu0 0.0
    %2805 = vmatprep.subr.mxu0 0.0
    %2806 = vmatpush2.msra.mxu0 0.0
    %2807 = vmatprep.subr.mxu0 0.0
    %2808 = vmatpush2.msra.mxu0 0.0
    %2809 = vmatprep.subr.mxu0 0.0
    %2810 = vmatpush2.msra.mxu0 0.0
    %2811 = vmatprep.subr.mxu0 0.0
    %2812 = vmatpush2.msra.mxu0 0.0
    %2813 = vmatprep.subr.mxu0 0.0
    %2814 = vmatpush2.msra.mxu0 0.0
    %2815 = vmatprep.subr.mxu0 0.0
    %2816 = vmatpush2.msra.mxu0 0.0
    %2817 = vmatprep.subr.mxu0 0.0
    %2818 = vmatpush2.msra.mxu0 0.0
    %2819 = vmatprep.subr.mxu0 0.0
    %2820 = vmatpush2.msra.mxu0 0.0
    %2821 = vmatprep.subr.mxu0 0.0
    %2822 = vmatpush2.msra.mxu0 0.0
    %2823 = vmatprep.subr.mxu0 0.0
    %2824 = vmatpush2.msra.mxu0 0.0
    %2825 = vmatprep.subr.mxu0 0.0
    %2826 = vmatpush2.msra.mxu0 0.0
    %2827 = vmatprep.subr.mxu0 %v2411
    %2828 = vmatpush2.msra.mxu0 %v2410
    %2829 = vmatprep.subr.mxu0 %v2407
    %2830 = vmatpush2.msra.mxu0 %v2406
    %2831 = vmatprep.mubr.f32.mxu0 %v2415
    %2832 = vmatmul.mubr.f32.gmra.mxu0 %v2084
    %v2833 = vpop.f32.mrf.mxu0
    %v2834 = vadd.f32 %v2577, %v2833
    %v2835 = vpop.f32.mrf.mxu0
    %v2836 = vadd.f32 %v2579, %v2835
    %2837 = vmatprep.mubr.f32.mxu0 %v2418
    %2838 = vmatmul.mubr.f32.gmra.mxu0 %v2088
    %v2839 = vpop.f32.mrf.mxu0
    %v2840 = vadd.f32 %v2583, %v2839
    %v2841 = vpop.f32.mrf.mxu0
    %v2842 = vadd.f32 %v2585, %v2841
    %2843 = vmatprep.mubr.f32.mxu0 %v2421
    %2844 = vmatmul.mubr.f32.gmra.mxu0 %v2092
    %v2845 = vpop.f32.mrf.mxu0
    %v2846 = vadd.f32 %v2589, %v2845
    %v2847 = vpop.f32.mrf.mxu0
    %v2848 = vadd.f32 %v2591, %v2847
    %2849 = vmatprep.mubr.f32.mxu0 %v2424
    %2850 = vmatmul.mubr.f32.gmra.mxu0 %v2096
    %v2851 = vpop.f32.mrf.mxu0
    %v2852 = vadd.f32 %v2595, %v2851
    %v2853 = vpop.f32.mrf.mxu0
    %v2854 = vadd.f32 %v2597, %v2853
    %2855 = vmatprep.mubr.f32.mxu0 %v2427
    %2856 = vmatmul.mubr.f32.gmra.mxu0 %v2100
    %v2857 = vpop.f32.mrf.mxu0
    %v2858 = vadd.f32 %v2601, %v2857
    %v2859 = vpop.f32.mrf.mxu0
    %v2860 = vadd.f32 %v2603, %v2859
    %2861 = vmatprep.mubr.f32.mxu0 %v2430
    %2862 = vmatmul.mubr.f32.gmra.mxu0 %v2104
    %v2863 = vpop.f32.mrf.mxu0
    %v2864 = vadd.f32 %v2607, %v2863
    %v2865 = vpop.f32.mrf.mxu0
    %v2866 = vadd.f32 %v2609, %v2865
    %2867 = vmatprep.mubr.f32.mxu0 %v2433
    %2868 = vmatmul.mubr.f32.gmra.mxu0 %v2108
    %v2869 = vpop.f32.mrf.mxu0
    %v2870 = vadd.f32 %v2613, %v2869
    %v2871 = vpop.f32.mrf.mxu0
    %v2872 = vadd.f32 %v2615, %v2871
    %2873 = vmatprep.mubr.f32.mxu0 %v2436
    %2874 = vmatmul.mubr.f32.gmra.mxu0 %v2112
    %v2875 = vpop.f32.mrf.mxu0
    %v2876 = vadd.f32 %v2619, %v2875
    %v2877 = vpop.f32.mrf.mxu0
    %v2878 = vadd.f32 %v2621, %v2877
    %2879 = vmatprep.mubr.f32.mxu0 %v2439
    %2880 = vmatmul.mubr.f32.gmra.mxu0 %v2116
    %v2881 = vpop.f32.mrf.mxu0
    %v2882 = vadd.f32 %v2625, %v2881
    %v2883 = vpop.f32.mrf.mxu0
    %v2884 = vadd.f32 %v2627, %v2883
    %2885 = vmatprep.mubr.f32.mxu0 %v2442
    %2886 = vmatmul.mubr.f32.gmra.mxu0 %v2120
    %v2887 = vpop.f32.mrf.mxu0
    %v2888 = vadd.f32 %v2631, %v2887
    %v2889 = vpop.f32.mrf.mxu0
    %v2890 = vadd.f32 %v2633, %v2889
    %2891 = vmatprep.mubr.f32.mxu0 %v2445
    %2892 = vmatmul.mubr.f32.gmra.mxu0 %v2124
    %v2893 = vpop.f32.mrf.mxu0
    %v2894 = vadd.f32 %v2637, %v2893
    %v2895 = vpop.f32.mrf.mxu0
    %v2896 = vadd.f32 %v2639, %v2895
    %2897 = vmatprep.mubr.f32.mxu0 %v2448
    %2898 = vmatmul.mubr.f32.gmra.mxu0 %v2128
    %v2899 = vpop.f32.mrf.mxu0
    %v2900 = vadd.f32 %v2643, %v2899
    %v2901 = vpop.f32.mrf.mxu0
    %v2902 = vadd.f32 %v2645, %v2901
    %2903 = vmatprep.mubr.f32.mxu0 %v2451
    %2904 = vmatmul.mubr.f32.gmra.mxu0 %v2132
    %v2905 = vpop.f32.mrf.mxu0
    %v2906 = vadd.f32 %v2649, %v2905
    %v2907 = vpop.f32.mrf.mxu0
    %v2908 = vadd.f32 %v2651, %v2907
    %2909 = vmatprep.mubr.f32.mxu0 %v2454
    %2910 = vmatmul.mubr.f32.gmra.mxu0 %v2136
    %v2911 = vpop.f32.mrf.mxu0
    %v2912 = vadd.f32 %v2655, %v2911
    %v2913 = vpop.f32.mrf.mxu0
    %v2914 = vadd.f32 %v2657, %v2913
    %2915 = vmatprep.mubr.f32.mxu0 %v2457
    %2916 = vmatmul.mubr.f32.gmra.mxu0 %v2140
    %v2917 = vpop.f32.mrf.mxu0
    %v2918 = vadd.f32 %v2661, %v2917
    %v2919 = vpop.f32.mrf.mxu0
    %v2920 = vadd.f32 %v2663, %v2919
    %2921 = vmatprep.mubr.f32.mxu0 %v2460
    %2922 = vmatmul.mubr.f32.gmra.mxu0 %v2144
    %v2923 = vpop.f32.mrf.mxu0
    %v2924 = vadd.f32 %v2667, %v2923
    %v2925 = vpop.f32.mrf.mxu0
    %v2926 = vadd.f32 %v2669, %v2925
    %2927 = vmatprep.mubr.f32.mxu0 %v2463
    %2928 = vmatmul.mubr.f32.gmra.mxu0 %v2148
    %v2929 = vpop.f32.mrf.mxu0
    %v2930 = vadd.f32 %v2673, %v2929
    %v2931 = vpop.f32.mrf.mxu0
    %v2932 = vadd.f32 %v2675, %v2931
    %2933 = vmatprep.mubr.f32.mxu0 %v2466
    %2934 = vmatmul.mubr.f32.gmra.mxu0 %v2152
    %v2935 = vpop.f32.mrf.mxu0
    %v2936 = vadd.f32 %v2679, %v2935
    %v2937 = vpop.f32.mrf.mxu0
    %v2938 = vadd.f32 %v2681, %v2937
    %2939 = vmatprep.mubr.f32.mxu0 %v2469
    %2940 = vmatmul.mubr.f32.gmra.mxu0 %v2156
    %v2941 = vpop.f32.mrf.mxu0
    %v2942 = vadd.f32 %v2685, %v2941
    %v2943 = vpop.f32.mrf.mxu0
    %v2944 = vadd.f32 %v2687, %v2943
    %2945 = vmatprep.mubr.f32.mxu0 %v2472
    %2946 = vmatmul.mubr.f32.gmra.mxu0 %v2160
    %v2947 = vpop.f32.mrf.mxu0
    %v2948 = vadd.f32 %v2691, %v2947
    %v2949 = vpop.f32.mrf.mxu0
    %v2950 = vadd.f32 %v2693, %v2949
    %2951 = vmatprep.mubr.f32.mxu0 %v2475
    %2952 = vmatmul.mubr.f32.gmra.mxu0 %v2164
    %v2953 = vpop.f32.mrf.mxu0
    %v2954 = vadd.f32 %v2697, %v2953
    %v2955 = vpop.f32.mrf.mxu0
    %v2956 = vadd.f32 %v2699, %v2955
    %2957 = vmatprep.mubr.f32.mxu0 %v2478
    %2958 = vmatmul.mubr.f32.gmra.mxu0 %v2168
    %v2959 = vpop.f32.mrf.mxu0
    %v2960 = vadd.f32 %v2703, %v2959
    %v2961 = vpop.f32.mrf.mxu0
    %v2962 = vadd.f32 %v2705, %v2961
    %2963 = vmatprep.mubr.f32.mxu0 %v2481
    %2964 = vmatmul.mubr.f32.gmra.mxu0 %v2172
    %v2965 = vpop.f32.mrf.mxu0
    %v2966 = vadd.f32 %v2709, %v2965
    %v2967 = vpop.f32.mrf.mxu0
    %v2968 = vadd.f32 %v2711, %v2967
    %2969 = vmatprep.mubr.f32.mxu0 %v2484
    %2970 = vmatmul.mubr.f32.gmra.mxu0 %v2176
    %v2971 = vpop.f32.mrf.mxu0
    %v2972 = vadd.f32 %v2715, %v2971
    %v2973 = vpop.f32.mrf.mxu0
    %v2974 = vadd.f32 %v2717, %v2973
    %2975 = vmatprep.mubr.f32.mxu0 %v2487
    %2976 = vmatmul.mubr.f32.gmra.mxu0 %v2180
    %v2977 = vpop.f32.mrf.mxu0
    %v2978 = vadd.f32 %v2721, %v2977
    %v2979 = vpop.f32.mrf.mxu0
    %v2980 = vadd.f32 %v2723, %v2979
    %2981 = vmatprep.mubr.f32.mxu0 %v2490
    %2982 = vmatmul.mubr.f32.gmra.mxu0 %v2184
    %v2983 = vpop.f32.mrf.mxu0
    %v2984 = vadd.f32 %v2727, %v2983
    %v2985 = vpop.f32.mrf.mxu0
    %v2986 = vadd.f32 %v2729, %v2985
    %2987 = vmatprep.mubr.f32.mxu0 %v2493
    %2988 = vmatmul.mubr.f32.gmra.mxu0 %v2188
    %v2989 = vpop.f32.mrf.mxu0
    %v2990 = vadd.f32 %v2733, %v2989
    %v2991 = vpop.f32.mrf.mxu0
    %v2992 = vadd.f32 %v2735, %v2991
    %2993 = vmatprep.mubr.f32.mxu0 %v2496
    %2994 = vmatmul.mubr.f32.gmra.mxu0 %v2192
    %v2995 = vpop.f32.mrf.mxu0
    %v2996 = vadd.f32 %v2739, %v2995
    %v2997 = vpop.f32.mrf.mxu0
    %v2998 = vadd.f32 %v2741, %v2997
    %2999 = vmatprep.mubr.f32.mxu0 %v2499
    %3000 = vmatmul.mubr.f32.gmra.mxu0 %v2196
    %v3001 = vpop.f32.mrf.mxu0
    %v3002 = vadd.f32 %v2745, %v3001
    %v3003 = vpop.f32.mrf.mxu0
    %v3004 = vadd.f32 %v2747, %v3003
    %3005 = vmatprep.mubr.f32.mxu0 %v2502
    %3006 = vmatmul.mubr.f32.gmra.mxu0 %v2200
    %v3007 = vpop.f32.mrf.mxu0
    %v3008 = vadd.f32 %v2751, %v3007
    %v3009 = vpop.f32.mrf.mxu0
    %v3010 = vadd.f32 %v2753, %v3009
    %3011 = vmatprep.mubr.f32.mxu0 %v2505
    %3012 = vmatmul.mubr.f32.gmra.mxu0 %v2204
    %v3013 = vpop.f32.mrf.mxu0
    %v3014 = vadd.f32 %v2757, %v3013
    %v3015 = vpop.f32.mrf.mxu0
    %v3016 = vadd.f32 %v2759, %v3015
    %3017 = vmatprep.mubr.f32.mxu0 %v2508
    %3018 = vmatmul.mubr.f32.gmra.mxu0 %v2208
    %v3019 = vpop.f32.mrf.mxu0
    %v3020 = vadd.f32 %v2763, %v3019
    %v3021 = vpop.f32.mrf.mxu0
    %v3022 = vadd.f32 %v2765, %v3021
    %3023 = vdwg.mxu0
    %3024 = vmatprep.subr.mxu0 %v2277
    %3025 = vmatpush1.msra.mxu0 %v2276
    %3026 = vmatprep.subr.mxu0 %v2273
    %3027 = vmatpush1.msra.mxu0 %v2272
    %3028 = vmatprep.subr.mxu0 %v2269
    %3029 = vmatpush1.msra.mxu0 %v2268
    %3030 = vmatprep.subr.mxu0 %v2265
    %3031 = vmatpush1.msra.mxu0 %v2264
    %3032 = vmatprep.subr.mxu0 %v2261
    %3033 = vmatpush1.msra.mxu0 %v2260
    %3034 = vmatprep.subr.mxu0 %v2257
    %3035 = vmatpush1.msra.mxu0 %v2256
    %3036 = vmatprep.subr.mxu0 %v2253
    %3037 = vmatpush1.msra.mxu0 %v2252
    %3038 = vmatprep.subr.mxu0 %v2249
    %3039 = vmatpush1.msra.mxu0 %v2248
    %3040 = vmatprep.subr.mxu0 %v2245
    %3041 = vmatpush1.msra.mxu0 %v2244
    %3042 = vmatprep.subr.mxu0 %v2241
    %3043 = vmatpush1.msra.mxu0 %v2240
    %3044 = vmatprep.subr.mxu0 %v2237
    %3045 = vmatpush1.msra.mxu0 %v2236
    %3046 = vmatprep.subr.mxu0 %v2233
    %3047 = vmatpush1.msra.mxu0 %v2232
    %3048 = vmatprep.subr.mxu0 %v2229
    %3049 = vmatpush1.msra.mxu0 %v2228
    %3050 = vmatprep.subr.mxu0 %v2225
    %3051 = vmatpush1.msra.mxu0 %v2224
    %3052 = vmatprep.subr.mxu0 %v2221
    %3053 = vmatpush1.msra.mxu0 %v2220
    %3054 = vmatprep.subr.mxu0 %v2217
    %3055 = vmatpush1.msra.mxu0 %v2216
    %3056 = vmatprep.subr.mxu0 %v2341
    %3057 = vmatpush2.msra.mxu0 %v2340
    %3058 = vmatprep.subr.mxu0 %v2337
    %3059 = vmatpush2.msra.mxu0 %v2336
    %3060 = vmatprep.subr.mxu0 %v2333
    %3061 = vmatpush2.msra.mxu0 %v2332
    %3062 = vmatprep.subr.mxu0 %v2329
    %3063 = vmatpush2.msra.mxu0 %v2328
    %3064 = vmatprep.subr.mxu0 %v2325
    %3065 = vmatpush2.msra.mxu0 %v2324
    %3066 = vmatprep.subr.mxu0 %v2321
    %3067 = vmatpush2.msra.mxu0 %v2320
    %3068 = vmatprep.subr.mxu0 %v2317
    %3069 = vmatpush2.msra.mxu0 %v2316
    %3070 = vmatprep.subr.mxu0 %v2313
    %3071 = vmatpush2.msra.mxu0 %v2312
    %3072 = vmatprep.subr.mxu0 %v2309
    %3073 = vmatpush2.msra.mxu0 %v2308
    %3074 = vmatprep.subr.mxu0 %v2305
    %3075 = vmatpush2.msra.mxu0 %v2304
    %3076 = vmatprep.subr.mxu0 %v2301
    %3077 = vmatpush2.msra.mxu0 %v2300
    %3078 = vmatprep.subr.mxu0 %v2297
    %3079 = vmatpush2.msra.mxu0 %v2296
    %3080 = vmatprep.subr.mxu0 %v2293
    %3081 = vmatpush2.msra.mxu0 %v2292
    %3082 = vmatprep.subr.mxu0 %v2289
    %3083 = vmatpush2.msra.mxu0 %v2288
    %3084 = vmatprep.subr.mxu0 %v2285
    %3085 = vmatpush2.msra.mxu0 %v2284
    %3086 = vmatprep.subr.mxu0 %v2281
    %3087 = vmatpush2.msra.mxu0 %v2280
    %3088 = vmatprep.mubr.f32.mxu0 %v2083
    %3089 = vmatmul.mubr.f32.gmra.mxu0 %v2082
    %v3090 = vpop.f32.mrf.mxu0
    %v3091 = vadd.f32 0.0, %v3090
    %v3092 = vpop.f32.mrf.mxu0
    %v3093 = vadd.f32 0.0, %v3092
    %3094 = vmatprep.mubr.f32.mxu0 %v2087
    %3095 = vmatmul.mubr.f32.gmra.mxu0 %v2086
    %v3096 = vpop.f32.mrf.mxu0
    %v3097 = vadd.f32 0.0, %v3096
    %v3098 = vpop.f32.mrf.mxu0
    %v3099 = vadd.f32 0.0, %v3098
    %3100 = vmatprep.mubr.f32.mxu0 %v2091
    %3101 = vmatmul.mubr.f32.gmra.mxu0 %v2090
    %v3102 = vpop.f32.mrf.mxu0
    %v3103 = vadd.f32 0.0, %v3102
    %v3104 = vpop.f32.mrf.mxu0
    %v3105 = vadd.f32 0.0, %v3104
    %3106 = vmatprep.mubr.f32.mxu0 %v2095
    %3107 = vmatmul.mubr.f32.gmra.mxu0 %v2094
    %v3108 = vpop.f32.mrf.mxu0
    %v3109 = vadd.f32 0.0, %v3108
    %v3110 = vpop.f32.mrf.mxu0
    %v3111 = vadd.f32 0.0, %v3110
    %3112 = vmatprep.mubr.f32.mxu0 %v2099
    %3113 = vmatmul.mubr.f32.gmra.mxu0 %v2098
    %v3114 = vpop.f32.mrf.mxu0
    %v3115 = vadd.f32 0.0, %v3114
    %v3116 = vpop.f32.mrf.mxu0
    %v3117 = vadd.f32 0.0, %v3116
    %3118 = vmatprep.mubr.f32.mxu0 %v2103
    %3119 = vmatmul.mubr.f32.gmra.mxu0 %v2102
    %v3120 = vpop.f32.mrf.mxu0
    %v3121 = vadd.f32 0.0, %v3120
    %v3122 = vpop.f32.mrf.mxu0
    %v3123 = vadd.f32 0.0, %v3122
    %3124 = vmatprep.mubr.f32.mxu0 %v2107
    %3125 = vmatmul.mubr.f32.gmra.mxu0 %v2106
    %v3126 = vpop.f32.mrf.mxu0
    %v3127 = vadd.f32 0.0, %v3126
    %v3128 = vpop.f32.mrf.mxu0
    %v3129 = vadd.f32 0.0, %v3128
    %3130 = vmatprep.mubr.f32.mxu0 %v2111
    %3131 = vmatmul.mubr.f32.gmra.mxu0 %v2110
    %v3132 = vpop.f32.mrf.mxu0
    %v3133 = vadd.f32 0.0, %v3132
    %v3134 = vpop.f32.mrf.mxu0
    %v3135 = vadd.f32 0.0, %v3134
    %3136 = vmatprep.mubr.f32.mxu0 %v2115
    %3137 = vmatmul.mubr.f32.gmra.mxu0 %v2114
    %v3138 = vpop.f32.mrf.mxu0
    %v3139 = vadd.f32 0.0, %v3138
    %v3140 = vpop.f32.mrf.mxu0
    %v3141 = vadd.f32 0.0, %v3140
    %3142 = vmatprep.mubr.f32.mxu0 %v2119
    %3143 = vmatmul.mubr.f32.gmra.mxu0 %v2118
    %v3144 = vpop.f32.mrf.mxu0
    %v3145 = vadd.f32 0.0, %v3144
    %v3146 = vpop.f32.mrf.mxu0
    %v3147 = vadd.f32 0.0, %v3146
    %3148 = vmatprep.mubr.f32.mxu0 %v2123
    %3149 = vmatmul.mubr.f32.gmra.mxu0 %v2122
    %v3150 = vpop.f32.mrf.mxu0
    %v3151 = vadd.f32 0.0, %v3150
    %v3152 = vpop.f32.mrf.mxu0
    %v3153 = vadd.f32 0.0, %v3152
    %3154 = vmatprep.mubr.f32.mxu0 %v2127
    %3155 = vmatmul.mubr.f32.gmra.mxu0 %v2126
    %v3156 = vpop.f32.mrf.mxu0
    %v3157 = vadd.f32 0.0, %v3156
    %v3158 = vpop.f32.mrf.mxu0
    %v3159 = vadd.f32 0.0, %v3158
    %3160 = vmatprep.mubr.f32.mxu0 %v2131
    %3161 = vmatmul.mubr.f32.gmra.mxu0 %v2130
    %v3162 = vpop.f32.mrf.mxu0
    %v3163 = vadd.f32 0.0, %v3162
    %v3164 = vpop.f32.mrf.mxu0
    %v3165 = vadd.f32 0.0, %v3164
    %3166 = vmatprep.mubr.f32.mxu0 %v2135
    %3167 = vmatmul.mubr.f32.gmra.mxu0 %v2134
    %v3168 = vpop.f32.mrf.mxu0
    %v3169 = vadd.f32 0.0, %v3168
    %v3170 = vpop.f32.mrf.mxu0
    %v3171 = vadd.f32 0.0, %v3170
    %3172 = vmatprep.mubr.f32.mxu0 %v2139
    %3173 = vmatmul.mubr.f32.gmra.mxu0 %v2138
    %v3174 = vpop.f32.mrf.mxu0
    %v3175 = vadd.f32 0.0, %v3174
    %v3176 = vpop.f32.mrf.mxu0
    %v3177 = vadd.f32 0.0, %v3176
    %3178 = vmatprep.mubr.f32.mxu0 %v2143
    %3179 = vmatmul.mubr.f32.gmra.mxu0 %v2142
    %v3180 = vpop.f32.mrf.mxu0
    %v3181 = vadd.f32 0.0, %v3180
    %v3182 = vpop.f32.mrf.mxu0
    %v3183 = vadd.f32 0.0, %v3182
    %3184 = vmatprep.mubr.f32.mxu0 %v2147
    %3185 = vmatmul.mubr.f32.gmra.mxu0 %v2146
    %v3186 = vpop.f32.mrf.mxu0
    %v3187 = vadd.f32 0.0, %v3186
    %v3188 = vpop.f32.mrf.mxu0
    %v3189 = vadd.f32 0.0, %v3188
    %3190 = vmatprep.mubr.f32.mxu0 %v2151
    %3191 = vmatmul.mubr.f32.gmra.mxu0 %v2150
    %v3192 = vpop.f32.mrf.mxu0
    %v3193 = vadd.f32 0.0, %v3192
    %v3194 = vpop.f32.mrf.mxu0
    %v3195 = vadd.f32 0.0, %v3194
    %3196 = vmatprep.mubr.f32.mxu0 %v2155
    %3197 = vmatmul.mubr.f32.gmra.mxu0 %v2154
    %v3198 = vpop.f32.mrf.mxu0
    %v3199 = vadd.f32 0.0, %v3198
    %v3200 = vpop.f32.mrf.mxu0
    %v3201 = vadd.f32 0.0, %v3200
    %3202 = vmatprep.mubr.f32.mxu0 %v2159
    %3203 = vmatmul.mubr.f32.gmra.mxu0 %v2158
    %v3204 = vpop.f32.mrf.mxu0
    %v3205 = vadd.f32 0.0, %v3204
    %v3206 = vpop.f32.mrf.mxu0
    %v3207 = vadd.f32 0.0, %v3206
    %3208 = vmatprep.mubr.f32.mxu0 %v2163
    %3209 = vmatmul.mubr.f32.gmra.mxu0 %v2162
    %v3210 = vpop.f32.mrf.mxu0
    %v3211 = vadd.f32 0.0, %v3210
    %v3212 = vpop.f32.mrf.mxu0
    %v3213 = vadd.f32 0.0, %v3212
    %3214 = vmatprep.mubr.f32.mxu0 %v2167
    %3215 = vmatmul.mubr.f32.gmra.mxu0 %v2166
    %v3216 = vpop.f32.mrf.mxu0
    %v3217 = vadd.f32 0.0, %v3216
    %v3218 = vpop.f32.mrf.mxu0
    %v3219 = vadd.f32 0.0, %v3218
    %3220 = vmatprep.mubr.f32.mxu0 %v2171
    %3221 = vmatmul.mubr.f32.gmra.mxu0 %v2170
    %v3222 = vpop.f32.mrf.mxu0
    %v3223 = vadd.f32 0.0, %v3222
    %v3224 = vpop.f32.mrf.mxu0
    %v3225 = vadd.f32 0.0, %v3224
    %3226 = vmatprep.mubr.f32.mxu0 %v2175
    %3227 = vmatmul.mubr.f32.gmra.mxu0 %v2174
    %v3228 = vpop.f32.mrf.mxu0
    %v3229 = vadd.f32 0.0, %v3228
    %v3230 = vpop.f32.mrf.mxu0
    %v3231 = vadd.f32 0.0, %v3230
    %3232 = vmatprep.mubr.f32.mxu0 %v2179
    %3233 = vmatmul.mubr.f32.gmra.mxu0 %v2178
    %v3234 = vpop.f32.mrf.mxu0
    %v3235 = vadd.f32 0.0, %v3234
    %v3236 = vpop.f32.mrf.mxu0
    %v3237 = vadd.f32 0.0, %v3236
    %3238 = vmatprep.mubr.f32.mxu0 %v2183
    %3239 = vmatmul.mubr.f32.gmra.mxu0 %v2182
    %v3240 = vpop.f32.mrf.mxu0
    %v3241 = vadd.f32 0.0, %v3240
    %v3242 = vpop.f32.mrf.mxu0
    %v3243 = vadd.f32 0.0, %v3242
    %3244 = vmatprep.mubr.f32.mxu0 %v2187
    %3245 = vmatmul.mubr.f32.gmra.mxu0 %v2186
    %v3246 = vpop.f32.mrf.mxu0
    %v3247 = vadd.f32 0.0, %v3246
    %v3248 = vpop.f32.mrf.mxu0
    %v3249 = vadd.f32 0.0, %v3248
    %3250 = vmatprep.mubr.f32.mxu0 %v2191
    %3251 = vmatmul.mubr.f32.gmra.mxu0 %v2190
    %v3252 = vpop.f32.mrf.mxu0
    %v3253 = vadd.f32 0.0, %v3252
    %v3254 = vpop.f32.mrf.mxu0
    %v3255 = vadd.f32 0.0, %v3254
    %3256 = vmatprep.mubr.f32.mxu0 %v2195
    %3257 = vmatmul.mubr.f32.gmra.mxu0 %v2194
    %v3258 = vpop.f32.mrf.mxu0
    %v3259 = vadd.f32 0.0, %v3258
    %v3260 = vpop.f32.mrf.mxu0
    %v3261 = vadd.f32 0.0, %v3260
    %3262 = vmatprep.mubr.f32.mxu0 %v2199
    %3263 = vmatmul.mubr.f32.gmra.mxu0 %v2198
    %v3264 = vpop.f32.mrf.mxu0
    %v3265 = vadd.f32 0.0, %v3264
    %v3266 = vpop.f32.mrf.mxu0
    %v3267 = vadd.f32 0.0, %v3266
    %3268 = vmatprep.mubr.f32.mxu0 %v2203
    %3269 = vmatmul.mubr.f32.gmra.mxu0 %v2202
    %v3270 = vpop.f32.mrf.mxu0
    %v3271 = vadd.f32 0.0, %v3270
    %v3272 = vpop.f32.mrf.mxu0
    %v3273 = vadd.f32 0.0, %v3272
    %3274 = vmatprep.mubr.f32.mxu0 %v2207
    %3275 = vmatmul.mubr.f32.gmra.mxu0 %v2206
    %v3276 = vpop.f32.mrf.mxu0
    %v3277 = vadd.f32 0.0, %v3276
    %v3278 = vpop.f32.mrf.mxu0
    %v3279 = vadd.f32 0.0, %v3278
    %3280 = vdwg.mxu0
    %3281 = vmatprep.subr.mxu0 %v2405
    %3282 = vmatpush1.msra.mxu0 %v2404
    %3283 = vmatprep.subr.mxu0 %v2401
    %3284 = vmatpush1.msra.mxu0 %v2400
    %3285 = vmatprep.subr.mxu0 %v2397
    %3286 = vmatpush1.msra.mxu0 %v2396
    %3287 = vmatprep.subr.mxu0 %v2393
    %3288 = vmatpush1.msra.mxu0 %v2392
    %3289 = vmatprep.subr.mxu0 %v2389
    %3290 = vmatpush1.msra.mxu0 %v2388
    %3291 = vmatprep.subr.mxu0 %v2385
    %3292 = vmatpush1.msra.mxu0 %v2384
    %3293 = vmatprep.subr.mxu0 %v2381
    %3294 = vmatpush1.msra.mxu0 %v2380
    %3295 = vmatprep.subr.mxu0 %v2377
    %3296 = vmatpush1.msra.mxu0 %v2376
    %3297 = vmatprep.subr.mxu0 %v2373
    %3298 = vmatpush1.msra.mxu0 %v2372
    %3299 = vmatprep.subr.mxu0 %v2369
    %3300 = vmatpush1.msra.mxu0 %v2368
    %3301 = vmatprep.subr.mxu0 %v2365
    %3302 = vmatpush1.msra.mxu0 %v2364
    %3303 = vmatprep.subr.mxu0 %v2361
    %3304 = vmatpush1.msra.mxu0 %v2360
    %3305 = vmatprep.subr.mxu0 %v2357
    %3306 = vmatpush1.msra.mxu0 %v2356
    %3307 = vmatprep.subr.mxu0 %v2353
    %3308 = vmatpush1.msra.mxu0 %v2352
    %3309 = vmatprep.subr.mxu0 %v2349
    %3310 = vmatpush1.msra.mxu0 %v2348
    %3311 = vmatprep.subr.mxu0 %v2345
    %3312 = vmatpush1.msra.mxu0 %v2344
    %3313 = vmatprep.subr.mxu0 0.0
    %3314 = vmatpush2.msra.mxu0 0.0
    %3315 = vmatprep.subr.mxu0 0.0
    %3316 = vmatpush2.msra.mxu0 0.0
    %3317 = vmatprep.subr.mxu0 0.0
    %3318 = vmatpush2.msra.mxu0 0.0
    %3319 = vmatprep.subr.mxu0 0.0
    %3320 = vmatpush2.msra.mxu0 0.0
    %3321 = vmatprep.subr.mxu0 0.0
    %3322 = vmatpush2.msra.mxu0 0.0
    %3323 = vmatprep.subr.mxu0 0.0
    %3324 = vmatpush2.msra.mxu0 0.0
    %3325 = vmatprep.subr.mxu0 0.0
    %3326 = vmatpush2.msra.mxu0 0.0
    %3327 = vmatprep.subr.mxu0 0.0
    %3328 = vmatpush2.msra.mxu0 0.0
    %3329 = vmatprep.subr.mxu0 0.0
    %3330 = vmatpush2.msra.mxu0 0.0
    %3331 = vmatprep.subr.mxu0 0.0
    %3332 = vmatpush2.msra.mxu0 0.0
    %3333 = vmatprep.subr.mxu0 0.0
    %3334 = vmatpush2.msra.mxu0 0.0
    %3335 = vmatprep.subr.mxu0 0.0
    %3336 = vmatpush2.msra.mxu0 0.0
    %3337 = vmatprep.subr.mxu0 0.0
    %3338 = vmatpush2.msra.mxu0 0.0
    %3339 = vmatprep.subr.mxu0 0.0
    %3340 = vmatpush2.msra.mxu0 0.0
    %3341 = vmatprep.subr.mxu0 %v2413
    %3342 = vmatpush2.msra.mxu0 %v2412
    %3343 = vmatprep.subr.mxu0 %v2409
    %3344 = vmatpush2.msra.mxu0 %v2408
    %3345 = vmatprep.mubr.f32.mxu0 %v2415
    %3346 = vmatmul.mubr.f32.gmra.mxu0 %v2084
    %v3347 = vpop.f32.mrf.mxu0
    %v3348 = vadd.f32 %v3091, %v3347
    %v3349 = vpop.f32.mrf.mxu0
    %v3350 = vadd.f32 %v3093, %v3349
    %3351 = vmatprep.mubr.f32.mxu0 %v2418
    %3352 = vmatmul.mubr.f32.gmra.mxu0 %v2088
    %v3353 = vpop.f32.mrf.mxu0
    %v3354 = vadd.f32 %v3097, %v3353
    %v3355 = vpop.f32.mrf.mxu0
    %v3356 = vadd.f32 %v3099, %v3355
    %3357 = vmatprep.mubr.f32.mxu0 %v2421
    %3358 = vmatmul.mubr.f32.gmra.mxu0 %v2092
    %v3359 = vpop.f32.mrf.mxu0
    %v3360 = vadd.f32 %v3103, %v3359
    %v3361 = vpop.f32.mrf.mxu0
    %v3362 = vadd.f32 %v3105, %v3361
    %3363 = vmatprep.mubr.f32.mxu0 %v2424
    %3364 = vmatmul.mubr.f32.gmra.mxu0 %v2096
    %v3365 = vpop.f32.mrf.mxu0
    %v3366 = vadd.f32 %v3109, %v3365
    %v3367 = vpop.f32.mrf.mxu0
    %v3368 = vadd.f32 %v3111, %v3367
    %3369 = vmatprep.mubr.f32.mxu0 %v2427
    %3370 = vmatmul.mubr.f32.gmra.mxu0 %v2100
    %v3371 = vpop.f32.mrf.mxu0
    %v3372 = vadd.f32 %v3115, %v3371
    %v3373 = vpop.f32.mrf.mxu0
    %v3374 = vadd.f32 %v3117, %v3373
    %3375 = vmatprep.mubr.f32.mxu0 %v2430
    %3376 = vmatmul.mubr.f32.gmra.mxu0 %v2104
    %v3377 = vpop.f32.mrf.mxu0
    %v3378 = vadd.f32 %v3121, %v3377
    %v3379 = vpop.f32.mrf.mxu0
    %v3380 = vadd.f32 %v3123, %v3379
    %3381 = vmatprep.mubr.f32.mxu0 %v2433
    %3382 = vmatmul.mubr.f32.gmra.mxu0 %v2108
    %v3383 = vpop.f32.mrf.mxu0
    %v3384 = vadd.f32 %v3127, %v3383
    %v3385 = vpop.f32.mrf.mxu0
    %v3386 = vadd.f32 %v3129, %v3385
    %3387 = vmatprep.mubr.f32.mxu0 %v2436
    %3388 = vmatmul.mubr.f32.gmra.mxu0 %v2112
    %v3389 = vpop.f32.mrf.mxu0
    %v3390 = vadd.f32 %v3133, %v3389
    %v3391 = vpop.f32.mrf.mxu0
    %v3392 = vadd.f32 %v3135, %v3391
    %3393 = vmatprep.mubr.f32.mxu0 %v2439
    %3394 = vmatmul.mubr.f32.gmra.mxu0 %v2116
    %v3395 = vpop.f32.mrf.mxu0
    %v3396 = vadd.f32 %v3139, %v3395
    %v3397 = vpop.f32.mrf.mxu0
    %v3398 = vadd.f32 %v3141, %v3397
    %3399 = vmatprep.mubr.f32.mxu0 %v2442
    %3400 = vmatmul.mubr.f32.gmra.mxu0 %v2120
    %v3401 = vpop.f32.mrf.mxu0
    %v3402 = vadd.f32 %v3145, %v3401
    %v3403 = vpop.f32.mrf.mxu0
    %v3404 = vadd.f32 %v3147, %v3403
    %3405 = vmatprep.mubr.f32.mxu0 %v2445
    %3406 = vmatmul.mubr.f32.gmra.mxu0 %v2124
    %v3407 = vpop.f32.mrf.mxu0
    %v3408 = vadd.f32 %v3151, %v3407
    %v3409 = vpop.f32.mrf.mxu0
    %v3410 = vadd.f32 %v3153, %v3409
    %3411 = vmatprep.mubr.f32.mxu0 %v2448
    %3412 = vmatmul.mubr.f32.gmra.mxu0 %v2128
    %v3413 = vpop.f32.mrf.mxu0
    %v3414 = vadd.f32 %v3157, %v3413
    %v3415 = vpop.f32.mrf.mxu0
    %v3416 = vadd.f32 %v3159, %v3415
    %3417 = vmatprep.mubr.f32.mxu0 %v2451
    %3418 = vmatmul.mubr.f32.gmra.mxu0 %v2132
    %v3419 = vpop.f32.mrf.mxu0
    %v3420 = vadd.f32 %v3163, %v3419
    %v3421 = vpop.f32.mrf.mxu0
    %v3422 = vadd.f32 %v3165, %v3421
    %3423 = vmatprep.mubr.f32.mxu0 %v2454
    %3424 = vmatmul.mubr.f32.gmra.mxu0 %v2136
    %v3425 = vpop.f32.mrf.mxu0
    %v3426 = vadd.f32 %v3169, %v3425
    %v3427 = vpop.f32.mrf.mxu0
    %v3428 = vadd.f32 %v3171, %v3427
    %3429 = vmatprep.mubr.f32.mxu0 %v2457
    %3430 = vmatmul.mubr.f32.gmra.mxu0 %v2140
    %v3431 = vpop.f32.mrf.mxu0
    %v3432 = vadd.f32 %v3175, %v3431
    %v3433 = vpop.f32.mrf.mxu0
    %v3434 = vadd.f32 %v3177, %v3433
    %3435 = vmatprep.mubr.f32.mxu0 %v2460
    %3436 = vmatmul.mubr.f32.gmra.mxu0 %v2144
    %v3437 = vpop.f32.mrf.mxu0
    %v3438 = vadd.f32 %v3181, %v3437
    %v3439 = vpop.f32.mrf.mxu0
    %v3440 = vadd.f32 %v3183, %v3439
    %3441 = vmatprep.mubr.f32.mxu0 %v2463
    %3442 = vmatmul.mubr.f32.gmra.mxu0 %v2148
    %v3443 = vpop.f32.mrf.mxu0
    %v3444 = vadd.f32 %v3187, %v3443
    %v3445 = vpop.f32.mrf.mxu0
    %v3446 = vadd.f32 %v3189, %v3445
    %3447 = vmatprep.mubr.f32.mxu0 %v2466
    %3448 = vmatmul.mubr.f32.gmra.mxu0 %v2152
    %v3449 = vpop.f32.mrf.mxu0
    %v3450 = vadd.f32 %v3193, %v3449
    %v3451 = vpop.f32.mrf.mxu0
    %v3452 = vadd.f32 %v3195, %v3451
    %3453 = vmatprep.mubr.f32.mxu0 %v2469
    %3454 = vmatmul.mubr.f32.gmra.mxu0 %v2156
    %v3455 = vpop.f32.mrf.mxu0
    %v3456 = vadd.f32 %v3199, %v3455
    %v3457 = vpop.f32.mrf.mxu0
    %v3458 = vadd.f32 %v3201, %v3457
    %3459 = vmatprep.mubr.f32.mxu0 %v2472
    %3460 = vmatmul.mubr.f32.gmra.mxu0 %v2160
    %v3461 = vpop.f32.mrf.mxu0
    %v3462 = vadd.f32 %v3205, %v3461
    %v3463 = vpop.f32.mrf.mxu0
    %v3464 = vadd.f32 %v3207, %v3463
    %3465 = vmatprep.mubr.f32.mxu0 %v2475
    %3466 = vmatmul.mubr.f32.gmra.mxu0 %v2164
    %v3467 = vpop.f32.mrf.mxu0
    %v3468 = vadd.f32 %v3211, %v3467
    %v3469 = vpop.f32.mrf.mxu0
    %v3470 = vadd.f32 %v3213, %v3469
    %3471 = vmatprep.mubr.f32.mxu0 %v2478
    %3472 = vmatmul.mubr.f32.gmra.mxu0 %v2168
    %v3473 = vpop.f32.mrf.mxu0
    %v3474 = vadd.f32 %v3217, %v3473
    %v3475 = vpop.f32.mrf.mxu0
    %v3476 = vadd.f32 %v3219, %v3475
    %3477 = vmatprep.mubr.f32.mxu0 %v2481
    %3478 = vmatmul.mubr.f32.gmra.mxu0 %v2172
    %v3479 = vpop.f32.mrf.mxu0
    %v3480 = vadd.f32 %v3223, %v3479
    %v3481 = vpop.f32.mrf.mxu0
    %v3482 = vadd.f32 %v3225, %v3481
    %3483 = vmatprep.mubr.f32.mxu0 %v2484
    %3484 = vmatmul.mubr.f32.gmra.mxu0 %v2176
    %v3485 = vpop.f32.mrf.mxu0
    %v3486 = vadd.f32 %v3229, %v3485
    %v3487 = vpop.f32.mrf.mxu0
    %v3488 = vadd.f32 %v3231, %v3487
    %3489 = vmatprep.mubr.f32.mxu0 %v2487
    %3490 = vmatmul.mubr.f32.gmra.mxu0 %v2180
    %v3491 = vpop.f32.mrf.mxu0
    %v3492 = vadd.f32 %v3235, %v3491
    %v3493 = vpop.f32.mrf.mxu0
    %v3494 = vadd.f32 %v3237, %v3493
    %3495 = vmatprep.mubr.f32.mxu0 %v2490
    %3496 = vmatmul.mubr.f32.gmra.mxu0 %v2184
    %v3497 = vpop.f32.mrf.mxu0
    %v3498 = vadd.f32 %v3241, %v3497
    %v3499 = vpop.f32.mrf.mxu0
    %v3500 = vadd.f32 %v3243, %v3499
    %3501 = vmatprep.mubr.f32.mxu0 %v2493
    %3502 = vmatmul.mubr.f32.gmra.mxu0 %v2188
    %v3503 = vpop.f32.mrf.mxu0
    %v3504 = vadd.f32 %v3247, %v3503
    %v3505 = vpop.f32.mrf.mxu0
    %v3506 = vadd.f32 %v3249, %v3505
    %3507 = vmatprep.mubr.f32.mxu0 %v2496
    %3508 = vmatmul.mubr.f32.gmra.mxu0 %v2192
    %v3509 = vpop.f32.mrf.mxu0
    %v3510 = vadd.f32 %v3253, %v3509
    %v3511 = vpop.f32.mrf.mxu0
    %v3512 = vadd.f32 %v3255, %v3511
    %3513 = vmatprep.mubr.f32.mxu0 %v2499
    %3514 = vmatmul.mubr.f32.gmra.mxu0 %v2196
    %v3515 = vpop.f32.mrf.mxu0
    %v3516 = vadd.f32 %v3259, %v3515
    %v3517 = vpop.f32.mrf.mxu0
    %v3518 = vadd.f32 %v3261, %v3517
    %3519 = vmatprep.mubr.f32.mxu0 %v2502
    %3520 = vmatmul.mubr.f32.gmra.mxu0 %v2200
    %v3521 = vpop.f32.mrf.mxu0
    %v3522 = vadd.f32 %v3265, %v3521
    %v3523 = vpop.f32.mrf.mxu0
    %v3524 = vadd.f32 %v3267, %v3523
    %3525 = vmatprep.mubr.f32.mxu0 %v2505
    %3526 = vmatmul.mubr.f32.gmra.mxu0 %v2204
    %v3527 = vpop.f32.mrf.mxu0
    %v3528 = vadd.f32 %v3271, %v3527
    %v3529 = vpop.f32.mrf.mxu0
    %v3530 = vadd.f32 %v3273, %v3529
    %3531 = vmatprep.mubr.f32.mxu0 %v2508
    %3532 = vmatmul.mubr.f32.gmra.mxu0 %v2208
    %v3533 = vpop.f32.mrf.mxu0
    %v3534 = vadd.f32 %v3277, %v3533
    %v3535 = vpop.f32.mrf.mxu0
    %v3536 = vadd.f32 %v3279, %v3535
    %3537 = vdwg.mxu0
    %v3538 = vadd.f32 %v2834, %v2840
    %v3539 = vadd.f32 %v3538, %v2846
    %v3540 = vadd.f32 %v3539, %v2852
    %v3541 = vadd.f32 %v3540, %v2858
    %v3542 = vadd.f32 %v3541, %v2864
    %v3543 = vadd.f32 %v3542, %v2870
    %v3544 = vadd.f32 %v3543, %v2876
    %v3545 = vadd.f32 %v3544, %v2882
    %v3546 = vadd.f32 %v3545, %v2888
    %v3547 = vadd.f32 %v3546, %v2894
    %v3548 = vadd.f32 %v3547, %v2900
    %v3549 = vadd.f32 %v3548, %v2906
    %v3550 = vadd.f32 %v3549, %v2912
    %v3551 = vadd.f32 %v3550, %v2918
    %v3552 = vadd.f32 %v3551, %v2924
    %v3553 = vadd.f32 %v3552, %v2930
    %v3554 = vadd.f32 %v3553, %v2936
    %v3555 = vadd.f32 %v3554, %v2942
    %v3556 = vadd.f32 %v3555, %v2948
    %v3557 = vadd.f32 %v3556, %v2954
    %v3558 = vadd.f32 %v3557, %v2960
    %v3559 = vadd.f32 %v3558, %v2966
    %v3560 = vadd.f32 %v3559, %v2972
    %v3561 = vadd.f32 %v3560, %v2978
    %v3562 = vadd.f32 %v3561, %v2984
    %v3563 = vadd.f32 %v3562, %v2990
    %v3564 = vadd.f32 %v3563, %v2996
    %v3565 = vadd.f32 %v3564, %v3002
    %v3566 = vadd.f32 %v3565, %v3008
    %v3567 = vadd.f32 %v3566, %v3014
    %v3568 = vadd.f32 %v3567, %v3020
    %v3569 = vrot.slane %v3568, 4
    %v3570 = vadd.f32 %v3568, %v3569
    %v3571 = vrot.slane %v3570, 2
    %v3572 = vadd.f32 %v3570, %v3571
    %v3573 = vrot.slane %v3572, 1
    %v3574 = vadd.f32 %v3572, %v3573
    %v3575 = vadd.f32 %v2836, %v2842
    %v3576 = vadd.f32 %v3575, %v2848
    %v3577 = vadd.f32 %v3576, %v2854
    %v3578 = vadd.f32 %v3577, %v2860
    %v3579 = vadd.f32 %v3578, %v2866
    %v3580 = vadd.f32 %v3579, %v2872
    %v3581 = vadd.f32 %v3580, %v2878
    %v3582 = vadd.f32 %v3581, %v2884
    %v3583 = vadd.f32 %v3582, %v2890
    %v3584 = vadd.f32 %v3583, %v2896
    %v3585 = vadd.f32 %v3584, %v2902
    %v3586 = vadd.f32 %v3585, %v2908
    %v3587 = vadd.f32 %v3586, %v2914
    %v3588 = vadd.f32 %v3587, %v2920
    %v3589 = vadd.f32 %v3588, %v2926
    %v3590 = vadd.f32 %v3589, %v2932
    %v3591 = vadd.f32 %v3590, %v2938
    %v3592 = vadd.f32 %v3591, %v2944
    %v3593 = vadd.f32 %v3592, %v2950
    %v3594 = vadd.f32 %v3593, %v2956
    %v3595 = vadd.f32 %v3594, %v2962
    %v3596 = vadd.f32 %v3595, %v2968
    %v3597 = vadd.f32 %v3596, %v2974
    %v3598 = vadd.f32 %v3597, %v2980
    %v3599 = vadd.f32 %v3598, %v2986
    %v3600 = vadd.f32 %v3599, %v2992
    %v3601 = vadd.f32 %v3600, %v2998
    %v3602 = vadd.f32 %v3601, %v3004
    %v3603 = vadd.f32 %v3602, %v3010
    %v3604 = vadd.f32 %v3603, %v3016
    %v3605 = vadd.f32 %v3604, %v3022
    %v3606 = vrot.slane %v3605, 4
    %v3607 = vadd.f32 %v3605, %v3606
    %v3608 = vrot.slane %v3607, 2
    %v3609 = vadd.f32 %v3607, %v3608
    %v3610 = vrot.slane %v3609, 1
    %v3611 = vadd.f32 %v3609, %v3610
    %v3612 = vadd.f32 %v3348, %v3354
    %v3613 = vadd.f32 %v3612, %v3360
    %v3614 = vadd.f32 %v3613, %v3366
    %v3615 = vadd.f32 %v3614, %v3372
    %v3616 = vadd.f32 %v3615, %v3378
    %v3617 = vadd.f32 %v3616, %v3384
    %v3618 = vadd.f32 %v3617, %v3390
    %v3619 = vadd.f32 %v3618, %v3396
    %v3620 = vadd.f32 %v3619, %v3402
    %v3621 = vadd.f32 %v3620, %v3408
    %v3622 = vadd.f32 %v3621, %v3414
    %v3623 = vadd.f32 %v3622, %v3420
    %v3624 = vadd.f32 %v3623, %v3426
    %v3625 = vadd.f32 %v3624, %v3432
    %v3626 = vadd.f32 %v3625, %v3438
    %v3627 = vadd.f32 %v3626, %v3444
    %v3628 = vadd.f32 %v3627, %v3450
    %v3629 = vadd.f32 %v3628, %v3456
    %v3630 = vadd.f32 %v3629, %v3462
    %v3631 = vadd.f32 %v3630, %v3468
    %v3632 = vadd.f32 %v3631, %v3474
    %v3633 = vadd.f32 %v3632, %v3480
    %v3634 = vadd.f32 %v3633, %v3486
    %v3635 = vadd.f32 %v3634, %v3492
    %v3636 = vadd.f32 %v3635, %v3498
    %v3637 = vadd.f32 %v3636, %v3504
    %v3638 = vadd.f32 %v3637, %v3510
    %v3639 = vadd.f32 %v3638, %v3516
    %v3640 = vadd.f32 %v3639, %v3522
    %v3641 = vadd.f32 %v3640, %v3528
    %v3642 = vadd.f32 %v3641, %v3534
    %v3643 = vrot.slane %v3642, 4
    %v3644 = vadd.f32 %v3642, %v3643
    %v3645 = vrot.slane %v3644, 2
    %v3646 = vadd.f32 %v3644, %v3645
    %v3647 = vrot.slane %v3646, 1
    %v3648 = vadd.f32 %v3646, %v3647
    %v3649 = vsel %vm1229, %v3350, 0.0
    %v3650 = vsel %vm1229, %v3356, 0.0
    %v3651 = vadd.f32 %v3649, %v3650
    %v3652 = vsel %vm1229, %v3362, 0.0
    %v3653 = vadd.f32 %v3651, %v3652
    %v3654 = vsel %vm1229, %v3368, 0.0
    %v3655 = vadd.f32 %v3653, %v3654
    %v3656 = vsel %vm1229, %v3374, 0.0
    %v3657 = vadd.f32 %v3655, %v3656
    %v3658 = vsel %vm1229, %v3380, 0.0
    %v3659 = vadd.f32 %v3657, %v3658
    %v3660 = vsel %vm1229, %v3386, 0.0
    %v3661 = vadd.f32 %v3659, %v3660
    %v3662 = vsel %vm1229, %v3392, 0.0
    %v3663 = vadd.f32 %v3661, %v3662
    %v3664 = vsel %vm1229, %v3398, 0.0
    %v3665 = vadd.f32 %v3663, %v3664
    %v3666 = vsel %vm1229, %v3404, 0.0
    %v3667 = vadd.f32 %v3665, %v3666
    %v3668 = vsel %vm1229, %v3410, 0.0
    %v3669 = vadd.f32 %v3667, %v3668
    %v3670 = vsel %vm1229, %v3416, 0.0
    %v3671 = vadd.f32 %v3669, %v3670
    %v3672 = vsel %vm1229, %v3422, 0.0
    %v3673 = vadd.f32 %v3671, %v3672
    %v3674 = vsel %vm1229, %v3428, 0.0
    %v3675 = vadd.f32 %v3673, %v3674
    %v3676 = vsel %vm1229, %v3434, 0.0
    %v3677 = vadd.f32 %v3675, %v3676
    %v3678 = vsel %vm1229, %v3440, 0.0
    %v3679 = vadd.f32 %v3677, %v3678
    %v3680 = vsel %vm1229, %v3446, 0.0
    %v3681 = vadd.f32 %v3679, %v3680
    %v3682 = vsel %vm1229, %v3452, 0.0
    %v3683 = vadd.f32 %v3681, %v3682
    %v3684 = vsel %vm1229, %v3458, 0.0
    %v3685 = vadd.f32 %v3683, %v3684
    %v3686 = vsel %vm1229, %v3464, 0.0
    %v3687 = vadd.f32 %v3685, %v3686
    %v3688 = vsel %vm1229, %v3470, 0.0
    %v3689 = vadd.f32 %v3687, %v3688
    %v3690 = vsel %vm1229, %v3476, 0.0
    %v3691 = vadd.f32 %v3689, %v3690
    %v3692 = vsel %vm1229, %v3482, 0.0
    %v3693 = vadd.f32 %v3691, %v3692
    %v3694 = vsel %vm1229, %v3488, 0.0
    %v3695 = vadd.f32 %v3693, %v3694
    %v3696 = vsel %vm1229, %v3494, 0.0
    %v3697 = vadd.f32 %v3695, %v3696
    %v3698 = vsel %vm1229, %v3500, 0.0
    %v3699 = vadd.f32 %v3697, %v3698
    %v3700 = vsel %vm1229, %v3506, 0.0
    %v3701 = vadd.f32 %v3699, %v3700
    %v3702 = vsel %vm1229, %v3512, 0.0
    %v3703 = vadd.f32 %v3701, %v3702
    %v3704 = vsel %vm1229, %v3518, 0.0
    %v3705 = vadd.f32 %v3703, %v3704
    %v3706 = vsel %vm1229, %v3524, 0.0
    %v3707 = vadd.f32 %v3705, %v3706
    %v3708 = vsel %vm1229, %v3530, 0.0
    %v3709 = vadd.f32 %v3707, %v3708
    %v3710 = vsel %vm1229, %v3536, 0.0
    %v3711 = vadd.f32 %v3709, %v3710
    %v3712 = vrot.slane %v3711, 4
    %v3713 = vadd.f32 %v3711, %v3712
    %v3714 = vrot.slane %v3713, 2
    %v3715 = vadd.f32 %v3713, %v3714
    %v3716 = vrot.slane %v3715, 1
    %v3717 = vadd.f32 %v3715, %v3716
    %v3718 = vmul.f32 %v3574, %v1299
    %v3719 = vmul.f32 %v3611, %v1299
    %v3720 = vmul.f32 %v3648, %v1299
    %v3721 = vmul.f32 %v3717, %v1299
    %v3722 = vsub.f32 %v2834, %v3718
    %v3723 = vsub.f32 %v2836, %v3719
    %v3724 = vsub.f32 %v3348, %v3720
    %v3725 = vsub.f32 %v3350, %v3721
    %v3726 = vsub.f32 %v2840, %v3718
    %v3727 = vsub.f32 %v2842, %v3719
    %v3728 = vsub.f32 %v3354, %v3720
    %v3729 = vsub.f32 %v3356, %v3721
    %v3730 = vsub.f32 %v2846, %v3718
    %v3731 = vsub.f32 %v2848, %v3719
    %v3732 = vsub.f32 %v3360, %v3720
    %v3733 = vsub.f32 %v3362, %v3721
    %v3734 = vsub.f32 %v2852, %v3718
    %v3735 = vsub.f32 %v2854, %v3719
    %v3736 = vsub.f32 %v3366, %v3720
    %v3737 = vsub.f32 %v3368, %v3721
    %v3738 = vsub.f32 %v2858, %v3718
    %v3739 = vsub.f32 %v2860, %v3719
    %v3740 = vsub.f32 %v3372, %v3720
    %v3741 = vsub.f32 %v3374, %v3721
    %v3742 = vsub.f32 %v2864, %v3718
    %v3743 = vsub.f32 %v2866, %v3719
    %v3744 = vsub.f32 %v3378, %v3720
    %v3745 = vsub.f32 %v3380, %v3721
    %v3746 = vsub.f32 %v2870, %v3718
    %v3747 = vsub.f32 %v2872, %v3719
    %v3748 = vsub.f32 %v3384, %v3720
    %v3749 = vsub.f32 %v3386, %v3721
    %v3750 = vsub.f32 %v2876, %v3718
    %v3751 = vsub.f32 %v2878, %v3719
    %v3752 = vsub.f32 %v3390, %v3720
    %v3753 = vsub.f32 %v3392, %v3721
    %v3754 = vsub.f32 %v2882, %v3718
    %v3755 = vsub.f32 %v2884, %v3719
    %v3756 = vsub.f32 %v3396, %v3720
    %v3757 = vsub.f32 %v3398, %v3721
    %v3758 = vsub.f32 %v2888, %v3718
    %v3759 = vsub.f32 %v2890, %v3719
    %v3760 = vsub.f32 %v3402, %v3720
    %v3761 = vsub.f32 %v3404, %v3721
    %v3762 = vsub.f32 %v2894, %v3718
    %v3763 = vsub.f32 %v2896, %v3719
    %v3764 = vsub.f32 %v3408, %v3720
    %v3765 = vsub.f32 %v3410, %v3721
    %v3766 = vsub.f32 %v2900, %v3718
    %v3767 = vsub.f32 %v2902, %v3719
    %v3768 = vsub.f32 %v3414, %v3720
    %v3769 = vsub.f32 %v3416, %v3721
    %v3770 = vsub.f32 %v2906, %v3718
    %v3771 = vsub.f32 %v2908, %v3719
    %v3772 = vsub.f32 %v3420, %v3720
    %v3773 = vsub.f32 %v3422, %v3721
    %v3774 = vsub.f32 %v2912, %v3718
    %v3775 = vsub.f32 %v2914, %v3719
    %v3776 = vsub.f32 %v3426, %v3720
    %v3777 = vsub.f32 %v3428, %v3721
    %v3778 = vsub.f32 %v2918, %v3718
    %v3779 = vsub.f32 %v2920, %v3719
    %v3780 = vsub.f32 %v3432, %v3720
    %v3781 = vsub.f32 %v3434, %v3721
    %v3782 = vsub.f32 %v2924, %v3718
    %v3783 = vsub.f32 %v2926, %v3719
    %v3784 = vsub.f32 %v3438, %v3720
    %v3785 = vsub.f32 %v3440, %v3721
    %v3786 = vsub.f32 %v2930, %v3718
    %v3787 = vsub.f32 %v2932, %v3719
    %v3788 = vsub.f32 %v3444, %v3720
    %v3789 = vsub.f32 %v3446, %v3721
    %v3790 = vsub.f32 %v2936, %v3718
    %v3791 = vsub.f32 %v2938, %v3719
    %v3792 = vsub.f32 %v3450, %v3720
    %v3793 = vsub.f32 %v3452, %v3721
    %v3794 = vsub.f32 %v2942, %v3718
    %v3795 = vsub.f32 %v2944, %v3719
    %v3796 = vsub.f32 %v3456, %v3720
    %v3797 = vsub.f32 %v3458, %v3721
    %v3798 = vsub.f32 %v2948, %v3718
    %v3799 = vsub.f32 %v2950, %v3719
    %v3800 = vsub.f32 %v3462, %v3720
    %v3801 = vsub.f32 %v3464, %v3721
    %v3802 = vsub.f32 %v2954, %v3718
    %v3803 = vsub.f32 %v2956, %v3719
    %v3804 = vsub.f32 %v3468, %v3720
    %v3805 = vsub.f32 %v3470, %v3721
    %v3806 = vsub.f32 %v2960, %v3718
    %v3807 = vsub.f32 %v2962, %v3719
    %v3808 = vsub.f32 %v3474, %v3720
    %v3809 = vsub.f32 %v3476, %v3721
    %v3810 = vsub.f32 %v2966, %v3718
    %v3811 = vsub.f32 %v2968, %v3719
    %v3812 = vsub.f32 %v3480, %v3720
    %v3813 = vsub.f32 %v3482, %v3721
    %v3814 = vsub.f32 %v2972, %v3718
    %v3815 = vsub.f32 %v2974, %v3719
    %v3816 = vsub.f32 %v3486, %v3720
    %v3817 = vsub.f32 %v3488, %v3721
    %v3818 = vsub.f32 %v2978, %v3718
    %v3819 = vsub.f32 %v2980, %v3719
    %v3820 = vsub.f32 %v3492, %v3720
    %v3821 = vsub.f32 %v3494, %v3721
    %v3822 = vsub.f32 %v2984, %v3718
    %v3823 = vsub.f32 %v2986, %v3719
    %v3824 = vsub.f32 %v3498, %v3720
    %v3825 = vsub.f32 %v3500, %v3721
    %v3826 = vsub.f32 %v2990, %v3718
    %v3827 = vsub.f32 %v2992, %v3719
    %v3828 = vsub.f32 %v3504, %v3720
    %v3829 = vsub.f32 %v3506, %v3721
    %v3830 = vsub.f32 %v2996, %v3718
    %v3831 = vsub.f32 %v2998, %v3719
    %v3832 = vsub.f32 %v3510, %v3720
    %v3833 = vsub.f32 %v3512, %v3721
    %v3834 = vsub.f32 %v3002, %v3718
    %v3835 = vsub.f32 %v3004, %v3719
    %v3836 = vsub.f32 %v3516, %v3720
    %v3837 = vsub.f32 %v3518, %v3721
    %v3838 = vsub.f32 %v3008, %v3718
    %v3839 = vsub.f32 %v3010, %v3719
    %v3840 = vsub.f32 %v3522, %v3720
    %v3841 = vsub.f32 %v3524, %v3721
    %v3842 = vsub.f32 %v3014, %v3718
    %v3843 = vsub.f32 %v3016, %v3719
    %v3844 = vsub.f32 %v3528, %v3720
    %v3845 = vsub.f32 %v3530, %v3721
    %v3846 = vsub.f32 %v3020, %v3718
    %v3847 = vsub.f32 %v3022, %v3719
    %v3848 = vsub.f32 %v3534, %v3720
    %v3849 = vsub.f32 %v3536, %v3721
    %v3850 = vmul.f32 %v3722, %v3722
    %v3851 = vmul.f32 %v3723, %v3723
    %v3852 = vmul.f32 %v3724, %v3724
    %v3853 = vmul.f32 %v3725, %v3725
    %v3854 = vmul.f32 %v3726, %v3726
    %v3855 = vmul.f32 %v3727, %v3727
    %v3856 = vmul.f32 %v3728, %v3728
    %v3857 = vmul.f32 %v3729, %v3729
    %v3858 = vmul.f32 %v3730, %v3730
    %v3859 = vmul.f32 %v3731, %v3731
    %v3860 = vmul.f32 %v3732, %v3732
    %v3861 = vmul.f32 %v3733, %v3733
    %v3862 = vmul.f32 %v3734, %v3734
    %v3863 = vmul.f32 %v3735, %v3735
    %v3864 = vmul.f32 %v3736, %v3736
    %v3865 = vmul.f32 %v3737, %v3737
    %v3866 = vmul.f32 %v3738, %v3738
    %v3867 = vmul.f32 %v3739, %v3739
    %v3868 = vmul.f32 %v3740, %v3740
    %v3869 = vmul.f32 %v3741, %v3741
    %v3870 = vmul.f32 %v3742, %v3742
    %v3871 = vmul.f32 %v3743, %v3743
    %v3872 = vmul.f32 %v3744, %v3744
    %v3873 = vmul.f32 %v3745, %v3745
    %v3874 = vmul.f32 %v3746, %v3746
    %v3875 = vmul.f32 %v3747, %v3747
    %v3876 = vmul.f32 %v3748, %v3748
    %v3877 = vmul.f32 %v3749, %v3749
    %v3878 = vmul.f32 %v3750, %v3750
    %v3879 = vmul.f32 %v3751, %v3751
    %v3880 = vmul.f32 %v3752, %v3752
    %v3881 = vmul.f32 %v3753, %v3753
    %v3882 = vmul.f32 %v3754, %v3754
    %v3883 = vmul.f32 %v3755, %v3755
    %v3884 = vmul.f32 %v3756, %v3756
    %v3885 = vmul.f32 %v3757, %v3757
    %v3886 = vmul.f32 %v3758, %v3758
    %v3887 = vmul.f32 %v3759, %v3759
    %v3888 = vmul.f32 %v3760, %v3760
    %v3889 = vmul.f32 %v3761, %v3761
    %v3890 = vmul.f32 %v3762, %v3762
    %v3891 = vmul.f32 %v3763, %v3763
    %v3892 = vmul.f32 %v3764, %v3764
    %v3893 = vmul.f32 %v3765, %v3765
    %v3894 = vmul.f32 %v3766, %v3766
    %v3895 = vmul.f32 %v3767, %v3767
    %v3896 = vmul.f32 %v3768, %v3768
    %v3897 = vmul.f32 %v3769, %v3769
    %v3898 = vmul.f32 %v3770, %v3770
    %v3899 = vmul.f32 %v3771, %v3771
    %v3900 = vmul.f32 %v3772, %v3772
    %v3901 = vmul.f32 %v3773, %v3773
    %v3902 = vmul.f32 %v3774, %v3774
    %v3903 = vmul.f32 %v3775, %v3775
    %v3904 = vmul.f32 %v3776, %v3776
    %v3905 = vmul.f32 %v3777, %v3777
    %v3906 = vmul.f32 %v3778, %v3778
    %v3907 = vmul.f32 %v3779, %v3779
    %v3908 = vmul.f32 %v3780, %v3780
    %v3909 = vmul.f32 %v3781, %v3781
    %v3910 = vmul.f32 %v3782, %v3782
    %v3911 = vmul.f32 %v3783, %v3783
    %v3912 = vmul.f32 %v3784, %v3784
    %v3913 = vmul.f32 %v3785, %v3785
    %v3914 = vmul.f32 %v3786, %v3786
    %v3915 = vmul.f32 %v3787, %v3787
    %v3916 = vmul.f32 %v3788, %v3788
    %v3917 = vmul.f32 %v3789, %v3789
    %v3918 = vmul.f32 %v3790, %v3790
    %v3919 = vmul.f32 %v3791, %v3791
    %v3920 = vmul.f32 %v3792, %v3792
    %v3921 = vmul.f32 %v3793, %v3793
    %v3922 = vmul.f32 %v3794, %v3794
    %v3923 = vmul.f32 %v3795, %v3795
    %v3924 = vmul.f32 %v3796, %v3796
    %v3925 = vmul.f32 %v3797, %v3797
    %v3926 = vmul.f32 %v3798, %v3798
    %v3927 = vmul.f32 %v3799, %v3799
    %v3928 = vmul.f32 %v3800, %v3800
    %v3929 = vmul.f32 %v3801, %v3801
    %v3930 = vmul.f32 %v3802, %v3802
    %v3931 = vmul.f32 %v3803, %v3803
    %v3932 = vmul.f32 %v3804, %v3804
    %v3933 = vmul.f32 %v3805, %v3805
    %v3934 = vmul.f32 %v3806, %v3806
    %v3935 = vmul.f32 %v3807, %v3807
    %v3936 = vmul.f32 %v3808, %v3808
    %v3937 = vmul.f32 %v3809, %v3809
    %v3938 = vmul.f32 %v3810, %v3810
    %v3939 = vmul.f32 %v3811, %v3811
    %v3940 = vmul.f32 %v3812, %v3812
    %v3941 = vmul.f32 %v3813, %v3813
    %v3942 = vmul.f32 %v3814, %v3814
    %v3943 = vmul.f32 %v3815, %v3815
    %v3944 = vmul.f32 %v3816, %v3816
    %v3945 = vmul.f32 %v3817, %v3817
    %v3946 = vmul.f32 %v3818, %v3818
    %v3947 = vmul.f32 %v3819, %v3819
    %v3948 = vmul.f32 %v3820, %v3820
    %v3949 = vmul.f32 %v3821, %v3821
    %v3950 = vmul.f32 %v3822, %v3822
    %v3951 = vmul.f32 %v3823, %v3823
    %v3952 = vmul.f32 %v3824, %v3824
    %v3953 = vmul.f32 %v3825, %v3825
    %v3954 = vmul.f32 %v3826, %v3826
    %v3955 = vmul.f32 %v3827, %v3827
    %v3956 = vmul.f32 %v3828, %v3828
    %v3957 = vmul.f32 %v3829, %v3829
    %v3958 = vmul.f32 %v3830, %v3830
    %v3959 = vmul.f32 %v3831, %v3831
    %v3960 = vmul.f32 %v3832, %v3832
    %v3961 = vmul.f32 %v3833, %v3833
    %v3962 = vmul.f32 %v3834, %v3834
    %v3963 = vmul.f32 %v3835, %v3835
    %v3964 = vmul.f32 %v3836, %v3836
    %v3965 = vmul.f32 %v3837, %v3837
    %v3966 = vmul.f32 %v3838, %v3838
    %v3967 = vmul.f32 %v3839, %v3839
    %v3968 = vmul.f32 %v3840, %v3840
    %v3969 = vmul.f32 %v3841, %v3841
    %v3970 = vmul.f32 %v3842, %v3842
    %v3971 = vmul.f32 %v3843, %v3843
    %v3972 = vmul.f32 %v3844, %v3844
    %v3973 = vmul.f32 %v3845, %v3845
    %v3974 = vmul.f32 %v3846, %v3846
    %v3975 = vmul.f32 %v3847, %v3847
    %v3976 = vmul.f32 %v3848, %v3848
    %v3977 = vmul.f32 %v3849, %v3849
    %v3978 = vadd.f32 %v3850, %v3854
    %v3979 = vadd.f32 %v3978, %v3858
    %v3980 = vadd.f32 %v3979, %v3862
    %v3981 = vadd.f32 %v3980, %v3866
    %v3982 = vadd.f32 %v3981, %v3870
    %v3983 = vadd.f32 %v3982, %v3874
    %v3984 = vadd.f32 %v3983, %v3878
    %v3985 = vadd.f32 %v3984, %v3882
    %v3986 = vadd.f32 %v3985, %v3886
    %v3987 = vadd.f32 %v3986, %v3890
    %v3988 = vadd.f32 %v3987, %v3894
    %v3989 = vadd.f32 %v3988, %v3898
    %v3990 = vadd.f32 %v3989, %v3902
    %v3991 = vadd.f32 %v3990, %v3906
    %v3992 = vadd.f32 %v3991, %v3910
    %v3993 = vadd.f32 %v3992, %v3914
    %v3994 = vadd.f32 %v3993, %v3918
    %v3995 = vadd.f32 %v3994, %v3922
    %v3996 = vadd.f32 %v3995, %v3926
    %v3997 = vadd.f32 %v3996, %v3930
    %v3998 = vadd.f32 %v3997, %v3934
    %v3999 = vadd.f32 %v3998, %v3938
    %v4000 = vadd.f32 %v3999, %v3942
    %v4001 = vadd.f32 %v4000, %v3946
    %v4002 = vadd.f32 %v4001, %v3950
    %v4003 = vadd.f32 %v4002, %v3954
    %v4004 = vadd.f32 %v4003, %v3958
    %v4005 = vadd.f32 %v4004, %v3962
    %v4006 = vadd.f32 %v4005, %v3966
    %v4007 = vadd.f32 %v4006, %v3970
    %v4008 = vadd.f32 %v4007, %v3974
    %v4009 = vrot.slane %v4008, 4
    %v4010 = vadd.f32 %v4008, %v4009
    %v4011 = vrot.slane %v4010, 2
    %v4012 = vadd.f32 %v4010, %v4011
    %v4013 = vrot.slane %v4012, 1
    %v4014 = vadd.f32 %v4012, %v4013
    %v4015 = vadd.f32 %v3851, %v3855
    %v4016 = vadd.f32 %v4015, %v3859
    %v4017 = vadd.f32 %v4016, %v3863
    %v4018 = vadd.f32 %v4017, %v3867
    %v4019 = vadd.f32 %v4018, %v3871
    %v4020 = vadd.f32 %v4019, %v3875
    %v4021 = vadd.f32 %v4020, %v3879
    %v4022 = vadd.f32 %v4021, %v3883
    %v4023 = vadd.f32 %v4022, %v3887
    %v4024 = vadd.f32 %v4023, %v3891
    %v4025 = vadd.f32 %v4024, %v3895
    %v4026 = vadd.f32 %v4025, %v3899
    %v4027 = vadd.f32 %v4026, %v3903
    %v4028 = vadd.f32 %v4027, %v3907
    %v4029 = vadd.f32 %v4028, %v3911
    %v4030 = vadd.f32 %v4029, %v3915
    %v4031 = vadd.f32 %v4030, %v3919
    %v4032 = vadd.f32 %v4031, %v3923
    %v4033 = vadd.f32 %v4032, %v3927
    %v4034 = vadd.f32 %v4033, %v3931
    %v4035 = vadd.f32 %v4034, %v3935
    %v4036 = vadd.f32 %v4035, %v3939
    %v4037 = vadd.f32 %v4036, %v3943
    %v4038 = vadd.f32 %v4037, %v3947
    %v4039 = vadd.f32 %v4038, %v3951
    %v4040 = vadd.f32 %v4039, %v3955
    %v4041 = vadd.f32 %v4040, %v3959
    %v4042 = vadd.f32 %v4041, %v3963
    %v4043 = vadd.f32 %v4042, %v3967
    %v4044 = vadd.f32 %v4043, %v3971
    %v4045 = vadd.f32 %v4044, %v3975
    %v4046 = vrot.slane %v4045, 4
    %v4047 = vadd.f32 %v4045, %v4046
    %v4048 = vrot.slane %v4047, 2
    %v4049 = vadd.f32 %v4047, %v4048
    %v4050 = vrot.slane %v4049, 1
    %v4051 = vadd.f32 %v4049, %v4050
    %v4052 = vadd.f32 %v3852, %v3856
    %v4053 = vadd.f32 %v4052, %v3860
    %v4054 = vadd.f32 %v4053, %v3864
    %v4055 = vadd.f32 %v4054, %v3868
    %v4056 = vadd.f32 %v4055, %v3872
    %v4057 = vadd.f32 %v4056, %v3876
    %v4058 = vadd.f32 %v4057, %v3880
    %v4059 = vadd.f32 %v4058, %v3884
    %v4060 = vadd.f32 %v4059, %v3888
    %v4061 = vadd.f32 %v4060, %v3892
    %v4062 = vadd.f32 %v4061, %v3896
    %v4063 = vadd.f32 %v4062, %v3900
    %v4064 = vadd.f32 %v4063, %v3904
    %v4065 = vadd.f32 %v4064, %v3908
    %v4066 = vadd.f32 %v4065, %v3912
    %v4067 = vadd.f32 %v4066, %v3916
    %v4068 = vadd.f32 %v4067, %v3920
    %v4069 = vadd.f32 %v4068, %v3924
    %v4070 = vadd.f32 %v4069, %v3928
    %v4071 = vadd.f32 %v4070, %v3932
    %v4072 = vadd.f32 %v4071, %v3936
    %v4073 = vadd.f32 %v4072, %v3940
    %v4074 = vadd.f32 %v4073, %v3944
    %v4075 = vadd.f32 %v4074, %v3948
    %v4076 = vadd.f32 %v4075, %v3952
    %v4077 = vadd.f32 %v4076, %v3956
    %v4078 = vadd.f32 %v4077, %v3960
    %v4079 = vadd.f32 %v4078, %v3964
    %v4080 = vadd.f32 %v4079, %v3968
    %v4081 = vadd.f32 %v4080, %v3972
    %v4082 = vadd.f32 %v4081, %v3976
    %v4083 = vrot.slane %v4082, 4
    %v4084 = vadd.f32 %v4082, %v4083
    %v4085 = vrot.slane %v4084, 2
    %v4086 = vadd.f32 %v4084, %v4085
    %v4087 = vrot.slane %v4086, 1
    %v4088 = vadd.f32 %v4086, %v4087
    %v4089 = vsel %vm1229, %v3853, 0.0
    %v4090 = vsel %vm1229, %v3857, 0.0
    %v4091 = vadd.f32 %v4089, %v4090
    %v4092 = vsel %vm1229, %v3861, 0.0
    %v4093 = vadd.f32 %v4091, %v4092
    %v4094 = vsel %vm1229, %v3865, 0.0
    %v4095 = vadd.f32 %v4093, %v4094
    %v4096 = vsel %vm1229, %v3869, 0.0
    %v4097 = vadd.f32 %v4095, %v4096
    %v4098 = vsel %vm1229, %v3873, 0.0
    %v4099 = vadd.f32 %v4097, %v4098
    %v4100 = vsel %vm1229, %v3877, 0.0
    %v4101 = vadd.f32 %v4099, %v4100
    %v4102 = vsel %vm1229, %v3881, 0.0
    %v4103 = vadd.f32 %v4101, %v4102
    %v4104 = vsel %vm1229, %v3885, 0.0
    %v4105 = vadd.f32 %v4103, %v4104
    %v4106 = vsel %vm1229, %v3889, 0.0
    %v4107 = vadd.f32 %v4105, %v4106
    %v4108 = vsel %vm1229, %v3893, 0.0
    %v4109 = vadd.f32 %v4107, %v4108
    %v4110 = vsel %vm1229, %v3897, 0.0
    %v4111 = vadd.f32 %v4109, %v4110
    %v4112 = vsel %vm1229, %v3901, 0.0
    %v4113 = vadd.f32 %v4111, %v4112
    %v4114 = vsel %vm1229, %v3905, 0.0
    %v4115 = vadd.f32 %v4113, %v4114
    %v4116 = vsel %vm1229, %v3909, 0.0
    %v4117 = vadd.f32 %v4115, %v4116
    %v4118 = vsel %vm1229, %v3913, 0.0
    %v4119 = vadd.f32 %v4117, %v4118
    %v4120 = vsel %vm1229, %v3917, 0.0
    %v4121 = vadd.f32 %v4119, %v4120
    %v4122 = vsel %vm1229, %v3921, 0.0
    %v4123 = vadd.f32 %v4121, %v4122
    %v4124 = vsel %vm1229, %v3925, 0.0
    %v4125 = vadd.f32 %v4123, %v4124
    %v4126 = vsel %vm1229, %v3929, 0.0
    %v4127 = vadd.f32 %v4125, %v4126
    %v4128 = vsel %vm1229, %v3933, 0.0
    %v4129 = vadd.f32 %v4127, %v4128
    %v4130 = vsel %vm1229, %v3937, 0.0
    %v4131 = vadd.f32 %v4129, %v4130
    %v4132 = vsel %vm1229, %v3941, 0.0
    %v4133 = vadd.f32 %v4131, %v4132
    %v4134 = vsel %vm1229, %v3945, 0.0
    %v4135 = vadd.f32 %v4133, %v4134
    %v4136 = vsel %vm1229, %v3949, 0.0
    %v4137 = vadd.f32 %v4135, %v4136
    %v4138 = vsel %vm1229, %v3953, 0.0
    %v4139 = vadd.f32 %v4137, %v4138
    %v4140 = vsel %vm1229, %v3957, 0.0
    %v4141 = vadd.f32 %v4139, %v4140
    %v4142 = vsel %vm1229, %v3961, 0.0
    %v4143 = vadd.f32 %v4141, %v4142
    %v4144 = vsel %vm1229, %v3965, 0.0
    %v4145 = vadd.f32 %v4143, %v4144
    %v4146 = vsel %vm1229, %v3969, 0.0
    %v4147 = vadd.f32 %v4145, %v4146
    %v4148 = vsel %vm1229, %v3973, 0.0
    %v4149 = vadd.f32 %v4147, %v4148
    %v4150 = vsel %vm1229, %v3977, 0.0
    %v4151 = vadd.f32 %v4149, %v4150
    %v4152 = vrot.slane %v4151, 4
    %v4153 = vadd.f32 %v4151, %v4152
    %v4154 = vrot.slane %v4153, 2
    %v4155 = vadd.f32 %v4153, %v4154
    %v4156 = vrot.slane %v4155, 1
    %v4157 = vadd.f32 %v4155, %v4156
    %v4158 = vmul.f32 %v4014, %v1299
    %v4159 = vmul.f32 %v4051, %v1299
    %v4160 = vmul.f32 %v4088, %v1299
    %v4161 = vmul.f32 %v4157, %v1299
    %v4162 = vld [vmem:[#allocation9 + $0x8] sm:$0xf]
    %v4163 = vld [vmem:[#allocation9 + $0xc] sm:$0xf]
    %v4164 = vadd.f32 %v4158, 1e-05
    %v4165 = vadd.f32 %v4159, 1e-05
    %v4166 = vadd.f32 %v4160, 1e-05
    %v4167 = vadd.f32 %v4161, 1e-05
    %v4168 = vrsqrt.pop %v4164
    %v4169 = vrsqrt.pop %v4165
    %v4170 = vrsqrt.pop %v4166
    %v4171 = vrsqrt.pop %v4167
    %v4176 = vcombine.low %v4168, %v4169
    %v4177 = vcombine.low %v4170, %v4171
    %v4179 = vunpack.c.l.s4 1966171168
    %v4180 = vunpack.c.0.s8 %v4179
    %v4181 = vlaneseq
    %v4182 = vshrl.u32 %v4181, 7
    %v4183 = vsub.s32 %v4180, %v4182
    %v4184 = vrot.slane %v4176, %v4183
    %v4186 = vunpack.c.l.s4 1966171168
    %v4187 = vunpack.c.0.s8 %v4186
    %v4188 = vlaneseq
    %v4189 = vshrl.u32 %v4188, 7
    %v4190 = vsub.s32 %v4187, %v4189
    %v4191 = vrot.slane %v4177, %v4190
    %v4192 = vcombine.low %v4184, %v4191
    %v4194 = vunpack.c.l.s4 1966171168
    %v4195 = vunpack.c.0.s8 %v4194
    %v4196 = vlaneseq
    %v4197 = vshrl.u32 %v4196, 7
    %v4198 = vsub.s32 %v4195, %v4197
    %v4199 = vrot.slane %v4192, %v4198
    %v4201 = vmul.f32 %v4162, %v4199
    %v4203 = vlaneseq
    %v4204 = vshrl.u32 %v4203, 7
    %v4205 = vsub.s32 0, %v4204
    %v4206 = vrot.slane %v4201, %v4205
    %v4207 = vlaneseq
    %v4208 = vshrl.u32 %v4207, 7
    %v4209 = vsub.s32 1, %v4208
    %v4210 = vrot.slane %v4201, %v4209
    %v4211 = vlaneseq
    %v4212 = vshrl.u32 %v4211, 7
    %v4213 = vsub.s32 2, %v4212
    %v4214 = vrot.slane %v4201, %v4213
    %v4215 = vlaneseq
    %v4216 = vshrl.u32 %v4215, 7
    %v4217 = vsub.s32 3, %v4216
    %v4218 = vrot.slane %v4201, %v4217
    %v4223 = vmul.f32 %v3722, %v4206
    %v4224 = vmul.f32 %v3723, %v4210
    %v4225 = vmul.f32 %v3724, %v4214
    %v4226 = vmul.f32 %v3725, %v4218
    %v4227 = vmul.f32 %v3726, %v4206
    %v4228 = vmul.f32 %v3727, %v4210
    %v4229 = vmul.f32 %v3728, %v4214
    %v4230 = vmul.f32 %v3729, %v4218
    %v4231 = vmul.f32 %v3730, %v4206
    %v4232 = vmul.f32 %v3731, %v4210
    %v4233 = vmul.f32 %v3732, %v4214
    %v4234 = vmul.f32 %v3733, %v4218
    %v4235 = vmul.f32 %v3734, %v4206
    %v4236 = vmul.f32 %v3735, %v4210
    %v4237 = vmul.f32 %v3736, %v4214
    %v4238 = vmul.f32 %v3737, %v4218
    %v4239 = vmul.f32 %v3738, %v4206
    %v4240 = vmul.f32 %v3739, %v4210
    %v4241 = vmul.f32 %v3740, %v4214
    %v4242 = vmul.f32 %v3741, %v4218
    %v4243 = vmul.f32 %v3742, %v4206
    %v4244 = vmul.f32 %v3743, %v4210
    %v4245 = vmul.f32 %v3744, %v4214
    %v4246 = vmul.f32 %v3745, %v4218
    %v4247 = vmul.f32 %v3746, %v4206
    %v4248 = vmul.f32 %v3747, %v4210
    %v4249 = vmul.f32 %v3748, %v4214
    %v4250 = vmul.f32 %v3749, %v4218
    %v4251 = vmul.f32 %v3750, %v4206
    %v4252 = vmul.f32 %v3751, %v4210
    %v4253 = vmul.f32 %v3752, %v4214
    %v4254 = vmul.f32 %v3753, %v4218
    %v4255 = vmul.f32 %v3754, %v4206
    %v4256 = vmul.f32 %v3755, %v4210
    %v4257 = vmul.f32 %v3756, %v4214
    %v4258 = vmul.f32 %v3757, %v4218
    %v4259 = vmul.f32 %v3758, %v4206
    %v4260 = vmul.f32 %v3759, %v4210
    %v4261 = vmul.f32 %v3760, %v4214
    %v4262 = vmul.f32 %v3761, %v4218
    %v4263 = vmul.f32 %v3762, %v4206
    %v4264 = vmul.f32 %v3763, %v4210
    %v4265 = vmul.f32 %v3764, %v4214
    %v4266 = vmul.f32 %v3765, %v4218
    %v4267 = vmul.f32 %v3766, %v4206
    %v4268 = vmul.f32 %v3767, %v4210
    %v4269 = vmul.f32 %v3768, %v4214
    %v4270 = vmul.f32 %v3769, %v4218
    %v4271 = vmul.f32 %v3770, %v4206
    %v4272 = vmul.f32 %v3771, %v4210
    %v4273 = vmul.f32 %v3772, %v4214
    %v4274 = vmul.f32 %v3773, %v4218
    %v4275 = vmul.f32 %v3774, %v4206
    %v4276 = vmul.f32 %v3775, %v4210
    %v4277 = vmul.f32 %v3776, %v4214
    %v4278 = vmul.f32 %v3777, %v4218
    %v4279 = vmul.f32 %v3778, %v4206
    %v4280 = vmul.f32 %v3779, %v4210
    %v4281 = vmul.f32 %v3780, %v4214
    %v4282 = vmul.f32 %v3781, %v4218
    %v4283 = vmul.f32 %v3782, %v4206
    %v4284 = vmul.f32 %v3783, %v4210
    %v4285 = vmul.f32 %v3784, %v4214
    %v4286 = vmul.f32 %v3785, %v4218
    %v4287 = vmul.f32 %v3786, %v4206
    %v4288 = vmul.f32 %v3787, %v4210
    %v4289 = vmul.f32 %v3788, %v4214
    %v4290 = vmul.f32 %v3789, %v4218
    %v4291 = vmul.f32 %v3790, %v4206
    %v4292 = vmul.f32 %v3791, %v4210
    %v4293 = vmul.f32 %v3792, %v4214
    %v4294 = vmul.f32 %v3793, %v4218
    %v4295 = vmul.f32 %v3794, %v4206
    %v4296 = vmul.f32 %v3795, %v4210
    %v4297 = vmul.f32 %v3796, %v4214
    %v4298 = vmul.f32 %v3797, %v4218
    %v4299 = vmul.f32 %v3798, %v4206
    %v4300 = vmul.f32 %v3799, %v4210
    %v4301 = vmul.f32 %v3800, %v4214
    %v4302 = vmul.f32 %v3801, %v4218
    %v4303 = vmul.f32 %v3802, %v4206
    %v4304 = vmul.f32 %v3803, %v4210
    %v4305 = vmul.f32 %v3804, %v4214
    %v4306 = vmul.f32 %v3805, %v4218
    %v4307 = vmul.f32 %v3806, %v4206
    %v4308 = vmul.f32 %v3807, %v4210
    %v4309 = vmul.f32 %v3808, %v4214
    %v4310 = vmul.f32 %v3809, %v4218
    %v4311 = vmul.f32 %v3810, %v4206
    %v4312 = vmul.f32 %v3811, %v4210
    %v4313 = vmul.f32 %v3812, %v4214
    %v4314 = vmul.f32 %v3813, %v4218
    %v4315 = vmul.f32 %v3814, %v4206
    %v4316 = vmul.f32 %v3815, %v4210
    %v4317 = vmul.f32 %v3816, %v4214
    %v4318 = vmul.f32 %v3817, %v4218
    %v4319 = vmul.f32 %v3818, %v4206
    %v4320 = vmul.f32 %v3819, %v4210
    %v4321 = vmul.f32 %v3820, %v4214
    %v4322 = vmul.f32 %v3821, %v4218
    %v4323 = vmul.f32 %v3822, %v4206
    %v4324 = vmul.f32 %v3823, %v4210
    %v4325 = vmul.f32 %v3824, %v4214
    %v4326 = vmul.f32 %v3825, %v4218
    %v4327 = vmul.f32 %v3826, %v4206
    %v4328 = vmul.f32 %v3827, %v4210
    %v4329 = vmul.f32 %v3828, %v4214
    %v4330 = vmul.f32 %v3829, %v4218
    %v4331 = vmul.f32 %v3830, %v4206
    %v4332 = vmul.f32 %v3831, %v4210
    %v4333 = vmul.f32 %v3832, %v4214
    %v4334 = vmul.f32 %v3833, %v4218
    %v4335 = vmul.f32 %v3834, %v4206
    %v4336 = vmul.f32 %v3835, %v4210
    %v4337 = vmul.f32 %v3836, %v4214
    %v4338 = vmul.f32 %v3837, %v4218
    %v4339 = vmul.f32 %v3838, %v4206
    %v4340 = vmul.f32 %v3839, %v4210
    %v4341 = vmul.f32 %v3840, %v4214
    %v4342 = vmul.f32 %v3841, %v4218
    %v4343 = vmul.f32 %v3842, %v4206
    %v4344 = vmul.f32 %v3843, %v4210
    %v4345 = vmul.f32 %v3844, %v4214
    %v4346 = vmul.f32 %v3845, %v4218
    %v4347 = vmul.f32 %v3846, %v4206
    %v4348 = vmul.f32 %v3847, %v4210
    %v4349 = vmul.f32 %v3848, %v4214
    %v4350 = vmul.f32 %v3849, %v4218
    %v4352 = vlaneseq
    %v4353 = vshrl.u32 %v4352, 7
    %v4354 = vsub.s32 0, %v4353
    %v4355 = vrot.slane %v4163, %v4354
    %v4356 = vlaneseq
    %v4357 = vshrl.u32 %v4356, 7
    %v4358 = vsub.s32 1, %v4357
    %v4359 = vrot.slane %v4163, %v4358
    %v4360 = vlaneseq
    %v4361 = vshrl.u32 %v4360, 7
    %v4362 = vsub.s32 2, %v4361
    %v4363 = vrot.slane %v4163, %v4362
    %v4364 = vlaneseq
    %v4365 = vshrl.u32 %v4364, 7
    %v4366 = vsub.s32 3, %v4365
    %v4367 = vrot.slane %v4163, %v4366
    %v4372 = vadd.f32 %v4223, %v4355
    %v4373 = vadd.f32 %v4224, %v4359
    %v4374 = vadd.f32 %v4225, %v4363
    %v4375 = vadd.f32 %v4226, %v4367
    %v4376 = vadd.f32 %v4227, %v4355
    %v4377 = vadd.f32 %v4228, %v4359
    %v4378 = vadd.f32 %v4229, %v4363
    %v4379 = vadd.f32 %v4230, %v4367
    %v4380 = vadd.f32 %v4231, %v4355
    %v4381 = vadd.f32 %v4232, %v4359
    %v4382 = vadd.f32 %v4233, %v4363
    %v4383 = vadd.f32 %v4234, %v4367
    %v4384 = vadd.f32 %v4235, %v4355
    %v4385 = vadd.f32 %v4236, %v4359
    %v4386 = vadd.f32 %v4237, %v4363
    %v4387 = vadd.f32 %v4238, %v4367
    %v4388 = vadd.f32 %v4239, %v4355
    %v4389 = vadd.f32 %v4240, %v4359
    %v4390 = vadd.f32 %v4241, %v4363
    %v4391 = vadd.f32 %v4242, %v4367
    %v4392 = vadd.f32 %v4243, %v4355
    %v4393 = vadd.f32 %v4244, %v4359
    %v4394 = vadd.f32 %v4245, %v4363
    %v4395 = vadd.f32 %v4246, %v4367
    %v4396 = vadd.f32 %v4247, %v4355
    %v4397 = vadd.f32 %v4248, %v4359
    %v4398 = vadd.f32 %v4249, %v4363
    %v4399 = vadd.f32 %v4250, %v4367
    %v4400 = vadd.f32 %v4251, %v4355
    %v4401 = vadd.f32 %v4252, %v4359
    %v4402 = vadd.f32 %v4253, %v4363
    %v4403 = vadd.f32 %v4254, %v4367
    %v4404 = vadd.f32 %v4255, %v4355
    %v4405 = vadd.f32 %v4256, %v4359
    %v4406 = vadd.f32 %v4257, %v4363
    %v4407 = vadd.f32 %v4258, %v4367
    %v4408 = vadd.f32 %v4259, %v4355
    %v4409 = vadd.f32 %v4260, %v4359
    %v4410 = vadd.f32 %v4261, %v4363
    %v4411 = vadd.f32 %v4262, %v4367
    %v4412 = vadd.f32 %v4263, %v4355
    %v4413 = vadd.f32 %v4264, %v4359
    %v4414 = vadd.f32 %v4265, %v4363
    %v4415 = vadd.f32 %v4266, %v4367
    %v4416 = vadd.f32 %v4267, %v4355
    %v4417 = vadd.f32 %v4268, %v4359
    %v4418 = vadd.f32 %v4269, %v4363
    %v4419 = vadd.f32 %v4270, %v4367
    %v4420 = vadd.f32 %v4271, %v4355
    %v4421 = vadd.f32 %v4272, %v4359
    %v4422 = vadd.f32 %v4273, %v4363
    %v4423 = vadd.f32 %v4274, %v4367
    %v4424 = vadd.f32 %v4275, %v4355
    %v4425 = vadd.f32 %v4276, %v4359
    %v4426 = vadd.f32 %v4277, %v4363
    %v4427 = vadd.f32 %v4278, %v4367
    %v4428 = vadd.f32 %v4279, %v4355
    %v4429 = vadd.f32 %v4280, %v4359
    %v4430 = vadd.f32 %v4281, %v4363
    %v4431 = vadd.f32 %v4282, %v4367
    %v4432 = vadd.f32 %v4283, %v4355
    %v4433 = vadd.f32 %v4284, %v4359
    %v4434 = vadd.f32 %v4285, %v4363
    %v4435 = vadd.f32 %v4286, %v4367
    %v4436 = vadd.f32 %v4287, %v4355
    %v4437 = vadd.f32 %v4288, %v4359
    %v4438 = vadd.f32 %v4289, %v4363
    %v4439 = vadd.f32 %v4290, %v4367
    %v4440 = vadd.f32 %v4291, %v4355
    %v4441 = vadd.f32 %v4292, %v4359
    %v4442 = vadd.f32 %v4293, %v4363
    %v4443 = vadd.f32 %v4294, %v4367
    %v4444 = vadd.f32 %v4295, %v4355
    %v4445 = vadd.f32 %v4296, %v4359
    %v4446 = vadd.f32 %v4297, %v4363
    %v4447 = vadd.f32 %v4298, %v4367
    %v4448 = vadd.f32 %v4299, %v4355
    %v4449 = vadd.f32 %v4300, %v4359
    %v4450 = vadd.f32 %v4301, %v4363
    %v4451 = vadd.f32 %v4302, %v4367
    %v4452 = vadd.f32 %v4303, %v4355
    %v4453 = vadd.f32 %v4304, %v4359
    %v4454 = vadd.f32 %v4305, %v4363
    %v4455 = vadd.f32 %v4306, %v4367
    %v4456 = vadd.f32 %v4307, %v4355
    %v4457 = vadd.f32 %v4308, %v4359
    %v4458 = vadd.f32 %v4309, %v4363
    %v4459 = vadd.f32 %v4310, %v4367
    %v4460 = vadd.f32 %v4311, %v4355
    %v4461 = vadd.f32 %v4312, %v4359
    %v4462 = vadd.f32 %v4313, %v4363
    %v4463 = vadd.f32 %v4314, %v4367
    %v4464 = vadd.f32 %v4315, %v4355
    %v4465 = vadd.f32 %v4316, %v4359
    %v4466 = vadd.f32 %v4317, %v4363
    %v4467 = vadd.f32 %v4318, %v4367
    %v4468 = vadd.f32 %v4319, %v4355
    %v4469 = vadd.f32 %v4320, %v4359
    %v4470 = vadd.f32 %v4321, %v4363
    %v4471 = vadd.f32 %v4322, %v4367
    %v4472 = vadd.f32 %v4323, %v4355
    %v4473 = vadd.f32 %v4324, %v4359
    %v4474 = vadd.f32 %v4325, %v4363
    %v4475 = vadd.f32 %v4326, %v4367
    %v4476 = vadd.f32 %v4327, %v4355
    %v4477 = vadd.f32 %v4328, %v4359
    %v4478 = vadd.f32 %v4329, %v4363
    %v4479 = vadd.f32 %v4330, %v4367
    %v4480 = vadd.f32 %v4331, %v4355
    %v4481 = vadd.f32 %v4332, %v4359
    %v4482 = vadd.f32 %v4333, %v4363
    %v4483 = vadd.f32 %v4334, %v4367
    %v4484 = vadd.f32 %v4335, %v4355
    %v4485 = vadd.f32 %v4336, %v4359
    %v4486 = vadd.f32 %v4337, %v4363
    %v4487 = vadd.f32 %v4338, %v4367
    %v4488 = vadd.f32 %v4339, %v4355
    %v4489 = vadd.f32 %v4340, %v4359
    %v4490 = vadd.f32 %v4341, %v4363
    %v4491 = vadd.f32 %v4342, %v4367
    %v4492 = vadd.f32 %v4343, %v4355
    %v4493 = vadd.f32 %v4344, %v4359
    %v4494 = vadd.f32 %v4345, %v4363
    %v4495 = vadd.f32 %v4346, %v4367
    %v4496 = vadd.f32 %v4347, %v4355
    %v4497 = vadd.f32 %v4348, %v4359
    %v4498 = vadd.f32 %v4349, %v4363
    %v4499 = vadd.f32 %v4350, %v4367
    %v4500 = vmax.f32 %v4372, 0.0
    %v4501 = vmax.f32 %v4373, 0.0
    %v4502 = vmax.f32 %v4374, 0.0
    %v4503 = vmax.f32 %v4375, 0.0
    %v4504 = vmax.f32 %v4376, 0.0
    %v4505 = vmax.f32 %v4377, 0.0
    %v4506 = vmax.f32 %v4378, 0.0
    %v4507 = vmax.f32 %v4379, 0.0
    %v4508 = vmax.f32 %v4380, 0.0
    %v4509 = vmax.f32 %v4381, 0.0
    %v4510 = vmax.f32 %v4382, 0.0
    %v4511 = vmax.f32 %v4383, 0.0
    %v4512 = vmax.f32 %v4384, 0.0
    %v4513 = vmax.f32 %v4385, 0.0
    %v4514 = vmax.f32 %v4386, 0.0
    %v4515 = vmax.f32 %v4387, 0.0
    %v4516 = vmax.f32 %v4388, 0.0
    %v4517 = vmax.f32 %v4389, 0.0
    %v4518 = vmax.f32 %v4390, 0.0
    %v4519 = vmax.f32 %v4391, 0.0
    %v4520 = vmax.f32 %v4392, 0.0
    %v4521 = vmax.f32 %v4393, 0.0
    %v4522 = vmax.f32 %v4394, 0.0
    %v4523 = vmax.f32 %v4395, 0.0
    %v4524 = vmax.f32 %v4396, 0.0
    %v4525 = vmax.f32 %v4397, 0.0
    %v4526 = vmax.f32 %v4398, 0.0
    %v4527 = vmax.f32 %v4399, 0.0
    %v4528 = vmax.f32 %v4400, 0.0
    %v4529 = vmax.f32 %v4401, 0.0
    %v4530 = vmax.f32 %v4402, 0.0
    %v4531 = vmax.f32 %v4403, 0.0
    %v4532 = vmax.f32 %v4404, 0.0
    %v4533 = vmax.f32 %v4405, 0.0
    %v4534 = vmax.f32 %v4406, 0.0
    %v4535 = vmax.f32 %v4407, 0.0
    %v4536 = vmax.f32 %v4408, 0.0
    %v4537 = vmax.f32 %v4409, 0.0
    %v4538 = vmax.f32 %v4410, 0.0
    %v4539 = vmax.f32 %v4411, 0.0
    %v4540 = vmax.f32 %v4412, 0.0
    %v4541 = vmax.f32 %v4413, 0.0
    %v4542 = vmax.f32 %v4414, 0.0
    %v4543 = vmax.f32 %v4415, 0.0
    %v4544 = vmax.f32 %v4416, 0.0
    %v4545 = vmax.f32 %v4417, 0.0
    %v4546 = vmax.f32 %v4418, 0.0
    %v4547 = vmax.f32 %v4419, 0.0
    %v4548 = vmax.f32 %v4420, 0.0
    %v4549 = vmax.f32 %v4421, 0.0
    %v4550 = vmax.f32 %v4422, 0.0
    %v4551 = vmax.f32 %v4423, 0.0
    %v4552 = vmax.f32 %v4424, 0.0
    %v4553 = vmax.f32 %v4425, 0.0
    %v4554 = vmax.f32 %v4426, 0.0
    %v4555 = vmax.f32 %v4427, 0.0
    %v4556 = vmax.f32 %v4428, 0.0
    %v4557 = vmax.f32 %v4429, 0.0
    %v4558 = vmax.f32 %v4430, 0.0
    %v4559 = vmax.f32 %v4431, 0.0
    %v4560 = vmax.f32 %v4432, 0.0
    %v4561 = vmax.f32 %v4433, 0.0
    %v4562 = vmax.f32 %v4434, 0.0
    %v4563 = vmax.f32 %v4435, 0.0
    %v4564 = vmax.f32 %v4436, 0.0
    %v4565 = vmax.f32 %v4437, 0.0
    %v4566 = vmax.f32 %v4438, 0.0
    %v4567 = vmax.f32 %v4439, 0.0
    %v4568 = vmax.f32 %v4440, 0.0
    %v4569 = vmax.f32 %v4441, 0.0
    %v4570 = vmax.f32 %v4442, 0.0
    %v4571 = vmax.f32 %v4443, 0.0
    %v4572 = vmax.f32 %v4444, 0.0
    %v4573 = vmax.f32 %v4445, 0.0
    %v4574 = vmax.f32 %v4446, 0.0
    %v4575 = vmax.f32 %v4447, 0.0
    %v4576 = vmax.f32 %v4448, 0.0
    %v4577 = vmax.f32 %v4449, 0.0
    %v4578 = vmax.f32 %v4450, 0.0
    %v4579 = vmax.f32 %v4451, 0.0
    %v4580 = vmax.f32 %v4452, 0.0
    %v4581 = vmax.f32 %v4453, 0.0
    %v4582 = vmax.f32 %v4454, 0.0
    %v4583 = vmax.f32 %v4455, 0.0
    %v4584 = vmax.f32 %v4456, 0.0
    %v4585 = vmax.f32 %v4457, 0.0
    %v4586 = vmax.f32 %v4458, 0.0
    %v4587 = vmax.f32 %v4459, 0.0
    %v4588 = vmax.f32 %v4460, 0.0
    %v4589 = vmax.f32 %v4461, 0.0
    %v4590 = vmax.f32 %v4462, 0.0
    %v4591 = vmax.f32 %v4463, 0.0
    %v4592 = vmax.f32 %v4464, 0.0
    %v4593 = vmax.f32 %v4465, 0.0
    %v4594 = vmax.f32 %v4466, 0.0
    %v4595 = vmax.f32 %v4467, 0.0
    %v4596 = vmax.f32 %v4468, 0.0
    %v4597 = vmax.f32 %v4469, 0.0
    %v4598 = vmax.f32 %v4470, 0.0
    %v4599 = vmax.f32 %v4471, 0.0
    %v4600 = vmax.f32 %v4472, 0.0
    %v4601 = vmax.f32 %v4473, 0.0
    %v4602 = vmax.f32 %v4474, 0.0
    %v4603 = vmax.f32 %v4475, 0.0
    %v4604 = vmax.f32 %v4476, 0.0
    %v4605 = vmax.f32 %v4477, 0.0
    %v4606 = vmax.f32 %v4478, 0.0
    %v4607 = vmax.f32 %v4479, 0.0
    %v4608 = vmax.f32 %v4480, 0.0
    %v4609 = vmax.f32 %v4481, 0.0
    %v4610 = vmax.f32 %v4482, 0.0
    %v4611 = vmax.f32 %v4483, 0.0
    %v4612 = vmax.f32 %v4484, 0.0
    %v4613 = vmax.f32 %v4485, 0.0
    %v4614 = vmax.f32 %v4486, 0.0
    %v4615 = vmax.f32 %v4487, 0.0
    %v4616 = vmax.f32 %v4488, 0.0
    %v4617 = vmax.f32 %v4489, 0.0
    %v4618 = vmax.f32 %v4490, 0.0
    %v4619 = vmax.f32 %v4491, 0.0
    %v4620 = vmax.f32 %v4492, 0.0
    %v4621 = vmax.f32 %v4493, 0.0
    %v4622 = vmax.f32 %v4494, 0.0
    %v4623 = vmax.f32 %v4495, 0.0
    %v4624 = vmax.f32 %v4496, 0.0
    %v4625 = vmax.f32 %v4497, 0.0
    %v4626 = vmax.f32 %v4498, 0.0
    %v4627 = vmax.f32 %v4499, 0.0
    %s4628 = smul.u32 %s2210, 3
    %s4629 = sshll.u32 %s4628, 4
    %4630 = dma.done %s222, %s4629
    %v4631 = vld [vmem:[#allocation4] sm:$0xff]
    %v4632 = vld [vmem:[#allocation4 + $0x8] sm:$0xff]
    %v4633 = vld [vmem:[#allocation4 + $0x10] sm:$0xff]
    %v4634 = vld [vmem:[#allocation4 + $0x18] sm:$0xff]
    %v4635 = vld [vmem:[#allocation4 + $0x20] sm:$0xff]
    %v4636 = vld [vmem:[#allocation4 + $0x28] sm:$0xff]
    %v4637 = vld [vmem:[#allocation4 + $0x30] sm:$0xff]
    %v4638 = vld [vmem:[#allocation4 + $0x38] sm:$0xff]
    %v4639 = vld [vmem:[#allocation4 + $0x40] sm:$0xff]
    %v4640 = vld [vmem:[#allocation4 + $0x48] sm:$0xff]
    %v4641 = vld [vmem:[#allocation4 + $0x50] sm:$0xff]
    %v4642 = vld [vmem:[#allocation4 + $0x58] sm:$0xff]
    %v4643 = vld [vmem:[#allocation4 + $0x60] sm:$0xff]
    %v4644 = vld [vmem:[#allocation4 + $0x68] sm:$0xff]
    %v4645 = vld [vmem:[#allocation4 + $0x70] sm:$0xff]
    %v4646 = vld [vmem:[#allocation4 + $0x78] sm:$0xff]
    %v4647 = vld [vmem:[#allocation4 + $0x80] sm:$0xff]
    %v4648 = vld [vmem:[#allocation4 + $0x88] sm:$0xff]
    %v4649 = vld [vmem:[#allocation4 + $0x90] sm:$0xff]
    %v4650 = vld [vmem:[#allocation4 + $0x98] sm:$0xff]
    %v4651 = vld [vmem:[#allocation4 + $0xa0] sm:$0xff]
    %v4652 = vld [vmem:[#allocation4 + $0xa8] sm:$0xff]
    %v4653 = vld [vmem:[#allocation4 + $0xb0] sm:$0xff]
    %v4654 = vld [vmem:[#allocation4 + $0xb8] sm:$0xff]
    %v4655 = vld [vmem:[#allocation4 + $0xc0] sm:$0xff]
    %v4656 = vld [vmem:[#allocation4 + $0xc8] sm:$0xff]
    %v4657 = vld [vmem:[#allocation4 + $0xd0] sm:$0xff]
    %v4658 = vld [vmem:[#allocation4 + $0xd8] sm:$0xff]
    %v4659 = vld [vmem:[#allocation4 + $0xe0] sm:$0xff]
    %v4660 = vld [vmem:[#allocation4 + $0xe8] sm:$0xff]
    %v4661 = vld [vmem:[#allocation4 + $0xf0] sm:$0xff]
    %v4662 = vld [vmem:[#allocation4 + $0xf8] sm:$0xff]
    %v4663 = vld [vmem:[#allocation4 + $0x100] sm:$0xff]
    %v4664 = vld [vmem:[#allocation4 + $0x108] sm:$0xff]
    %v4665 = vld [vmem:[#allocation4 + $0x110] sm:$0xff]
    %v4666 = vld [vmem:[#allocation4 + $0x118] sm:$0xff]
    %v4667 = vld [vmem:[#allocation4 + $0x120] sm:$0xff]
    %v4668 = vld [vmem:[#allocation4 + $0x128] sm:$0xff]
    %v4669 = vld [vmem:[#allocation4 + $0x130] sm:$0xff]
    %v4670 = vld [vmem:[#allocation4 + $0x138] sm:$0xff]
    %v4671 = vld [vmem:[#allocation4 + $0x140] sm:$0xff]
    %v4672 = vld [vmem:[#allocation4 + $0x148] sm:$0xff]
    %v4673 = vld [vmem:[#allocation4 + $0x150] sm:$0xff]
    %v4674 = vld [vmem:[#allocation4 + $0x158] sm:$0xff]
    %v4675 = vld [vmem:[#allocation4 + $0x160] sm:$0xff]
    %v4676 = vld [vmem:[#allocation4 + $0x168] sm:$0xff]
    %v4677 = vld [vmem:[#allocation4 + $0x170] sm:$0xff]
    %v4678 = vld [vmem:[#allocation4 + $0x178] sm:$0xff]
    %v4679 = vld [vmem:[#allocation4 + $0x180] sm:$0xff]
    %v4680 = vld [vmem:[#allocation4 + $0x188] sm:$0xff]
    %v4681 = vld [vmem:[#allocation4 + $0x190] sm:$0xff]
    %v4682 = vld [vmem:[#allocation4 + $0x198] sm:$0xff]
    %v4683 = vld [vmem:[#allocation4 + $0x1a0] sm:$0xff]
    %v4684 = vld [vmem:[#allocation4 + $0x1a8] sm:$0xff]
    %v4685 = vld [vmem:[#allocation4 + $0x1b0] sm:$0xff]
    %v4686 = vld [vmem:[#allocation4 + $0x1b8] sm:$0xff]
    %v4687 = vld [vmem:[#allocation4 + $0x1c0] sm:$0xff]
    %v4688 = vld [vmem:[#allocation4 + $0x1c8] sm:$0xff]
    %v4689 = vld [vmem:[#allocation4 + $0x1d0] sm:$0xff]
    %v4690 = vld [vmem:[#allocation4 + $0x1d8] sm:$0xff]
    %v4691 = vld [vmem:[#allocation4 + $0x1e0] sm:$0xff]
    %v4692 = vld [vmem:[#allocation4 + $0x1e8] sm:$0xff]
    %v4693 = vld [vmem:[#allocation4 + $0x1f0] sm:$0xff]
    %v4694 = vld [vmem:[#allocation4 + $0x1f8] sm:$0xff]
    %v4695 = vld [vmem:[#allocation4 + $0x200] sm:$0xff]
    %v4696 = vld [vmem:[#allocation4 + $0x208] sm:$0xff]
    %v4697 = vld [vmem:[#allocation4 + $0x210] sm:$0xff]
    %v4698 = vld [vmem:[#allocation4 + $0x218] sm:$0xff]
    %v4699 = vld [vmem:[#allocation4 + $0x220] sm:$0xff]
    %v4700 = vld [vmem:[#allocation4 + $0x228] sm:$0xff]
    %v4701 = vld [vmem:[#allocation4 + $0x230] sm:$0xff]
    %v4702 = vld [vmem:[#allocation4 + $0x238] sm:$0xff]
    %v4703 = vld [vmem:[#allocation4 + $0x240] sm:$0xff]
    %v4704 = vld [vmem:[#allocation4 + $0x248] sm:$0xff]
    %v4705 = vld [vmem:[#allocation4 + $0x250] sm:$0xff]
    %v4706 = vld [vmem:[#allocation4 + $0x258] sm:$0xff]
    %v4707 = vld [vmem:[#allocation4 + $0x260] sm:$0xff]
    %v4708 = vld [vmem:[#allocation4 + $0x268] sm:$0xff]
    %v4709 = vld [vmem:[#allocation4 + $0x270] sm:$0xff]
    %v4710 = vld [vmem:[#allocation4 + $0x278] sm:$0xff]
    %v4711 = vld [vmem:[#allocation4 + $0x280] sm:$0xff]
    %v4712 = vld [vmem:[#allocation4 + $0x288] sm:$0xff]
    %v4713 = vld [vmem:[#allocation4 + $0x290] sm:$0xff]
    %v4714 = vld [vmem:[#allocation4 + $0x298] sm:$0xff]
    %v4715 = vld [vmem:[#allocation4 + $0x2a0] sm:$0xff]
    %v4716 = vld [vmem:[#allocation4 + $0x2a8] sm:$0xff]
    %v4717 = vld [vmem:[#allocation4 + $0x2b0] sm:$0xff]
    %v4718 = vld [vmem:[#allocation4 + $0x2b8] sm:$0xff]
    %v4719 = vld [vmem:[#allocation4 + $0x2c0] sm:$0xff]
    %v4720 = vld [vmem:[#allocation4 + $0x2c8] sm:$0xff]
    %v4721 = vld [vmem:[#allocation4 + $0x2d0] sm:$0xff]
    %v4722 = vld [vmem:[#allocation4 + $0x2d8] sm:$0xff]
    %v4723 = vld [vmem:[#allocation4 + $0x2e0] sm:$0xff]
    %v4724 = vld [vmem:[#allocation4 + $0x2e8] sm:$0xff]
    %v4725 = vld [vmem:[#allocation4 + $0x2f0] sm:$0xff]
    %v4726 = vld [vmem:[#allocation4 + $0x2f8] sm:$0xff]
    %v4727 = vld [vmem:[#allocation4 + $0x300] sm:$0xff]
    %v4728 = vld [vmem:[#allocation4 + $0x308] sm:$0xff]
    %v4729 = vld [vmem:[#allocation4 + $0x310] sm:$0xff]
    %v4730 = vld [vmem:[#allocation4 + $0x318] sm:$0xff]
    %v4731 = vld [vmem:[#allocation4 + $0x320] sm:$0xff]
    %v4732 = vld [vmem:[#allocation4 + $0x328] sm:$0xff]
    %v4733 = vld [vmem:[#allocation4 + $0x330] sm:$0xff]
    %v4734 = vld [vmem:[#allocation4 + $0x338] sm:$0xff]
    %v4735 = vld [vmem:[#allocation4 + $0x340] sm:$0xff]
    %v4736 = vld [vmem:[#allocation4 + $0x348] sm:$0xff]
    %v4737 = vld [vmem:[#allocation4 + $0x350] sm:$0xff]
    %v4738 = vld [vmem:[#allocation4 + $0x358] sm:$0xff]
    %v4739 = vld [vmem:[#allocation4 + $0x360] sm:$0xff]
    %v4740 = vld [vmem:[#allocation4 + $0x368] sm:$0xff]
    %v4741 = vld [vmem:[#allocation4 + $0x370] sm:$0xff]
    %v4742 = vld [vmem:[#allocation4 + $0x378] sm:$0xff]
    %v4743 = vld [vmem:[#allocation4 + $0x380] sm:$0xff]
    %v4744 = vld [vmem:[#allocation4 + $0x388] sm:$0xff]
    %v4745 = vld [vmem:[#allocation4 + $0x390] sm:$0xff]
    %v4746 = vld [vmem:[#allocation4 + $0x398] sm:$0xff]
    %v4747 = vld [vmem:[#allocation4 + $0x3a0] sm:$0xff]
    %v4748 = vld [vmem:[#allocation4 + $0x3a8] sm:$0xff]
    %v4749 = vld [vmem:[#allocation4 + $0x3b0] sm:$0xff]
    %v4750 = vld [vmem:[#allocation4 + $0x3b8] sm:$0xff]
    %v4751 = vld [vmem:[#allocation4 + $0x3c0] sm:$0xff]
    %v4752 = vld [vmem:[#allocation4 + $0x3c8] sm:$0xff]
    %v4753 = vld [vmem:[#allocation4 + $0x3d0] sm:$0xff]
    %v4754 = vld [vmem:[#allocation4 + $0x3d8] sm:$0xff]
    %v4755 = vld [vmem:[#allocation4 + $0x3e0] sm:$0xff]
    %v4756 = vld [vmem:[#allocation4 + $0x3e8] sm:$0xff]
    %v4757 = vld [vmem:[#allocation4 + $0x3f0] sm:$0xff]
    %v4758 = vld [vmem:[#allocation4 + $0x3f8] sm:$0xff]
    %v4759 = vld [vmem:[#allocation4 + $0x400] sm:$0xff]
    %v4760 = vld [vmem:[#allocation4 + $0x408] sm:$0xff]
    %v4761 = vld [vmem:[#allocation4 + $0x410] sm:$0xff]
    %v4762 = vld [vmem:[#allocation4 + $0x418] sm:$0xff]
    %v4763 = vld [vmem:[#allocation4 + $0x420] sm:$0xff]
    %v4764 = vld [vmem:[#allocation4 + $0x428] sm:$0xff]
    %v4765 = vld [vmem:[#allocation4 + $0x430] sm:$0xff]
    %v4766 = vld [vmem:[#allocation4 + $0x438] sm:$0xff]
    %v4767 = vld [vmem:[#allocation4 + $0x440] sm:$0xff]
    %v4768 = vld [vmem:[#allocation4 + $0x448] sm:$0xff]
    %v4769 = vld [vmem:[#allocation4 + $0x450] sm:$0xff]
    %v4770 = vld [vmem:[#allocation4 + $0x458] sm:$0xff]
    %v4771 = vld [vmem:[#allocation4 + $0x460] sm:$0xff]
    %v4772 = vld [vmem:[#allocation4 + $0x468] sm:$0xff]
    %v4773 = vld [vmem:[#allocation4 + $0x470] sm:$0xff]
    %v4774 = vld [vmem:[#allocation4 + $0x478] sm:$0xff]
    %v4775 = vld [vmem:[#allocation4 + $0x480] sm:$0xff]
    %v4776 = vld [vmem:[#allocation4 + $0x488] sm:$0xff]
    %v4777 = vld [vmem:[#allocation4 + $0x490] sm:$0xff]
    %v4778 = vld [vmem:[#allocation4 + $0x498] sm:$0xff]
    %v4779 = vld [vmem:[#allocation4 + $0x4a0] sm:$0xff]
    %v4780 = vld [vmem:[#allocation4 + $0x4a8] sm:$0xff]
    %v4782 = vsel %vm1229, %v4503, 0
    %v4785 = vsel %vm1229, %v4507, 0
    %v4788 = vsel %vm1229, %v4511, 0
    %v4791 = vsel %vm1229, %v4515, 0
    %v4794 = vsel %vm1229, %v4519, 0
    %v4797 = vsel %vm1229, %v4523, 0
    %v4800 = vsel %vm1229, %v4527, 0
    %v4803 = vsel %vm1229, %v4531, 0
    %v4806 = vsel %vm1229, %v4535, 0
    %v4809 = vsel %vm1229, %v4539, 0
    %v4812 = vsel %vm1229, %v4543, 0
    %v4815 = vsel %vm1229, %v4547, 0
    %v4818 = vsel %vm1229, %v4551, 0
    %v4821 = vsel %vm1229, %v4555, 0
    %v4824 = vsel %vm1229, %v4559, 0
    %v4827 = vsel %vm1229, %v4563, 0
    %v4830 = vsel %vm1229, %v4567, 0
    %v4833 = vsel %vm1229, %v4571, 0
    %v4836 = vsel %vm1229, %v4575, 0
    %v4839 = vsel %vm1229, %v4579, 0
    %v4842 = vsel %vm1229, %v4583, 0
    %v4845 = vsel %vm1229, %v4587, 0
    %v4848 = vsel %vm1229, %v4591, 0
    %v4851 = vsel %vm1229, %v4595, 0
    %v4854 = vsel %vm1229, %v4599, 0
    %v4857 = vsel %vm1229, %v4603, 0
    %v4860 = vsel %vm1229, %v4607, 0
    %v4863 = vsel %vm1229, %v4611, 0
    %v4866 = vsel %vm1229, %v4615, 0
    %v4869 = vsel %vm1229, %v4619, 0
    %v4872 = vsel %vm1229, %v4623, 0
    %v4875 = vsel %vm1229, %v4627, 0
    %4877 = vmatprep.subr.mxu0 %v4677
    %4878 = vmatpush1.msra.mxu0 %v4676
    %4879 = vmatprep.subr.mxu0 %v4674
    %4880 = vmatpush1.msra.mxu0 %v4673
    %4881 = vmatprep.subr.mxu0 %v4671
    %4882 = vmatpush1.msra.mxu0 %v4670
    %4883 = vmatprep.subr.mxu0 %v4668
    %4884 = vmatpush1.msra.mxu0 %v4667
    %4885 = vmatprep.subr.mxu0 %v4665
    %4886 = vmatpush1.msra.mxu0 %v4664
    %4887 = vmatprep.subr.mxu0 %v4662
    %4888 = vmatpush1.msra.mxu0 %v4661
    %4889 = vmatprep.subr.mxu0 %v4659
    %4890 = vmatpush1.msra.mxu0 %v4658
    %4891 = vmatprep.subr.mxu0 %v4656
    %4892 = vmatpush1.msra.mxu0 %v4655
    %4893 = vmatprep.subr.mxu0 %v4653
    %4894 = vmatpush1.msra.mxu0 %v4652
    %4895 = vmatprep.subr.mxu0 %v4650
    %4896 = vmatpush1.msra.mxu0 %v4649
    %4897 = vmatprep.subr.mxu0 %v4647
    %4898 = vmatpush1.msra.mxu0 %v4646
    %4899 = vmatprep.subr.mxu0 %v4644
    %4900 = vmatpush1.msra.mxu0 %v4643
    %4901 = vmatprep.subr.mxu0 %v4641
    %4902 = vmatpush1.msra.mxu0 %v4640
    %4903 = vmatprep.subr.mxu0 %v4638
    %4904 = vmatpush1.msra.mxu0 %v4637
    %4905 = vmatprep.subr.mxu0 %v4635
    %4906 = vmatpush1.msra.mxu0 %v4634
    %4907 = vmatprep.subr.mxu0 %v4632
    %4908 = vmatpush1.msra.mxu0 %v4631
    %4909 = vmatprep.subr.mxu0 %v4725
    %4910 = vmatpush2.msra.mxu0 %v4724
    %4911 = vmatprep.subr.mxu0 %v4722
    %4912 = vmatpush2.msra.mxu0 %v4721
    %4913 = vmatprep.subr.mxu0 %v4719
    %4914 = vmatpush2.msra.mxu0 %v4718
    %4915 = vmatprep.subr.mxu0 %v4716
    %4916 = vmatpush2.msra.mxu0 %v4715
    %4917 = vmatprep.subr.mxu0 %v4713
    %4918 = vmatpush2.msra.mxu0 %v4712
    %4919 = vmatprep.subr.mxu0 %v4710
    %4920 = vmatpush2.msra.mxu0 %v4709
    %4921 = vmatprep.subr.mxu0 %v4707
    %4922 = vmatpush2.msra.mxu0 %v4706
    %4923 = vmatprep.subr.mxu0 %v4704
    %4924 = vmatpush2.msra.mxu0 %v4703
    %4925 = vmatprep.subr.mxu0 %v4701
    %4926 = vmatpush2.msra.mxu0 %v4700
    %4927 = vmatprep.subr.mxu0 %v4698
    %4928 = vmatpush2.msra.mxu0 %v4697
    %4929 = vmatprep.subr.mxu0 %v4695
    %4930 = vmatpush2.msra.mxu0 %v4694
    %4931 = vmatprep.subr.mxu0 %v4692
    %4932 = vmatpush2.msra.mxu0 %v4691
    %4933 = vmatprep.subr.mxu0 %v4689
    %4934 = vmatpush2.msra.mxu0 %v4688
    %4935 = vmatprep.subr.mxu0 %v4686
    %4936 = vmatpush2.msra.mxu0 %v4685
    %4937 = vmatprep.subr.mxu0 %v4683
    %4938 = vmatpush2.msra.mxu0 %v4682
    %4939 = vmatprep.subr.mxu0 %v4680
    %4940 = vmatpush2.msra.mxu0 %v4679
    %4941 = vmatprep.mubr.f32.mxu0 %v4501
    %4942 = vmatmul.mubr.f32.gmra.mxu0 %v4500
    %v4943 = vpop.f32.mrf.mxu0
    %v4944 = vadd.f32 0.0, %v4943
    %v4945 = vpop.f32.mrf.mxu0
    %v4946 = vadd.f32 0.0, %v4945
    %4947 = vmatprep.mubr.f32.mxu0 %v4505
    %4948 = vmatmul.mubr.f32.gmra.mxu0 %v4504
    %v4949 = vpop.f32.mrf.mxu0
    %v4950 = vadd.f32 0.0, %v4949
    %v4951 = vpop.f32.mrf.mxu0
    %v4952 = vadd.f32 0.0, %v4951
    %4953 = vmatprep.mubr.f32.mxu0 %v4509
    %4954 = vmatmul.mubr.f32.gmra.mxu0 %v4508
    %v4955 = vpop.f32.mrf.mxu0
    %v4956 = vadd.f32 0.0, %v4955
    %v4957 = vpop.f32.mrf.mxu0
    %v4958 = vadd.f32 0.0, %v4957
    %4959 = vmatprep.mubr.f32.mxu0 %v4513
    %4960 = vmatmul.mubr.f32.gmra.mxu0 %v4512
    %v4961 = vpop.f32.mrf.mxu0
    %v4962 = vadd.f32 0.0, %v4961
    %v4963 = vpop.f32.mrf.mxu0
    %v4964 = vadd.f32 0.0, %v4963
    %4965 = vmatprep.mubr.f32.mxu0 %v4517
    %4966 = vmatmul.mubr.f32.gmra.mxu0 %v4516
    %v4967 = vpop.f32.mrf.mxu0
    %v4968 = vadd.f32 0.0, %v4967
    %v4969 = vpop.f32.mrf.mxu0
    %v4970 = vadd.f32 0.0, %v4969
    %4971 = vmatprep.mubr.f32.mxu0 %v4521
    %4972 = vmatmul.mubr.f32.gmra.mxu0 %v4520
    %v4973 = vpop.f32.mrf.mxu0
    %v4974 = vadd.f32 0.0, %v4973
    %v4975 = vpop.f32.mrf.mxu0
    %v4976 = vadd.f32 0.0, %v4975
    %4977 = vmatprep.mubr.f32.mxu0 %v4525
    %4978 = vmatmul.mubr.f32.gmra.mxu0 %v4524
    %v4979 = vpop.f32.mrf.mxu0
    %v4980 = vadd.f32 0.0, %v4979
    %v4981 = vpop.f32.mrf.mxu0
    %v4982 = vadd.f32 0.0, %v4981
    %4983 = vmatprep.mubr.f32.mxu0 %v4529
    %4984 = vmatmul.mubr.f32.gmra.mxu0 %v4528
    %v4985 = vpop.f32.mrf.mxu0
    %v4986 = vadd.f32 0.0, %v4985
    %v4987 = vpop.f32.mrf.mxu0
    %v4988 = vadd.f32 0.0, %v4987
    %4989 = vmatprep.mubr.f32.mxu0 %v4533
    %4990 = vmatmul.mubr.f32.gmra.mxu0 %v4532
    %v4991 = vpop.f32.mrf.mxu0
    %v4992 = vadd.f32 0.0, %v4991
    %v4993 = vpop.f32.mrf.mxu0
    %v4994 = vadd.f32 0.0, %v4993
    %4995 = vmatprep.mubr.f32.mxu0 %v4537
    %4996 = vmatmul.mubr.f32.gmra.mxu0 %v4536
    %v4997 = vpop.f32.mrf.mxu0
    %v4998 = vadd.f32 0.0, %v4997
    %v4999 = vpop.f32.mrf.mxu0
    %v5000 = vadd.f32 0.0, %v4999
    %5001 = vmatprep.mubr.f32.mxu0 %v4541
    %5002 = vmatmul.mubr.f32.gmra.mxu0 %v4540
    %v5003 = vpop.f32.mrf.mxu0
    %v5004 = vadd.f32 0.0, %v5003
    %v5005 = vpop.f32.mrf.mxu0
    %v5006 = vadd.f32 0.0, %v5005
    %5007 = vmatprep.mubr.f32.mxu0 %v4545
    %5008 = vmatmul.mubr.f32.gmra.mxu0 %v4544
    %v5009 = vpop.f32.mrf.mxu0
    %v5010 = vadd.f32 0.0, %v5009
    %v5011 = vpop.f32.mrf.mxu0
    %v5012 = vadd.f32 0.0, %v5011
    %5013 = vmatprep.mubr.f32.mxu0 %v4549
    %5014 = vmatmul.mubr.f32.gmra.mxu0 %v4548
    %v5015 = vpop.f32.mrf.mxu0
    %v5016 = vadd.f32 0.0, %v5015
    %v5017 = vpop.f32.mrf.mxu0
    %v5018 = vadd.f32 0.0, %v5017
    %5019 = vmatprep.mubr.f32.mxu0 %v4553
    %5020 = vmatmul.mubr.f32.gmra.mxu0 %v4552
    %v5021 = vpop.f32.mrf.mxu0
    %v5022 = vadd.f32 0.0, %v5021
    %v5023 = vpop.f32.mrf.mxu0
    %v5024 = vadd.f32 0.0, %v5023
    %5025 = vmatprep.mubr.f32.mxu0 %v4557
    %5026 = vmatmul.mubr.f32.gmra.mxu0 %v4556
    %v5027 = vpop.f32.mrf.mxu0
    %v5028 = vadd.f32 0.0, %v5027
    %v5029 = vpop.f32.mrf.mxu0
    %v5030 = vadd.f32 0.0, %v5029
    %5031 = vmatprep.mubr.f32.mxu0 %v4561
    %5032 = vmatmul.mubr.f32.gmra.mxu0 %v4560
    %v5033 = vpop.f32.mrf.mxu0
    %v5034 = vadd.f32 0.0, %v5033
    %v5035 = vpop.f32.mrf.mxu0
    %v5036 = vadd.f32 0.0, %v5035
    %5037 = vmatprep.mubr.f32.mxu0 %v4565
    %5038 = vmatmul.mubr.f32.gmra.mxu0 %v4564
    %v5039 = vpop.f32.mrf.mxu0
    %v5040 = vadd.f32 0.0, %v5039
    %v5041 = vpop.f32.mrf.mxu0
    %v5042 = vadd.f32 0.0, %v5041
    %5043 = vmatprep.mubr.f32.mxu0 %v4569
    %5044 = vmatmul.mubr.f32.gmra.mxu0 %v4568
    %v5045 = vpop.f32.mrf.mxu0
    %v5046 = vadd.f32 0.0, %v5045
    %v5047 = vpop.f32.mrf.mxu0
    %v5048 = vadd.f32 0.0, %v5047
    %5049 = vmatprep.mubr.f32.mxu0 %v4573
    %5050 = vmatmul.mubr.f32.gmra.mxu0 %v4572
    %v5051 = vpop.f32.mrf.mxu0
    %v5052 = vadd.f32 0.0, %v5051
    %v5053 = vpop.f32.mrf.mxu0
    %v5054 = vadd.f32 0.0, %v5053
    %5055 = vmatprep.mubr.f32.mxu0 %v4577
    %5056 = vmatmul.mubr.f32.gmra.mxu0 %v4576
    %v5057 = vpop.f32.mrf.mxu0
    %v5058 = vadd.f32 0.0, %v5057
    %v5059 = vpop.f32.mrf.mxu0
    %v5060 = vadd.f32 0.0, %v5059
    %5061 = vmatprep.mubr.f32.mxu0 %v4581
    %5062 = vmatmul.mubr.f32.gmra.mxu0 %v4580
    %v5063 = vpop.f32.mrf.mxu0
    %v5064 = vadd.f32 0.0, %v5063
    %v5065 = vpop.f32.mrf.mxu0
    %v5066 = vadd.f32 0.0, %v5065
    %5067 = vmatprep.mubr.f32.mxu0 %v4585
    %5068 = vmatmul.mubr.f32.gmra.mxu0 %v4584
    %v5069 = vpop.f32.mrf.mxu0
    %v5070 = vadd.f32 0.0, %v5069
    %v5071 = vpop.f32.mrf.mxu0
    %v5072 = vadd.f32 0.0, %v5071
    %5073 = vmatprep.mubr.f32.mxu0 %v4589
    %5074 = vmatmul.mubr.f32.gmra.mxu0 %v4588
    %v5075 = vpop.f32.mrf.mxu0
    %v5076 = vadd.f32 0.0, %v5075
    %v5077 = vpop.f32.mrf.mxu0
    %v5078 = vadd.f32 0.0, %v5077
    %5079 = vmatprep.mubr.f32.mxu0 %v4593
    %5080 = vmatmul.mubr.f32.gmra.mxu0 %v4592
    %v5081 = vpop.f32.mrf.mxu0
    %v5082 = vadd.f32 0.0, %v5081
    %v5083 = vpop.f32.mrf.mxu0
    %v5084 = vadd.f32 0.0, %v5083
    %5085 = vmatprep.mubr.f32.mxu0 %v4597
    %5086 = vmatmul.mubr.f32.gmra.mxu0 %v4596
    %v5087 = vpop.f32.mrf.mxu0
    %v5088 = vadd.f32 0.0, %v5087
    %v5089 = vpop.f32.mrf.mxu0
    %v5090 = vadd.f32 0.0, %v5089
    %5091 = vmatprep.mubr.f32.mxu0 %v4601
    %5092 = vmatmul.mubr.f32.gmra.mxu0 %v4600
    %v5093 = vpop.f32.mrf.mxu0
    %v5094 = vadd.f32 0.0, %v5093
    %v5095 = vpop.f32.mrf.mxu0
    %v5096 = vadd.f32 0.0, %v5095
    %5097 = vmatprep.mubr.f32.mxu0 %v4605
    %5098 = vmatmul.mubr.f32.gmra.mxu0 %v4604
    %v5099 = vpop.f32.mrf.mxu0
    %v5100 = vadd.f32 0.0, %v5099
    %v5101 = vpop.f32.mrf.mxu0
    %v5102 = vadd.f32 0.0, %v5101
    %5103 = vmatprep.mubr.f32.mxu0 %v4609
    %5104 = vmatmul.mubr.f32.gmra.mxu0 %v4608
    %v5105 = vpop.f32.mrf.mxu0
    %v5106 = vadd.f32 0.0, %v5105
    %v5107 = vpop.f32.mrf.mxu0
    %v5108 = vadd.f32 0.0, %v5107
    %5109 = vmatprep.mubr.f32.mxu0 %v4613
    %5110 = vmatmul.mubr.f32.gmra.mxu0 %v4612
    %v5111 = vpop.f32.mrf.mxu0
    %v5112 = vadd.f32 0.0, %v5111
    %v5113 = vpop.f32.mrf.mxu0
    %v5114 = vadd.f32 0.0, %v5113
    %5115 = vmatprep.mubr.f32.mxu0 %v4617
    %5116 = vmatmul.mubr.f32.gmra.mxu0 %v4616
    %v5117 = vpop.f32.mrf.mxu0
    %v5118 = vadd.f32 0.0, %v5117
    %v5119 = vpop.f32.mrf.mxu0
    %v5120 = vadd.f32 0.0, %v5119
    %5121 = vmatprep.mubr.f32.mxu0 %v4621
    %5122 = vmatmul.mubr.f32.gmra.mxu0 %v4620
    %v5123 = vpop.f32.mrf.mxu0
    %v5124 = vadd.f32 0.0, %v5123
    %v5125 = vpop.f32.mrf.mxu0
    %v5126 = vadd.f32 0.0, %v5125
    %5127 = vmatprep.mubr.f32.mxu0 %v4625
    %5128 = vmatmul.mubr.f32.gmra.mxu0 %v4624
    %v5129 = vpop.f32.mrf.mxu0
    %v5130 = vadd.f32 0.0, %v5129
    %v5131 = vpop.f32.mrf.mxu0
    %v5132 = vadd.f32 0.0, %v5131
    %5133 = vdwg.mxu0
    %5134 = vmatprep.subr.mxu0 %v4773
    %5135 = vmatpush1.msra.mxu0 %v4772
    %5136 = vmatprep.subr.mxu0 %v4770
    %5137 = vmatpush1.msra.mxu0 %v4769
    %5138 = vmatprep.subr.mxu0 %v4767
    %5139 = vmatpush1.msra.mxu0 %v4766
    %5140 = vmatprep.subr.mxu0 %v4764
    %5141 = vmatpush1.msra.mxu0 %v4763
    %5142 = vmatprep.subr.mxu0 %v4761
    %5143 = vmatpush1.msra.mxu0 %v4760
    %5144 = vmatprep.subr.mxu0 %v4758
    %5145 = vmatpush1.msra.mxu0 %v4757
    %5146 = vmatprep.subr.mxu0 %v4755
    %5147 = vmatpush1.msra.mxu0 %v4754
    %5148 = vmatprep.subr.mxu0 %v4752
    %5149 = vmatpush1.msra.mxu0 %v4751
    %5150 = vmatprep.subr.mxu0 %v4749
    %5151 = vmatpush1.msra.mxu0 %v4748
    %5152 = vmatprep.subr.mxu0 %v4746
    %5153 = vmatpush1.msra.mxu0 %v4745
    %5154 = vmatprep.subr.mxu0 %v4743
    %5155 = vmatpush1.msra.mxu0 %v4742
    %5156 = vmatprep.subr.mxu0 %v4740
    %5157 = vmatpush1.msra.mxu0 %v4739
    %5158 = vmatprep.subr.mxu0 %v4737
    %5159 = vmatpush1.msra.mxu0 %v4736
    %5160 = vmatprep.subr.mxu0 %v4734
    %5161 = vmatpush1.msra.mxu0 %v4733
    %5162 = vmatprep.subr.mxu0 %v4731
    %5163 = vmatpush1.msra.mxu0 %v4730
    %5164 = vmatprep.subr.mxu0 %v4728
    %5165 = vmatpush1.msra.mxu0 %v4727
    %5166 = vmatprep.subr.mxu0 0.0
    %5167 = vmatpush2.msra.mxu0 0.0
    %5168 = vmatprep.subr.mxu0 0.0
    %5169 = vmatpush2.msra.mxu0 0.0
    %5170 = vmatprep.subr.mxu0 0.0
    %5171 = vmatpush2.msra.mxu0 0.0
    %5172 = vmatprep.subr.mxu0 0.0
    %5173 = vmatpush2.msra.mxu0 0.0
    %5174 = vmatprep.subr.mxu0 0.0
    %5175 = vmatpush2.msra.mxu0 0.0
    %5176 = vmatprep.subr.mxu0 0.0
    %5177 = vmatpush2.msra.mxu0 0.0
    %5178 = vmatprep.subr.mxu0 0.0
    %5179 = vmatpush2.msra.mxu0 0.0
    %5180 = vmatprep.subr.mxu0 0.0
    %5181 = vmatpush2.msra.mxu0 0.0
    %5182 = vmatprep.subr.mxu0 0.0
    %5183 = vmatpush2.msra.mxu0 0.0
    %5184 = vmatprep.subr.mxu0 0.0
    %5185 = vmatpush2.msra.mxu0 0.0
    %5186 = vmatprep.subr.mxu0 0.0
    %5187 = vmatpush2.msra.mxu0 0.0
    %5188 = vmatprep.subr.mxu0 0.0
    %5189 = vmatpush2.msra.mxu0 0.0
    %5190 = vmatprep.subr.mxu0 0.0
    %5191 = vmatpush2.msra.mxu0 0.0
    %5192 = vmatprep.subr.mxu0 0.0
    %5193 = vmatpush2.msra.mxu0 0.0
    %5194 = vmatprep.subr.mxu0 %v4779
    %5195 = vmatpush2.msra.mxu0 %v4778
    %5196 = vmatprep.subr.mxu0 %v4776
    %5197 = vmatpush2.msra.mxu0 %v4775
    %5198 = vmatprep.mubr.f32.mxu0 %v4782
    %5199 = vmatmul.mubr.f32.gmra.mxu0 %v4502
    %v5200 = vpop.f32.mrf.mxu0
    %v5201 = vadd.f32 %v4944, %v5200
    %v5202 = vpop.f32.mrf.mxu0
    %v5203 = vadd.f32 %v4946, %v5202
    %5204 = vmatprep.mubr.f32.mxu0 %v4785
    %5205 = vmatmul.mubr.f32.gmra.mxu0 %v4506
    %v5206 = vpop.f32.mrf.mxu0
    %v5207 = vadd.f32 %v4950, %v5206
    %v5208 = vpop.f32.mrf.mxu0
    %v5209 = vadd.f32 %v4952, %v5208
    %5210 = vmatprep.mubr.f32.mxu0 %v4788
    %5211 = vmatmul.mubr.f32.gmra.mxu0 %v4510
    %v5212 = vpop.f32.mrf.mxu0
    %v5213 = vadd.f32 %v4956, %v5212
    %v5214 = vpop.f32.mrf.mxu0
    %v5215 = vadd.f32 %v4958, %v5214
    %5216 = vmatprep.mubr.f32.mxu0 %v4791
    %5217 = vmatmul.mubr.f32.gmra.mxu0 %v4514
    %v5218 = vpop.f32.mrf.mxu0
    %v5219 = vadd.f32 %v4962, %v5218
    %v5220 = vpop.f32.mrf.mxu0
    %v5221 = vadd.f32 %v4964, %v5220
    %5222 = vmatprep.mubr.f32.mxu0 %v4794
    %5223 = vmatmul.mubr.f32.gmra.mxu0 %v4518
    %v5224 = vpop.f32.mrf.mxu0
    %v5225 = vadd.f32 %v4968, %v5224
    %v5226 = vpop.f32.mrf.mxu0
    %v5227 = vadd.f32 %v4970, %v5226
    %5228 = vmatprep.mubr.f32.mxu0 %v4797
    %5229 = vmatmul.mubr.f32.gmra.mxu0 %v4522
    %v5230 = vpop.f32.mrf.mxu0
    %v5231 = vadd.f32 %v4974, %v5230
    %v5232 = vpop.f32.mrf.mxu0
    %v5233 = vadd.f32 %v4976, %v5232
    %5234 = vmatprep.mubr.f32.mxu0 %v4800
    %5235 = vmatmul.mubr.f32.gmra.mxu0 %v4526
    %v5236 = vpop.f32.mrf.mxu0
    %v5237 = vadd.f32 %v4980, %v5236
    %v5238 = vpop.f32.mrf.mxu0
    %v5239 = vadd.f32 %v4982, %v5238
    %5240 = vmatprep.mubr.f32.mxu0 %v4803
    %5241 = vmatmul.mubr.f32.gmra.mxu0 %v4530
    %v5242 = vpop.f32.mrf.mxu0
    %v5243 = vadd.f32 %v4986, %v5242
    %v5244 = vpop.f32.mrf.mxu0
    %v5245 = vadd.f32 %v4988, %v5244
    %5246 = vmatprep.mubr.f32.mxu0 %v4806
    %5247 = vmatmul.mubr.f32.gmra.mxu0 %v4534
    %v5248 = vpop.f32.mrf.mxu0
    %v5249 = vadd.f32 %v4992, %v5248
    %v5250 = vpop.f32.mrf.mxu0
    %v5251 = vadd.f32 %v4994, %v5250
    %5252 = vmatprep.mubr.f32.mxu0 %v4809
    %5253 = vmatmul.mubr.f32.gmra.mxu0 %v4538
    %v5254 = vpop.f32.mrf.mxu0
    %v5255 = vadd.f32 %v4998, %v5254
    %v5256 = vpop.f32.mrf.mxu0
    %v5257 = vadd.f32 %v5000, %v5256
    %5258 = vmatprep.mubr.f32.mxu0 %v4812
    %5259 = vmatmul.mubr.f32.gmra.mxu0 %v4542
    %v5260 = vpop.f32.mrf.mxu0
    %v5261 = vadd.f32 %v5004, %v5260
    %v5262 = vpop.f32.mrf.mxu0
    %v5263 = vadd.f32 %v5006, %v5262
    %5264 = vmatprep.mubr.f32.mxu0 %v4815
    %5265 = vmatmul.mubr.f32.gmra.mxu0 %v4546
    %v5266 = vpop.f32.mrf.mxu0
    %v5267 = vadd.f32 %v5010, %v5266
    %v5268 = vpop.f32.mrf.mxu0
    %v5269 = vadd.f32 %v5012, %v5268
    %5270 = vmatprep.mubr.f32.mxu0 %v4818
    %5271 = vmatmul.mubr.f32.gmra.mxu0 %v4550
    %v5272 = vpop.f32.mrf.mxu0
    %v5273 = vadd.f32 %v5016, %v5272
    %v5274 = vpop.f32.mrf.mxu0
    %v5275 = vadd.f32 %v5018, %v5274
    %5276 = vmatprep.mubr.f32.mxu0 %v4821
    %5277 = vmatmul.mubr.f32.gmra.mxu0 %v4554
    %v5278 = vpop.f32.mrf.mxu0
    %v5279 = vadd.f32 %v5022, %v5278
    %v5280 = vpop.f32.mrf.mxu0
    %v5281 = vadd.f32 %v5024, %v5280
    %5282 = vmatprep.mubr.f32.mxu0 %v4824
    %5283 = vmatmul.mubr.f32.gmra.mxu0 %v4558
    %v5284 = vpop.f32.mrf.mxu0
    %v5285 = vadd.f32 %v5028, %v5284
    %v5286 = vpop.f32.mrf.mxu0
    %v5287 = vadd.f32 %v5030, %v5286
    %5288 = vmatprep.mubr.f32.mxu0 %v4827
    %5289 = vmatmul.mubr.f32.gmra.mxu0 %v4562
    %v5290 = vpop.f32.mrf.mxu0
    %v5291 = vadd.f32 %v5034, %v5290
    %v5292 = vpop.f32.mrf.mxu0
    %v5293 = vadd.f32 %v5036, %v5292
    %5294 = vmatprep.mubr.f32.mxu0 %v4830
    %5295 = vmatmul.mubr.f32.gmra.mxu0 %v4566
    %v5296 = vpop.f32.mrf.mxu0
    %v5297 = vadd.f32 %v5040, %v5296
    %v5298 = vpop.f32.mrf.mxu0
    %v5299 = vadd.f32 %v5042, %v5298
    %5300 = vmatprep.mubr.f32.mxu0 %v4833
    %5301 = vmatmul.mubr.f32.gmra.mxu0 %v4570
    %v5302 = vpop.f32.mrf.mxu0
    %v5303 = vadd.f32 %v5046, %v5302
    %v5304 = vpop.f32.mrf.mxu0
    %v5305 = vadd.f32 %v5048, %v5304
    %5306 = vmatprep.mubr.f32.mxu0 %v4836
    %5307 = vmatmul.mubr.f32.gmra.mxu0 %v4574
    %v5308 = vpop.f32.mrf.mxu0
    %v5309 = vadd.f32 %v5052, %v5308
    %v5310 = vpop.f32.mrf.mxu0
    %v5311 = vadd.f32 %v5054, %v5310
    %5312 = vmatprep.mubr.f32.mxu0 %v4839
    %5313 = vmatmul.mubr.f32.gmra.mxu0 %v4578
    %v5314 = vpop.f32.mrf.mxu0
    %v5315 = vadd.f32 %v5058, %v5314
    %v5316 = vpop.f32.mrf.mxu0
    %v5317 = vadd.f32 %v5060, %v5316
    %5318 = vmatprep.mubr.f32.mxu0 %v4842
    %5319 = vmatmul.mubr.f32.gmra.mxu0 %v4582
    %v5320 = vpop.f32.mrf.mxu0
    %v5321 = vadd.f32 %v5064, %v5320
    %v5322 = vpop.f32.mrf.mxu0
    %v5323 = vadd.f32 %v5066, %v5322
    %5324 = vmatprep.mubr.f32.mxu0 %v4845
    %5325 = vmatmul.mubr.f32.gmra.mxu0 %v4586
    %v5326 = vpop.f32.mrf.mxu0
    %v5327 = vadd.f32 %v5070, %v5326
    %v5328 = vpop.f32.mrf.mxu0
    %v5329 = vadd.f32 %v5072, %v5328
    %5330 = vmatprep.mubr.f32.mxu0 %v4848
    %5331 = vmatmul.mubr.f32.gmra.mxu0 %v4590
    %v5332 = vpop.f32.mrf.mxu0
    %v5333 = vadd.f32 %v5076, %v5332
    %v5334 = vpop.f32.mrf.mxu0
    %v5335 = vadd.f32 %v5078, %v5334
    %5336 = vmatprep.mubr.f32.mxu0 %v4851
    %5337 = vmatmul.mubr.f32.gmra.mxu0 %v4594
    %v5338 = vpop.f32.mrf.mxu0
    %v5339 = vadd.f32 %v5082, %v5338
    %v5340 = vpop.f32.mrf.mxu0
    %v5341 = vadd.f32 %v5084, %v5340
    %5342 = vmatprep.mubr.f32.mxu0 %v4854
    %5343 = vmatmul.mubr.f32.gmra.mxu0 %v4598
    %v5344 = vpop.f32.mrf.mxu0
    %v5345 = vadd.f32 %v5088, %v5344
    %v5346 = vpop.f32.mrf.mxu0
    %v5347 = vadd.f32 %v5090, %v5346
    %5348 = vmatprep.mubr.f32.mxu0 %v4857
    %5349 = vmatmul.mubr.f32.gmra.mxu0 %v4602
    %v5350 = vpop.f32.mrf.mxu0
    %v5351 = vadd.f32 %v5094, %v5350
    %v5352 = vpop.f32.mrf.mxu0
    %v5353 = vadd.f32 %v5096, %v5352
    %5354 = vmatprep.mubr.f32.mxu0 %v4860
    %5355 = vmatmul.mubr.f32.gmra.mxu0 %v4606
    %v5356 = vpop.f32.mrf.mxu0
    %v5357 = vadd.f32 %v5100, %v5356
    %v5358 = vpop.f32.mrf.mxu0
    %v5359 = vadd.f32 %v5102, %v5358
    %5360 = vmatprep.mubr.f32.mxu0 %v4863
    %5361 = vmatmul.mubr.f32.gmra.mxu0 %v4610
    %v5362 = vpop.f32.mrf.mxu0
    %v5363 = vadd.f32 %v5106, %v5362
    %v5364 = vpop.f32.mrf.mxu0
    %v5365 = vadd.f32 %v5108, %v5364
    %5366 = vmatprep.mubr.f32.mxu0 %v4866
    %5367 = vmatmul.mubr.f32.gmra.mxu0 %v4614
    %v5368 = vpop.f32.mrf.mxu0
    %v5369 = vadd.f32 %v5112, %v5368
    %v5370 = vpop.f32.mrf.mxu0
    %v5371 = vadd.f32 %v5114, %v5370
    %5372 = vmatprep.mubr.f32.mxu0 %v4869
    %5373 = vmatmul.mubr.f32.gmra.mxu0 %v4618
    %v5374 = vpop.f32.mrf.mxu0
    %v5375 = vadd.f32 %v5118, %v5374
    %v5376 = vpop.f32.mrf.mxu0
    %v5377 = vadd.f32 %v5120, %v5376
    %5378 = vmatprep.mubr.f32.mxu0 %v4872
    %5379 = vmatmul.mubr.f32.gmra.mxu0 %v4622
    %v5380 = vpop.f32.mrf.mxu0
    %v5381 = vadd.f32 %v5124, %v5380
    %v5382 = vpop.f32.mrf.mxu0
    %v5383 = vadd.f32 %v5126, %v5382
    %5384 = vmatprep.mubr.f32.mxu0 %v4875
    %5385 = vmatmul.mubr.f32.gmra.mxu0 %v4626
    %v5386 = vpop.f32.mrf.mxu0
    %v5387 = vadd.f32 %v5130, %v5386
    %v5388 = vpop.f32.mrf.mxu0
    %v5389 = vadd.f32 %v5132, %v5388
    %5390 = vdwg.mxu0
    %5391 = vmatprep.subr.mxu0 0.0
    %5392 = vmatpush1.msra.mxu0 %v4678
    %5393 = vmatprep.subr.mxu0 0.0
    %5394 = vmatpush1.msra.mxu0 %v4675
    %5395 = vmatprep.subr.mxu0 0.0
    %5396 = vmatpush1.msra.mxu0 %v4672
    %5397 = vmatprep.subr.mxu0 0.0
    %5398 = vmatpush1.msra.mxu0 %v4669
    %5399 = vmatprep.subr.mxu0 0.0
    %5400 = vmatpush1.msra.mxu0 %v4666
    %5401 = vmatprep.subr.mxu0 0.0
    %5402 = vmatpush1.msra.mxu0 %v4663
    %5403 = vmatprep.subr.mxu0 0.0
    %5404 = vmatpush1.msra.mxu0 %v4660
    %5405 = vmatprep.subr.mxu0 0.0
    %5406 = vmatpush1.msra.mxu0 %v4657
    %5407 = vmatprep.subr.mxu0 0.0
    %5408 = vmatpush1.msra.mxu0 %v4654
    %5409 = vmatprep.subr.mxu0 0.0
    %5410 = vmatpush1.msra.mxu0 %v4651
    %5411 = vmatprep.subr.mxu0 0.0
    %5412 = vmatpush1.msra.mxu0 %v4648
    %5413 = vmatprep.subr.mxu0 0.0
    %5414 = vmatpush1.msra.mxu0 %v4645
    %5415 = vmatprep.subr.mxu0 0.0
    %5416 = vmatpush1.msra.mxu0 %v4642
    %5417 = vmatprep.subr.mxu0 0.0
    %5418 = vmatpush1.msra.mxu0 %v4639
    %5419 = vmatprep.subr.mxu0 0.0
    %5420 = vmatpush1.msra.mxu0 %v4636
    %5421 = vmatprep.subr.mxu0 0.0
    %5422 = vmatpush1.msra.mxu0 %v4633
    %5423 = vmatprep.subr.mxu0 0.0
    %5424 = vmatpush2.msra.mxu0 %v4726
    %5425 = vmatprep.subr.mxu0 0.0
    %5426 = vmatpush2.msra.mxu0 %v4723
    %5427 = vmatprep.subr.mxu0 0.0
    %5428 = vmatpush2.msra.mxu0 %v4720
    %5429 = vmatprep.subr.mxu0 0.0
    %5430 = vmatpush2.msra.mxu0 %v4717
    %5431 = vmatprep.subr.mxu0 0.0
    %5432 = vmatpush2.msra.mxu0 %v4714
    %5433 = vmatprep.subr.mxu0 0.0
    %5434 = vmatpush2.msra.mxu0 %v4711
    %5435 = vmatprep.subr.mxu0 0.0
    %5436 = vmatpush2.msra.mxu0 %v4708
    %5437 = vmatprep.subr.mxu0 0.0
    %5438 = vmatpush2.msra.mxu0 %v4705
    %5439 = vmatprep.subr.mxu0 0.0
    %5440 = vmatpush2.msra.mxu0 %v4702
    %5441 = vmatprep.subr.mxu0 0.0
    %5442 = vmatpush2.msra.mxu0 %v4699
    %5443 = vmatprep.subr.mxu0 0.0
    %5444 = vmatpush2.msra.mxu0 %v4696
    %5445 = vmatprep.subr.mxu0 0.0
    %5446 = vmatpush2.msra.mxu0 %v4693
    %5447 = vmatprep.subr.mxu0 0.0
    %5448 = vmatpush2.msra.mxu0 %v4690
    %5449 = vmatprep.subr.mxu0 0.0
    %5450 = vmatpush2.msra.mxu0 %v4687
    %5451 = vmatprep.subr.mxu0 0.0
    %5452 = vmatpush2.msra.mxu0 %v4684
    %5453 = vmatprep.subr.mxu0 0.0
    %5454 = vmatpush2.msra.mxu0 %v4681
    %5455 = vmatprep.mubr.f32.mxu0 %v4501
    %5456 = vmatmul.mubr.f32.gmra.mxu0 %v4500
    %v5457 = vpop.f32.mrf.mxu0
    %v5458 = vadd.f32 0.0, %v5457
    %v5459 = vpop.f32.mrf.mxu0
    %5460 = vmatprep.mubr.f32.mxu0 %v4505
    %5461 = vmatmul.mubr.f32.gmra.mxu0 %v4504
    %v5462 = vpop.f32.mrf.mxu0
    %v5463 = vadd.f32 0.0, %v5462
    %v5464 = vpop.f32.mrf.mxu0
    %5465 = vmatprep.mubr.f32.mxu0 %v4509
    %5466 = vmatmul.mubr.f32.gmra.mxu0 %v4508
    %v5467 = vpop.f32.mrf.mxu0
    %v5468 = vadd.f32 0.0, %v5467
    %v5469 = vpop.f32.mrf.mxu0
    %5470 = vmatprep.mubr.f32.mxu0 %v4513
    %5471 = vmatmul.mubr.f32.gmra.mxu0 %v4512
    %v5472 = vpop.f32.mrf.mxu0
    %v5473 = vadd.f32 0.0, %v5472
    %v5474 = vpop.f32.mrf.mxu0
    %5475 = vmatprep.mubr.f32.mxu0 %v4517
    %5476 = vmatmul.mubr.f32.gmra.mxu0 %v4516
    %v5477 = vpop.f32.mrf.mxu0
    %v5478 = vadd.f32 0.0, %v5477
    %v5479 = vpop.f32.mrf.mxu0
    %5480 = vmatprep.mubr.f32.mxu0 %v4521
    %5481 = vmatmul.mubr.f32.gmra.mxu0 %v4520
    %v5482 = vpop.f32.mrf.mxu0
    %v5483 = vadd.f32 0.0, %v5482
    %v5484 = vpop.f32.mrf.mxu0
    %5485 = vmatprep.mubr.f32.mxu0 %v4525
    %5486 = vmatmul.mubr.f32.gmra.mxu0 %v4524
    %v5487 = vpop.f32.mrf.mxu0
    %v5488 = vadd.f32 0.0, %v5487
    %v5489 = vpop.f32.mrf.mxu0
    %5490 = vmatprep.mubr.f32.mxu0 %v4529
    %5491 = vmatmul.mubr.f32.gmra.mxu0 %v4528
    %v5492 = vpop.f32.mrf.mxu0
    %v5493 = vadd.f32 0.0, %v5492
    %v5494 = vpop.f32.mrf.mxu0
    %5495 = vmatprep.mubr.f32.mxu0 %v4533
    %5496 = vmatmul.mubr.f32.gmra.mxu0 %v4532
    %v5497 = vpop.f32.mrf.mxu0
    %v5498 = vadd.f32 0.0, %v5497
    %v5499 = vpop.f32.mrf.mxu0
    %5500 = vmatprep.mubr.f32.mxu0 %v4537
    %5501 = vmatmul.mubr.f32.gmra.mxu0 %v4536
    %v5502 = vpop.f32.mrf.mxu0
    %v5503 = vadd.f32 0.0, %v5502
    %v5504 = vpop.f32.mrf.mxu0
    %5505 = vmatprep.mubr.f32.mxu0 %v4541
    %5506 = vmatmul.mubr.f32.gmra.mxu0 %v4540
    %v5507 = vpop.f32.mrf.mxu0
    %v5508 = vadd.f32 0.0, %v5507
    %v5509 = vpop.f32.mrf.mxu0
    %5510 = vmatprep.mubr.f32.mxu0 %v4545
    %5511 = vmatmul.mubr.f32.gmra.mxu0 %v4544
    %v5512 = vpop.f32.mrf.mxu0
    %v5513 = vadd.f32 0.0, %v5512
    %v5514 = vpop.f32.mrf.mxu0
    %5515 = vmatprep.mubr.f32.mxu0 %v4549
    %5516 = vmatmul.mubr.f32.gmra.mxu0 %v4548
    %v5517 = vpop.f32.mrf.mxu0
    %v5518 = vadd.f32 0.0, %v5517
    %v5519 = vpop.f32.mrf.mxu0
    %5520 = vmatprep.mubr.f32.mxu0 %v4553
    %5521 = vmatmul.mubr.f32.gmra.mxu0 %v4552
    %v5522 = vpop.f32.mrf.mxu0
    %v5523 = vadd.f32 0.0, %v5522
    %v5524 = vpop.f32.mrf.mxu0
    %5525 = vmatprep.mubr.f32.mxu0 %v4557
    %5526 = vmatmul.mubr.f32.gmra.mxu0 %v4556
    %v5527 = vpop.f32.mrf.mxu0
    %v5528 = vadd.f32 0.0, %v5527
    %v5529 = vpop.f32.mrf.mxu0
    %5530 = vmatprep.mubr.f32.mxu0 %v4561
    %5531 = vmatmul.mubr.f32.gmra.mxu0 %v4560
    %v5532 = vpop.f32.mrf.mxu0
    %v5533 = vadd.f32 0.0, %v5532
    %v5534 = vpop.f32.mrf.mxu0
    %5535 = vmatprep.mubr.f32.mxu0 %v4565
    %5536 = vmatmul.mubr.f32.gmra.mxu0 %v4564
    %v5537 = vpop.f32.mrf.mxu0
    %v5538 = vadd.f32 0.0, %v5537
    %v5539 = vpop.f32.mrf.mxu0
    %5540 = vmatprep.mubr.f32.mxu0 %v4569
    %5541 = vmatmul.mubr.f32.gmra.mxu0 %v4568
    %v5542 = vpop.f32.mrf.mxu0
    %v5543 = vadd.f32 0.0, %v5542
    %v5544 = vpop.f32.mrf.mxu0
    %5545 = vmatprep.mubr.f32.mxu0 %v4573
    %5546 = vmatmul.mubr.f32.gmra.mxu0 %v4572
    %v5547 = vpop.f32.mrf.mxu0
    %v5548 = vadd.f32 0.0, %v5547
    %v5549 = vpop.f32.mrf.mxu0
    %5550 = vmatprep.mubr.f32.mxu0 %v4577
    %5551 = vmatmul.mubr.f32.gmra.mxu0 %v4576
    %v5552 = vpop.f32.mrf.mxu0
    %v5553 = vadd.f32 0.0, %v5552
    %v5554 = vpop.f32.mrf.mxu0
    %5555 = vmatprep.mubr.f32.mxu0 %v4581
    %5556 = vmatmul.mubr.f32.gmra.mxu0 %v4580
    %v5557 = vpop.f32.mrf.mxu0
    %v5558 = vadd.f32 0.0, %v5557
    %v5559 = vpop.f32.mrf.mxu0
    %5560 = vmatprep.mubr.f32.mxu0 %v4585
    %5561 = vmatmul.mubr.f32.gmra.mxu0 %v4584
    %v5562 = vpop.f32.mrf.mxu0
    %v5563 = vadd.f32 0.0, %v5562
    %v5564 = vpop.f32.mrf.mxu0
    %5565 = vmatprep.mubr.f32.mxu0 %v4589
    %5566 = vmatmul.mubr.f32.gmra.mxu0 %v4588
    %v5567 = vpop.f32.mrf.mxu0
    %v5568 = vadd.f32 0.0, %v5567
    %v5569 = vpop.f32.mrf.mxu0
    %5570 = vmatprep.mubr.f32.mxu0 %v4593
    %5571 = vmatmul.mubr.f32.gmra.mxu0 %v4592
    %v5572 = vpop.f32.mrf.mxu0
    %v5573 = vadd.f32 0.0, %v5572
    %v5574 = vpop.f32.mrf.mxu0
    %5575 = vmatprep.mubr.f32.mxu0 %v4597
    %5576 = vmatmul.mubr.f32.gmra.mxu0 %v4596
    %v5577 = vpop.f32.mrf.mxu0
    %v5578 = vadd.f32 0.0, %v5577
    %v5579 = vpop.f32.mrf.mxu0
    %5580 = vmatprep.mubr.f32.mxu0 %v4601
    %5581 = vmatmul.mubr.f32.gmra.mxu0 %v4600
    %v5582 = vpop.f32.mrf.mxu0
    %v5583 = vadd.f32 0.0, %v5582
    %v5584 = vpop.f32.mrf.mxu0
    %5585 = vmatprep.mubr.f32.mxu0 %v4605
    %5586 = vmatmul.mubr.f32.gmra.mxu0 %v4604
    %v5587 = vpop.f32.mrf.mxu0
    %v5588 = vadd.f32 0.0, %v5587
    %v5589 = vpop.f32.mrf.mxu0
    %5590 = vmatprep.mubr.f32.mxu0 %v4609
    %5591 = vmatmul.mubr.f32.gmra.mxu0 %v4608
    %v5592 = vpop.f32.mrf.mxu0
    %v5593 = vadd.f32 0.0, %v5592
    %v5594 = vpop.f32.mrf.mxu0
    %5595 = vmatprep.mubr.f32.mxu0 %v4613
    %5596 = vmatmul.mubr.f32.gmra.mxu0 %v4612
    %v5597 = vpop.f32.mrf.mxu0
    %v5598 = vadd.f32 0.0, %v5597
    %v5599 = vpop.f32.mrf.mxu0
    %5600 = vmatprep.mubr.f32.mxu0 %v4617
    %5601 = vmatmul.mubr.f32.gmra.mxu0 %v4616
    %v5602 = vpop.f32.mrf.mxu0
    %v5603 = vadd.f32 0.0, %v5602
    %v5604 = vpop.f32.mrf.mxu0
    %5605 = vmatprep.mubr.f32.mxu0 %v4621
    %5606 = vmatmul.mubr.f32.gmra.mxu0 %v4620
    %v5607 = vpop.f32.mrf.mxu0
    %v5608 = vadd.f32 0.0, %v5607
    %v5609 = vpop.f32.mrf.mxu0
    %5610 = vmatprep.mubr.f32.mxu0 %v4625
    %5611 = vmatmul.mubr.f32.gmra.mxu0 %v4624
    %v5612 = vpop.f32.mrf.mxu0
    %v5613 = vadd.f32 0.0, %v5612
    %v5614 = vpop.f32.mrf.mxu0
    %5615 = vdwg.mxu0
    %5616 = vmatprep.subr.mxu0 0.0
    %5617 = vmatpush1.msra.mxu0 %v4774
    %5618 = vmatprep.subr.mxu0 0.0
    %5619 = vmatpush1.msra.mxu0 %v4771
    %5620 = vmatprep.subr.mxu0 0.0
    %5621 = vmatpush1.msra.mxu0 %v4768
    %5622 = vmatprep.subr.mxu0 0.0
    %5623 = vmatpush1.msra.mxu0 %v4765
    %5624 = vmatprep.subr.mxu0 0.0
    %5625 = vmatpush1.msra.mxu0 %v4762
    %5626 = vmatprep.subr.mxu0 0.0
    %5627 = vmatpush1.msra.mxu0 %v4759
    %5628 = vmatprep.subr.mxu0 0.0
    %5629 = vmatpush1.msra.mxu0 %v4756
    %5630 = vmatprep.subr.mxu0 0.0
    %5631 = vmatpush1.msra.mxu0 %v4753
    %5632 = vmatprep.subr.mxu0 0.0
    %5633 = vmatpush1.msra.mxu0 %v4750
    %5634 = vmatprep.subr.mxu0 0.0
    %5635 = vmatpush1.msra.mxu0 %v4747
    %5636 = vmatprep.subr.mxu0 0.0
    %5637 = vmatpush1.msra.mxu0 %v4744
    %5638 = vmatprep.subr.mxu0 0.0
    %5639 = vmatpush1.msra.mxu0 %v4741
    %5640 = vmatprep.subr.mxu0 0.0
    %5641 = vmatpush1.msra.mxu0 %v4738
    %5642 = vmatprep.subr.mxu0 0.0
    %5643 = vmatpush1.msra.mxu0 %v4735
    %5644 = vmatprep.subr.mxu0 0.0
    %5645 = vmatpush1.msra.mxu0 %v4732
    %5646 = vmatprep.subr.mxu0 0.0
    %5647 = vmatpush1.msra.mxu0 %v4729
    %5648 = vmatprep.subr.mxu0 0.0
    %5649 = vmatpush2.msra.mxu0 0.0
    %5650 = vmatprep.subr.mxu0 0.0
    %5651 = vmatpush2.msra.mxu0 0.0
    %5652 = vmatprep.subr.mxu0 0.0
    %5653 = vmatpush2.msra.mxu0 0.0
    %5654 = vmatprep.subr.mxu0 0.0
    %5655 = vmatpush2.msra.mxu0 0.0
    %5656 = vmatprep.subr.mxu0 0.0
    %5657 = vmatpush2.msra.mxu0 0.0
    %5658 = vmatprep.subr.mxu0 0.0
    %5659 = vmatpush2.msra.mxu0 0.0
    %5660 = vmatprep.subr.mxu0 0.0
    %5661 = vmatpush2.msra.mxu0 0.0
    %5662 = vmatprep.subr.mxu0 0.0
    %5663 = vmatpush2.msra.mxu0 0.0
    %5664 = vmatprep.subr.mxu0 0.0
    %5665 = vmatpush2.msra.mxu0 0.0
    %5666 = vmatprep.subr.mxu0 0.0
    %5667 = vmatpush2.msra.mxu0 0.0
    %5668 = vmatprep.subr.mxu0 0.0
    %5669 = vmatpush2.msra.mxu0 0.0
    %5670 = vmatprep.subr.mxu0 0.0
    %5671 = vmatpush2.msra.mxu0 0.0
    %5672 = vmatprep.subr.mxu0 0.0
    %5673 = vmatpush2.msra.mxu0 0.0
    %5674 = vmatprep.subr.mxu0 0.0
    %5675 = vmatpush2.msra.mxu0 0.0
    %5676 = vmatprep.subr.mxu0 0.0
    %5677 = vmatpush2.msra.mxu0 %v4780
    %5678 = vmatprep.subr.mxu0 0.0
    %5679 = vmatpush2.msra.mxu0 %v4777
    %5680 = vmatprep.mubr.f32.mxu0 %v4782
    %5681 = vmatmul.mubr.f32.gmra.mxu0 %v4502
    %v5682 = vpop.f32.mrf.mxu0
    %v5683 = vadd.f32 %v5458, %v5682
    %v5684 = vpop.f32.mrf.mxu0
    %5685 = vmatprep.mubr.f32.mxu0 %v4785
    %5686 = vmatmul.mubr.f32.gmra.mxu0 %v4506
    %v5687 = vpop.f32.mrf.mxu0
    %v5688 = vadd.f32 %v5463, %v5687
    %v5689 = vpop.f32.mrf.mxu0
    %5690 = vmatprep.mubr.f32.mxu0 %v4788
    %5691 = vmatmul.mubr.f32.gmra.mxu0 %v4510
    %v5692 = vpop.f32.mrf.mxu0
    %v5693 = vadd.f32 %v5468, %v5692
    %v5694 = vpop.f32.mrf.mxu0
    %5695 = vmatprep.mubr.f32.mxu0 %v4791
    %5696 = vmatmul.mubr.f32.gmra.mxu0 %v4514
    %v5697 = vpop.f32.mrf.mxu0
    %v5698 = vadd.f32 %v5473, %v5697
    %v5699 = vpop.f32.mrf.mxu0
    %5700 = vmatprep.mubr.f32.mxu0 %v4794
    %5701 = vmatmul.mubr.f32.gmra.mxu0 %v4518
    %v5702 = vpop.f32.mrf.mxu0
    %v5703 = vadd.f32 %v5478, %v5702
    %v5704 = vpop.f32.mrf.mxu0
    %5705 = vmatprep.mubr.f32.mxu0 %v4797
    %5706 = vmatmul.mubr.f32.gmra.mxu0 %v4522
    %v5707 = vpop.f32.mrf.mxu0
    %v5708 = vadd.f32 %v5483, %v5707
    %v5709 = vpop.f32.mrf.mxu0
    %5710 = vmatprep.mubr.f32.mxu0 %v4800
    %5711 = vmatmul.mubr.f32.gmra.mxu0 %v4526
    %v5712 = vpop.f32.mrf.mxu0
    %v5713 = vadd.f32 %v5488, %v5712
    %v5714 = vpop.f32.mrf.mxu0
    %5715 = vmatprep.mubr.f32.mxu0 %v4803
    %5716 = vmatmul.mubr.f32.gmra.mxu0 %v4530
    %v5717 = vpop.f32.mrf.mxu0
    %v5718 = vadd.f32 %v5493, %v5717
    %v5719 = vpop.f32.mrf.mxu0
    %5720 = vmatprep.mubr.f32.mxu0 %v4806
    %5721 = vmatmul.mubr.f32.gmra.mxu0 %v4534
    %v5722 = vpop.f32.mrf.mxu0
    %v5723 = vadd.f32 %v5498, %v5722
    %v5724 = vpop.f32.mrf.mxu0
    %5725 = vmatprep.mubr.f32.mxu0 %v4809
    %5726 = vmatmul.mubr.f32.gmra.mxu0 %v4538
    %v5727 = vpop.f32.mrf.mxu0
    %v5728 = vadd.f32 %v5503, %v5727
    %v5729 = vpop.f32.mrf.mxu0
    %5730 = vmatprep.mubr.f32.mxu0 %v4812
    %5731 = vmatmul.mubr.f32.gmra.mxu0 %v4542
    %v5732 = vpop.f32.mrf.mxu0
    %v5733 = vadd.f32 %v5508, %v5732
    %v5734 = vpop.f32.mrf.mxu0
    %5735 = vmatprep.mubr.f32.mxu0 %v4815
    %5736 = vmatmul.mubr.f32.gmra.mxu0 %v4546
    %v5737 = vpop.f32.mrf.mxu0
    %v5738 = vadd.f32 %v5513, %v5737
    %v5739 = vpop.f32.mrf.mxu0
    %5740 = vmatprep.mubr.f32.mxu0 %v4818
    %5741 = vmatmul.mubr.f32.gmra.mxu0 %v4550
    %v5742 = vpop.f32.mrf.mxu0
    %v5743 = vadd.f32 %v5518, %v5742
    %v5744 = vpop.f32.mrf.mxu0
    %5745 = vmatprep.mubr.f32.mxu0 %v4821
    %5746 = vmatmul.mubr.f32.gmra.mxu0 %v4554
    %v5747 = vpop.f32.mrf.mxu0
    %v5748 = vadd.f32 %v5523, %v5747
    %v5749 = vpop.f32.mrf.mxu0
    %5750 = vmatprep.mubr.f32.mxu0 %v4824
    %5751 = vmatmul.mubr.f32.gmra.mxu0 %v4558
    %v5752 = vpop.f32.mrf.mxu0
    %v5753 = vadd.f32 %v5528, %v5752
    %v5754 = vpop.f32.mrf.mxu0
    %5755 = vmatprep.mubr.f32.mxu0 %v4827
    %5756 = vmatmul.mubr.f32.gmra.mxu0 %v4562
    %v5757 = vpop.f32.mrf.mxu0
    %v5758 = vadd.f32 %v5533, %v5757
    %v5759 = vpop.f32.mrf.mxu0
    %5760 = vmatprep.mubr.f32.mxu0 %v4830
    %5761 = vmatmul.mubr.f32.gmra.mxu0 %v4566
    %v5762 = vpop.f32.mrf.mxu0
    %v5763 = vadd.f32 %v5538, %v5762
    %v5764 = vpop.f32.mrf.mxu0
    %5765 = vmatprep.mubr.f32.mxu0 %v4833
    %5766 = vmatmul.mubr.f32.gmra.mxu0 %v4570
    %v5767 = vpop.f32.mrf.mxu0
    %v5768 = vadd.f32 %v5543, %v5767
    %v5769 = vpop.f32.mrf.mxu0
    %5770 = vmatprep.mubr.f32.mxu0 %v4836
    %5771 = vmatmul.mubr.f32.gmra.mxu0 %v4574
    %v5772 = vpop.f32.mrf.mxu0
    %v5773 = vadd.f32 %v5548, %v5772
    %v5774 = vpop.f32.mrf.mxu0
    %5775 = vmatprep.mubr.f32.mxu0 %v4839
    %5776 = vmatmul.mubr.f32.gmra.mxu0 %v4578
    %v5777 = vpop.f32.mrf.mxu0
    %v5778 = vadd.f32 %v5553, %v5777
    %v5779 = vpop.f32.mrf.mxu0
    %5780 = vmatprep.mubr.f32.mxu0 %v4842
    %5781 = vmatmul.mubr.f32.gmra.mxu0 %v4582
    %v5782 = vpop.f32.mrf.mxu0
    %v5783 = vadd.f32 %v5558, %v5782
    %v5784 = vpop.f32.mrf.mxu0
    %5785 = vmatprep.mubr.f32.mxu0 %v4845
    %5786 = vmatmul.mubr.f32.gmra.mxu0 %v4586
    %v5787 = vpop.f32.mrf.mxu0
    %v5788 = vadd.f32 %v5563, %v5787
    %v5789 = vpop.f32.mrf.mxu0
    %5790 = vmatprep.mubr.f32.mxu0 %v4848
    %5791 = vmatmul.mubr.f32.gmra.mxu0 %v4590
    %v5792 = vpop.f32.mrf.mxu0
    %v5793 = vadd.f32 %v5568, %v5792
    %v5794 = vpop.f32.mrf.mxu0
    %5795 = vmatprep.mubr.f32.mxu0 %v4851
    %5796 = vmatmul.mubr.f32.gmra.mxu0 %v4594
    %v5797 = vpop.f32.mrf.mxu0
    %v5798 = vadd.f32 %v5573, %v5797
    %v5799 = vpop.f32.mrf.mxu0
    %5800 = vmatprep.mubr.f32.mxu0 %v4854
    %5801 = vmatmul.mubr.f32.gmra.mxu0 %v4598
    %v5802 = vpop.f32.mrf.mxu0
    %v5803 = vadd.f32 %v5578, %v5802
    %v5804 = vpop.f32.mrf.mxu0
    %5805 = vmatprep.mubr.f32.mxu0 %v4857
    %5806 = vmatmul.mubr.f32.gmra.mxu0 %v4602
    %v5807 = vpop.f32.mrf.mxu0
    %v5808 = vadd.f32 %v5583, %v5807
    %v5809 = vpop.f32.mrf.mxu0
    %5810 = vmatprep.mubr.f32.mxu0 %v4860
    %5811 = vmatmul.mubr.f32.gmra.mxu0 %v4606
    %v5812 = vpop.f32.mrf.mxu0
    %v5813 = vadd.f32 %v5588, %v5812
    %v5814 = vpop.f32.mrf.mxu0
    %5815 = vmatprep.mubr.f32.mxu0 %v4863
    %5816 = vmatmul.mubr.f32.gmra.mxu0 %v4610
    %v5817 = vpop.f32.mrf.mxu0
    %v5818 = vadd.f32 %v5593, %v5817
    %v5819 = vpop.f32.mrf.mxu0
    %5820 = vmatprep.mubr.f32.mxu0 %v4866
    %5821 = vmatmul.mubr.f32.gmra.mxu0 %v4614
    %v5822 = vpop.f32.mrf.mxu0
    %v5823 = vadd.f32 %v5598, %v5822
    %v5824 = vpop.f32.mrf.mxu0
    %5825 = vmatprep.mubr.f32.mxu0 %v4869
    %5826 = vmatmul.mubr.f32.gmra.mxu0 %v4618
    %v5827 = vpop.f32.mrf.mxu0
    %v5828 = vadd.f32 %v5603, %v5827
    %v5829 = vpop.f32.mrf.mxu0
    %5830 = vmatprep.mubr.f32.mxu0 %v4872
    %5831 = vmatmul.mubr.f32.gmra.mxu0 %v4622
    %v5832 = vpop.f32.mrf.mxu0
    %v5833 = vadd.f32 %v5608, %v5832
    %v5834 = vpop.f32.mrf.mxu0
    %5835 = vmatprep.mubr.f32.mxu0 %v4875
    %5836 = vmatmul.mubr.f32.gmra.mxu0 %v4626
    %v5837 = vpop.f32.mrf.mxu0
    %v5838 = vadd.f32 %v5613, %v5837
    %v5839 = vpop.f32.mrf.mxu0
    %5840 = vdwg.mxu0
    %v5841 = vadd.f32 %v5201, %v5207
    %v5842 = vadd.f32 %v5841, %v5213
    %v5843 = vadd.f32 %v5842, %v5219
    %v5844 = vadd.f32 %v5843, %v5225
    %v5845 = vadd.f32 %v5844, %v5231
    %v5846 = vadd.f32 %v5845, %v5237
    %v5847 = vadd.f32 %v5846, %v5243
    %v5848 = vadd.f32 %v5847, %v5249
    %v5849 = vadd.f32 %v5848, %v5255
    %v5850 = vadd.f32 %v5849, %v5261
    %v5851 = vadd.f32 %v5850, %v5267
    %v5852 = vadd.f32 %v5851, %v5273
    %v5853 = vadd.f32 %v5852, %v5279
    %v5854 = vadd.f32 %v5853, %v5285
    %v5855 = vadd.f32 %v5854, %v5291
    %v5856 = vadd.f32 %v5855, %v5297
    %v5857 = vadd.f32 %v5856, %v5303
    %v5858 = vadd.f32 %v5857, %v5309
    %v5859 = vadd.f32 %v5858, %v5315
    %v5860 = vadd.f32 %v5859, %v5321
    %v5861 = vadd.f32 %v5860, %v5327
    %v5862 = vadd.f32 %v5861, %v5333
    %v5863 = vadd.f32 %v5862, %v5339
    %v5864 = vadd.f32 %v5863, %v5345
    %v5865 = vadd.f32 %v5864, %v5351
    %v5866 = vadd.f32 %v5865, %v5357
    %v5867 = vadd.f32 %v5866, %v5363
    %v5868 = vadd.f32 %v5867, %v5369
    %v5869 = vadd.f32 %v5868, %v5375
    %v5870 = vadd.f32 %v5869, %v5381
    %v5871 = vadd.f32 %v5870, %v5387
    %v5872 = vrot.slane %v5871, 4
    %v5873 = vadd.f32 %v5871, %v5872
    %v5874 = vrot.slane %v5873, 2
    %v5875 = vadd.f32 %v5873, %v5874
    %v5876 = vrot.slane %v5875, 1
    %v5877 = vadd.f32 %v5875, %v5876
    %v5878 = vadd.f32 %v5203, %v5209
    %v5879 = vadd.f32 %v5878, %v5215
    %v5880 = vadd.f32 %v5879, %v5221
    %v5881 = vadd.f32 %v5880, %v5227
    %v5882 = vadd.f32 %v5881, %v5233
    %v5883 = vadd.f32 %v5882, %v5239
    %v5884 = vadd.f32 %v5883, %v5245
    %v5885 = vadd.f32 %v5884, %v5251
    %v5886 = vadd.f32 %v5885, %v5257
    %v5887 = vadd.f32 %v5886, %v5263
    %v5888 = vadd.f32 %v5887, %v5269
    %v5889 = vadd.f32 %v5888, %v5275
    %v5890 = vadd.f32 %v5889, %v5281
    %v5891 = vadd.f32 %v5890, %v5287
    %v5892 = vadd.f32 %v5891, %v5293
    %v5893 = vadd.f32 %v5892, %v5299
    %v5894 = vadd.f32 %v5893, %v5305
    %v5895 = vadd.f32 %v5894, %v5311
    %v5896 = vadd.f32 %v5895, %v5317
    %v5897 = vadd.f32 %v5896, %v5323
    %v5898 = vadd.f32 %v5897, %v5329
    %v5899 = vadd.f32 %v5898, %v5335
    %v5900 = vadd.f32 %v5899, %v5341
    %v5901 = vadd.f32 %v5900, %v5347
    %v5902 = vadd.f32 %v5901, %v5353
    %v5903 = vadd.f32 %v5902, %v5359
    %v5904 = vadd.f32 %v5903, %v5365
    %v5905 = vadd.f32 %v5904, %v5371
    %v5906 = vadd.f32 %v5905, %v5377
    %v5907 = vadd.f32 %v5906, %v5383
    %v5908 = vadd.f32 %v5907, %v5389
    %v5909 = vrot.slane %v5908, 4
    %v5910 = vadd.f32 %v5908, %v5909
    %v5911 = vrot.slane %v5910, 2
    %v5912 = vadd.f32 %v5910, %v5911
    %v5913 = vrot.slane %v5912, 1
    %v5914 = vadd.f32 %v5912, %v5913
    %vm5915 = vcmask 359424
    %v5916 = vsel %vm5915, %v5683, 0.0
    %v5917 = vsel %vm5915, %v5688, 0.0
    %v5918 = vadd.f32 %v5916, %v5917
    %v5919 = vsel %vm5915, %v5693, 0.0
    %v5920 = vadd.f32 %v5918, %v5919
    %v5921 = vsel %vm5915, %v5698, 0.0
    %v5922 = vadd.f32 %v5920, %v5921
    %v5923 = vsel %vm5915, %v5703, 0.0
    %v5924 = vadd.f32 %v5922, %v5923
    %v5925 = vsel %vm5915, %v5708, 0.0
    %v5926 = vadd.f32 %v5924, %v5925
    %v5927 = vsel %vm5915, %v5713, 0.0
    %v5928 = vadd.f32 %v5926, %v5927
    %v5929 = vsel %vm5915, %v5718, 0.0
    %v5930 = vadd.f32 %v5928, %v5929
    %v5931 = vsel %vm5915, %v5723, 0.0
    %v5932 = vadd.f32 %v5930, %v5931
    %v5933 = vsel %vm5915, %v5728, 0.0
    %v5934 = vadd.f32 %v5932, %v5933
    %v5935 = vsel %vm5915, %v5733, 0.0
    %v5936 = vadd.f32 %v5934, %v5935
    %v5937 = vsel %vm5915, %v5738, 0.0
    %v5938 = vadd.f32 %v5936, %v5937
    %v5939 = vsel %vm5915, %v5743, 0.0
    %v5940 = vadd.f32 %v5938, %v5939
    %v5941 = vsel %vm5915, %v5748, 0.0
    %v5942 = vadd.f32 %v5940, %v5941
    %v5943 = vsel %vm5915, %v5753, 0.0
    %v5944 = vadd.f32 %v5942, %v5943
    %v5945 = vsel %vm5915, %v5758, 0.0
    %v5946 = vadd.f32 %v5944, %v5945
    %v5947 = vsel %vm5915, %v5763, 0.0
    %v5948 = vadd.f32 %v5946, %v5947
    %v5949 = vsel %vm5915, %v5768, 0.0
    %v5950 = vadd.f32 %v5948, %v5949
    %v5951 = vsel %vm5915, %v5773, 0.0
    %v5952 = vadd.f32 %v5950, %v5951
    %v5953 = vsel %vm5915, %v5778, 0.0
    %v5954 = vadd.f32 %v5952, %v5953
    %v5955 = vsel %vm5915, %v5783, 0.0
    %v5956 = vadd.f32 %v5954, %v5955
    %v5957 = vsel %vm5915, %v5788, 0.0
    %v5958 = vadd.f32 %v5956, %v5957
    %v5959 = vsel %vm5915, %v5793, 0.0
    %v5960 = vadd.f32 %v5958, %v5959
    %v5961 = vsel %vm5915, %v5798, 0.0
    %v5962 = vadd.f32 %v5960, %v5961
    %v5963 = vsel %vm5915, %v5803, 0.0
    %v5964 = vadd.f32 %v5962, %v5963
    %v5965 = vsel %vm5915, %v5808, 0.0
    %v5966 = vadd.f32 %v5964, %v5965
    %v5967 = vsel %vm5915, %v5813, 0.0
    %v5968 = vadd.f32 %v5966, %v5967
    %v5969 = vsel %vm5915, %v5818, 0.0
    %v5970 = vadd.f32 %v5968, %v5969
    %v5971 = vsel %vm5915, %v5823, 0.0
    %v5972 = vadd.f32 %v5970, %v5971
    %v5973 = vsel %vm5915, %v5828, 0.0
    %v5974 = vadd.f32 %v5972, %v5973
    %v5975 = vsel %vm5915, %v5833, 0.0
    %v5976 = vadd.f32 %v5974, %v5975
    %v5977 = vsel %vm5915, %v5838, 0.0
    %v5978 = vadd.f32 %v5976, %v5977
    %v5979 = vrot.slane %v5978, 4
    %v5980 = vadd.f32 %v5978, %v5979
    %v5981 = vrot.slane %v5980, 2
    %v5982 = vadd.f32 %v5980, %v5981
    %v5983 = vrot.slane %v5982, 1
    %v5984 = vadd.f32 %v5982, %v5983
    %v5985 = vmul.f32 %v5877, %v1299
    %v5986 = vmul.f32 %v5914, %v1299
    %v5987 = vmul.f32 %v5984, %v1299
    %v5988 = vsub.f32 %v5201, %v5985
    %v5989 = vsub.f32 %v5203, %v5986
    %v5990 = vsub.f32 %v5683, %v5987
    %v5991 = vsub.f32 %v5207, %v5985
    %v5992 = vsub.f32 %v5209, %v5986
    %v5993 = vsub.f32 %v5688, %v5987
    %v5994 = vsub.f32 %v5213, %v5985
    %v5995 = vsub.f32 %v5215, %v5986
    %v5996 = vsub.f32 %v5693, %v5987
    %v5997 = vsub.f32 %v5219, %v5985
    %v5998 = vsub.f32 %v5221, %v5986
    %v5999 = vsub.f32 %v5698, %v5987
    %v6000 = vsub.f32 %v5225, %v5985
    %v6001 = vsub.f32 %v5227, %v5986
    %v6002 = vsub.f32 %v5703, %v5987
    %v6003 = vsub.f32 %v5231, %v5985
    %v6004 = vsub.f32 %v5233, %v5986
    %v6005 = vsub.f32 %v5708, %v5987
    %v6006 = vsub.f32 %v5237, %v5985
    %v6007 = vsub.f32 %v5239, %v5986
    %v6008 = vsub.f32 %v5713, %v5987
    %v6009 = vsub.f32 %v5243, %v5985
    %v6010 = vsub.f32 %v5245, %v5986
    %v6011 = vsub.f32 %v5718, %v5987
    %v6012 = vsub.f32 %v5249, %v5985
    %v6013 = vsub.f32 %v5251, %v5986
    %v6014 = vsub.f32 %v5723, %v5987
    %v6015 = vsub.f32 %v5255, %v5985
    %v6016 = vsub.f32 %v5257, %v5986
    %v6017 = vsub.f32 %v5728, %v5987
    %v6018 = vsub.f32 %v5261, %v5985
    %v6019 = vsub.f32 %v5263, %v5986
    %v6020 = vsub.f32 %v5733, %v5987
    %v6021 = vsub.f32 %v5267, %v5985
    %v6022 = vsub.f32 %v5269, %v5986
    %v6023 = vsub.f32 %v5738, %v5987
    %v6024 = vsub.f32 %v5273, %v5985
    %v6025 = vsub.f32 %v5275, %v5986
    %v6026 = vsub.f32 %v5743, %v5987
    %v6027 = vsub.f32 %v5279, %v5985
    %v6028 = vsub.f32 %v5281, %v5986
    %v6029 = vsub.f32 %v5748, %v5987
    %v6030 = vsub.f32 %v5285, %v5985
    %v6031 = vsub.f32 %v5287, %v5986
    %v6032 = vsub.f32 %v5753, %v5987
    %v6033 = vsub.f32 %v5291, %v5985
    %v6034 = vsub.f32 %v5293, %v5986
    %v6035 = vsub.f32 %v5758, %v5987
    %v6036 = vsub.f32 %v5297, %v5985
    %v6037 = vsub.f32 %v5299, %v5986
    %v6038 = vsub.f32 %v5763, %v5987
    %v6039 = vsub.f32 %v5303, %v5985
    %v6040 = vsub.f32 %v5305, %v5986
    %v6041 = vsub.f32 %v5768, %v5987
    %v6042 = vsub.f32 %v5309, %v5985
    %v6043 = vsub.f32 %v5311, %v5986
    %v6044 = vsub.f32 %v5773, %v5987
    %v6045 = vsub.f32 %v5315, %v5985
    %v6046 = vsub.f32 %v5317, %v5986
    %v6047 = vsub.f32 %v5778, %v5987
    %v6048 = vsub.f32 %v5321, %v5985
    %v6049 = vsub.f32 %v5323, %v5986
    %v6050 = vsub.f32 %v5783, %v5987
    %v6051 = vsub.f32 %v5327, %v5985
    %v6052 = vsub.f32 %v5329, %v5986
    %v6053 = vsub.f32 %v5788, %v5987
    %v6054 = vsub.f32 %v5333, %v5985
    %v6055 = vsub.f32 %v5335, %v5986
    %v6056 = vsub.f32 %v5793, %v5987
    %v6057 = vsub.f32 %v5339, %v5985
    %v6058 = vsub.f32 %v5341, %v5986
    %v6059 = vsub.f32 %v5798, %v5987
    %v6060 = vsub.f32 %v5345, %v5985
    %v6061 = vsub.f32 %v5347, %v5986
    %v6062 = vsub.f32 %v5803, %v5987
    %v6063 = vsub.f32 %v5351, %v5985
    %v6064 = vsub.f32 %v5353, %v5986
    %v6065 = vsub.f32 %v5808, %v5987
    %v6066 = vsub.f32 %v5357, %v5985
    %v6067 = vsub.f32 %v5359, %v5986
    %v6068 = vsub.f32 %v5813, %v5987
    %v6069 = vsub.f32 %v5363, %v5985
    %v6070 = vsub.f32 %v5365, %v5986
    %v6071 = vsub.f32 %v5818, %v5987
    %v6072 = vsub.f32 %v5369, %v5985
    %v6073 = vsub.f32 %v5371, %v5986
    %v6074 = vsub.f32 %v5823, %v5987
    %v6075 = vsub.f32 %v5375, %v5985
    %v6076 = vsub.f32 %v5377, %v5986
    %v6077 = vsub.f32 %v5828, %v5987
    %v6078 = vsub.f32 %v5381, %v5985
    %v6079 = vsub.f32 %v5383, %v5986
    %v6080 = vsub.f32 %v5833, %v5987
    %v6081 = vsub.f32 %v5387, %v5985
    %v6082 = vsub.f32 %v5389, %v5986
    %v6083 = vsub.f32 %v5838, %v5987
    %v6084 = vmul.f32 %v5988, %v5988
    %v6085 = vmul.f32 %v5989, %v5989
    %v6086 = vmul.f32 %v5990, %v5990
    %v6087 = vmul.f32 %v5991, %v5991
    %v6088 = vmul.f32 %v5992, %v5992
    %v6089 = vmul.f32 %v5993, %v5993
    %v6090 = vmul.f32 %v5994, %v5994
    %v6091 = vmul.f32 %v5995, %v5995
    %v6092 = vmul.f32 %v5996, %v5996
    %v6093 = vmul.f32 %v5997, %v5997
    %v6094 = vmul.f32 %v5998, %v5998
    %v6095 = vmul.f32 %v5999, %v5999
    %v6096 = vmul.f32 %v6000, %v6000
    %v6097 = vmul.f32 %v6001, %v6001
    %v6098 = vmul.f32 %v6002, %v6002
    %v6099 = vmul.f32 %v6003, %v6003
    %v6100 = vmul.f32 %v6004, %v6004
    %v6101 = vmul.f32 %v6005, %v6005
    %v6102 = vmul.f32 %v6006, %v6006
    %v6103 = vmul.f32 %v6007, %v6007
    %v6104 = vmul.f32 %v6008, %v6008
    %v6105 = vmul.f32 %v6009, %v6009
    %v6106 = vmul.f32 %v6010, %v6010
    %v6107 = vmul.f32 %v6011, %v6011
    %v6108 = vmul.f32 %v6012, %v6012
    %v6109 = vmul.f32 %v6013, %v6013
    %v6110 = vmul.f32 %v6014, %v6014
    %v6111 = vmul.f32 %v6015, %v6015
    %v6112 = vmul.f32 %v6016, %v6016
    %v6113 = vmul.f32 %v6017, %v6017
    %v6114 = vmul.f32 %v6018, %v6018
    %v6115 = vmul.f32 %v6019, %v6019
    %v6116 = vmul.f32 %v6020, %v6020
    %v6117 = vmul.f32 %v6021, %v6021
    %v6118 = vmul.f32 %v6022, %v6022
    %v6119 = vmul.f32 %v6023, %v6023
    %v6120 = vmul.f32 %v6024, %v6024
    %v6121 = vmul.f32 %v6025, %v6025
    %v6122 = vmul.f32 %v6026, %v6026
    %v6123 = vmul.f32 %v6027, %v6027
    %v6124 = vmul.f32 %v6028, %v6028
    %v6125 = vmul.f32 %v6029, %v6029
    %v6126 = vmul.f32 %v6030, %v6030
    %v6127 = vmul.f32 %v6031, %v6031
    %v6128 = vmul.f32 %v6032, %v6032
    %v6129 = vmul.f32 %v6033, %v6033
    %v6130 = vmul.f32 %v6034, %v6034
    %v6131 = vmul.f32 %v6035, %v6035
    %v6132 = vmul.f32 %v6036, %v6036
    %v6133 = vmul.f32 %v6037, %v6037
    %v6134 = vmul.f32 %v6038, %v6038
    %v6135 = vmul.f32 %v6039, %v6039
    %v6136 = vmul.f32 %v6040, %v6040
    %v6137 = vmul.f32 %v6041, %v6041
    %v6138 = vmul.f32 %v6042, %v6042
    %v6139 = vmul.f32 %v6043, %v6043
    %v6140 = vmul.f32 %v6044, %v6044
    %v6141 = vmul.f32 %v6045, %v6045
    %v6142 = vmul.f32 %v6046, %v6046
    %v6143 = vmul.f32 %v6047, %v6047
    %v6144 = vmul.f32 %v6048, %v6048
    %v6145 = vmul.f32 %v6049, %v6049
    %v6146 = vmul.f32 %v6050, %v6050
    %v6147 = vmul.f32 %v6051, %v6051
    %v6148 = vmul.f32 %v6052, %v6052
    %v6149 = vmul.f32 %v6053, %v6053
    %v6150 = vmul.f32 %v6054, %v6054
    %v6151 = vmul.f32 %v6055, %v6055
    %v6152 = vmul.f32 %v6056, %v6056
    %v6153 = vmul.f32 %v6057, %v6057
    %v6154 = vmul.f32 %v6058, %v6058
    %v6155 = vmul.f32 %v6059, %v6059
    %v6156 = vmul.f32 %v6060, %v6060
    %v6157 = vmul.f32 %v6061, %v6061
    %v6158 = vmul.f32 %v6062, %v6062
    %v6159 = vmul.f32 %v6063, %v6063
    %v6160 = vmul.f32 %v6064, %v6064
    %v6161 = vmul.f32 %v6065, %v6065
    %v6162 = vmul.f32 %v6066, %v6066
    %v6163 = vmul.f32 %v6067, %v6067
    %v6164 = vmul.f32 %v6068, %v6068
    %v6165 = vmul.f32 %v6069, %v6069
    %v6166 = vmul.f32 %v6070, %v6070
    %v6167 = vmul.f32 %v6071, %v6071
    %v6168 = vmul.f32 %v6072, %v6072
    %v6169 = vmul.f32 %v6073, %v6073
    %v6170 = vmul.f32 %v6074, %v6074
    %v6171 = vmul.f32 %v6075, %v6075
    %v6172 = vmul.f32 %v6076, %v6076
    %v6173 = vmul.f32 %v6077, %v6077
    %v6174 = vmul.f32 %v6078, %v6078
    %v6175 = vmul.f32 %v6079, %v6079
    %v6176 = vmul.f32 %v6080, %v6080
    %v6177 = vmul.f32 %v6081, %v6081
    %v6178 = vmul.f32 %v6082, %v6082
    %v6179 = vmul.f32 %v6083, %v6083
    %v6180 = vadd.f32 %v6084, %v6087
    %v6181 = vadd.f32 %v6180, %v6090
    %v6182 = vadd.f32 %v6181, %v6093
    %v6183 = vadd.f32 %v6182, %v6096
    %v6184 = vadd.f32 %v6183, %v6099
    %v6185 = vadd.f32 %v6184, %v6102
    %v6186 = vadd.f32 %v6185, %v6105
    %v6187 = vadd.f32 %v6186, %v6108
    %v6188 = vadd.f32 %v6187, %v6111
    %v6189 = vadd.f32 %v6188, %v6114
    %v6190 = vadd.f32 %v6189, %v6117
    %v6191 = vadd.f32 %v6190, %v6120
    %v6192 = vadd.f32 %v6191, %v6123
    %v6193 = vadd.f32 %v6192, %v6126
    %v6194 = vadd.f32 %v6193, %v6129
    %v6195 = vadd.f32 %v6194, %v6132
    %v6196 = vadd.f32 %v6195, %v6135
    %v6197 = vadd.f32 %v6196, %v6138
    %v6198 = vadd.f32 %v6197, %v6141
    %v6199 = vadd.f32 %v6198, %v6144
    %v6200 = vadd.f32 %v6199, %v6147
    %v6201 = vadd.f32 %v6200, %v6150
    %v6202 = vadd.f32 %v6201, %v6153
    %v6203 = vadd.f32 %v6202, %v6156
    %v6204 = vadd.f32 %v6203, %v6159
    %v6205 = vadd.f32 %v6204, %v6162
    %v6206 = vadd.f32 %v6205, %v6165
    %v6207 = vadd.f32 %v6206, %v6168
    %v6208 = vadd.f32 %v6207, %v6171
    %v6209 = vadd.f32 %v6208, %v6174
    %v6210 = vadd.f32 %v6209, %v6177
    %v6211 = vrot.slane %v6210, 4
    %v6212 = vadd.f32 %v6210, %v6211
    %v6213 = vrot.slane %v6212, 2
    %v6214 = vadd.f32 %v6212, %v6213
    %v6215 = vrot.slane %v6214, 1
    %v6216 = vadd.f32 %v6214, %v6215
    %v6217 = vadd.f32 %v6085, %v6088
    %v6218 = vadd.f32 %v6217, %v6091
    %v6219 = vadd.f32 %v6218, %v6094
    %v6220 = vadd.f32 %v6219, %v6097
    %v6221 = vadd.f32 %v6220, %v6100
    %v6222 = vadd.f32 %v6221, %v6103
    %v6223 = vadd.f32 %v6222, %v6106
    %v6224 = vadd.f32 %v6223, %v6109
    %v6225 = vadd.f32 %v6224, %v6112
    %v6226 = vadd.f32 %v6225, %v6115
    %v6227 = vadd.f32 %v6226, %v6118
    %v6228 = vadd.f32 %v6227, %v6121
    %v6229 = vadd.f32 %v6228, %v6124
    %v6230 = vadd.f32 %v6229, %v6127
    %v6231 = vadd.f32 %v6230, %v6130
    %v6232 = vadd.f32 %v6231, %v6133
    %v6233 = vadd.f32 %v6232, %v6136
    %v6234 = vadd.f32 %v6233, %v6139
    %v6235 = vadd.f32 %v6234, %v6142
    %v6236 = vadd.f32 %v6235, %v6145
    %v6237 = vadd.f32 %v6236, %v6148
    %v6238 = vadd.f32 %v6237, %v6151
    %v6239 = vadd.f32 %v6238, %v6154
    %v6240 = vadd.f32 %v6239, %v6157
    %v6241 = vadd.f32 %v6240, %v6160
    %v6242 = vadd.f32 %v6241, %v6163
    %v6243 = vadd.f32 %v6242, %v6166
    %v6244 = vadd.f32 %v6243, %v6169
    %v6245 = vadd.f32 %v6244, %v6172
    %v6246 = vadd.f32 %v6245, %v6175
    %v6247 = vadd.f32 %v6246, %v6178
    %v6248 = vrot.slane %v6247, 4
    %v6249 = vadd.f32 %v6247, %v6248
    %v6250 = vrot.slane %v6249, 2
    %v6251 = vadd.f32 %v6249, %v6250
    %v6252 = vrot.slane %v6251, 1
    %v6253 = vadd.f32 %v6251, %v6252
    %v6254 = vsel %vm5915, %v6086, 0.0
    %v6255 = vsel %vm5915, %v6089, 0.0
    %v6256 = vadd.f32 %v6254, %v6255
    %v6257 = vsel %vm5915, %v6092, 0.0
    %v6258 = vadd.f32 %v6256, %v6257
    %v6259 = vsel %vm5915, %v6095, 0.0
    %v6260 = vadd.f32 %v6258, %v6259
    %v6261 = vsel %vm5915, %v6098, 0.0
    %v6262 = vadd.f32 %v6260, %v6261
    %v6263 = vsel %vm5915, %v6101, 0.0
    %v6264 = vadd.f32 %v6262, %v6263
    %v6265 = vsel %vm5915, %v6104, 0.0
    %v6266 = vadd.f32 %v6264, %v6265
    %v6267 = vsel %vm5915, %v6107, 0.0
    %v6268 = vadd.f32 %v6266, %v6267
    %v6269 = vsel %vm5915, %v6110, 0.0
    %v6270 = vadd.f32 %v6268, %v6269
    %v6271 = vsel %vm5915, %v6113, 0.0
    %v6272 = vadd.f32 %v6270, %v6271
    %v6273 = vsel %vm5915, %v6116, 0.0
    %v6274 = vadd.f32 %v6272, %v6273
    %v6275 = vsel %vm5915, %v6119, 0.0
    %v6276 = vadd.f32 %v6274, %v6275
    %v6277 = vsel %vm5915, %v6122, 0.0
    %v6278 = vadd.f32 %v6276, %v6277
    %v6279 = vsel %vm5915, %v6125, 0.0
    %v6280 = vadd.f32 %v6278, %v6279
    %v6281 = vsel %vm5915, %v6128, 0.0
    %v6282 = vadd.f32 %v6280, %v6281
    %v6283 = vsel %vm5915, %v6131, 0.0
    %v6284 = vadd.f32 %v6282, %v6283
    %v6285 = vsel %vm5915, %v6134, 0.0
    %v6286 = vadd.f32 %v6284, %v6285
    %v6287 = vsel %vm5915, %v6137, 0.0
    %v6288 = vadd.f32 %v6286, %v6287
    %v6289 = vsel %vm5915, %v6140, 0.0
    %v6290 = vadd.f32 %v6288, %v6289
    %v6291 = vsel %vm5915, %v6143, 0.0
    %v6292 = vadd.f32 %v6290, %v6291
    %v6293 = vsel %vm5915, %v6146, 0.0
    %v6294 = vadd.f32 %v6292, %v6293
    %v6295 = vsel %vm5915, %v6149, 0.0
    %v6296 = vadd.f32 %v6294, %v6295
    %v6297 = vsel %vm5915, %v6152, 0.0
    %v6298 = vadd.f32 %v6296, %v6297
    %v6299 = vsel %vm5915, %v6155, 0.0
    %v6300 = vadd.f32 %v6298, %v6299
    %v6301 = vsel %vm5915, %v6158, 0.0
    %v6302 = vadd.f32 %v6300, %v6301
    %v6303 = vsel %vm5915, %v6161, 0.0
    %v6304 = vadd.f32 %v6302, %v6303
    %v6305 = vsel %vm5915, %v6164, 0.0
    %v6306 = vadd.f32 %v6304, %v6305
    %v6307 = vsel %vm5915, %v6167, 0.0
    %v6308 = vadd.f32 %v6306, %v6307
    %v6309 = vsel %vm5915, %v6170, 0.0
    %v6310 = vadd.f32 %v6308, %v6309
    %v6311 = vsel %vm5915, %v6173, 0.0
    %v6312 = vadd.f32 %v6310, %v6311
    %v6313 = vsel %vm5915, %v6176, 0.0
    %v6314 = vadd.f32 %v6312, %v6313
    %v6315 = vsel %vm5915, %v6179, 0.0
    %v6316 = vadd.f32 %v6314, %v6315
    %v6317 = vrot.slane %v6316, 4
    %v6318 = vadd.f32 %v6316, %v6317
    %v6319 = vrot.slane %v6318, 2
    %v6320 = vadd.f32 %v6318, %v6319
    %v6321 = vrot.slane %v6320, 1
    %v6322 = vadd.f32 %v6320, %v6321
    %v6323 = vmul.f32 %v6216, %v1299
    %v6324 = vmul.f32 %v6253, %v1299
    %v6325 = vmul.f32 %v6322, %v1299
    %v6326 = vld [vmem:[#allocation9 + $0x10] sm:$0x7]
    %v6327 = vld [vmem:[#allocation9 + $0x13] sm:$0x7]
    %v6328 = vadd.f32 %v6323, 1e-05
    %v6329 = vadd.f32 %v6324, 1e-05
    %v6330 = vadd.f32 %v6325, 1e-05
    %v6331 = vrsqrt.pop %v6328
    %v6332 = vrsqrt.pop %v6329
    %v6333 = vrsqrt.pop %v6330
    %v6337 = vcombine.low %v6331, %v6332
    %v6339 = vunpack.c.l.s4 1966171168
    %v6340 = vunpack.c.0.s8 %v6339
    %v6341 = vlaneseq
    %v6342 = vshrl.u32 %v6341, 7
    %v6343 = vsub.s32 %v6340, %v6342
    %v6344 = vrot.slane %v6337, %v6343
    %v6346 = vunpack.c.l.s4 1966171168
    %v6347 = vunpack.c.0.s8 %v6346
    %v6348 = vlaneseq
    %v6349 = vshrl.u32 %v6348, 7
    %v6350 = vsub.s32 %v6347, %v6349
    %v6351 = vrot.slane %v6333, %v6350
    %v6352 = vcombine.low %v6344, %v6351
    %v6354 = vunpack.c.l.s4 1966171168
    %v6355 = vunpack.c.0.s8 %v6354
    %v6356 = vlaneseq
    %v6357 = vshrl.u32 %v6356, 7
    %v6358 = vsub.s32 %v6355, %v6357
    %v6359 = vrot.slane %v6352, %v6358
    %v6361 = vmul.f32 %v6326, %v6359
    %v6363 = vlaneseq
    %v6364 = vshrl.u32 %v6363, 7
    %v6365 = vsub.s32 0, %v6364
    %v6366 = vrot.slane %v6361, %v6365
    %v6367 = vlaneseq
    %v6368 = vshrl.u32 %v6367, 7
    %v6369 = vsub.s32 1, %v6368
    %v6370 = vrot.slane %v6361, %v6369
    %v6371 = vlaneseq
    %v6372 = vshrl.u32 %v6371, 7
    %v6373 = vsub.s32 2, %v6372
    %v6374 = vrot.slane %v6361, %v6373
    %v6378 = vmul.f32 %v5988, %v6366
    %v6379 = vmul.f32 %v5989, %v6370
    %v6380 = vmul.f32 %v5990, %v6374
    %v6381 = vmul.f32 %v5991, %v6366
    %v6382 = vmul.f32 %v5992, %v6370
    %v6383 = vmul.f32 %v5993, %v6374
    %v6384 = vmul.f32 %v5994, %v6366
    %v6385 = vmul.f32 %v5995, %v6370
    %v6386 = vmul.f32 %v5996, %v6374
    %v6387 = vmul.f32 %v5997, %v6366
    %v6388 = vmul.f32 %v5998, %v6370
    %v6389 = vmul.f32 %v5999, %v6374
    %v6390 = vmul.f32 %v6000, %v6366
    %v6391 = vmul.f32 %v6001, %v6370
    %v6392 = vmul.f32 %v6002, %v6374
    %v6393 = vmul.f32 %v6003, %v6366
    %v6394 = vmul.f32 %v6004, %v6370
    %v6395 = vmul.f32 %v6005, %v6374
    %v6396 = vmul.f32 %v6006, %v6366
    %v6397 = vmul.f32 %v6007, %v6370
    %v6398 = vmul.f32 %v6008, %v6374
    %v6399 = vmul.f32 %v6009, %v6366
    %v6400 = vmul.f32 %v6010, %v6370
    %v6401 = vmul.f32 %v6011, %v6374
    %v6402 = vmul.f32 %v6012, %v6366
    %v6403 = vmul.f32 %v6013, %v6370
    %v6404 = vmul.f32 %v6014, %v6374
    %v6405 = vmul.f32 %v6015, %v6366
    %v6406 = vmul.f32 %v6016, %v6370
    %v6407 = vmul.f32 %v6017, %v6374
    %v6408 = vmul.f32 %v6018, %v6366
    %v6409 = vmul.f32 %v6019, %v6370
    %v6410 = vmul.f32 %v6020, %v6374
    %v6411 = vmul.f32 %v6021, %v6366
    %v6412 = vmul.f32 %v6022, %v6370
    %v6413 = vmul.f32 %v6023, %v6374
    %v6414 = vmul.f32 %v6024, %v6366
    %v6415 = vmul.f32 %v6025, %v6370
    %v6416 = vmul.f32 %v6026, %v6374
    %v6417 = vmul.f32 %v6027, %v6366
    %v6418 = vmul.f32 %v6028, %v6370
    %v6419 = vmul.f32 %v6029, %v6374
    %v6420 = vmul.f32 %v6030, %v6366
    %v6421 = vmul.f32 %v6031, %v6370
    %v6422 = vmul.f32 %v6032, %v6374
    %v6423 = vmul.f32 %v6033, %v6366
    %v6424 = vmul.f32 %v6034, %v6370
    %v6425 = vmul.f32 %v6035, %v6374
    %v6426 = vmul.f32 %v6036, %v6366
    %v6427 = vmul.f32 %v6037, %v6370
    %v6428 = vmul.f32 %v6038, %v6374
    %v6429 = vmul.f32 %v6039, %v6366
    %v6430 = vmul.f32 %v6040, %v6370
    %v6431 = vmul.f32 %v6041, %v6374
    %v6432 = vmul.f32 %v6042, %v6366
    %v6433 = vmul.f32 %v6043, %v6370
    %v6434 = vmul.f32 %v6044, %v6374
    %v6435 = vmul.f32 %v6045, %v6366
    %v6436 = vmul.f32 %v6046, %v6370
    %v6437 = vmul.f32 %v6047, %v6374
    %v6438 = vmul.f32 %v6048, %v6366
    %v6439 = vmul.f32 %v6049, %v6370
    %v6440 = vmul.f32 %v6050, %v6374
    %v6441 = vmul.f32 %v6051, %v6366
    %v6442 = vmul.f32 %v6052, %v6370
    %v6443 = vmul.f32 %v6053, %v6374
    %v6444 = vmul.f32 %v6054, %v6366
    %v6445 = vmul.f32 %v6055, %v6370
    %v6446 = vmul.f32 %v6056, %v6374
    %v6447 = vmul.f32 %v6057, %v6366
    %v6448 = vmul.f32 %v6058, %v6370
    %v6449 = vmul.f32 %v6059, %v6374
    %v6450 = vmul.f32 %v6060, %v6366
    %v6451 = vmul.f32 %v6061, %v6370
    %v6452 = vmul.f32 %v6062, %v6374
    %v6453 = vmul.f32 %v6063, %v6366
    %v6454 = vmul.f32 %v6064, %v6370
    %v6455 = vmul.f32 %v6065, %v6374
    %v6456 = vmul.f32 %v6066, %v6366
    %v6457 = vmul.f32 %v6067, %v6370
    %v6458 = vmul.f32 %v6068, %v6374
    %v6459 = vmul.f32 %v6069, %v6366
    %v6460 = vmul.f32 %v6070, %v6370
    %v6461 = vmul.f32 %v6071, %v6374
    %v6462 = vmul.f32 %v6072, %v6366
    %v6463 = vmul.f32 %v6073, %v6370
    %v6464 = vmul.f32 %v6074, %v6374
    %v6465 = vmul.f32 %v6075, %v6366
    %v6466 = vmul.f32 %v6076, %v6370
    %v6467 = vmul.f32 %v6077, %v6374
    %v6468 = vmul.f32 %v6078, %v6366
    %v6469 = vmul.f32 %v6079, %v6370
    %v6470 = vmul.f32 %v6080, %v6374
    %v6471 = vmul.f32 %v6081, %v6366
    %v6472 = vmul.f32 %v6082, %v6370
    %v6473 = vmul.f32 %v6083, %v6374
    %v6475 = vlaneseq
    %v6476 = vshrl.u32 %v6475, 7
    %v6477 = vsub.s32 0, %v6476
    %v6478 = vrot.slane %v6327, %v6477
    %v6479 = vlaneseq
    %v6480 = vshrl.u32 %v6479, 7
    %v6481 = vsub.s32 1, %v6480
    %v6482 = vrot.slane %v6327, %v6481
    %v6483 = vlaneseq
    %v6484 = vshrl.u32 %v6483, 7
    %v6485 = vsub.s32 2, %v6484
    %v6486 = vrot.slane %v6327, %v6485
    %v6490 = vadd.f32 %v6378, %v6478
    %v6491 = vadd.f32 %v6379, %v6482
    %v6492 = vadd.f32 %v6380, %v6486
    %v6493 = vadd.f32 %v6381, %v6478
    %v6494 = vadd.f32 %v6382, %v6482
    %v6495 = vadd.f32 %v6383, %v6486
    %v6496 = vadd.f32 %v6384, %v6478
    %v6497 = vadd.f32 %v6385, %v6482
    %v6498 = vadd.f32 %v6386, %v6486
    %v6499 = vadd.f32 %v6387, %v6478
    %v6500 = vadd.f32 %v6388, %v6482
    %v6501 = vadd.f32 %v6389, %v6486
    %v6502 = vadd.f32 %v6390, %v6478
    %v6503 = vadd.f32 %v6391, %v6482
    %v6504 = vadd.f32 %v6392, %v6486
    %v6505 = vadd.f32 %v6393, %v6478
    %v6506 = vadd.f32 %v6394, %v6482
    %v6507 = vadd.f32 %v6395, %v6486
    %v6508 = vadd.f32 %v6396, %v6478
    %v6509 = vadd.f32 %v6397, %v6482
    %v6510 = vadd.f32 %v6398, %v6486
    %v6511 = vadd.f32 %v6399, %v6478
    %v6512 = vadd.f32 %v6400, %v6482
    %v6513 = vadd.f32 %v6401, %v6486
    %v6514 = vadd.f32 %v6402, %v6478
    %v6515 = vadd.f32 %v6403, %v6482
    %v6516 = vadd.f32 %v6404, %v6486
    %v6517 = vadd.f32 %v6405, %v6478
    %v6518 = vadd.f32 %v6406, %v6482
    %v6519 = vadd.f32 %v6407, %v6486
    %v6520 = vadd.f32 %v6408, %v6478
    %v6521 = vadd.f32 %v6409, %v6482
    %v6522 = vadd.f32 %v6410, %v6486
    %v6523 = vadd.f32 %v6411, %v6478
    %v6524 = vadd.f32 %v6412, %v6482
    %v6525 = vadd.f32 %v6413, %v6486
    %v6526 = vadd.f32 %v6414, %v6478
    %v6527 = vadd.f32 %v6415, %v6482
    %v6528 = vadd.f32 %v6416, %v6486
    %v6529 = vadd.f32 %v6417, %v6478
    %v6530 = vadd.f32 %v6418, %v6482
    %v6531 = vadd.f32 %v6419, %v6486
    %v6532 = vadd.f32 %v6420, %v6478
    %v6533 = vadd.f32 %v6421, %v6482
    %v6534 = vadd.f32 %v6422, %v6486
    %v6535 = vadd.f32 %v6423, %v6478
    %v6536 = vadd.f32 %v6424, %v6482
    %v6537 = vadd.f32 %v6425, %v6486
    %v6538 = vadd.f32 %v6426, %v6478
    %v6539 = vadd.f32 %v6427, %v6482
    %v6540 = vadd.f32 %v6428, %v6486
    %v6541 = vadd.f32 %v6429, %v6478
    %v6542 = vadd.f32 %v6430, %v6482
    %v6543 = vadd.f32 %v6431, %v6486
    %v6544 = vadd.f32 %v6432, %v6478
    %v6545 = vadd.f32 %v6433, %v6482
    %v6546 = vadd.f32 %v6434, %v6486
    %v6547 = vadd.f32 %v6435, %v6478
    %v6548 = vadd.f32 %v6436, %v6482
    %v6549 = vadd.f32 %v6437, %v6486
    %v6550 = vadd.f32 %v6438, %v6478
    %v6551 = vadd.f32 %v6439, %v6482
    %v6552 = vadd.f32 %v6440, %v6486
    %v6553 = vadd.f32 %v6441, %v6478
    %v6554 = vadd.f32 %v6442, %v6482
    %v6555 = vadd.f32 %v6443, %v6486
    %v6556 = vadd.f32 %v6444, %v6478
    %v6557 = vadd.f32 %v6445, %v6482
    %v6558 = vadd.f32 %v6446, %v6486
    %v6559 = vadd.f32 %v6447, %v6478
    %v6560 = vadd.f32 %v6448, %v6482
    %v6561 = vadd.f32 %v6449, %v6486
    %v6562 = vadd.f32 %v6450, %v6478
    %v6563 = vadd.f32 %v6451, %v6482
    %v6564 = vadd.f32 %v6452, %v6486
    %v6565 = vadd.f32 %v6453, %v6478
    %v6566 = vadd.f32 %v6454, %v6482
    %v6567 = vadd.f32 %v6455, %v6486
    %v6568 = vadd.f32 %v6456, %v6478
    %v6569 = vadd.f32 %v6457, %v6482
    %v6570 = vadd.f32 %v6458, %v6486
    %v6571 = vadd.f32 %v6459, %v6478
    %v6572 = vadd.f32 %v6460, %v6482
    %v6573 = vadd.f32 %v6461, %v6486
    %v6574 = vadd.f32 %v6462, %v6478
    %v6575 = vadd.f32 %v6463, %v6482
    %v6576 = vadd.f32 %v6464, %v6486
    %v6577 = vadd.f32 %v6465, %v6478
    %v6578 = vadd.f32 %v6466, %v6482
    %v6579 = vadd.f32 %v6467, %v6486
    %v6580 = vadd.f32 %v6468, %v6478
    %v6581 = vadd.f32 %v6469, %v6482
    %v6582 = vadd.f32 %v6470, %v6486
    %v6583 = vadd.f32 %v6471, %v6478
    %v6584 = vadd.f32 %v6472, %v6482
    %v6585 = vadd.f32 %v6473, %v6486
    %v6586 = vmax.f32 %v6490, 0.0
    %v6587 = vmax.f32 %v6491, 0.0
    %v6588 = vmax.f32 %v6492, 0.0
    %v6589 = vmax.f32 %v6493, 0.0
    %v6590 = vmax.f32 %v6494, 0.0
    %v6591 = vmax.f32 %v6495, 0.0
    %v6592 = vmax.f32 %v6496, 0.0
    %v6593 = vmax.f32 %v6497, 0.0
    %v6594 = vmax.f32 %v6498, 0.0
    %v6595 = vmax.f32 %v6499, 0.0
    %v6596 = vmax.f32 %v6500, 0.0
    %v6597 = vmax.f32 %v6501, 0.0
    %v6598 = vmax.f32 %v6502, 0.0
    %v6599 = vmax.f32 %v6503, 0.0
    %v6600 = vmax.f32 %v6504, 0.0
    %v6601 = vmax.f32 %v6505, 0.0
    %v6602 = vmax.f32 %v6506, 0.0
    %v6603 = vmax.f32 %v6507, 0.0
    %v6604 = vmax.f32 %v6508, 0.0
    %v6605 = vmax.f32 %v6509, 0.0
    %v6606 = vmax.f32 %v6510, 0.0
    %v6607 = vmax.f32 %v6511, 0.0
    %v6608 = vmax.f32 %v6512, 0.0
    %v6609 = vmax.f32 %v6513, 0.0
    %v6610 = vmax.f32 %v6514, 0.0
    %v6611 = vmax.f32 %v6515, 0.0
    %v6612 = vmax.f32 %v6516, 0.0
    %v6613 = vmax.f32 %v6517, 0.0
    %v6614 = vmax.f32 %v6518, 0.0
    %v6615 = vmax.f32 %v6519, 0.0
    %v6616 = vmax.f32 %v6520, 0.0
    %v6617 = vmax.f32 %v6521, 0.0
    %v6618 = vmax.f32 %v6522, 0.0
    %v6619 = vmax.f32 %v6523, 0.0
    %v6620 = vmax.f32 %v6524, 0.0
    %v6621 = vmax.f32 %v6525, 0.0
    %v6622 = vmax.f32 %v6526, 0.0
    %v6623 = vmax.f32 %v6527, 0.0
    %v6624 = vmax.f32 %v6528, 0.0
    %v6625 = vmax.f32 %v6529, 0.0
    %v6626 = vmax.f32 %v6530, 0.0
    %v6627 = vmax.f32 %v6531, 0.0
    %v6628 = vmax.f32 %v6532, 0.0
    %v6629 = vmax.f32 %v6533, 0.0
    %v6630 = vmax.f32 %v6534, 0.0
    %v6631 = vmax.f32 %v6535, 0.0
    %v6632 = vmax.f32 %v6536, 0.0
    %v6633 = vmax.f32 %v6537, 0.0
    %v6634 = vmax.f32 %v6538, 0.0
    %v6635 = vmax.f32 %v6539, 0.0
    %v6636 = vmax.f32 %v6540, 0.0
    %v6637 = vmax.f32 %v6541, 0.0
    %v6638 = vmax.f32 %v6542, 0.0
    %v6639 = vmax.f32 %v6543, 0.0
    %v6640 = vmax.f32 %v6544, 0.0
    %v6641 = vmax.f32 %v6545, 0.0
    %v6642 = vmax.f32 %v6546, 0.0
    %v6643 = vmax.f32 %v6547, 0.0
    %v6644 = vmax.f32 %v6548, 0.0
    %v6645 = vmax.f32 %v6549, 0.0
    %v6646 = vmax.f32 %v6550, 0.0
    %v6647 = vmax.f32 %v6551, 0.0
    %v6648 = vmax.f32 %v6552, 0.0
    %v6649 = vmax.f32 %v6553, 0.0
    %v6650 = vmax.f32 %v6554, 0.0
    %v6651 = vmax.f32 %v6555, 0.0
    %v6652 = vmax.f32 %v6556, 0.0
    %v6653 = vmax.f32 %v6557, 0.0
    %v6654 = vmax.f32 %v6558, 0.0
    %v6655 = vmax.f32 %v6559, 0.0
    %v6656 = vmax.f32 %v6560, 0.0
    %v6657 = vmax.f32 %v6561, 0.0
    %v6658 = vmax.f32 %v6562, 0.0
    %v6659 = vmax.f32 %v6563, 0.0
    %v6660 = vmax.f32 %v6564, 0.0
    %v6661 = vmax.f32 %v6565, 0.0
    %v6662 = vmax.f32 %v6566, 0.0
    %v6663 = vmax.f32 %v6567, 0.0
    %v6664 = vmax.f32 %v6568, 0.0
    %v6665 = vmax.f32 %v6569, 0.0
    %v6666 = vmax.f32 %v6570, 0.0
    %v6667 = vmax.f32 %v6571, 0.0
    %v6668 = vmax.f32 %v6572, 0.0
    %v6669 = vmax.f32 %v6573, 0.0
    %v6670 = vmax.f32 %v6574, 0.0
    %v6671 = vmax.f32 %v6575, 0.0
    %v6672 = vmax.f32 %v6576, 0.0
    %v6673 = vmax.f32 %v6577, 0.0
    %v6674 = vmax.f32 %v6578, 0.0
    %v6675 = vmax.f32 %v6579, 0.0
    %v6676 = vmax.f32 %v6580, 0.0
    %v6677 = vmax.f32 %v6581, 0.0
    %v6678 = vmax.f32 %v6582, 0.0
    %v6679 = vmax.f32 %v6583, 0.0
    %v6680 = vmax.f32 %v6584, 0.0
    %v6681 = vmax.f32 %v6585, 0.0
    %s6682 = smul.u32 8, 38
    %s6683 = smul.u32 %s6682, 3
    %s6684 = sshll.u32 %s6683, 4
    %6685 = dma.done %s234, %s6684
    %v6686 = vld [vmem:[#allocation5] sm:$0xff]
    %v6687 = vld [vmem:[#allocation5 + $0x8] sm:$0xff]
    %v6688 = vld [vmem:[#allocation5 + $0x10] sm:$0xff]
    %v6689 = vld [vmem:[#allocation5 + $0x18] sm:$0xff]
    %v6690 = vld [vmem:[#allocation5 + $0x20] sm:$0xff]
    %v6691 = vld [vmem:[#allocation5 + $0x28] sm:$0xff]
    %v6692 = vld [vmem:[#allocation5 + $0x30] sm:$0xff]
    %v6693 = vld [vmem:[#allocation5 + $0x38] sm:$0xff]
    %v6694 = vld [vmem:[#allocation5 + $0x40] sm:$0xff]
    %v6695 = vld [vmem:[#allocation5 + $0x48] sm:$0xff]
    %v6696 = vld [vmem:[#allocation5 + $0x50] sm:$0xff]
    %v6697 = vld [vmem:[#allocation5 + $0x58] sm:$0xff]
    %v6698 = vld [vmem:[#allocation5 + $0x60] sm:$0xff]
    %v6699 = vld [vmem:[#allocation5 + $0x68] sm:$0xff]
    %v6700 = vld [vmem:[#allocation5 + $0x70] sm:$0xff]
    %v6701 = vld [vmem:[#allocation5 + $0x78] sm:$0xff]
    %v6702 = vld [vmem:[#allocation5 + $0x80] sm:$0xff]
    %v6703 = vld [vmem:[#allocation5 + $0x88] sm:$0xff]
    %v6704 = vld [vmem:[#allocation5 + $0x90] sm:$0xff]
    %v6705 = vld [vmem:[#allocation5 + $0x98] sm:$0xff]
    %v6706 = vld [vmem:[#allocation5 + $0xa0] sm:$0xff]
    %v6707 = vld [vmem:[#allocation5 + $0xa8] sm:$0xff]
    %v6708 = vld [vmem:[#allocation5 + $0xb0] sm:$0xff]
    %v6709 = vld [vmem:[#allocation5 + $0xb8] sm:$0xff]
    %v6710 = vld [vmem:[#allocation5 + $0xc0] sm:$0xff]
    %v6711 = vld [vmem:[#allocation5 + $0xc8] sm:$0xff]
    %v6712 = vld [vmem:[#allocation5 + $0xd0] sm:$0xff]
    %v6713 = vld [vmem:[#allocation5 + $0xd8] sm:$0xff]
    %v6714 = vld [vmem:[#allocation5 + $0xe0] sm:$0xff]
    %v6715 = vld [vmem:[#allocation5 + $0xe8] sm:$0xff]
    %v6716 = vld [vmem:[#allocation5 + $0xf0] sm:$0xff]
    %v6717 = vld [vmem:[#allocation5 + $0xf8] sm:$0xff]
    %v6718 = vld [vmem:[#allocation5 + $0x100] sm:$0xff]
    %v6719 = vld [vmem:[#allocation5 + $0x108] sm:$0xff]
    %v6720 = vld [vmem:[#allocation5 + $0x110] sm:$0xff]
    %v6721 = vld [vmem:[#allocation5 + $0x118] sm:$0xff]
    %v6722 = vld [vmem:[#allocation5 + $0x120] sm:$0xff]
    %v6723 = vld [vmem:[#allocation5 + $0x128] sm:$0xff]
    %v6724 = vld [vmem:[#allocation5 + $0x130] sm:$0xff]
    %v6725 = vld [vmem:[#allocation5 + $0x138] sm:$0xff]
    %v6726 = vld [vmem:[#allocation5 + $0x140] sm:$0xff]
    %v6727 = vld [vmem:[#allocation5 + $0x148] sm:$0xff]
    %v6728 = vld [vmem:[#allocation5 + $0x150] sm:$0xff]
    %v6729 = vld [vmem:[#allocation5 + $0x158] sm:$0xff]
    %v6730 = vld [vmem:[#allocation5 + $0x160] sm:$0xff]
    %v6731 = vld [vmem:[#allocation5 + $0x168] sm:$0xff]
    %v6732 = vld [vmem:[#allocation5 + $0x170] sm:$0xff]
    %v6733 = vld [vmem:[#allocation5 + $0x178] sm:$0xff]
    %v6734 = vld [vmem:[#allocation5 + $0x180] sm:$0xff]
    %v6735 = vld [vmem:[#allocation5 + $0x188] sm:$0xff]
    %v6736 = vld [vmem:[#allocation5 + $0x190] sm:$0xff]
    %v6737 = vld [vmem:[#allocation5 + $0x198] sm:$0xff]
    %v6738 = vld [vmem:[#allocation5 + $0x1a0] sm:$0xff]
    %v6739 = vld [vmem:[#allocation5 + $0x1a8] sm:$0xff]
    %v6740 = vld [vmem:[#allocation5 + $0x1b0] sm:$0xff]
    %v6741 = vld [vmem:[#allocation5 + $0x1b8] sm:$0xff]
    %v6742 = vld [vmem:[#allocation5 + $0x1c0] sm:$0xff]
    %v6743 = vld [vmem:[#allocation5 + $0x1c8] sm:$0xff]
    %v6744 = vld [vmem:[#allocation5 + $0x1d0] sm:$0xff]
    %v6745 = vld [vmem:[#allocation5 + $0x1d8] sm:$0xff]
    %v6746 = vld [vmem:[#allocation5 + $0x1e0] sm:$0xff]
    %v6747 = vld [vmem:[#allocation5 + $0x1e8] sm:$0xff]
    %v6748 = vld [vmem:[#allocation5 + $0x1f0] sm:$0xff]
    %v6749 = vld [vmem:[#allocation5 + $0x1f8] sm:$0xff]
    %v6750 = vld [vmem:[#allocation5 + $0x200] sm:$0xff]
    %v6751 = vld [vmem:[#allocation5 + $0x208] sm:$0xff]
    %v6752 = vld [vmem:[#allocation5 + $0x210] sm:$0xff]
    %v6753 = vld [vmem:[#allocation5 + $0x218] sm:$0xff]
    %v6754 = vld [vmem:[#allocation5 + $0x220] sm:$0xff]
    %v6755 = vld [vmem:[#allocation5 + $0x228] sm:$0xff]
    %v6756 = vld [vmem:[#allocation5 + $0x230] sm:$0xff]
    %v6757 = vld [vmem:[#allocation5 + $0x238] sm:$0xff]
    %v6758 = vld [vmem:[#allocation5 + $0x240] sm:$0xff]
    %v6759 = vld [vmem:[#allocation5 + $0x248] sm:$0xff]
    %v6760 = vld [vmem:[#allocation5 + $0x250] sm:$0xff]
    %v6761 = vld [vmem:[#allocation5 + $0x258] sm:$0xff]
    %v6762 = vld [vmem:[#allocation5 + $0x260] sm:$0xff]
    %v6763 = vld [vmem:[#allocation5 + $0x268] sm:$0xff]
    %v6764 = vld [vmem:[#allocation5 + $0x270] sm:$0xff]
    %v6765 = vld [vmem:[#allocation5 + $0x278] sm:$0xff]
    %v6766 = vld [vmem:[#allocation5 + $0x280] sm:$0xff]
    %v6767 = vld [vmem:[#allocation5 + $0x288] sm:$0xff]
    %v6768 = vld [vmem:[#allocation5 + $0x290] sm:$0xff]
    %v6769 = vld [vmem:[#allocation5 + $0x298] sm:$0xff]
    %v6770 = vld [vmem:[#allocation5 + $0x2a0] sm:$0xff]
    %v6771 = vld [vmem:[#allocation5 + $0x2a8] sm:$0xff]
    %v6772 = vld [vmem:[#allocation5 + $0x2b0] sm:$0xff]
    %v6773 = vld [vmem:[#allocation5 + $0x2b8] sm:$0xff]
    %v6774 = vld [vmem:[#allocation5 + $0x2c0] sm:$0xff]
    %v6775 = vld [vmem:[#allocation5 + $0x2c8] sm:$0xff]
    %v6776 = vld [vmem:[#allocation5 + $0x2d0] sm:$0xff]
    %v6777 = vld [vmem:[#allocation5 + $0x2d8] sm:$0xff]
    %v6778 = vld [vmem:[#allocation5 + $0x2e0] sm:$0xff]
    %v6779 = vld [vmem:[#allocation5 + $0x2e8] sm:$0xff]
    %v6780 = vld [vmem:[#allocation5 + $0x2f0] sm:$0xff]
    %v6781 = vld [vmem:[#allocation5 + $0x2f8] sm:$0xff]
    %v6782 = vld [vmem:[#allocation5 + $0x300] sm:$0xff]
    %v6783 = vld [vmem:[#allocation5 + $0x308] sm:$0xff]
    %v6784 = vld [vmem:[#allocation5 + $0x310] sm:$0xff]
    %v6785 = vld [vmem:[#allocation5 + $0x318] sm:$0xff]
    %v6786 = vld [vmem:[#allocation5 + $0x320] sm:$0xff]
    %v6787 = vld [vmem:[#allocation5 + $0x328] sm:$0xff]
    %v6788 = vld [vmem:[#allocation5 + $0x330] sm:$0xff]
    %v6789 = vld [vmem:[#allocation5 + $0x338] sm:$0xff]
    %v6790 = vld [vmem:[#allocation5 + $0x340] sm:$0xff]
    %v6791 = vld [vmem:[#allocation5 + $0x348] sm:$0xff]
    %v6792 = vld [vmem:[#allocation5 + $0x350] sm:$0xff]
    %v6793 = vld [vmem:[#allocation5 + $0x358] sm:$0xff]
    %v6794 = vld [vmem:[#allocation5 + $0x360] sm:$0xff]
    %v6795 = vld [vmem:[#allocation5 + $0x368] sm:$0xff]
    %v6796 = vld [vmem:[#allocation5 + $0x370] sm:$0xff]
    %v6797 = vld [vmem:[#allocation5 + $0x378] sm:$0xf]
    %v6798 = vld [vmem:[#allocation5 + $0x380] sm:$0xf]
    %v6799 = vld [vmem:[#allocation5 + $0x388] sm:$0xf]
    %v6801 = vsel %vm5915, %v6588, 0
    %v6804 = vsel %vm5915, %v6591, 0
    %v6807 = vsel %vm5915, %v6594, 0
    %v6810 = vsel %vm5915, %v6597, 0
    %v6813 = vsel %vm5915, %v6600, 0
    %v6816 = vsel %vm5915, %v6603, 0
    %v6819 = vsel %vm5915, %v6606, 0
    %v6822 = vsel %vm5915, %v6609, 0
    %v6825 = vsel %vm5915, %v6612, 0
    %v6828 = vsel %vm5915, %v6615, 0
    %v6831 = vsel %vm5915, %v6618, 0
    %v6834 = vsel %vm5915, %v6621, 0
    %v6837 = vsel %vm5915, %v6624, 0
    %v6840 = vsel %vm5915, %v6627, 0
    %v6843 = vsel %vm5915, %v6630, 0
    %v6846 = vsel %vm5915, %v6633, 0
    %v6849 = vsel %vm5915, %v6636, 0
    %v6852 = vsel %vm5915, %v6639, 0
    %v6855 = vsel %vm5915, %v6642, 0
    %v6858 = vsel %vm5915, %v6645, 0
    %v6861 = vsel %vm5915, %v6648, 0
    %v6864 = vsel %vm5915, %v6651, 0
    %v6867 = vsel %vm5915, %v6654, 0
    %v6870 = vsel %vm5915, %v6657, 0
    %v6873 = vsel %vm5915, %v6660, 0
    %v6876 = vsel %vm5915, %v6663, 0
    %v6879 = vsel %vm5915, %v6666, 0
    %v6882 = vsel %vm5915, %v6669, 0
    %v6885 = vsel %vm5915, %v6672, 0
    %v6888 = vsel %vm5915, %v6675, 0
    %v6891 = vsel %vm5915, %v6678, 0
    %v6894 = vsel %vm5915, %v6681, 0
    %vm6896 = vcmask 1043456
    %v6898 = vsel %vm6896, %v6797, 0
    %v6901 = vsel %vm6896, %v6798, 0
    %v6904 = vsel %vm6896, %v6799, 0
    %6906 = vmatprep.subr.mxu0 %v6732
    %6907 = vmatpush1.msra.mxu0 %v6731
    %6908 = vmatprep.subr.mxu0 %v6729
    %6909 = vmatpush1.msra.mxu0 %v6728
    %6910 = vmatprep.subr.mxu0 %v6726
    %6911 = vmatpush1.msra.mxu0 %v6725
    %6912 = vmatprep.subr.mxu0 %v6723
    %6913 = vmatpush1.msra.mxu0 %v6722
    %6914 = vmatprep.subr.mxu0 %v6720
    %6915 = vmatpush1.msra.mxu0 %v6719
    %6916 = vmatprep.subr.mxu0 %v6717
    %6917 = vmatpush1.msra.mxu0 %v6716
    %6918 = vmatprep.subr.mxu0 %v6714
    %6919 = vmatpush1.msra.mxu0 %v6713
    %6920 = vmatprep.subr.mxu0 %v6711
    %6921 = vmatpush1.msra.mxu0 %v6710
    %6922 = vmatprep.subr.mxu0 %v6708
    %6923 = vmatpush1.msra.mxu0 %v6707
    %6924 = vmatprep.subr.mxu0 %v6705
    %6925 = vmatpush1.msra.mxu0 %v6704
    %6926 = vmatprep.subr.mxu0 %v6702
    %6927 = vmatpush1.msra.mxu0 %v6701
    %6928 = vmatprep.subr.mxu0 %v6699
    %6929 = vmatpush1.msra.mxu0 %v6698
    %6930 = vmatprep.subr.mxu0 %v6696
    %6931 = vmatpush1.msra.mxu0 %v6695
    %6932 = vmatprep.subr.mxu0 %v6693
    %6933 = vmatpush1.msra.mxu0 %v6692
    %6934 = vmatprep.subr.mxu0 %v6690
    %6935 = vmatpush1.msra.mxu0 %v6689
    %6936 = vmatprep.subr.mxu0 %v6687
    %6937 = vmatpush1.msra.mxu0 %v6686
    %6938 = vmatprep.subr.mxu0 %v6780
    %6939 = vmatpush2.msra.mxu0 %v6779
    %6940 = vmatprep.subr.mxu0 %v6777
    %6941 = vmatpush2.msra.mxu0 %v6776
    %6942 = vmatprep.subr.mxu0 %v6774
    %6943 = vmatpush2.msra.mxu0 %v6773
    %6944 = vmatprep.subr.mxu0 %v6771
    %6945 = vmatpush2.msra.mxu0 %v6770
    %6946 = vmatprep.subr.mxu0 %v6768
    %6947 = vmatpush2.msra.mxu0 %v6767
    %6948 = vmatprep.subr.mxu0 %v6765
    %6949 = vmatpush2.msra.mxu0 %v6764
    %6950 = vmatprep.subr.mxu0 %v6762
    %6951 = vmatpush2.msra.mxu0 %v6761
    %6952 = vmatprep.subr.mxu0 %v6759
    %6953 = vmatpush2.msra.mxu0 %v6758
    %6954 = vmatprep.subr.mxu0 %v6756
    %6955 = vmatpush2.msra.mxu0 %v6755
    %6956 = vmatprep.subr.mxu0 %v6753
    %6957 = vmatpush2.msra.mxu0 %v6752
    %6958 = vmatprep.subr.mxu0 %v6750
    %6959 = vmatpush2.msra.mxu0 %v6749
    %6960 = vmatprep.subr.mxu0 %v6747
    %6961 = vmatpush2.msra.mxu0 %v6746
    %6962 = vmatprep.subr.mxu0 %v6744
    %6963 = vmatpush2.msra.mxu0 %v6743
    %6964 = vmatprep.subr.mxu0 %v6741
    %6965 = vmatpush2.msra.mxu0 %v6740
    %6966 = vmatprep.subr.mxu0 %v6738
    %6967 = vmatpush2.msra.mxu0 %v6737
    %6968 = vmatprep.subr.mxu0 %v6735
    %6969 = vmatpush2.msra.mxu0 %v6734
    %6970 = vmatprep.mubr.f32.mxu0 %v6587
    %6971 = vmatmul.mubr.f32.gmra.mxu0 %v6586
    %v6972 = vpop.f32.mrf.mxu0
    %v6973 = vadd.f32 0.0, %v6972
    %v6974 = vpop.f32.mrf.mxu0
    %v6975 = vadd.f32 0.0, %v6974
    %6976 = vmatprep.mubr.f32.mxu0 %v6590
    %6977 = vmatmul.mubr.f32.gmra.mxu0 %v6589
    %v6978 = vpop.f32.mrf.mxu0
    %v6979 = vadd.f32 0.0, %v6978
    %v6980 = vpop.f32.mrf.mxu0
    %v6981 = vadd.f32 0.0, %v6980
    %6982 = vmatprep.mubr.f32.mxu0 %v6593
    %6983 = vmatmul.mubr.f32.gmra.mxu0 %v6592
    %v6984 = vpop.f32.mrf.mxu0
    %v6985 = vadd.f32 0.0, %v6984
    %v6986 = vpop.f32.mrf.mxu0
    %v6987 = vadd.f32 0.0, %v6986
    %6988 = vmatprep.mubr.f32.mxu0 %v6596
    %6989 = vmatmul.mubr.f32.gmra.mxu0 %v6595
    %v6990 = vpop.f32.mrf.mxu0
    %v6991 = vadd.f32 0.0, %v6990
    %v6992 = vpop.f32.mrf.mxu0
    %v6993 = vadd.f32 0.0, %v6992
    %6994 = vmatprep.mubr.f32.mxu0 %v6599
    %6995 = vmatmul.mubr.f32.gmra.mxu0 %v6598
    %v6996 = vpop.f32.mrf.mxu0
    %v6997 = vadd.f32 0.0, %v6996
    %v6998 = vpop.f32.mrf.mxu0
    %v6999 = vadd.f32 0.0, %v6998
    %7000 = vmatprep.mubr.f32.mxu0 %v6602
    %7001 = vmatmul.mubr.f32.gmra.mxu0 %v6601
    %v7002 = vpop.f32.mrf.mxu0
    %v7003 = vadd.f32 0.0, %v7002
    %v7004 = vpop.f32.mrf.mxu0
    %v7005 = vadd.f32 0.0, %v7004
    %7006 = vmatprep.mubr.f32.mxu0 %v6605
    %7007 = vmatmul.mubr.f32.gmra.mxu0 %v6604
    %v7008 = vpop.f32.mrf.mxu0
    %v7009 = vadd.f32 0.0, %v7008
    %v7010 = vpop.f32.mrf.mxu0
    %v7011 = vadd.f32 0.0, %v7010
    %7012 = vmatprep.mubr.f32.mxu0 %v6608
    %7013 = vmatmul.mubr.f32.gmra.mxu0 %v6607
    %v7014 = vpop.f32.mrf.mxu0
    %v7015 = vadd.f32 0.0, %v7014
    %v7016 = vpop.f32.mrf.mxu0
    %v7017 = vadd.f32 0.0, %v7016
    %7018 = vmatprep.mubr.f32.mxu0 %v6611
    %7019 = vmatmul.mubr.f32.gmra.mxu0 %v6610
    %v7020 = vpop.f32.mrf.mxu0
    %v7021 = vadd.f32 0.0, %v7020
    %v7022 = vpop.f32.mrf.mxu0
    %v7023 = vadd.f32 0.0, %v7022
    %7024 = vmatprep.mubr.f32.mxu0 %v6614
    %7025 = vmatmul.mubr.f32.gmra.mxu0 %v6613
    %v7026 = vpop.f32.mrf.mxu0
    %v7027 = vadd.f32 0.0, %v7026
    %v7028 = vpop.f32.mrf.mxu0
    %v7029 = vadd.f32 0.0, %v7028
    %7030 = vmatprep.mubr.f32.mxu0 %v6617
    %7031 = vmatmul.mubr.f32.gmra.mxu0 %v6616
    %v7032 = vpop.f32.mrf.mxu0
    %v7033 = vadd.f32 0.0, %v7032
    %v7034 = vpop.f32.mrf.mxu0
    %v7035 = vadd.f32 0.0, %v7034
    %7036 = vmatprep.mubr.f32.mxu0 %v6620
    %7037 = vmatmul.mubr.f32.gmra.mxu0 %v6619
    %v7038 = vpop.f32.mrf.mxu0
    %v7039 = vadd.f32 0.0, %v7038
    %v7040 = vpop.f32.mrf.mxu0
    %v7041 = vadd.f32 0.0, %v7040
    %7042 = vmatprep.mubr.f32.mxu0 %v6623
    %7043 = vmatmul.mubr.f32.gmra.mxu0 %v6622
    %v7044 = vpop.f32.mrf.mxu0
    %v7045 = vadd.f32 0.0, %v7044
    %v7046 = vpop.f32.mrf.mxu0
    %v7047 = vadd.f32 0.0, %v7046
    %7048 = vmatprep.mubr.f32.mxu0 %v6626
    %7049 = vmatmul.mubr.f32.gmra.mxu0 %v6625
    %v7050 = vpop.f32.mrf.mxu0
    %v7051 = vadd.f32 0.0, %v7050
    %v7052 = vpop.f32.mrf.mxu0
    %v7053 = vadd.f32 0.0, %v7052
    %7054 = vmatprep.mubr.f32.mxu0 %v6629
    %7055 = vmatmul.mubr.f32.gmra.mxu0 %v6628
    %v7056 = vpop.f32.mrf.mxu0
    %v7057 = vadd.f32 0.0, %v7056
    %v7058 = vpop.f32.mrf.mxu0
    %v7059 = vadd.f32 0.0, %v7058
    %7060 = vmatprep.mubr.f32.mxu0 %v6632
    %7061 = vmatmul.mubr.f32.gmra.mxu0 %v6631
    %v7062 = vpop.f32.mrf.mxu0
    %v7063 = vadd.f32 0.0, %v7062
    %v7064 = vpop.f32.mrf.mxu0
    %v7065 = vadd.f32 0.0, %v7064
    %7066 = vmatprep.mubr.f32.mxu0 %v6635
    %7067 = vmatmul.mubr.f32.gmra.mxu0 %v6634
    %v7068 = vpop.f32.mrf.mxu0
    %v7069 = vadd.f32 0.0, %v7068
    %v7070 = vpop.f32.mrf.mxu0
    %v7071 = vadd.f32 0.0, %v7070
    %7072 = vmatprep.mubr.f32.mxu0 %v6638
    %7073 = vmatmul.mubr.f32.gmra.mxu0 %v6637
    %v7074 = vpop.f32.mrf.mxu0
    %v7075 = vadd.f32 0.0, %v7074
    %v7076 = vpop.f32.mrf.mxu0
    %v7077 = vadd.f32 0.0, %v7076
    %7078 = vmatprep.mubr.f32.mxu0 %v6641
    %7079 = vmatmul.mubr.f32.gmra.mxu0 %v6640
    %v7080 = vpop.f32.mrf.mxu0
    %v7081 = vadd.f32 0.0, %v7080
    %v7082 = vpop.f32.mrf.mxu0
    %v7083 = vadd.f32 0.0, %v7082
    %7084 = vmatprep.mubr.f32.mxu0 %v6644
    %7085 = vmatmul.mubr.f32.gmra.mxu0 %v6643
    %v7086 = vpop.f32.mrf.mxu0
    %v7087 = vadd.f32 0.0, %v7086
    %v7088 = vpop.f32.mrf.mxu0
    %v7089 = vadd.f32 0.0, %v7088
    %7090 = vmatprep.mubr.f32.mxu0 %v6647
    %7091 = vmatmul.mubr.f32.gmra.mxu0 %v6646
    %v7092 = vpop.f32.mrf.mxu0
    %v7093 = vadd.f32 0.0, %v7092
    %v7094 = vpop.f32.mrf.mxu0
    %v7095 = vadd.f32 0.0, %v7094
    %7096 = vmatprep.mubr.f32.mxu0 %v6650
    %7097 = vmatmul.mubr.f32.gmra.mxu0 %v6649
    %v7098 = vpop.f32.mrf.mxu0
    %v7099 = vadd.f32 0.0, %v7098
    %v7100 = vpop.f32.mrf.mxu0
    %v7101 = vadd.f32 0.0, %v7100
    %7102 = vmatprep.mubr.f32.mxu0 %v6653
    %7103 = vmatmul.mubr.f32.gmra.mxu0 %v6652
    %v7104 = vpop.f32.mrf.mxu0
    %v7105 = vadd.f32 0.0, %v7104
    %v7106 = vpop.f32.mrf.mxu0
    %v7107 = vadd.f32 0.0, %v7106
    %7108 = vmatprep.mubr.f32.mxu0 %v6656
    %7109 = vmatmul.mubr.f32.gmra.mxu0 %v6655
    %v7110 = vpop.f32.mrf.mxu0
    %v7111 = vadd.f32 0.0, %v7110
    %v7112 = vpop.f32.mrf.mxu0
    %v7113 = vadd.f32 0.0, %v7112
    %7114 = vmatprep.mubr.f32.mxu0 %v6659
    %7115 = vmatmul.mubr.f32.gmra.mxu0 %v6658
    %v7116 = vpop.f32.mrf.mxu0
    %v7117 = vadd.f32 0.0, %v7116
    %v7118 = vpop.f32.mrf.mxu0
    %v7119 = vadd.f32 0.0, %v7118
    %7120 = vmatprep.mubr.f32.mxu0 %v6662
    %7121 = vmatmul.mubr.f32.gmra.mxu0 %v6661
    %v7122 = vpop.f32.mrf.mxu0
    %v7123 = vadd.f32 0.0, %v7122
    %v7124 = vpop.f32.mrf.mxu0
    %v7125 = vadd.f32 0.0, %v7124
    %7126 = vmatprep.mubr.f32.mxu0 %v6665
    %7127 = vmatmul.mubr.f32.gmra.mxu0 %v6664
    %v7128 = vpop.f32.mrf.mxu0
    %v7129 = vadd.f32 0.0, %v7128
    %v7130 = vpop.f32.mrf.mxu0
    %v7131 = vadd.f32 0.0, %v7130
    %7132 = vmatprep.mubr.f32.mxu0 %v6668
    %7133 = vmatmul.mubr.f32.gmra.mxu0 %v6667
    %v7134 = vpop.f32.mrf.mxu0
    %v7135 = vadd.f32 0.0, %v7134
    %v7136 = vpop.f32.mrf.mxu0
    %v7137 = vadd.f32 0.0, %v7136
    %7138 = vmatprep.mubr.f32.mxu0 %v6671
    %7139 = vmatmul.mubr.f32.gmra.mxu0 %v6670
    %v7140 = vpop.f32.mrf.mxu0
    %v7141 = vadd.f32 0.0, %v7140
    %v7142 = vpop.f32.mrf.mxu0
    %v7143 = vadd.f32 0.0, %v7142
    %7144 = vmatprep.mubr.f32.mxu0 %v6674
    %7145 = vmatmul.mubr.f32.gmra.mxu0 %v6673
    %v7146 = vpop.f32.mrf.mxu0
    %v7147 = vadd.f32 0.0, %v7146
    %v7148 = vpop.f32.mrf.mxu0
    %v7149 = vadd.f32 0.0, %v7148
    %7150 = vmatprep.mubr.f32.mxu0 %v6677
    %7151 = vmatmul.mubr.f32.gmra.mxu0 %v6676
    %v7152 = vpop.f32.mrf.mxu0
    %v7153 = vadd.f32 0.0, %v7152
    %v7154 = vpop.f32.mrf.mxu0
    %v7155 = vadd.f32 0.0, %v7154
    %7156 = vmatprep.mubr.f32.mxu0 %v6680
    %7157 = vmatmul.mubr.f32.gmra.mxu0 %v6679
    %v7158 = vpop.f32.mrf.mxu0
    %v7159 = vadd.f32 0.0, %v7158
    %v7160 = vpop.f32.mrf.mxu0
    %v7161 = vadd.f32 0.0, %v7160
    %7162 = vdwg.mxu0
    %7163 = vmatprep.subr.mxu0 0.0
    %7164 = vmatpush1.msra.mxu0 0.0
    %7165 = vmatprep.subr.mxu0 0.0
    %7166 = vmatpush1.msra.mxu0 0.0
    %7167 = vmatprep.subr.mxu0 0.0
    %7168 = vmatpush1.msra.mxu0 0.0
    %7169 = vmatprep.subr.mxu0 0.0
    %7170 = vmatpush1.msra.mxu0 0.0
    %7171 = vmatprep.subr.mxu0 0.0
    %7172 = vmatpush1.msra.mxu0 0.0
    %7173 = vmatprep.subr.mxu0 0.0
    %7174 = vmatpush1.msra.mxu0 0.0
    %7175 = vmatprep.subr.mxu0 0.0
    %7176 = vmatpush1.msra.mxu0 0.0
    %7177 = vmatprep.subr.mxu0 0.0
    %7178 = vmatpush1.msra.mxu0 0.0
    %7179 = vmatprep.subr.mxu0 0.0
    %7180 = vmatpush1.msra.mxu0 0.0
    %7181 = vmatprep.subr.mxu0 0.0
    %7182 = vmatpush1.msra.mxu0 0.0
    %7183 = vmatprep.subr.mxu0 %v6901
    %7184 = vmatpush1.msra.mxu0 %v6898
    %7185 = vmatprep.subr.mxu0 %v6795
    %7186 = vmatpush1.msra.mxu0 %v6794
    %7187 = vmatprep.subr.mxu0 %v6792
    %7188 = vmatpush1.msra.mxu0 %v6791
    %7189 = vmatprep.subr.mxu0 %v6789
    %7190 = vmatpush1.msra.mxu0 %v6788
    %7191 = vmatprep.subr.mxu0 %v6786
    %7192 = vmatpush1.msra.mxu0 %v6785
    %7193 = vmatprep.subr.mxu0 %v6783
    %7194 = vmatpush1.msra.mxu0 %v6782
    %7195 = vmatprep.subr.mxu0 0.0
    %7196 = vmatpush2.msra.mxu0 0.0
    %7197 = vmatprep.subr.mxu0 0.0
    %7198 = vmatpush2.msra.mxu0 0.0
    %7199 = vmatprep.subr.mxu0 0.0
    %7200 = vmatpush2.msra.mxu0 0.0
    %7201 = vmatprep.subr.mxu0 0.0
    %7202 = vmatpush2.msra.mxu0 0.0
    %7203 = vmatprep.subr.mxu0 0.0
    %7204 = vmatpush2.msra.mxu0 0.0
    %7205 = vmatprep.subr.mxu0 0.0
    %7206 = vmatpush2.msra.mxu0 0.0
    %7207 = vmatprep.subr.mxu0 0.0
    %7208 = vmatpush2.msra.mxu0 0.0
    %7209 = vmatprep.subr.mxu0 0.0
    %7210 = vmatpush2.msra.mxu0 0.0
    %7211 = vmatprep.subr.mxu0 0.0
    %7212 = vmatpush2.msra.mxu0 0.0
    %7213 = vmatprep.subr.mxu0 0.0
    %7214 = vmatpush2.msra.mxu0 0.0
    %7215 = vmatprep.subr.mxu0 0.0
    %7216 = vmatpush2.msra.mxu0 0.0
    %7217 = vmatprep.subr.mxu0 0.0
    %7218 = vmatpush2.msra.mxu0 0.0
    %7219 = vmatprep.subr.mxu0 0.0
    %7220 = vmatpush2.msra.mxu0 0.0
    %7221 = vmatprep.subr.mxu0 0.0
    %7222 = vmatpush2.msra.mxu0 0.0
    %7223 = vmatprep.subr.mxu0 0.0
    %7224 = vmatpush2.msra.mxu0 0.0
    %7225 = vmatprep.subr.mxu0 0.0
    %7226 = vmatpush2.msra.mxu0 0.0
    %7227 = vmatprep.mubr.f32.mxu0 0.0
    %7228 = vmatmul.mubr.f32.gmra.mxu0 %v6801
    %v7229 = vpop.f32.mrf.mxu0
    %v7230 = vadd.f32 %v6973, %v7229
    %v7231 = vpop.f32.mrf.mxu0
    %v7232 = vadd.f32 %v6975, %v7231
    %7233 = vmatprep.mubr.f32.mxu0 0.0
    %7234 = vmatmul.mubr.f32.gmra.mxu0 %v6804
    %v7235 = vpop.f32.mrf.mxu0
    %v7236 = vadd.f32 %v6979, %v7235
    %v7237 = vpop.f32.mrf.mxu0
    %v7238 = vadd.f32 %v6981, %v7237
    %7239 = vmatprep.mubr.f32.mxu0 0.0
    %7240 = vmatmul.mubr.f32.gmra.mxu0 %v6807
    %v7241 = vpop.f32.mrf.mxu0
    %v7242 = vadd.f32 %v6985, %v7241
    %v7243 = vpop.f32.mrf.mxu0
    %v7244 = vadd.f32 %v6987, %v7243
    %7245 = vmatprep.mubr.f32.mxu0 0.0
    %7246 = vmatmul.mubr.f32.gmra.mxu0 %v6810
    %v7247 = vpop.f32.mrf.mxu0
    %v7248 = vadd.f32 %v6991, %v7247
    %v7249 = vpop.f32.mrf.mxu0
    %v7250 = vadd.f32 %v6993, %v7249
    %7251 = vmatprep.mubr.f32.mxu0 0.0
    %7252 = vmatmul.mubr.f32.gmra.mxu0 %v6813
    %v7253 = vpop.f32.mrf.mxu0
    %v7254 = vadd.f32 %v6997, %v7253
    %v7255 = vpop.f32.mrf.mxu0
    %v7256 = vadd.f32 %v6999, %v7255
    %7257 = vmatprep.mubr.f32.mxu0 0.0
    %7258 = vmatmul.mubr.f32.gmra.mxu0 %v6816
    %v7259 = vpop.f32.mrf.mxu0
    %v7260 = vadd.f32 %v7003, %v7259
    %v7261 = vpop.f32.mrf.mxu0
    %v7262 = vadd.f32 %v7005, %v7261
    %7263 = vmatprep.mubr.f32.mxu0 0.0
    %7264 = vmatmul.mubr.f32.gmra.mxu0 %v6819
    %v7265 = vpop.f32.mrf.mxu0
    %v7266 = vadd.f32 %v7009, %v7265
    %v7267 = vpop.f32.mrf.mxu0
    %v7268 = vadd.f32 %v7011, %v7267
    %7269 = vmatprep.mubr.f32.mxu0 0.0
    %7270 = vmatmul.mubr.f32.gmra.mxu0 %v6822
    %v7271 = vpop.f32.mrf.mxu0
    %v7272 = vadd.f32 %v7015, %v7271
    %v7273 = vpop.f32.mrf.mxu0
    %v7274 = vadd.f32 %v7017, %v7273
    %7275 = vmatprep.mubr.f32.mxu0 0.0
    %7276 = vmatmul.mubr.f32.gmra.mxu0 %v6825
    %v7277 = vpop.f32.mrf.mxu0
    %v7278 = vadd.f32 %v7021, %v7277
    %v7279 = vpop.f32.mrf.mxu0
    %v7280 = vadd.f32 %v7023, %v7279
    %7281 = vmatprep.mubr.f32.mxu0 0.0
    %7282 = vmatmul.mubr.f32.gmra.mxu0 %v6828
    %v7283 = vpop.f32.mrf.mxu0
    %v7284 = vadd.f32 %v7027, %v7283
    %v7285 = vpop.f32.mrf.mxu0
    %v7286 = vadd.f32 %v7029, %v7285
    %7287 = vmatprep.mubr.f32.mxu0 0.0
    %7288 = vmatmul.mubr.f32.gmra.mxu0 %v6831
    %v7289 = vpop.f32.mrf.mxu0
    %v7290 = vadd.f32 %v7033, %v7289
    %v7291 = vpop.f32.mrf.mxu0
    %v7292 = vadd.f32 %v7035, %v7291
    %7293 = vmatprep.mubr.f32.mxu0 0.0
    %7294 = vmatmul.mubr.f32.gmra.mxu0 %v6834
    %v7295 = vpop.f32.mrf.mxu0
    %v7296 = vadd.f32 %v7039, %v7295
    %v7297 = vpop.f32.mrf.mxu0
    %v7298 = vadd.f32 %v7041, %v7297
    %7299 = vmatprep.mubr.f32.mxu0 0.0
    %7300 = vmatmul.mubr.f32.gmra.mxu0 %v6837
    %v7301 = vpop.f32.mrf.mxu0
    %v7302 = vadd.f32 %v7045, %v7301
    %v7303 = vpop.f32.mrf.mxu0
    %v7304 = vadd.f32 %v7047, %v7303
    %7305 = vmatprep.mubr.f32.mxu0 0.0
    %7306 = vmatmul.mubr.f32.gmra.mxu0 %v6840
    %v7307 = vpop.f32.mrf.mxu0
    %v7308 = vadd.f32 %v7051, %v7307
    %v7309 = vpop.f32.mrf.mxu0
    %v7310 = vadd.f32 %v7053, %v7309
    %7311 = vmatprep.mubr.f32.mxu0 0.0
    %7312 = vmatmul.mubr.f32.gmra.mxu0 %v6843
    %v7313 = vpop.f32.mrf.mxu0
    %v7314 = vadd.f32 %v7057, %v7313
    %v7315 = vpop.f32.mrf.mxu0
    %v7316 = vadd.f32 %v7059, %v7315
    %7317 = vmatprep.mubr.f32.mxu0 0.0
    %7318 = vmatmul.mubr.f32.gmra.mxu0 %v6846
    %v7319 = vpop.f32.mrf.mxu0
    %v7320 = vadd.f32 %v7063, %v7319
    %v7321 = vpop.f32.mrf.mxu0
    %v7322 = vadd.f32 %v7065, %v7321
    %7323 = vmatprep.mubr.f32.mxu0 0.0
    %7324 = vmatmul.mubr.f32.gmra.mxu0 %v6849
    %v7325 = vpop.f32.mrf.mxu0
    %v7326 = vadd.f32 %v7069, %v7325
    %v7327 = vpop.f32.mrf.mxu0
    %v7328 = vadd.f32 %v7071, %v7327
    %7329 = vmatprep.mubr.f32.mxu0 0.0
    %7330 = vmatmul.mubr.f32.gmra.mxu0 %v6852
    %v7331 = vpop.f32.mrf.mxu0
    %v7332 = vadd.f32 %v7075, %v7331
    %v7333 = vpop.f32.mrf.mxu0
    %v7334 = vadd.f32 %v7077, %v7333
    %7335 = vmatprep.mubr.f32.mxu0 0.0
    %7336 = vmatmul.mubr.f32.gmra.mxu0 %v6855
    %v7337 = vpop.f32.mrf.mxu0
    %v7338 = vadd.f32 %v7081, %v7337
    %v7339 = vpop.f32.mrf.mxu0
    %v7340 = vadd.f32 %v7083, %v7339
    %7341 = vmatprep.mubr.f32.mxu0 0.0
    %7342 = vmatmul.mubr.f32.gmra.mxu0 %v6858
    %v7343 = vpop.f32.mrf.mxu0
    %v7344 = vadd.f32 %v7087, %v7343
    %v7345 = vpop.f32.mrf.mxu0
    %v7346 = vadd.f32 %v7089, %v7345
    %7347 = vmatprep.mubr.f32.mxu0 0.0
    %7348 = vmatmul.mubr.f32.gmra.mxu0 %v6861
    %v7349 = vpop.f32.mrf.mxu0
    %v7350 = vadd.f32 %v7093, %v7349
    %v7351 = vpop.f32.mrf.mxu0
    %v7352 = vadd.f32 %v7095, %v7351
    %7353 = vmatprep.mubr.f32.mxu0 0.0
    %7354 = vmatmul.mubr.f32.gmra.mxu0 %v6864
    %v7355 = vpop.f32.mrf.mxu0
    %v7356 = vadd.f32 %v7099, %v7355
    %v7357 = vpop.f32.mrf.mxu0
    %v7358 = vadd.f32 %v7101, %v7357
    %7359 = vmatprep.mubr.f32.mxu0 0.0
    %7360 = vmatmul.mubr.f32.gmra.mxu0 %v6867
    %v7361 = vpop.f32.mrf.mxu0
    %v7362 = vadd.f32 %v7105, %v7361
    %v7363 = vpop.f32.mrf.mxu0
    %v7364 = vadd.f32 %v7107, %v7363
    %7365 = vmatprep.mubr.f32.mxu0 0.0
    %7366 = vmatmul.mubr.f32.gmra.mxu0 %v6870
    %v7367 = vpop.f32.mrf.mxu0
    %v7368 = vadd.f32 %v7111, %v7367
    %v7369 = vpop.f32.mrf.mxu0
    %v7370 = vadd.f32 %v7113, %v7369
    %7371 = vmatprep.mubr.f32.mxu0 0.0
    %7372 = vmatmul.mubr.f32.gmra.mxu0 %v6873
    %v7373 = vpop.f32.mrf.mxu0
    %v7374 = vadd.f32 %v7117, %v7373
    %v7375 = vpop.f32.mrf.mxu0
    %v7376 = vadd.f32 %v7119, %v7375
    %7377 = vmatprep.mubr.f32.mxu0 0.0
    %7378 = vmatmul.mubr.f32.gmra.mxu0 %v6876
    %v7379 = vpop.f32.mrf.mxu0
    %v7380 = vadd.f32 %v7123, %v7379
    %v7381 = vpop.f32.mrf.mxu0
    %v7382 = vadd.f32 %v7125, %v7381
    %7383 = vmatprep.mubr.f32.mxu0 0.0
    %7384 = vmatmul.mubr.f32.gmra.mxu0 %v6879
    %v7385 = vpop.f32.mrf.mxu0
    %v7386 = vadd.f32 %v7129, %v7385
    %v7387 = vpop.f32.mrf.mxu0
    %v7388 = vadd.f32 %v7131, %v7387
    %7389 = vmatprep.mubr.f32.mxu0 0.0
    %7390 = vmatmul.mubr.f32.gmra.mxu0 %v6882
    %v7391 = vpop.f32.mrf.mxu0
    %v7392 = vadd.f32 %v7135, %v7391
    %v7393 = vpop.f32.mrf.mxu0
    %v7394 = vadd.f32 %v7137, %v7393
    %7395 = vmatprep.mubr.f32.mxu0 0.0
    %7396 = vmatmul.mubr.f32.gmra.mxu0 %v6885
    %v7397 = vpop.f32.mrf.mxu0
    %v7398 = vadd.f32 %v7141, %v7397
    %v7399 = vpop.f32.mrf.mxu0
    %v7400 = vadd.f32 %v7143, %v7399
    %7401 = vmatprep.mubr.f32.mxu0 0.0
    %7402 = vmatmul.mubr.f32.gmra.mxu0 %v6888
    %v7403 = vpop.f32.mrf.mxu0
    %v7404 = vadd.f32 %v7147, %v7403
    %v7405 = vpop.f32.mrf.mxu0
    %v7406 = vadd.f32 %v7149, %v7405
    %7407 = vmatprep.mubr.f32.mxu0 0.0
    %7408 = vmatmul.mubr.f32.gmra.mxu0 %v6891
    %v7409 = vpop.f32.mrf.mxu0
    %v7410 = vadd.f32 %v7153, %v7409
    %v7411 = vpop.f32.mrf.mxu0
    %v7412 = vadd.f32 %v7155, %v7411
    %7413 = vmatprep.mubr.f32.mxu0 0.0
    %7414 = vmatmul.mubr.f32.gmra.mxu0 %v6894
    %v7415 = vpop.f32.mrf.mxu0
    %v7416 = vadd.f32 %v7159, %v7415
    %v7417 = vpop.f32.mrf.mxu0
    %v7418 = vadd.f32 %v7161, %v7417
    %7419 = vdwg.mxu0
    %7420 = vmatprep.subr.mxu0 0.0
    %7421 = vmatpush1.msra.mxu0 %v6733
    %7422 = vmatprep.subr.mxu0 0.0
    %7423 = vmatpush1.msra.mxu0 %v6730
    %7424 = vmatprep.subr.mxu0 0.0
    %7425 = vmatpush1.msra.mxu0 %v6727
    %7426 = vmatprep.subr.mxu0 0.0
    %7427 = vmatpush1.msra.mxu0 %v6724
    %7428 = vmatprep.subr.mxu0 0.0
    %7429 = vmatpush1.msra.mxu0 %v6721
    %7430 = vmatprep.subr.mxu0 0.0
    %7431 = vmatpush1.msra.mxu0 %v6718
    %7432 = vmatprep.subr.mxu0 0.0
    %7433 = vmatpush1.msra.mxu0 %v6715
    %7434 = vmatprep.subr.mxu0 0.0
    %7435 = vmatpush1.msra.mxu0 %v6712
    %7436 = vmatprep.subr.mxu0 0.0
    %7437 = vmatpush1.msra.mxu0 %v6709
    %7438 = vmatprep.subr.mxu0 0.0
    %7439 = vmatpush1.msra.mxu0 %v6706
    %7440 = vmatprep.subr.mxu0 0.0
    %7441 = vmatpush1.msra.mxu0 %v6703
    %7442 = vmatprep.subr.mxu0 0.0
    %7443 = vmatpush1.msra.mxu0 %v6700
    %7444 = vmatprep.subr.mxu0 0.0
    %7445 = vmatpush1.msra.mxu0 %v6697
    %7446 = vmatprep.subr.mxu0 0.0
    %7447 = vmatpush1.msra.mxu0 %v6694
    %7448 = vmatprep.subr.mxu0 0.0
    %7449 = vmatpush1.msra.mxu0 %v6691
    %7450 = vmatprep.subr.mxu0 0.0
    %7451 = vmatpush1.msra.mxu0 %v6688
    %7452 = vmatprep.subr.mxu0 0.0
    %7453 = vmatpush2.msra.mxu0 %v6781
    %7454 = vmatprep.subr.mxu0 0.0
    %7455 = vmatpush2.msra.mxu0 %v6778
    %7456 = vmatprep.subr.mxu0 0.0
    %7457 = vmatpush2.msra.mxu0 %v6775
    %7458 = vmatprep.subr.mxu0 0.0
    %7459 = vmatpush2.msra.mxu0 %v6772
    %7460 = vmatprep.subr.mxu0 0.0
    %7461 = vmatpush2.msra.mxu0 %v6769
    %7462 = vmatprep.subr.mxu0 0.0
    %7463 = vmatpush2.msra.mxu0 %v6766
    %7464 = vmatprep.subr.mxu0 0.0
    %7465 = vmatpush2.msra.mxu0 %v6763
    %7466 = vmatprep.subr.mxu0 0.0
    %7467 = vmatpush2.msra.mxu0 %v6760
    %7468 = vmatprep.subr.mxu0 0.0
    %7469 = vmatpush2.msra.mxu0 %v6757
    %7470 = vmatprep.subr.mxu0 0.0
    %7471 = vmatpush2.msra.mxu0 %v6754
    %7472 = vmatprep.subr.mxu0 0.0
    %7473 = vmatpush2.msra.mxu0 %v6751
    %7474 = vmatprep.subr.mxu0 0.0
    %7475 = vmatpush2.msra.mxu0 %v6748
    %7476 = vmatprep.subr.mxu0 0.0
    %7477 = vmatpush2.msra.mxu0 %v6745
    %7478 = vmatprep.subr.mxu0 0.0
    %7479 = vmatpush2.msra.mxu0 %v6742
    %7480 = vmatprep.subr.mxu0 0.0
    %7481 = vmatpush2.msra.mxu0 %v6739
    %7482 = vmatprep.subr.mxu0 0.0
    %7483 = vmatpush2.msra.mxu0 %v6736
    %7484 = vmatprep.mubr.f32.mxu0 %v6587
    %7485 = vmatmul.mubr.f32.gmra.mxu0 %v6586
    %v7486 = vpop.f32.mrf.mxu0
    %v7487 = vadd.f32 0.0, %v7486
    %v7488 = vpop.f32.mrf.mxu0
    %7489 = vmatprep.mubr.f32.mxu0 %v6590
    %7490 = vmatmul.mubr.f32.gmra.mxu0 %v6589
    %v7491 = vpop.f32.mrf.mxu0
    %v7492 = vadd.f32 0.0, %v7491
    %v7493 = vpop.f32.mrf.mxu0
    %7494 = vmatprep.mubr.f32.mxu0 %v6593
    %7495 = vmatmul.mubr.f32.gmra.mxu0 %v6592
    %v7496 = vpop.f32.mrf.mxu0
    %v7497 = vadd.f32 0.0, %v7496
    %v7498 = vpop.f32.mrf.mxu0
    %7499 = vmatprep.mubr.f32.mxu0 %v6596
    %7500 = vmatmul.mubr.f32.gmra.mxu0 %v6595
    %v7501 = vpop.f32.mrf.mxu0
    %v7502 = vadd.f32 0.0, %v7501
    %v7503 = vpop.f32.mrf.mxu0
    %7504 = vmatprep.mubr.f32.mxu0 %v6599
    %7505 = vmatmul.mubr.f32.gmra.mxu0 %v6598
    %v7506 = vpop.f32.mrf.mxu0
    %v7507 = vadd.f32 0.0, %v7506
    %v7508 = vpop.f32.mrf.mxu0
    %7509 = vmatprep.mubr.f32.mxu0 %v6602
    %7510 = vmatmul.mubr.f32.gmra.mxu0 %v6601
    %v7511 = vpop.f32.mrf.mxu0
    %v7512 = vadd.f32 0.0, %v7511
    %v7513 = vpop.f32.mrf.mxu0
    %7514 = vmatprep.mubr.f32.mxu0 %v6605
    %7515 = vmatmul.mubr.f32.gmra.mxu0 %v6604
    %v7516 = vpop.f32.mrf.mxu0
    %v7517 = vadd.f32 0.0, %v7516
    %v7518 = vpop.f32.mrf.mxu0
    %7519 = vmatprep.mubr.f32.mxu0 %v6608
    %7520 = vmatmul.mubr.f32.gmra.mxu0 %v6607
    %v7521 = vpop.f32.mrf.mxu0
    %v7522 = vadd.f32 0.0, %v7521
    %v7523 = vpop.f32.mrf.mxu0
    %7524 = vmatprep.mubr.f32.mxu0 %v6611
    %7525 = vmatmul.mubr.f32.gmra.mxu0 %v6610
    %v7526 = vpop.f32.mrf.mxu0
    %v7527 = vadd.f32 0.0, %v7526
    %v7528 = vpop.f32.mrf.mxu0
    %7529 = vmatprep.mubr.f32.mxu0 %v6614
    %7530 = vmatmul.mubr.f32.gmra.mxu0 %v6613
    %v7531 = vpop.f32.mrf.mxu0
    %v7532 = vadd.f32 0.0, %v7531
    %v7533 = vpop.f32.mrf.mxu0
    %7534 = vmatprep.mubr.f32.mxu0 %v6617
    %7535 = vmatmul.mubr.f32.gmra.mxu0 %v6616
    %v7536 = vpop.f32.mrf.mxu0
    %v7537 = vadd.f32 0.0, %v7536
    %v7538 = vpop.f32.mrf.mxu0
    %7539 = vmatprep.mubr.f32.mxu0 %v6620
    %7540 = vmatmul.mubr.f32.gmra.mxu0 %v6619
    %v7541 = vpop.f32.mrf.mxu0
    %v7542 = vadd.f32 0.0, %v7541
    %v7543 = vpop.f32.mrf.mxu0
    %7544 = vmatprep.mubr.f32.mxu0 %v6623
    %7545 = vmatmul.mubr.f32.gmra.mxu0 %v6622
    %v7546 = vpop.f32.mrf.mxu0
    %v7547 = vadd.f32 0.0, %v7546
    %v7548 = vpop.f32.mrf.mxu0
    %7549 = vmatprep.mubr.f32.mxu0 %v6626
    %7550 = vmatmul.mubr.f32.gmra.mxu0 %v6625
    %v7551 = vpop.f32.mrf.mxu0
    %v7552 = vadd.f32 0.0, %v7551
    %v7553 = vpop.f32.mrf.mxu0
    %7554 = vmatprep.mubr.f32.mxu0 %v6629
    %7555 = vmatmul.mubr.f32.gmra.mxu0 %v6628
    %v7556 = vpop.f32.mrf.mxu0
    %v7557 = vadd.f32 0.0, %v7556
    %v7558 = vpop.f32.mrf.mxu0
    %7559 = vmatprep.mubr.f32.mxu0 %v6632
    %7560 = vmatmul.mubr.f32.gmra.mxu0 %v6631
    %v7561 = vpop.f32.mrf.mxu0
    %v7562 = vadd.f32 0.0, %v7561
    %v7563 = vpop.f32.mrf.mxu0
    %7564 = vmatprep.mubr.f32.mxu0 %v6635
    %7565 = vmatmul.mubr.f32.gmra.mxu0 %v6634
    %v7566 = vpop.f32.mrf.mxu0
    %v7567 = vadd.f32 0.0, %v7566
    %v7568 = vpop.f32.mrf.mxu0
    %7569 = vmatprep.mubr.f32.mxu0 %v6638
    %7570 = vmatmul.mubr.f32.gmra.mxu0 %v6637
    %v7571 = vpop.f32.mrf.mxu0
    %v7572 = vadd.f32 0.0, %v7571
    %v7573 = vpop.f32.mrf.mxu0
    %7574 = vmatprep.mubr.f32.mxu0 %v6641
    %7575 = vmatmul.mubr.f32.gmra.mxu0 %v6640
    %v7576 = vpop.f32.mrf.mxu0
    %v7577 = vadd.f32 0.0, %v7576
    %v7578 = vpop.f32.mrf.mxu0
    %7579 = vmatprep.mubr.f32.mxu0 %v6644
    %7580 = vmatmul.mubr.f32.gmra.mxu0 %v6643
    %v7581 = vpop.f32.mrf.mxu0
    %v7582 = vadd.f32 0.0, %v7581
    %v7583 = vpop.f32.mrf.mxu0
    %7584 = vmatprep.mubr.f32.mxu0 %v6647
    %7585 = vmatmul.mubr.f32.gmra.mxu0 %v6646
    %v7586 = vpop.f32.mrf.mxu0
    %v7587 = vadd.f32 0.0, %v7586
    %v7588 = vpop.f32.mrf.mxu0
    %7589 = vmatprep.mubr.f32.mxu0 %v6650
    %7590 = vmatmul.mubr.f32.gmra.mxu0 %v6649
    %v7591 = vpop.f32.mrf.mxu0
    %v7592 = vadd.f32 0.0, %v7591
    %v7593 = vpop.f32.mrf.mxu0
    %7594 = vmatprep.mubr.f32.mxu0 %v6653
    %7595 = vmatmul.mubr.f32.gmra.mxu0 %v6652
    %v7596 = vpop.f32.mrf.mxu0
    %v7597 = vadd.f32 0.0, %v7596
    %v7598 = vpop.f32.mrf.mxu0
    %7599 = vmatprep.mubr.f32.mxu0 %v6656
    %7600 = vmatmul.mubr.f32.gmra.mxu0 %v6655
    %v7601 = vpop.f32.mrf.mxu0
    %v7602 = vadd.f32 0.0, %v7601
    %v7603 = vpop.f32.mrf.mxu0
    %7604 = vmatprep.mubr.f32.mxu0 %v6659
    %7605 = vmatmul.mubr.f32.gmra.mxu0 %v6658
    %v7606 = vpop.f32.mrf.mxu0
    %v7607 = vadd.f32 0.0, %v7606
    %v7608 = vpop.f32.mrf.mxu0
    %7609 = vmatprep.mubr.f32.mxu0 %v6662
    %7610 = vmatmul.mubr.f32.gmra.mxu0 %v6661
    %v7611 = vpop.f32.mrf.mxu0
    %v7612 = vadd.f32 0.0, %v7611
    %v7613 = vpop.f32.mrf.mxu0
    %7614 = vmatprep.mubr.f32.mxu0 %v6665
    %7615 = vmatmul.mubr.f32.gmra.mxu0 %v6664
    %v7616 = vpop.f32.mrf.mxu0
    %v7617 = vadd.f32 0.0, %v7616
    %v7618 = vpop.f32.mrf.mxu0
    %7619 = vmatprep.mubr.f32.mxu0 %v6668
    %7620 = vmatmul.mubr.f32.gmra.mxu0 %v6667
    %v7621 = vpop.f32.mrf.mxu0
    %v7622 = vadd.f32 0.0, %v7621
    %v7623 = vpop.f32.mrf.mxu0
    %7624 = vmatprep.mubr.f32.mxu0 %v6671
    %7625 = vmatmul.mubr.f32.gmra.mxu0 %v6670
    %v7626 = vpop.f32.mrf.mxu0
    %v7627 = vadd.f32 0.0, %v7626
    %v7628 = vpop.f32.mrf.mxu0
    %7629 = vmatprep.mubr.f32.mxu0 %v6674
    %7630 = vmatmul.mubr.f32.gmra.mxu0 %v6673
    %v7631 = vpop.f32.mrf.mxu0
    %v7632 = vadd.f32 0.0, %v7631
    %v7633 = vpop.f32.mrf.mxu0
    %7634 = vmatprep.mubr.f32.mxu0 %v6677
    %7635 = vmatmul.mubr.f32.gmra.mxu0 %v6676
    %v7636 = vpop.f32.mrf.mxu0
    %v7637 = vadd.f32 0.0, %v7636
    %v7638 = vpop.f32.mrf.mxu0
    %7639 = vmatprep.mubr.f32.mxu0 %v6680
    %7640 = vmatmul.mubr.f32.gmra.mxu0 %v6679
    %v7641 = vpop.f32.mrf.mxu0
    %v7642 = vadd.f32 0.0, %v7641
    %v7643 = vpop.f32.mrf.mxu0
    %7644 = vdwg.mxu0
    %7645 = vmatprep.subr.mxu0 0.0
    %7646 = vmatpush1.msra.mxu0 0.0
    %7647 = vmatprep.subr.mxu0 0.0
    %7648 = vmatpush1.msra.mxu0 0.0
    %7649 = vmatprep.subr.mxu0 0.0
    %7650 = vmatpush1.msra.mxu0 0.0
    %7651 = vmatprep.subr.mxu0 0.0
    %7652 = vmatpush1.msra.mxu0 0.0
    %7653 = vmatprep.subr.mxu0 0.0
    %7654 = vmatpush1.msra.mxu0 0.0
    %7655 = vmatprep.subr.mxu0 0.0
    %7656 = vmatpush1.msra.mxu0 0.0
    %7657 = vmatprep.subr.mxu0 0.0
    %7658 = vmatpush1.msra.mxu0 0.0
    %7659 = vmatprep.subr.mxu0 0.0
    %7660 = vmatpush1.msra.mxu0 0.0
    %7661 = vmatprep.subr.mxu0 0.0
    %7662 = vmatpush1.msra.mxu0 0.0
    %7663 = vmatprep.subr.mxu0 0.0
    %7664 = vmatpush1.msra.mxu0 0.0
    %7665 = vmatprep.subr.mxu0 0.0
    %7666 = vmatpush1.msra.mxu0 %v6904
    %7667 = vmatprep.subr.mxu0 0.0
    %7668 = vmatpush1.msra.mxu0 %v6796
    %7669 = vmatprep.subr.mxu0 0.0
    %7670 = vmatpush1.msra.mxu0 %v6793
    %7671 = vmatprep.subr.mxu0 0.0
    %7672 = vmatpush1.msra.mxu0 %v6790
    %7673 = vmatprep.subr.mxu0 0.0
    %7674 = vmatpush1.msra.mxu0 %v6787
    %7675 = vmatprep.subr.mxu0 0.0
    %7676 = vmatpush1.msra.mxu0 %v6784
    %7677 = vmatprep.subr.mxu0 0.0
    %7678 = vmatpush2.msra.mxu0 0.0
    %7679 = vmatprep.subr.mxu0 0.0
    %7680 = vmatpush2.msra.mxu0 0.0
    %7681 = vmatprep.subr.mxu0 0.0
    %7682 = vmatpush2.msra.mxu0 0.0
    %7683 = vmatprep.subr.mxu0 0.0
    %7684 = vmatpush2.msra.mxu0 0.0
    %7685 = vmatprep.subr.mxu0 0.0
    %7686 = vmatpush2.msra.mxu0 0.0
    %7687 = vmatprep.subr.mxu0 0.0
    %7688 = vmatpush2.msra.mxu0 0.0
    %7689 = vmatprep.subr.mxu0 0.0
    %7690 = vmatpush2.msra.mxu0 0.0
    %7691 = vmatprep.subr.mxu0 0.0
    %7692 = vmatpush2.msra.mxu0 0.0
    %7693 = vmatprep.subr.mxu0 0.0
    %7694 = vmatpush2.msra.mxu0 0.0
    %7695 = vmatprep.subr.mxu0 0.0
    %7696 = vmatpush2.msra.mxu0 0.0
    %7697 = vmatprep.subr.mxu0 0.0
    %7698 = vmatpush2.msra.mxu0 0.0
    %7699 = vmatprep.subr.mxu0 0.0
    %7700 = vmatpush2.msra.mxu0 0.0
    %7701 = vmatprep.subr.mxu0 0.0
    %7702 = vmatpush2.msra.mxu0 0.0
    %7703 = vmatprep.subr.mxu0 0.0
    %7704 = vmatpush2.msra.mxu0 0.0
    %7705 = vmatprep.subr.mxu0 0.0
    %7706 = vmatpush2.msra.mxu0 0.0
    %7707 = vmatprep.subr.mxu0 0.0
    %7708 = vmatpush2.msra.mxu0 0.0
    %7709 = vmatprep.mubr.f32.mxu0 0.0
    %7710 = vmatmul.mubr.f32.gmra.mxu0 %v6801
    %v7711 = vpop.f32.mrf.mxu0
    %v7712 = vadd.f32 %v7487, %v7711
    %v7713 = vpop.f32.mrf.mxu0
    %7714 = vmatprep.mubr.f32.mxu0 0.0
    %7715 = vmatmul.mubr.f32.gmra.mxu0 %v6804
    %v7716 = vpop.f32.mrf.mxu0
    %v7717 = vadd.f32 %v7492, %v7716
    %v7718 = vpop.f32.mrf.mxu0
    %7719 = vmatprep.mubr.f32.mxu0 0.0
    %7720 = vmatmul.mubr.f32.gmra.mxu0 %v6807
    %v7721 = vpop.f32.mrf.mxu0
    %v7722 = vadd.f32 %v7497, %v7721
    %v7723 = vpop.f32.mrf.mxu0
    %7724 = vmatprep.mubr.f32.mxu0 0.0
    %7725 = vmatmul.mubr.f32.gmra.mxu0 %v6810
    %v7726 = vpop.f32.mrf.mxu0
    %v7727 = vadd.f32 %v7502, %v7726
    %v7728 = vpop.f32.mrf.mxu0
    %7729 = vmatprep.mubr.f32.mxu0 0.0
    %7730 = vmatmul.mubr.f32.gmra.mxu0 %v6813
    %v7731 = vpop.f32.mrf.mxu0
    %v7732 = vadd.f32 %v7507, %v7731
    %v7733 = vpop.f32.mrf.mxu0
    %7734 = vmatprep.mubr.f32.mxu0 0.0
    %7735 = vmatmul.mubr.f32.gmra.mxu0 %v6816
    %v7736 = vpop.f32.mrf.mxu0
    %v7737 = vadd.f32 %v7512, %v7736
    %v7738 = vpop.f32.mrf.mxu0
    %7739 = vmatprep.mubr.f32.mxu0 0.0
    %7740 = vmatmul.mubr.f32.gmra.mxu0 %v6819
    %v7741 = vpop.f32.mrf.mxu0
    %v7742 = vadd.f32 %v7517, %v7741
    %v7743 = vpop.f32.mrf.mxu0
    %7744 = vmatprep.mubr.f32.mxu0 0.0
    %7745 = vmatmul.mubr.f32.gmra.mxu0 %v6822
    %v7746 = vpop.f32.mrf.mxu0
    %v7747 = vadd.f32 %v7522, %v7746
    %v7748 = vpop.f32.mrf.mxu0
    %7749 = vmatprep.mubr.f32.mxu0 0.0
    %7750 = vmatmul.mubr.f32.gmra.mxu0 %v6825
    %v7751 = vpop.f32.mrf.mxu0
    %v7752 = vadd.f32 %v7527, %v7751
    %v7753 = vpop.f32.mrf.mxu0
    %7754 = vmatprep.mubr.f32.mxu0 0.0
    %7755 = vmatmul.mubr.f32.gmra.mxu0 %v6828
    %v7756 = vpop.f32.mrf.mxu0
    %v7757 = vadd.f32 %v7532, %v7756
    %v7758 = vpop.f32.mrf.mxu0
    %7759 = vmatprep.mubr.f32.mxu0 0.0
    %7760 = vmatmul.mubr.f32.gmra.mxu0 %v6831
    %v7761 = vpop.f32.mrf.mxu0
    %v7762 = vadd.f32 %v7537, %v7761
    %v7763 = vpop.f32.mrf.mxu0
    %7764 = vmatprep.mubr.f32.mxu0 0.0
    %7765 = vmatmul.mubr.f32.gmra.mxu0 %v6834
    %v7766 = vpop.f32.mrf.mxu0
    %v7767 = vadd.f32 %v7542, %v7766
    %v7768 = vpop.f32.mrf.mxu0
    %7769 = vmatprep.mubr.f32.mxu0 0.0
    %7770 = vmatmul.mubr.f32.gmra.mxu0 %v6837
    %v7771 = vpop.f32.mrf.mxu0
    %v7772 = vadd.f32 %v7547, %v7771
    %v7773 = vpop.f32.mrf.mxu0
    %7774 = vmatprep.mubr.f32.mxu0 0.0
    %7775 = vmatmul.mubr.f32.gmra.mxu0 %v6840
    %v7776 = vpop.f32.mrf.mxu0
    %v7777 = vadd.f32 %v7552, %v7776
    %v7778 = vpop.f32.mrf.mxu0
    %7779 = vmatprep.mubr.f32.mxu0 0.0
    %7780 = vmatmul.mubr.f32.gmra.mxu0 %v6843
    %v7781 = vpop.f32.mrf.mxu0
    %v7782 = vadd.f32 %v7557, %v7781
    %v7783 = vpop.f32.mrf.mxu0
    %7784 = vmatprep.mubr.f32.mxu0 0.0
    %7785 = vmatmul.mubr.f32.gmra.mxu0 %v6846
    %v7786 = vpop.f32.mrf.mxu0
    %v7787 = vadd.f32 %v7562, %v7786
    %v7788 = vpop.f32.mrf.mxu0
    %7789 = vmatprep.mubr.f32.mxu0 0.0
    %7790 = vmatmul.mubr.f32.gmra.mxu0 %v6849
    %v7791 = vpop.f32.mrf.mxu0
    %v7792 = vadd.f32 %v7567, %v7791
    %v7793 = vpop.f32.mrf.mxu0
    %7794 = vmatprep.mubr.f32.mxu0 0.0
    %7795 = vmatmul.mubr.f32.gmra.mxu0 %v6852
    %v7796 = vpop.f32.mrf.mxu0
    %v7797 = vadd.f32 %v7572, %v7796
    %v7798 = vpop.f32.mrf.mxu0
    %7799 = vmatprep.mubr.f32.mxu0 0.0
    %7800 = vmatmul.mubr.f32.gmra.mxu0 %v6855
    %v7801 = vpop.f32.mrf.mxu0
    %v7802 = vadd.f32 %v7577, %v7801
    %v7803 = vpop.f32.mrf.mxu0
    %7804 = vmatprep.mubr.f32.mxu0 0.0
    %7805 = vmatmul.mubr.f32.gmra.mxu0 %v6858
    %v7806 = vpop.f32.mrf.mxu0
    %v7807 = vadd.f32 %v7582, %v7806
    %v7808 = vpop.f32.mrf.mxu0
    %7809 = vmatprep.mubr.f32.mxu0 0.0
    %7810 = vmatmul.mubr.f32.gmra.mxu0 %v6861
    %v7811 = vpop.f32.mrf.mxu0
    %v7812 = vadd.f32 %v7587, %v7811
    %v7813 = vpop.f32.mrf.mxu0
    %7814 = vmatprep.mubr.f32.mxu0 0.0
    %7815 = vmatmul.mubr.f32.gmra.mxu0 %v6864
    %v7816 = vpop.f32.mrf.mxu0
    %v7817 = vadd.f32 %v7592, %v7816
    %v7818 = vpop.f32.mrf.mxu0
    %7819 = vmatprep.mubr.f32.mxu0 0.0
    %7820 = vmatmul.mubr.f32.gmra.mxu0 %v6867
    %v7821 = vpop.f32.mrf.mxu0
    %v7822 = vadd.f32 %v7597, %v7821
    %v7823 = vpop.f32.mrf.mxu0
    %7824 = vmatprep.mubr.f32.mxu0 0.0
    %7825 = vmatmul.mubr.f32.gmra.mxu0 %v6870
    %v7826 = vpop.f32.mrf.mxu0
    %v7827 = vadd.f32 %v7602, %v7826
    %v7828 = vpop.f32.mrf.mxu0
    %7829 = vmatprep.mubr.f32.mxu0 0.0
    %7830 = vmatmul.mubr.f32.gmra.mxu0 %v6873
    %v7831 = vpop.f32.mrf.mxu0
    %v7832 = vadd.f32 %v7607, %v7831
    %v7833 = vpop.f32.mrf.mxu0
    %7834 = vmatprep.mubr.f32.mxu0 0.0
    %7835 = vmatmul.mubr.f32.gmra.mxu0 %v6876
    %v7836 = vpop.f32.mrf.mxu0
    %v7837 = vadd.f32 %v7612, %v7836
    %v7838 = vpop.f32.mrf.mxu0
    %7839 = vmatprep.mubr.f32.mxu0 0.0
    %7840 = vmatmul.mubr.f32.gmra.mxu0 %v6879
    %v7841 = vpop.f32.mrf.mxu0
    %v7842 = vadd.f32 %v7617, %v7841
    %v7843 = vpop.f32.mrf.mxu0
    %7844 = vmatprep.mubr.f32.mxu0 0.0
    %7845 = vmatmul.mubr.f32.gmra.mxu0 %v6882
    %v7846 = vpop.f32.mrf.mxu0
    %v7847 = vadd.f32 %v7622, %v7846
    %v7848 = vpop.f32.mrf.mxu0
    %7849 = vmatprep.mubr.f32.mxu0 0.0
    %7850 = vmatmul.mubr.f32.gmra.mxu0 %v6885
    %v7851 = vpop.f32.mrf.mxu0
    %v7852 = vadd.f32 %v7627, %v7851
    %v7853 = vpop.f32.mrf.mxu0
    %7854 = vmatprep.mubr.f32.mxu0 0.0
    %7855 = vmatmul.mubr.f32.gmra.mxu0 %v6888
    %v7856 = vpop.f32.mrf.mxu0
    %v7857 = vadd.f32 %v7632, %v7856
    %v7858 = vpop.f32.mrf.mxu0
    %7859 = vmatprep.mubr.f32.mxu0 0.0
    %7860 = vmatmul.mubr.f32.gmra.mxu0 %v6891
    %v7861 = vpop.f32.mrf.mxu0
    %v7862 = vadd.f32 %v7637, %v7861
    %v7863 = vpop.f32.mrf.mxu0
    %7864 = vmatprep.mubr.f32.mxu0 0.0
    %7865 = vmatmul.mubr.f32.gmra.mxu0 %v6894
    %v7866 = vpop.f32.mrf.mxu0
    %v7867 = vadd.f32 %v7642, %v7866
    %v7868 = vpop.f32.mrf.mxu0
    %7869 = vdwg.mxu0
    %v7870 = vadd.f32 %v7230, %v7236
    %v7871 = vadd.f32 %v7870, %v7242
    %v7872 = vadd.f32 %v7871, %v7248
    %v7873 = vadd.f32 %v7872, %v7254
    %v7874 = vadd.f32 %v7873, %v7260
    %v7875 = vadd.f32 %v7874, %v7266
    %v7876 = vadd.f32 %v7875, %v7272
    %v7877 = vadd.f32 %v7876, %v7278
    %v7878 = vadd.f32 %v7877, %v7284
    %v7879 = vadd.f32 %v7878, %v7290
    %v7880 = vadd.f32 %v7879, %v7296
    %v7881 = vadd.f32 %v7880, %v7302
    %v7882 = vadd.f32 %v7881, %v7308
    %v7883 = vadd.f32 %v7882, %v7314
    %v7884 = vadd.f32 %v7883, %v7320
    %v7885 = vadd.f32 %v7884, %v7326
    %v7886 = vadd.f32 %v7885, %v7332
    %v7887 = vadd.f32 %v7886, %v7338
    %v7888 = vadd.f32 %v7887, %v7344
    %v7889 = vadd.f32 %v7888, %v7350
    %v7890 = vadd.f32 %v7889, %v7356
    %v7891 = vadd.f32 %v7890, %v7362
    %v7892 = vadd.f32 %v7891, %v7368
    %v7893 = vadd.f32 %v7892, %v7374
    %v7894 = vadd.f32 %v7893, %v7380
    %v7895 = vadd.f32 %v7894, %v7386
    %v7896 = vadd.f32 %v7895, %v7392
    %v7897 = vadd.f32 %v7896, %v7398
    %v7898 = vadd.f32 %v7897, %v7404
    %v7899 = vadd.f32 %v7898, %v7410
    %v7900 = vadd.f32 %v7899, %v7416
    %v7901 = vrot.slane %v7900, 4
    %v7902 = vadd.f32 %v7900, %v7901
    %v7903 = vrot.slane %v7902, 2
    %v7904 = vadd.f32 %v7902, %v7903
    %v7905 = vrot.slane %v7904, 1
    %v7906 = vadd.f32 %v7904, %v7905
    %v7907 = vadd.f32 %v7232, %v7238
    %v7908 = vadd.f32 %v7907, %v7244
    %v7909 = vadd.f32 %v7908, %v7250
    %v7910 = vadd.f32 %v7909, %v7256
    %v7911 = vadd.f32 %v7910, %v7262
    %v7912 = vadd.f32 %v7911, %v7268
    %v7913 = vadd.f32 %v7912, %v7274
    %v7914 = vadd.f32 %v7913, %v7280
    %v7915 = vadd.f32 %v7914, %v7286
    %v7916 = vadd.f32 %v7915, %v7292
    %v7917 = vadd.f32 %v7916, %v7298
    %v7918 = vadd.f32 %v7917, %v7304
    %v7919 = vadd.f32 %v7918, %v7310
    %v7920 = vadd.f32 %v7919, %v7316
    %v7921 = vadd.f32 %v7920, %v7322
    %v7922 = vadd.f32 %v7921, %v7328
    %v7923 = vadd.f32 %v7922, %v7334
    %v7924 = vadd.f32 %v7923, %v7340
    %v7925 = vadd.f32 %v7924, %v7346
    %v7926 = vadd.f32 %v7925, %v7352
    %v7927 = vadd.f32 %v7926, %v7358
    %v7928 = vadd.f32 %v7927, %v7364
    %v7929 = vadd.f32 %v7928, %v7370
    %v7930 = vadd.f32 %v7929, %v7376
    %v7931 = vadd.f32 %v7930, %v7382
    %v7932 = vadd.f32 %v7931, %v7388
    %v7933 = vadd.f32 %v7932, %v7394
    %v7934 = vadd.f32 %v7933, %v7400
    %v7935 = vadd.f32 %v7934, %v7406
    %v7936 = vadd.f32 %v7935, %v7412
    %v7937 = vadd.f32 %v7936, %v7418
    %v7938 = vrot.slane %v7937, 4
    %v7939 = vadd.f32 %v7937, %v7938
    %v7940 = vrot.slane %v7939, 2
    %v7941 = vadd.f32 %v7939, %v7940
    %v7942 = vrot.slane %v7941, 1
    %v7943 = vadd.f32 %v7941, %v7942
    %v7944 = vsel %vm5915, %v7712, 0.0
    %v7945 = vsel %vm5915, %v7717, 0.0
    %v7946 = vadd.f32 %v7944, %v7945
    %v7947 = vsel %vm5915, %v7722, 0.0
    %v7948 = vadd.f32 %v7946, %v7947
    %v7949 = vsel %vm5915, %v7727, 0.0
    %v7950 = vadd.f32 %v7948, %v7949
    %v7951 = vsel %vm5915, %v7732, 0.0
    %v7952 = vadd.f32 %v7950, %v7951
    %v7953 = vsel %vm5915, %v7737, 0.0
    %v7954 = vadd.f32 %v7952, %v7953
    %v7955 = vsel %vm5915, %v7742, 0.0
    %v7956 = vadd.f32 %v7954, %v7955
    %v7957 = vsel %vm5915, %v7747, 0.0
    %v7958 = vadd.f32 %v7956, %v7957
    %v7959 = vsel %vm5915, %v7752, 0.0
    %v7960 = vadd.f32 %v7958, %v7959
    %v7961 = vsel %vm5915, %v7757, 0.0
    %v7962 = vadd.f32 %v7960, %v7961
    %v7963 = vsel %vm5915, %v7762, 0.0
    %v7964 = vadd.f32 %v7962, %v7963
    %v7965 = vsel %vm5915, %v7767, 0.0
    %v7966 = vadd.f32 %v7964, %v7965
    %v7967 = vsel %vm5915, %v7772, 0.0
    %v7968 = vadd.f32 %v7966, %v7967
    %v7969 = vsel %vm5915, %v7777, 0.0
    %v7970 = vadd.f32 %v7968, %v7969
    %v7971 = vsel %vm5915, %v7782, 0.0
    %v7972 = vadd.f32 %v7970, %v7971
    %v7973 = vsel %vm5915, %v7787, 0.0
    %v7974 = vadd.f32 %v7972, %v7973
    %v7975 = vsel %vm5915, %v7792, 0.0
    %v7976 = vadd.f32 %v7974, %v7975
    %v7977 = vsel %vm5915, %v7797, 0.0
    %v7978 = vadd.f32 %v7976, %v7977
    %v7979 = vsel %vm5915, %v7802, 0.0
    %v7980 = vadd.f32 %v7978, %v7979
    %v7981 = vsel %vm5915, %v7807, 0.0
    %v7982 = vadd.f32 %v7980, %v7981
    %v7983 = vsel %vm5915, %v7812, 0.0
    %v7984 = vadd.f32 %v7982, %v7983
    %v7985 = vsel %vm5915, %v7817, 0.0
    %v7986 = vadd.f32 %v7984, %v7985
    %v7987 = vsel %vm5915, %v7822, 0.0
    %v7988 = vadd.f32 %v7986, %v7987
    %v7989 = vsel %vm5915, %v7827, 0.0
    %v7990 = vadd.f32 %v7988, %v7989
    %v7991 = vsel %vm5915, %v7832, 0.0
    %v7992 = vadd.f32 %v7990, %v7991
    %v7993 = vsel %vm5915, %v7837, 0.0
    %v7994 = vadd.f32 %v7992, %v7993
    %v7995 = vsel %vm5915, %v7842, 0.0
    %v7996 = vadd.f32 %v7994, %v7995
    %v7997 = vsel %vm5915, %v7847, 0.0
    %v7998 = vadd.f32 %v7996, %v7997
    %v7999 = vsel %vm5915, %v7852, 0.0
    %v8000 = vadd.f32 %v7998, %v7999
    %v8001 = vsel %vm5915, %v7857, 0.0
    %v8002 = vadd.f32 %v8000, %v8001
    %v8003 = vsel %vm5915, %v7862, 0.0
    %v8004 = vadd.f32 %v8002, %v8003
    %v8005 = vsel %vm5915, %v7867, 0.0
    %v8006 = vadd.f32 %v8004, %v8005
    %v8007 = vrot.slane %v8006, 4
    %v8008 = vadd.f32 %v8006, %v8007
    %v8009 = vrot.slane %v8008, 2
    %v8010 = vadd.f32 %v8008, %v8009
    %v8011 = vrot.slane %v8010, 1
    %v8012 = vadd.f32 %v8010, %v8011
    %v8013 = vmul.f32 %v7906, %v1299
    %v8014 = vmul.f32 %v7943, %v1299
    %v8015 = vmul.f32 %v8012, %v1299
    %v8016 = vsub.f32 %v7230, %v8013
    %v8017 = vsub.f32 %v7232, %v8014
    %v8018 = vsub.f32 %v7712, %v8015
    %v8019 = vsub.f32 %v7236, %v8013
    %v8020 = vsub.f32 %v7238, %v8014
    %v8021 = vsub.f32 %v7717, %v8015
    %v8022 = vsub.f32 %v7242, %v8013
    %v8023 = vsub.f32 %v7244, %v8014
    %v8024 = vsub.f32 %v7722, %v8015
    %v8025 = vsub.f32 %v7248, %v8013
    %v8026 = vsub.f32 %v7250, %v8014
    %v8027 = vsub.f32 %v7727, %v8015
    %v8028 = vsub.f32 %v7254, %v8013
    %v8029 = vsub.f32 %v7256, %v8014
    %v8030 = vsub.f32 %v7732, %v8015
    %v8031 = vsub.f32 %v7260, %v8013
    %v8032 = vsub.f32 %v7262, %v8014
    %v8033 = vsub.f32 %v7737, %v8015
    %v8034 = vsub.f32 %v7266, %v8013
    %v8035 = vsub.f32 %v7268, %v8014
    %v8036 = vsub.f32 %v7742, %v8015
    %v8037 = vsub.f32 %v7272, %v8013
    %v8038 = vsub.f32 %v7274, %v8014
    %v8039 = vsub.f32 %v7747, %v8015
    %v8040 = vsub.f32 %v7278, %v8013
    %v8041 = vsub.f32 %v7280, %v8014
    %v8042 = vsub.f32 %v7752, %v8015
    %v8043 = vsub.f32 %v7284, %v8013
    %v8044 = vsub.f32 %v7286, %v8014
    %v8045 = vsub.f32 %v7757, %v8015
    %v8046 = vsub.f32 %v7290, %v8013
    %v8047 = vsub.f32 %v7292, %v8014
    %v8048 = vsub.f32 %v7762, %v8015
    %v8049 = vsub.f32 %v7296, %v8013
    %v8050 = vsub.f32 %v7298, %v8014
    %v8051 = vsub.f32 %v7767, %v8015
    %v8052 = vsub.f32 %v7302, %v8013
    %v8053 = vsub.f32 %v7304, %v8014
    %v8054 = vsub.f32 %v7772, %v8015
    %v8055 = vsub.f32 %v7308, %v8013
    %v8056 = vsub.f32 %v7310, %v8014
    %v8057 = vsub.f32 %v7777, %v8015
    %v8058 = vsub.f32 %v7314, %v8013
    %v8059 = vsub.f32 %v7316, %v8014
    %v8060 = vsub.f32 %v7782, %v8015
    %v8061 = vsub.f32 %v7320, %v8013
    %v8062 = vsub.f32 %v7322, %v8014
    %v8063 = vsub.f32 %v7787, %v8015
    %v8064 = vsub.f32 %v7326, %v8013
    %v8065 = vsub.f32 %v7328, %v8014
    %v8066 = vsub.f32 %v7792, %v8015
    %v8067 = vsub.f32 %v7332, %v8013
    %v8068 = vsub.f32 %v7334, %v8014
    %v8069 = vsub.f32 %v7797, %v8015
    %v8070 = vsub.f32 %v7338, %v8013
    %v8071 = vsub.f32 %v7340, %v8014
    %v8072 = vsub.f32 %v7802, %v8015
    %v8073 = vsub.f32 %v7344, %v8013
    %v8074 = vsub.f32 %v7346, %v8014
    %v8075 = vsub.f32 %v7807, %v8015
    %v8076 = vsub.f32 %v7350, %v8013
    %v8077 = vsub.f32 %v7352, %v8014
    %v8078 = vsub.f32 %v7812, %v8015
    %v8079 = vsub.f32 %v7356, %v8013
    %v8080 = vsub.f32 %v7358, %v8014
    %v8081 = vsub.f32 %v7817, %v8015
    %v8082 = vsub.f32 %v7362, %v8013
    %v8083 = vsub.f32 %v7364, %v8014
    %v8084 = vsub.f32 %v7822, %v8015
    %v8085 = vsub.f32 %v7368, %v8013
    %v8086 = vsub.f32 %v7370, %v8014
    %v8087 = vsub.f32 %v7827, %v8015
    %v8088 = vsub.f32 %v7374, %v8013
    %v8089 = vsub.f32 %v7376, %v8014
    %v8090 = vsub.f32 %v7832, %v8015
    %v8091 = vsub.f32 %v7380, %v8013
    %v8092 = vsub.f32 %v7382, %v8014
    %v8093 = vsub.f32 %v7837, %v8015
    %v8094 = vsub.f32 %v7386, %v8013
    %v8095 = vsub.f32 %v7388, %v8014
    %v8096 = vsub.f32 %v7842, %v8015
    %v8097 = vsub.f32 %v7392, %v8013
    %v8098 = vsub.f32 %v7394, %v8014
    %v8099 = vsub.f32 %v7847, %v8015
    %v8100 = vsub.f32 %v7398, %v8013
    %v8101 = vsub.f32 %v7400, %v8014
    %v8102 = vsub.f32 %v7852, %v8015
    %v8103 = vsub.f32 %v7404, %v8013
    %v8104 = vsub.f32 %v7406, %v8014
    %v8105 = vsub.f32 %v7857, %v8015
    %v8106 = vsub.f32 %v7410, %v8013
    %v8107 = vsub.f32 %v7412, %v8014
    %v8108 = vsub.f32 %v7862, %v8015
    %v8109 = vsub.f32 %v7416, %v8013
    %v8110 = vsub.f32 %v7418, %v8014
    %v8111 = vsub.f32 %v7867, %v8015
    %v8112 = vmul.f32 %v8016, %v8016
    %v8113 = vmul.f32 %v8017, %v8017
    %v8114 = vmul.f32 %v8018, %v8018
    %v8115 = vmul.f32 %v8019, %v8019
    %v8116 = vmul.f32 %v8020, %v8020
    %v8117 = vmul.f32 %v8021, %v8021
    %v8118 = vmul.f32 %v8022, %v8022
    %v8119 = vmul.f32 %v8023, %v8023
    %v8120 = vmul.f32 %v8024, %v8024
    %v8121 = vmul.f32 %v8025, %v8025
    %v8122 = vmul.f32 %v8026, %v8026
    %v8123 = vmul.f32 %v8027, %v8027
    %v8124 = vmul.f32 %v8028, %v8028
    %v8125 = vmul.f32 %v8029, %v8029
    %v8126 = vmul.f32 %v8030, %v8030
    %v8127 = vmul.f32 %v8031, %v8031
    %v8128 = vmul.f32 %v8032, %v8032
    %v8129 = vmul.f32 %v8033, %v8033
    %v8130 = vmul.f32 %v8034, %v8034
    %v8131 = vmul.f32 %v8035, %v8035
    %v8132 = vmul.f32 %v8036, %v8036
    %v8133 = vmul.f32 %v8037, %v8037
    %v8134 = vmul.f32 %v8038, %v8038
    %v8135 = vmul.f32 %v8039, %v8039
    %v8136 = vmul.f32 %v8040, %v8040
    %v8137 = vmul.f32 %v8041, %v8041
    %v8138 = vmul.f32 %v8042, %v8042
    %v8139 = vmul.f32 %v8043, %v8043
    %v8140 = vmul.f32 %v8044, %v8044
    %v8141 = vmul.f32 %v8045, %v8045
    %v8142 = vmul.f32 %v8046, %v8046
    %v8143 = vmul.f32 %v8047, %v8047
    %v8144 = vmul.f32 %v8048, %v8048
    %v8145 = vmul.f32 %v8049, %v8049
    %v8146 = vmul.f32 %v8050, %v8050
    %v8147 = vmul.f32 %v8051, %v8051
    %v8148 = vmul.f32 %v8052, %v8052
    %v8149 = vmul.f32 %v8053, %v8053
    %v8150 = vmul.f32 %v8054, %v8054
    %v8151 = vmul.f32 %v8055, %v8055
    %v8152 = vmul.f32 %v8056, %v8056
    %v8153 = vmul.f32 %v8057, %v8057
    %v8154 = vmul.f32 %v8058, %v8058
    %v8155 = vmul.f32 %v8059, %v8059
    %v8156 = vmul.f32 %v8060, %v8060
    %v8157 = vmul.f32 %v8061, %v8061
    %v8158 = vmul.f32 %v8062, %v8062
    %v8159 = vmul.f32 %v8063, %v8063
    %v8160 = vmul.f32 %v8064, %v8064
    %v8161 = vmul.f32 %v8065, %v8065
    %v8162 = vmul.f32 %v8066, %v8066
    %v8163 = vmul.f32 %v8067, %v8067
    %v8164 = vmul.f32 %v8068, %v8068
    %v8165 = vmul.f32 %v8069, %v8069
    %v8166 = vmul.f32 %v8070, %v8070
    %v8167 = vmul.f32 %v8071, %v8071
    %v8168 = vmul.f32 %v8072, %v8072
    %v8169 = vmul.f32 %v8073, %v8073
    %v8170 = vmul.f32 %v8074, %v8074
    %v8171 = vmul.f32 %v8075, %v8075
    %v8172 = vmul.f32 %v8076, %v8076
    %v8173 = vmul.f32 %v8077, %v8077
    %v8174 = vmul.f32 %v8078, %v8078
    %v8175 = vmul.f32 %v8079, %v8079
    %v8176 = vmul.f32 %v8080, %v8080
    %v8177 = vmul.f32 %v8081, %v8081
    %v8178 = vmul.f32 %v8082, %v8082
    %v8179 = vmul.f32 %v8083, %v8083
    %v8180 = vmul.f32 %v8084, %v8084
    %v8181 = vmul.f32 %v8085, %v8085
    %v8182 = vmul.f32 %v8086, %v8086
    %v8183 = vmul.f32 %v8087, %v8087
    %v8184 = vmul.f32 %v8088, %v8088
    %v8185 = vmul.f32 %v8089, %v8089
    %v8186 = vmul.f32 %v8090, %v8090
    %v8187 = vmul.f32 %v8091, %v8091
    %v8188 = vmul.f32 %v8092, %v8092
    %v8189 = vmul.f32 %v8093, %v8093
    %v8190 = vmul.f32 %v8094, %v8094
    %v8191 = vmul.f32 %v8095, %v8095
    %v8192 = vmul.f32 %v8096, %v8096
    %v8193 = vmul.f32 %v8097, %v8097
    %v8194 = vmul.f32 %v8098, %v8098
    %v8195 = vmul.f32 %v8099, %v8099
    %v8196 = vmul.f32 %v8100, %v8100
    %v8197 = vmul.f32 %v8101, %v8101
    %v8198 = vmul.f32 %v8102, %v8102
    %v8199 = vmul.f32 %v8103, %v8103
    %v8200 = vmul.f32 %v8104, %v8104
    %v8201 = vmul.f32 %v8105, %v8105
    %v8202 = vmul.f32 %v8106, %v8106
    %v8203 = vmul.f32 %v8107, %v8107
    %v8204 = vmul.f32 %v8108, %v8108
    %v8205 = vmul.f32 %v8109, %v8109
    %v8206 = vmul.f32 %v8110, %v8110
    %v8207 = vmul.f32 %v8111, %v8111
    %v8208 = vadd.f32 %v8112, %v8115
    %v8209 = vadd.f32 %v8208, %v8118
    %v8210 = vadd.f32 %v8209, %v8121
    %v8211 = vadd.f32 %v8210, %v8124
    %v8212 = vadd.f32 %v8211, %v8127
    %v8213 = vadd.f32 %v8212, %v8130
    %v8214 = vadd.f32 %v8213, %v8133
    %v8215 = vadd.f32 %v8214, %v8136
    %v8216 = vadd.f32 %v8215, %v8139
    %v8217 = vadd.f32 %v8216, %v8142
    %v8218 = vadd.f32 %v8217, %v8145
    %v8219 = vadd.f32 %v8218, %v8148
    %v8220 = vadd.f32 %v8219, %v8151
    %v8221 = vadd.f32 %v8220, %v8154
    %v8222 = vadd.f32 %v8221, %v8157
    %v8223 = vadd.f32 %v8222, %v8160
    %v8224 = vadd.f32 %v8223, %v8163
    %v8225 = vadd.f32 %v8224, %v8166
    %v8226 = vadd.f32 %v8225, %v8169
    %v8227 = vadd.f32 %v8226, %v8172
    %v8228 = vadd.f32 %v8227, %v8175
    %v8229 = vadd.f32 %v8228, %v8178
    %v8230 = vadd.f32 %v8229, %v8181
    %v8231 = vadd.f32 %v8230, %v8184
    %v8232 = vadd.f32 %v8231, %v8187
    %v8233 = vadd.f32 %v8232, %v8190
    %v8234 = vadd.f32 %v8233, %v8193
    %v8235 = vadd.f32 %v8234, %v8196
    %v8236 = vadd.f32 %v8235, %v8199
    %v8237 = vadd.f32 %v8236, %v8202
    %v8238 = vadd.f32 %v8237, %v8205
    %v8239 = vrot.slane %v8238, 4
    %v8240 = vadd.f32 %v8238, %v8239
    %v8241 = vrot.slane %v8240, 2
    %v8242 = vadd.f32 %v8240, %v8241
    %v8243 = vrot.slane %v8242, 1
    %v8244 = vadd.f32 %v8242, %v8243
    %v8245 = vadd.f32 %v8113, %v8116
    %v8246 = vadd.f32 %v8245, %v8119
    %v8247 = vadd.f32 %v8246, %v8122
    %v8248 = vadd.f32 %v8247, %v8125
    %v8249 = vadd.f32 %v8248, %v8128
    %v8250 = vadd.f32 %v8249, %v8131
    %v8251 = vadd.f32 %v8250, %v8134
    %v8252 = vadd.f32 %v8251, %v8137
    %v8253 = vadd.f32 %v8252, %v8140
    %v8254 = vadd.f32 %v8253, %v8143
    %v8255 = vadd.f32 %v8254, %v8146
    %v8256 = vadd.f32 %v8255, %v8149
    %v8257 = vadd.f32 %v8256, %v8152
    %v8258 = vadd.f32 %v8257, %v8155
    %v8259 = vadd.f32 %v8258, %v8158
    %v8260 = vadd.f32 %v8259, %v8161
    %v8261 = vadd.f32 %v8260, %v8164
    %v8262 = vadd.f32 %v8261, %v8167
    %v8263 = vadd.f32 %v8262, %v8170
    %v8264 = vadd.f32 %v8263, %v8173
    %v8265 = vadd.f32 %v8264, %v8176
    %v8266 = vadd.f32 %v8265, %v8179
    %v8267 = vadd.f32 %v8266, %v8182
    %v8268 = vadd.f32 %v8267, %v8185
    %v8269 = vadd.f32 %v8268, %v8188
    %v8270 = vadd.f32 %v8269, %v8191
    %v8271 = vadd.f32 %v8270, %v8194
    %v8272 = vadd.f32 %v8271, %v8197
    %v8273 = vadd.f32 %v8272, %v8200
    %v8274 = vadd.f32 %v8273, %v8203
    %v8275 = vadd.f32 %v8274, %v8206
    %v8276 = vrot.slane %v8275, 4
    %v8277 = vadd.f32 %v8275, %v8276
    %v8278 = vrot.slane %v8277, 2
    %v8279 = vadd.f32 %v8277, %v8278
    %v8280 = vrot.slane %v8279, 1
    %v8281 = vadd.f32 %v8279, %v8280
    %v8282 = vsel %vm5915, %v8114, 0.0
    %v8283 = vsel %vm5915, %v8117, 0.0
    %v8284 = vadd.f32 %v8282, %v8283
    %v8285 = vsel %vm5915, %v8120, 0.0
    %v8286 = vadd.f32 %v8284, %v8285
    %v8287 = vsel %vm5915, %v8123, 0.0
    %v8288 = vadd.f32 %v8286, %v8287
    %v8289 = vsel %vm5915, %v8126, 0.0
    %v8290 = vadd.f32 %v8288, %v8289
    %v8291 = vsel %vm5915, %v8129, 0.0
    %v8292 = vadd.f32 %v8290, %v8291
    %v8293 = vsel %vm5915, %v8132, 0.0
    %v8294 = vadd.f32 %v8292, %v8293
    %v8295 = vsel %vm5915, %v8135, 0.0
    %v8296 = vadd.f32 %v8294, %v8295
    %v8297 = vsel %vm5915, %v8138, 0.0
    %v8298 = vadd.f32 %v8296, %v8297
    %v8299 = vsel %vm5915, %v8141, 0.0
    %v8300 = vadd.f32 %v8298, %v8299
    %v8301 = vsel %vm5915, %v8144, 0.0
    %v8302 = vadd.f32 %v8300, %v8301
    %v8303 = vsel %vm5915, %v8147, 0.0
    %v8304 = vadd.f32 %v8302, %v8303
    %v8305 = vsel %vm5915, %v8150, 0.0
    %v8306 = vadd.f32 %v8304, %v8305
    %v8307 = vsel %vm5915, %v8153, 0.0
    %v8308 = vadd.f32 %v8306, %v8307
    %v8309 = vsel %vm5915, %v8156, 0.0
    %v8310 = vadd.f32 %v8308, %v8309
    %v8311 = vsel %vm5915, %v8159, 0.0
    %v8312 = vadd.f32 %v8310, %v8311
    %v8313 = vsel %vm5915, %v8162, 0.0
    %v8314 = vadd.f32 %v8312, %v8313
    %v8315 = vsel %vm5915, %v8165, 0.0
    %v8316 = vadd.f32 %v8314, %v8315
    %v8317 = vsel %vm5915, %v8168, 0.0
    %v8318 = vadd.f32 %v8316, %v8317
    %v8319 = vsel %vm5915, %v8171, 0.0
    %v8320 = vadd.f32 %v8318, %v8319
    %v8321 = vsel %vm5915, %v8174, 0.0
    %v8322 = vadd.f32 %v8320, %v8321
    %v8323 = vsel %vm5915, %v8177, 0.0
    %v8324 = vadd.f32 %v8322, %v8323
    %v8325 = vsel %vm5915, %v8180, 0.0
    %v8326 = vadd.f32 %v8324, %v8325
    %v8327 = vsel %vm5915, %v8183, 0.0
    %v8328 = vadd.f32 %v8326, %v8327
    %v8329 = vsel %vm5915, %v8186, 0.0
    %v8330 = vadd.f32 %v8328, %v8329
    %v8331 = vsel %vm5915, %v8189, 0.0
    %v8332 = vadd.f32 %v8330, %v8331
    %v8333 = vsel %vm5915, %v8192, 0.0
    %v8334 = vadd.f32 %v8332, %v8333
    %v8335 = vsel %vm5915, %v8195, 0.0
    %v8336 = vadd.f32 %v8334, %v8335
    %v8337 = vsel %vm5915, %v8198, 0.0
    %v8338 = vadd.f32 %v8336, %v8337
    %v8339 = vsel %vm5915, %v8201, 0.0
    %v8340 = vadd.f32 %v8338, %v8339
    %v8341 = vsel %vm5915, %v8204, 0.0
    %v8342 = vadd.f32 %v8340, %v8341
    %v8343 = vsel %vm5915, %v8207, 0.0
    %v8344 = vadd.f32 %v8342, %v8343
    %v8345 = vrot.slane %v8344, 4
    %v8346 = vadd.f32 %v8344, %v8345
    %v8347 = vrot.slane %v8346, 2
    %v8348 = vadd.f32 %v8346, %v8347
    %v8349 = vrot.slane %v8348, 1
    %v8350 = vadd.f32 %v8348, %v8349
    %v8351 = vmul.f32 %v8244, %v1299
    %v8352 = vmul.f32 %v8281, %v1299
    %v8353 = vmul.f32 %v8350, %v1299
    %v8354 = vld [vmem:[#allocation9 + $0x16] sm:$0x7]
    %v8355 = vld [vmem:[#allocation9 + $0x19] sm:$0x7]
    %v8356 = vadd.f32 %v8351, 1e-05
    %v8357 = vadd.f32 %v8352, 1e-05
    %v8358 = vadd.f32 %v8353, 1e-05
    %v8359 = vrsqrt.pop %v8356
    %v8360 = vrsqrt.pop %v8357
    %v8361 = vrsqrt.pop %v8358
    %v8365 = vcombine.low %v8359, %v8360
    %v8367 = vunpack.c.l.s4 1966171168
    %v8368 = vunpack.c.0.s8 %v8367
    %v8369 = vlaneseq
    %v8370 = vshrl.u32 %v8369, 7
    %v8371 = vsub.s32 %v8368, %v8370
    %v8372 = vrot.slane %v8365, %v8371
    %v8374 = vunpack.c.l.s4 1966171168
    %v8375 = vunpack.c.0.s8 %v8374
    %v8376 = vlaneseq
    %v8377 = vshrl.u32 %v8376, 7
    %v8378 = vsub.s32 %v8375, %v8377
    %v8379 = vrot.slane %v8361, %v8378
    %v8380 = vcombine.low %v8372, %v8379
    %v8382 = vunpack.c.l.s4 1966171168
    %v8383 = vunpack.c.0.s8 %v8382
    %v8384 = vlaneseq
    %v8385 = vshrl.u32 %v8384, 7
    %v8386 = vsub.s32 %v8383, %v8385
    %v8387 = vrot.slane %v8380, %v8386
    %v8389 = vmul.f32 %v8354, %v8387
    %v8391 = vlaneseq
    %v8392 = vshrl.u32 %v8391, 7
    %v8393 = vsub.s32 0, %v8392
    %v8394 = vrot.slane %v8389, %v8393
    %v8395 = vlaneseq
    %v8396 = vshrl.u32 %v8395, 7
    %v8397 = vsub.s32 1, %v8396
    %v8398 = vrot.slane %v8389, %v8397
    %v8399 = vlaneseq
    %v8400 = vshrl.u32 %v8399, 7
    %v8401 = vsub.s32 2, %v8400
    %v8402 = vrot.slane %v8389, %v8401
    %v8406 = vmul.f32 %v8016, %v8394
    %v8407 = vmul.f32 %v8017, %v8398
    %v8408 = vmul.f32 %v8018, %v8402
    %v8409 = vmul.f32 %v8019, %v8394
    %v8410 = vmul.f32 %v8020, %v8398
    %v8411 = vmul.f32 %v8021, %v8402
    %v8412 = vmul.f32 %v8022, %v8394
    %v8413 = vmul.f32 %v8023, %v8398
    %v8414 = vmul.f32 %v8024, %v8402
    %v8415 = vmul.f32 %v8025, %v8394
    %v8416 = vmul.f32 %v8026, %v8398
    %v8417 = vmul.f32 %v8027, %v8402
    %v8418 = vmul.f32 %v8028, %v8394
    %v8419 = vmul.f32 %v8029, %v8398
    %v8420 = vmul.f32 %v8030, %v8402
    %v8421 = vmul.f32 %v8031, %v8394
    %v8422 = vmul.f32 %v8032, %v8398
    %v8423 = vmul.f32 %v8033, %v8402
    %v8424 = vmul.f32 %v8034, %v8394
    %v8425 = vmul.f32 %v8035, %v8398
    %v8426 = vmul.f32 %v8036, %v8402
    %v8427 = vmul.f32 %v8037, %v8394
    %v8428 = vmul.f32 %v8038, %v8398
    %v8429 = vmul.f32 %v8039, %v8402
    %v8430 = vmul.f32 %v8040, %v8394
    %v8431 = vmul.f32 %v8041, %v8398
    %v8432 = vmul.f32 %v8042, %v8402
    %v8433 = vmul.f32 %v8043, %v8394
    %v8434 = vmul.f32 %v8044, %v8398
    %v8435 = vmul.f32 %v8045, %v8402
    %v8436 = vmul.f32 %v8046, %v8394
    %v8437 = vmul.f32 %v8047, %v8398
    %v8438 = vmul.f32 %v8048, %v8402
    %v8439 = vmul.f32 %v8049, %v8394
    %v8440 = vmul.f32 %v8050, %v8398
    %v8441 = vmul.f32 %v8051, %v8402
    %v8442 = vmul.f32 %v8052, %v8394
    %v8443 = vmul.f32 %v8053, %v8398
    %v8444 = vmul.f32 %v8054, %v8402
    %v8445 = vmul.f32 %v8055, %v8394
    %v8446 = vmul.f32 %v8056, %v8398
    %v8447 = vmul.f32 %v8057, %v8402
    %v8448 = vmul.f32 %v8058, %v8394
    %v8449 = vmul.f32 %v8059, %v8398
    %v8450 = vmul.f32 %v8060, %v8402
    %v8451 = vmul.f32 %v8061, %v8394
    %v8452 = vmul.f32 %v8062, %v8398
    %v8453 = vmul.f32 %v8063, %v8402
    %v8454 = vmul.f32 %v8064, %v8394
    %v8455 = vmul.f32 %v8065, %v8398
    %v8456 = vmul.f32 %v8066, %v8402
    %v8457 = vmul.f32 %v8067, %v8394
    %v8458 = vmul.f32 %v8068, %v8398
    %v8459 = vmul.f32 %v8069, %v8402
    %v8460 = vmul.f32 %v8070, %v8394
    %v8461 = vmul.f32 %v8071, %v8398
    %v8462 = vmul.f32 %v8072, %v8402
    %v8463 = vmul.f32 %v8073, %v8394
    %v8464 = vmul.f32 %v8074, %v8398
    %v8465 = vmul.f32 %v8075, %v8402
    %v8466 = vmul.f32 %v8076, %v8394
    %v8467 = vmul.f32 %v8077, %v8398
    %v8468 = vmul.f32 %v8078, %v8402
    %v8469 = vmul.f32 %v8079, %v8394
    %v8470 = vmul.f32 %v8080, %v8398
    %v8471 = vmul.f32 %v8081, %v8402
    %v8472 = vmul.f32 %v8082, %v8394
    %v8473 = vmul.f32 %v8083, %v8398
    %v8474 = vmul.f32 %v8084, %v8402
    %v8475 = vmul.f32 %v8085, %v8394
    %v8476 = vmul.f32 %v8086, %v8398
    %v8477 = vmul.f32 %v8087, %v8402
    %v8478 = vmul.f32 %v8088, %v8394
    %v8479 = vmul.f32 %v8089, %v8398
    %v8480 = vmul.f32 %v8090, %v8402
    %v8481 = vmul.f32 %v8091, %v8394
    %v8482 = vmul.f32 %v8092, %v8398
    %v8483 = vmul.f32 %v8093, %v8402
    %v8484 = vmul.f32 %v8094, %v8394
    %v8485 = vmul.f32 %v8095, %v8398
    %v8486 = vmul.f32 %v8096, %v8402
    %v8487 = vmul.f32 %v8097, %v8394
    %v8488 = vmul.f32 %v8098, %v8398
    %v8489 = vmul.f32 %v8099, %v8402
    %v8490 = vmul.f32 %v8100, %v8394
    %v8491 = vmul.f32 %v8101, %v8398
    %v8492 = vmul.f32 %v8102, %v8402
    %v8493 = vmul.f32 %v8103, %v8394
    %v8494 = vmul.f32 %v8104, %v8398
    %v8495 = vmul.f32 %v8105, %v8402
    %v8496 = vmul.f32 %v8106, %v8394
    %v8497 = vmul.f32 %v8107, %v8398
    %v8498 = vmul.f32 %v8108, %v8402
    %v8499 = vmul.f32 %v8109, %v8394
    %v8500 = vmul.f32 %v8110, %v8398
    %v8501 = vmul.f32 %v8111, %v8402
    %v8503 = vlaneseq
    %v8504 = vshrl.u32 %v8503, 7
    %v8505 = vsub.s32 0, %v8504
    %v8506 = vrot.slane %v8355, %v8505
    %v8507 = vlaneseq
    %v8508 = vshrl.u32 %v8507, 7
    %v8509 = vsub.s32 1, %v8508
    %v8510 = vrot.slane %v8355, %v8509
    %v8511 = vlaneseq
    %v8512 = vshrl.u32 %v8511, 7
    %v8513 = vsub.s32 2, %v8512
    %v8514 = vrot.slane %v8355, %v8513
    %v8518 = vadd.f32 %v8406, %v8506
    %v8519 = vadd.f32 %v8407, %v8510
    %v8520 = vadd.f32 %v8408, %v8514
    %v8521 = vadd.f32 %v8409, %v8506
    %v8522 = vadd.f32 %v8410, %v8510
    %v8523 = vadd.f32 %v8411, %v8514
    %v8524 = vadd.f32 %v8412, %v8506
    %v8525 = vadd.f32 %v8413, %v8510
    %v8526 = vadd.f32 %v8414, %v8514
    %v8527 = vadd.f32 %v8415, %v8506
    %v8528 = vadd.f32 %v8416, %v8510
    %v8529 = vadd.f32 %v8417, %v8514
    %v8530 = vadd.f32 %v8418, %v8506
    %v8531 = vadd.f32 %v8419, %v8510
    %v8532 = vadd.f32 %v8420, %v8514
    %v8533 = vadd.f32 %v8421, %v8506
    %v8534 = vadd.f32 %v8422, %v8510
    %v8535 = vadd.f32 %v8423, %v8514
    %v8536 = vadd.f32 %v8424, %v8506
    %v8537 = vadd.f32 %v8425, %v8510
    %v8538 = vadd.f32 %v8426, %v8514
    %v8539 = vadd.f32 %v8427, %v8506
    %v8540 = vadd.f32 %v8428, %v8510
    %v8541 = vadd.f32 %v8429, %v8514
    %v8542 = vadd.f32 %v8430, %v8506
    %v8543 = vadd.f32 %v8431, %v8510
    %v8544 = vadd.f32 %v8432, %v8514
    %v8545 = vadd.f32 %v8433, %v8506
    %v8546 = vadd.f32 %v8434, %v8510
    %v8547 = vadd.f32 %v8435, %v8514
    %v8548 = vadd.f32 %v8436, %v8506
    %v8549 = vadd.f32 %v8437, %v8510
    %v8550 = vadd.f32 %v8438, %v8514
    %v8551 = vadd.f32 %v8439, %v8506
    %v8552 = vadd.f32 %v8440, %v8510
    %v8553 = vadd.f32 %v8441, %v8514
    %v8554 = vadd.f32 %v8442, %v8506
    %v8555 = vadd.f32 %v8443, %v8510
    %v8556 = vadd.f32 %v8444, %v8514
    %v8557 = vadd.f32 %v8445, %v8506
    %v8558 = vadd.f32 %v8446, %v8510
    %v8559 = vadd.f32 %v8447, %v8514
    %v8560 = vadd.f32 %v8448, %v8506
    %v8561 = vadd.f32 %v8449, %v8510
    %v8562 = vadd.f32 %v8450, %v8514
    %v8563 = vadd.f32 %v8451, %v8506
    %v8564 = vadd.f32 %v8452, %v8510
    %v8565 = vadd.f32 %v8453, %v8514
    %v8566 = vadd.f32 %v8454, %v8506
    %v8567 = vadd.f32 %v8455, %v8510
    %v8568 = vadd.f32 %v8456, %v8514
    %v8569 = vadd.f32 %v8457, %v8506
    %v8570 = vadd.f32 %v8458, %v8510
    %v8571 = vadd.f32 %v8459, %v8514
    %v8572 = vadd.f32 %v8460, %v8506
    %v8573 = vadd.f32 %v8461, %v8510
    %v8574 = vadd.f32 %v8462, %v8514
    %v8575 = vadd.f32 %v8463, %v8506
    %v8576 = vadd.f32 %v8464, %v8510
    %v8577 = vadd.f32 %v8465, %v8514
    %v8578 = vadd.f32 %v8466, %v8506
    %v8579 = vadd.f32 %v8467, %v8510
    %v8580 = vadd.f32 %v8468, %v8514
    %v8581 = vadd.f32 %v8469, %v8506
    %v8582 = vadd.f32 %v8470, %v8510
    %v8583 = vadd.f32 %v8471, %v8514
    %v8584 = vadd.f32 %v8472, %v8506
    %v8585 = vadd.f32 %v8473, %v8510
    %v8586 = vadd.f32 %v8474, %v8514
    %v8587 = vadd.f32 %v8475, %v8506
    %v8588 = vadd.f32 %v8476, %v8510
    %v8589 = vadd.f32 %v8477, %v8514
    %v8590 = vadd.f32 %v8478, %v8506
    %v8591 = vadd.f32 %v8479, %v8510
    %v8592 = vadd.f32 %v8480, %v8514
    %v8593 = vadd.f32 %v8481, %v8506
    %v8594 = vadd.f32 %v8482, %v8510
    %v8595 = vadd.f32 %v8483, %v8514
    %v8596 = vadd.f32 %v8484, %v8506
    %v8597 = vadd.f32 %v8485, %v8510
    %v8598 = vadd.f32 %v8486, %v8514
    %v8599 = vadd.f32 %v8487, %v8506
    %v8600 = vadd.f32 %v8488, %v8510
    %v8601 = vadd.f32 %v8489, %v8514
    %v8602 = vadd.f32 %v8490, %v8506
    %v8603 = vadd.f32 %v8491, %v8510
    %v8604 = vadd.f32 %v8492, %v8514
    %v8605 = vadd.f32 %v8493, %v8506
    %v8606 = vadd.f32 %v8494, %v8510
    %v8607 = vadd.f32 %v8495, %v8514
    %v8608 = vadd.f32 %v8496, %v8506
    %v8609 = vadd.f32 %v8497, %v8510
    %v8610 = vadd.f32 %v8498, %v8514
    %v8611 = vadd.f32 %v8499, %v8506
    %v8612 = vadd.f32 %v8500, %v8510
    %v8613 = vadd.f32 %v8501, %v8514
    %v8614 = vmax.f32 %v8518, 0.0
    %v8615 = vmax.f32 %v8519, 0.0
    %v8616 = vmax.f32 %v8520, 0.0
    %v8617 = vmax.f32 %v8521, 0.0
    %v8618 = vmax.f32 %v8522, 0.0
    %v8619 = vmax.f32 %v8523, 0.0
    %v8620 = vmax.f32 %v8524, 0.0
    %v8621 = vmax.f32 %v8525, 0.0
    %v8622 = vmax.f32 %v8526, 0.0
    %v8623 = vmax.f32 %v8527, 0.0
    %v8624 = vmax.f32 %v8528, 0.0
    %v8625 = vmax.f32 %v8529, 0.0
    %v8626 = vmax.f32 %v8530, 0.0
    %v8627 = vmax.f32 %v8531, 0.0
    %v8628 = vmax.f32 %v8532, 0.0
    %v8629 = vmax.f32 %v8533, 0.0
    %v8630 = vmax.f32 %v8534, 0.0
    %v8631 = vmax.f32 %v8535, 0.0
    %v8632 = vmax.f32 %v8536, 0.0
    %v8633 = vmax.f32 %v8537, 0.0
    %v8634 = vmax.f32 %v8538, 0.0
    %v8635 = vmax.f32 %v8539, 0.0
    %v8636 = vmax.f32 %v8540, 0.0
    %v8637 = vmax.f32 %v8541, 0.0
    %v8638 = vmax.f32 %v8542, 0.0
    %v8639 = vmax.f32 %v8543, 0.0
    %v8640 = vmax.f32 %v8544, 0.0
    %v8641 = vmax.f32 %v8545, 0.0
    %v8642 = vmax.f32 %v8546, 0.0
    %v8643 = vmax.f32 %v8547, 0.0
    %v8644 = vmax.f32 %v8548, 0.0
    %v8645 = vmax.f32 %v8549, 0.0
    %v8646 = vmax.f32 %v8550, 0.0
    %v8647 = vmax.f32 %v8551, 0.0
    %v8648 = vmax.f32 %v8552, 0.0
    %v8649 = vmax.f32 %v8553, 0.0
    %v8650 = vmax.f32 %v8554, 0.0
    %v8651 = vmax.f32 %v8555, 0.0
    %v8652 = vmax.f32 %v8556, 0.0
    %v8653 = vmax.f32 %v8557, 0.0
    %v8654 = vmax.f32 %v8558, 0.0
    %v8655 = vmax.f32 %v8559, 0.0
    %v8656 = vmax.f32 %v8560, 0.0
    %v8657 = vmax.f32 %v8561, 0.0
    %v8658 = vmax.f32 %v8562, 0.0
    %v8659 = vmax.f32 %v8563, 0.0
    %v8660 = vmax.f32 %v8564, 0.0
    %v8661 = vmax.f32 %v8565, 0.0
    %v8662 = vmax.f32 %v8566, 0.0
    %v8663 = vmax.f32 %v8567, 0.0
    %v8664 = vmax.f32 %v8568, 0.0
    %v8665 = vmax.f32 %v8569, 0.0
    %v8666 = vmax.f32 %v8570, 0.0
    %v8667 = vmax.f32 %v8571, 0.0
    %v8668 = vmax.f32 %v8572, 0.0
    %v8669 = vmax.f32 %v8573, 0.0
    %v8670 = vmax.f32 %v8574, 0.0
    %v8671 = vmax.f32 %v8575, 0.0
    %v8672 = vmax.f32 %v8576, 0.0
    %v8673 = vmax.f32 %v8577, 0.0
    %v8674 = vmax.f32 %v8578, 0.0
    %v8675 = vmax.f32 %v8579, 0.0
    %v8676 = vmax.f32 %v8580, 0.0
    %v8677 = vmax.f32 %v8581, 0.0
    %v8678 = vmax.f32 %v8582, 0.0
    %v8679 = vmax.f32 %v8583, 0.0
    %v8680 = vmax.f32 %v8584, 0.0
    %v8681 = vmax.f32 %v8585, 0.0
    %v8682 = vmax.f32 %v8586, 0.0
    %v8683 = vmax.f32 %v8587, 0.0
    %v8684 = vmax.f32 %v8588, 0.0
    %v8685 = vmax.f32 %v8589, 0.0
    %v8686 = vmax.f32 %v8590, 0.0
    %v8687 = vmax.f32 %v8591, 0.0
    %v8688 = vmax.f32 %v8592, 0.0
    %v8689 = vmax.f32 %v8593, 0.0
    %v8690 = vmax.f32 %v8594, 0.0
    %v8691 = vmax.f32 %v8595, 0.0
    %v8692 = vmax.f32 %v8596, 0.0
    %v8693 = vmax.f32 %v8597, 0.0
    %v8694 = vmax.f32 %v8598, 0.0
    %v8695 = vmax.f32 %v8599, 0.0
    %v8696 = vmax.f32 %v8600, 0.0
    %v8697 = vmax.f32 %v8601, 0.0
    %v8698 = vmax.f32 %v8602, 0.0
    %v8699 = vmax.f32 %v8603, 0.0
    %v8700 = vmax.f32 %v8604, 0.0
    %v8701 = vmax.f32 %v8605, 0.0
    %v8702 = vmax.f32 %v8606, 0.0
    %v8703 = vmax.f32 %v8607, 0.0
    %v8704 = vmax.f32 %v8608, 0.0
    %v8705 = vmax.f32 %v8609, 0.0
    %v8706 = vmax.f32 %v8610, 0.0
    %v8707 = vmax.f32 %v8611, 0.0
    %v8708 = vmax.f32 %v8612, 0.0
    %v8709 = vmax.f32 %v8613, 0.0
    %v8710 = vld [vmem:[#allocation9 + $0x1f] sm:$0x1]
    %v8711 = vld [vmem:[#allocation9 + $0x1c] sm:$0x7]
    %v8713 = vlaneseq
    %v8714 = vshrl.u32 %v8713, 7
    %v8715 = vsub.s32 0, %v8714
    %v8716 = vrot.slane %v8711, %v8715
    %v8717 = vlaneseq
    %v8718 = vshrl.u32 %v8717, 7
    %v8719 = vsub.s32 1, %v8718
    %v8720 = vrot.slane %v8711, %v8719
    %v8721 = vlaneseq
    %v8722 = vshrl.u32 %v8721, 7
    %v8723 = vsub.s32 2, %v8722
    %v8724 = vrot.slane %v8711, %v8723
    %v8728 = vmul.f32 %v8614, %v8716
    %v8729 = vmul.f32 %v8615, %v8720
    %v8730 = vmul.f32 %v8616, %v8724
    %v8731 = vmul.f32 %v8617, %v8716
    %v8732 = vmul.f32 %v8618, %v8720
    %v8733 = vmul.f32 %v8619, %v8724
    %v8734 = vmul.f32 %v8620, %v8716
    %v8735 = vmul.f32 %v8621, %v8720
    %v8736 = vmul.f32 %v8622, %v8724
    %v8737 = vmul.f32 %v8623, %v8716
    %v8738 = vmul.f32 %v8624, %v8720
    %v8739 = vmul.f32 %v8625, %v8724
    %v8740 = vmul.f32 %v8626, %v8716
    %v8741 = vmul.f32 %v8627, %v8720
    %v8742 = vmul.f32 %v8628, %v8724
    %v8743 = vmul.f32 %v8629, %v8716
    %v8744 = vmul.f32 %v8630, %v8720
    %v8745 = vmul.f32 %v8631, %v8724
    %v8746 = vmul.f32 %v8632, %v8716
    %v8747 = vmul.f32 %v8633, %v8720
    %v8748 = vmul.f32 %v8634, %v8724
    %v8749 = vmul.f32 %v8635, %v8716
    %v8750 = vmul.f32 %v8636, %v8720
    %v8751 = vmul.f32 %v8637, %v8724
    %v8752 = vmul.f32 %v8638, %v8716
    %v8753 = vmul.f32 %v8639, %v8720
    %v8754 = vmul.f32 %v8640, %v8724
    %v8755 = vmul.f32 %v8641, %v8716
    %v8756 = vmul.f32 %v8642, %v8720
    %v8757 = vmul.f32 %v8643, %v8724
    %v8758 = vmul.f32 %v8644, %v8716
    %v8759 = vmul.f32 %v8645, %v8720
    %v8760 = vmul.f32 %v8646, %v8724
    %v8761 = vmul.f32 %v8647, %v8716
    %v8762 = vmul.f32 %v8648, %v8720
    %v8763 = vmul.f32 %v8649, %v8724
    %v8764 = vmul.f32 %v8650, %v8716
    %v8765 = vmul.f32 %v8651, %v8720
    %v8766 = vmul.f32 %v8652, %v8724
    %v8767 = vmul.f32 %v8653, %v8716
    %v8768 = vmul.f32 %v8654, %v8720
    %v8769 = vmul.f32 %v8655, %v8724
    %v8770 = vmul.f32 %v8656, %v8716
    %v8771 = vmul.f32 %v8657, %v8720
    %v8772 = vmul.f32 %v8658, %v8724
    %v8773 = vmul.f32 %v8659, %v8716
    %v8774 = vmul.f32 %v8660, %v8720
    %v8775 = vmul.f32 %v8661, %v8724
    %v8776 = vmul.f32 %v8662, %v8716
    %v8777 = vmul.f32 %v8663, %v8720
    %v8778 = vmul.f32 %v8664, %v8724
    %v8779 = vmul.f32 %v8665, %v8716
    %v8780 = vmul.f32 %v8666, %v8720
    %v8781 = vmul.f32 %v8667, %v8724
    %v8782 = vmul.f32 %v8668, %v8716
    %v8783 = vmul.f32 %v8669, %v8720
    %v8784 = vmul.f32 %v8670, %v8724
    %v8785 = vmul.f32 %v8671, %v8716
    %v8786 = vmul.f32 %v8672, %v8720
    %v8787 = vmul.f32 %v8673, %v8724
    %v8788 = vmul.f32 %v8674, %v8716
    %v8789 = vmul.f32 %v8675, %v8720
    %v8790 = vmul.f32 %v8676, %v8724
    %v8791 = vmul.f32 %v8677, %v8716
    %v8792 = vmul.f32 %v8678, %v8720
    %v8793 = vmul.f32 %v8679, %v8724
    %v8794 = vmul.f32 %v8680, %v8716
    %v8795 = vmul.f32 %v8681, %v8720
    %v8796 = vmul.f32 %v8682, %v8724
    %v8797 = vmul.f32 %v8683, %v8716
    %v8798 = vmul.f32 %v8684, %v8720
    %v8799 = vmul.f32 %v8685, %v8724
    %v8800 = vmul.f32 %v8686, %v8716
    %v8801 = vmul.f32 %v8687, %v8720
    %v8802 = vmul.f32 %v8688, %v8724
    %v8803 = vmul.f32 %v8689, %v8716
    %v8804 = vmul.f32 %v8690, %v8720
    %v8805 = vmul.f32 %v8691, %v8724
    %v8806 = vmul.f32 %v8692, %v8716
    %v8807 = vmul.f32 %v8693, %v8720
    %v8808 = vmul.f32 %v8694, %v8724
    %v8809 = vmul.f32 %v8695, %v8716
    %v8810 = vmul.f32 %v8696, %v8720
    %v8811 = vmul.f32 %v8697, %v8724
    %v8812 = vmul.f32 %v8698, %v8716
    %v8813 = vmul.f32 %v8699, %v8720
    %v8814 = vmul.f32 %v8700, %v8724
    %v8815 = vmul.f32 %v8701, %v8716
    %v8816 = vmul.f32 %v8702, %v8720
    %v8817 = vmul.f32 %v8703, %v8724
    %v8818 = vmul.f32 %v8704, %v8716
    %v8819 = vmul.f32 %v8705, %v8720
    %v8820 = vmul.f32 %v8706, %v8724
    %v8821 = vmul.f32 %v8707, %v8716
    %v8822 = vmul.f32 %v8708, %v8720
    %v8823 = vmul.f32 %v8709, %v8724
    %v8824 = vadd.f32 %v8728, %v8729
    %v8825 = vsel %vm5915, %v8730, 0.0
    %v8826 = vadd.f32 %v8824, %v8825
    %8827 = vadd.xlane.f32.xlu0 %v8826
    %v8828 = vpop.xlane.xlu0 %8827
    %v8829 = vadd.f32 %v8731, %v8732
    %v8830 = vsel %vm5915, %v8733, 0.0
    %v8831 = vadd.f32 %v8829, %v8830
    %8832 = vadd.xlane.f32.xlu0 %v8831
    %v8833 = vpop.xlane.xlu0 %8832
    %v8834 = vadd.f32 %v8734, %v8735
    %v8835 = vsel %vm5915, %v8736, 0.0
    %v8836 = vadd.f32 %v8834, %v8835
    %8837 = vadd.xlane.f32.xlu0 %v8836
    %v8838 = vpop.xlane.xlu0 %8837
    %v8839 = vadd.f32 %v8737, %v8738
    %v8840 = vsel %vm5915, %v8739, 0.0
    %v8841 = vadd.f32 %v8839, %v8840
    %8842 = vadd.xlane.f32.xlu0 %v8841
    %v8843 = vpop.xlane.xlu0 %8842
    %v8844 = vadd.f32 %v8740, %v8741
    %v8845 = vsel %vm5915, %v8742, 0.0
    %v8846 = vadd.f32 %v8844, %v8845
    %8847 = vadd.xlane.f32.xlu0 %v8846
    %v8848 = vpop.xlane.xlu0 %8847
    %v8849 = vadd.f32 %v8743, %v8744
    %v8850 = vsel %vm5915, %v8745, 0.0
    %v8851 = vadd.f32 %v8849, %v8850
    %8852 = vadd.xlane.f32.xlu0 %v8851
    %v8853 = vpop.xlane.xlu0 %8852
    %v8854 = vadd.f32 %v8746, %v8747
    %v8855 = vsel %vm5915, %v8748, 0.0
    %v8856 = vadd.f32 %v8854, %v8855
    %8857 = vadd.xlane.f32.xlu0 %v8856
    %v8858 = vpop.xlane.xlu0 %8857
    %v8859 = vadd.f32 %v8749, %v8750
    %v8860 = vsel %vm5915, %v8751, 0.0
    %v8861 = vadd.f32 %v8859, %v8860
    %8862 = vadd.xlane.f32.xlu0 %v8861
    %v8863 = vpop.xlane.xlu0 %8862
    %v8864 = vadd.f32 %v8752, %v8753
    %v8865 = vsel %vm5915, %v8754, 0.0
    %v8866 = vadd.f32 %v8864, %v8865
    %8867 = vadd.xlane.f32.xlu0 %v8866
    %v8868 = vpop.xlane.xlu0 %8867
    %v8869 = vadd.f32 %v8755, %v8756
    %v8870 = vsel %vm5915, %v8757, 0.0
    %v8871 = vadd.f32 %v8869, %v8870
    %8872 = vadd.xlane.f32.xlu0 %v8871
    %v8873 = vpop.xlane.xlu0 %8872
    %v8874 = vadd.f32 %v8758, %v8759
    %v8875 = vsel %vm5915, %v8760, 0.0
    %v8876 = vadd.f32 %v8874, %v8875
    %8877 = vadd.xlane.f32.xlu0 %v8876
    %v8878 = vpop.xlane.xlu0 %8877
    %v8879 = vadd.f32 %v8761, %v8762
    %v8880 = vsel %vm5915, %v8763, 0.0
    %v8881 = vadd.f32 %v8879, %v8880
    %8882 = vadd.xlane.f32.xlu0 %v8881
    %v8883 = vpop.xlane.xlu0 %8882
    %v8884 = vadd.f32 %v8764, %v8765
    %v8885 = vsel %vm5915, %v8766, 0.0
    %v8886 = vadd.f32 %v8884, %v8885
    %8887 = vadd.xlane.f32.xlu0 %v8886
    %v8888 = vpop.xlane.xlu0 %8887
    %v8889 = vadd.f32 %v8767, %v8768
    %v8890 = vsel %vm5915, %v8769, 0.0
    %v8891 = vadd.f32 %v8889, %v8890
    %8892 = vadd.xlane.f32.xlu0 %v8891
    %v8893 = vpop.xlane.xlu0 %8892
    %v8894 = vadd.f32 %v8770, %v8771
    %v8895 = vsel %vm5915, %v8772, 0.0
    %v8896 = vadd.f32 %v8894, %v8895
    %8897 = vadd.xlane.f32.xlu0 %v8896
    %v8898 = vpop.xlane.xlu0 %8897
    %v8899 = vadd.f32 %v8773, %v8774
    %v8900 = vsel %vm5915, %v8775, 0.0
    %v8901 = vadd.f32 %v8899, %v8900
    %8902 = vadd.xlane.f32.xlu0 %v8901
    %v8903 = vpop.xlane.xlu0 %8902
    %v8904 = vadd.f32 %v8776, %v8777
    %v8905 = vsel %vm5915, %v8778, 0.0
    %v8906 = vadd.f32 %v8904, %v8905
    %8907 = vadd.xlane.f32.xlu0 %v8906
    %v8908 = vpop.xlane.xlu0 %8907
    %v8909 = vadd.f32 %v8779, %v8780
    %v8910 = vsel %vm5915, %v8781, 0.0
    %v8911 = vadd.f32 %v8909, %v8910
    %8912 = vadd.xlane.f32.xlu0 %v8911
    %v8913 = vpop.xlane.xlu0 %8912
    %v8914 = vadd.f32 %v8782, %v8783
    %v8915 = vsel %vm5915, %v8784, 0.0
    %v8916 = vadd.f32 %v8914, %v8915
    %8917 = vadd.xlane.f32.xlu0 %v8916
    %v8918 = vpop.xlane.xlu0 %8917
    %v8919 = vadd.f32 %v8785, %v8786
    %v8920 = vsel %vm5915, %v8787, 0.0
    %v8921 = vadd.f32 %v8919, %v8920
    %8922 = vadd.xlane.f32.xlu0 %v8921
    %v8923 = vpop.xlane.xlu0 %8922
    %v8924 = vadd.f32 %v8788, %v8789
    %v8925 = vsel %vm5915, %v8790, 0.0
    %v8926 = vadd.f32 %v8924, %v8925
    %8927 = vadd.xlane.f32.xlu0 %v8926
    %v8928 = vpop.xlane.xlu0 %8927
    %v8929 = vadd.f32 %v8791, %v8792
    %v8930 = vsel %vm5915, %v8793, 0.0
    %v8931 = vadd.f32 %v8929, %v8930
    %8932 = vadd.xlane.f32.xlu0 %v8931
    %v8933 = vpop.xlane.xlu0 %8932
    %v8934 = vadd.f32 %v8794, %v8795
    %v8935 = vsel %vm5915, %v8796, 0.0
    %v8936 = vadd.f32 %v8934, %v8935
    %8937 = vadd.xlane.f32.xlu0 %v8936
    %v8938 = vpop.xlane.xlu0 %8937
    %v8939 = vadd.f32 %v8797, %v8798
    %v8940 = vsel %vm5915, %v8799, 0.0
    %v8941 = vadd.f32 %v8939, %v8940
    %8942 = vadd.xlane.f32.xlu0 %v8941
    %v8943 = vpop.xlane.xlu0 %8942
    %v8944 = vadd.f32 %v8800, %v8801
    %v8945 = vsel %vm5915, %v8802, 0.0
    %v8946 = vadd.f32 %v8944, %v8945
    %8947 = vadd.xlane.f32.xlu0 %v8946
    %v8948 = vpop.xlane.xlu0 %8947
    %v8949 = vadd.f32 %v8803, %v8804
    %v8950 = vsel %vm5915, %v8805, 0.0
    %v8951 = vadd.f32 %v8949, %v8950
    %8952 = vadd.xlane.f32.xlu0 %v8951
    %v8953 = vpop.xlane.xlu0 %8952
    %v8954 = vadd.f32 %v8806, %v8807
    %v8955 = vsel %vm5915, %v8808, 0.0
    %v8956 = vadd.f32 %v8954, %v8955
    %8957 = vadd.xlane.f32.xlu0 %v8956
    %v8958 = vpop.xlane.xlu0 %8957
    %v8959 = vadd.f32 %v8809, %v8810
    %v8960 = vsel %vm5915, %v8811, 0.0
    %v8961 = vadd.f32 %v8959, %v8960
    %8962 = vadd.xlane.f32.xlu0 %v8961
    %v8963 = vpop.xlane.xlu0 %8962
    %v8964 = vadd.f32 %v8812, %v8813
    %v8965 = vsel %vm5915, %v8814, 0.0
    %v8966 = vadd.f32 %v8964, %v8965
    %8967 = vadd.xlane.f32.xlu0 %v8966
    %v8968 = vpop.xlane.xlu0 %8967
    %v8969 = vadd.f32 %v8815, %v8816
    %v8970 = vsel %vm5915, %v8817, 0.0
    %v8971 = vadd.f32 %v8969, %v8970
    %8972 = vadd.xlane.f32.xlu0 %v8971
    %v8973 = vpop.xlane.xlu0 %8972
    %v8974 = vadd.f32 %v8818, %v8819
    %v8975 = vsel %vm5915, %v8820, 0.0
    %v8976 = vadd.f32 %v8974, %v8975
    %8977 = vadd.xlane.f32.xlu0 %v8976
    %v8978 = vpop.xlane.xlu0 %8977
    %v8979 = vadd.f32 %v8821, %v8822
    %v8980 = vsel %vm5915, %v8823, 0.0
    %v8981 = vadd.f32 %v8979, %v8980
    %8982 = vadd.xlane.f32.xlu0 %v8981
    %v8983 = vpop.xlane.xlu0 %8982
    %v8985 = vlaneseq
    %v8986 = vshrl.u32 %v8985, 7
    %v8987 = vsub.s32 0, %v8986
    %v8988 = vrot.slane %v8710, %v8987
    %v8990 = vadd.f32 %v8828, %v8988
    %v8991 = vadd.f32 %v8833, %v8988
    %v8992 = vadd.f32 %v8838, %v8988
    %v8993 = vadd.f32 %v8843, %v8988
    %v8994 = vadd.f32 %v8848, %v8988
    %v8995 = vadd.f32 %v8853, %v8988
    %v8996 = vadd.f32 %v8858, %v8988
    %v8997 = vadd.f32 %v8863, %v8988
    %v8998 = vadd.f32 %v8868, %v8988
    %v8999 = vadd.f32 %v8873, %v8988
    %v9000 = vadd.f32 %v8878, %v8988
    %v9001 = vadd.f32 %v8883, %v8988
    %v9002 = vadd.f32 %v8888, %v8988
    %v9003 = vadd.f32 %v8893, %v8988
    %v9004 = vadd.f32 %v8898, %v8988
    %v9005 = vadd.f32 %v8903, %v8988
    %v9006 = vadd.f32 %v8908, %v8988
    %v9007 = vadd.f32 %v8913, %v8988
    %v9008 = vadd.f32 %v8918, %v8988
    %v9009 = vadd.f32 %v8923, %v8988
    %v9010 = vadd.f32 %v8928, %v8988
    %v9011 = vadd.f32 %v8933, %v8988
    %v9012 = vadd.f32 %v8938, %v8988
    %v9013 = vadd.f32 %v8943, %v8988
    %v9014 = vadd.f32 %v8948, %v8988
    %v9015 = vadd.f32 %v8953, %v8988
    %v9016 = vadd.f32 %v8958, %v8988
    %v9017 = vadd.f32 %v8963, %v8988
    %v9018 = vadd.f32 %v8968, %v8988
    %v9019 = vadd.f32 %v8973, %v8988
    %v9020 = vadd.f32 %v8978, %v8988
    %v9021 = vadd.f32 %v8983, %v8988
    %v9022 = vtanh.pop %v8990
    %v9023 = vtanh.pop %v8991
    %v9024 = vtanh.pop %v8992
    %v9025 = vtanh.pop %v8993
    %v9026 = vtanh.pop %v8994
    %v9027 = vtanh.pop %v8995
    %v9028 = vtanh.pop %v8996
    %v9029 = vtanh.pop %v8997
    %v9030 = vtanh.pop %v8998
    %v9031 = vtanh.pop %v8999
    %v9032 = vtanh.pop %v9000
    %v9033 = vtanh.pop %v9001
    %v9034 = vtanh.pop %v9002
    %v9035 = vtanh.pop %v9003
    %v9036 = vtanh.pop %v9004
    %v9037 = vtanh.pop %v9005
    %v9038 = vtanh.pop %v9006
    %v9039 = vtanh.pop %v9007
    %v9040 = vtanh.pop %v9008
    %v9041 = vtanh.pop %v9009
    %v9042 = vtanh.pop %v9010
    %v9043 = vtanh.pop %v9011
    %v9044 = vtanh.pop %v9012
    %v9045 = vtanh.pop %v9013
    %v9046 = vtanh.pop %v9014
    %v9047 = vtanh.pop %v9015
    %v9048 = vtanh.pop %v9016
    %v9049 = vtanh.pop %v9017
    %v9050 = vtanh.pop %v9018
    %v9051 = vtanh.pop %v9019
    %v9052 = vtanh.pop %v9020
    %v9053 = vtanh.pop %v9021
    %vm9054 = vcmask 7168
    %9055 = vst.msk [vmem:[%s6] sm:$0xff] %vm9054, %v9022
    %9056 = vst.msk [vmem:[%s6 + $0x8] sm:$0xff] %vm9054, %v9023
    %9057 = vst.msk [vmem:[%s6 + $0x10] sm:$0xff] %vm9054, %v9024
    %9058 = vst.msk [vmem:[%s6 + $0x18] sm:$0xff] %vm9054, %v9025
    %9059 = vst.msk [vmem:[%s6 + $0x20] sm:$0xff] %vm9054, %v9026
    %9060 = vst.msk [vmem:[%s6 + $0x28] sm:$0xff] %vm9054, %v9027
    %9061 = vst.msk [vmem:[%s6 + $0x30] sm:$0xff] %vm9054, %v9028
    %9062 = vst.msk [vmem:[%s6 + $0x38] sm:$0xff] %vm9054, %v9029
    %9063 = vst.msk [vmem:[%s6 + $0x40] sm:$0xff] %vm9054, %v9030
    %9064 = vst.msk [vmem:[%s6 + $0x48] sm:$0xff] %vm9054, %v9031
    %9065 = vst.msk [vmem:[%s6 + $0x50] sm:$0xff] %vm9054, %v9032
    %9066 = vst.msk [vmem:[%s6 + $0x58] sm:$0xff] %vm9054, %v9033
    %9067 = vst.msk [vmem:[%s6 + $0x60] sm:$0xff] %vm9054, %v9034
    %9068 = vst.msk [vmem:[%s6 + $0x68] sm:$0xff] %vm9054, %v9035
    %9069 = vst.msk [vmem:[%s6 + $0x70] sm:$0xff] %vm9054, %v9036
    %9070 = vst.msk [vmem:[%s6 + $0x78] sm:$0xff] %vm9054, %v9037
    %9071 = vst.msk [vmem:[%s6 + $0x80] sm:$0xff] %vm9054, %v9038
    %9072 = vst.msk [vmem:[%s6 + $0x88] sm:$0xff] %vm9054, %v9039
    %9073 = vst.msk [vmem:[%s6 + $0x90] sm:$0xff] %vm9054, %v9040
    %9074 = vst.msk [vmem:[%s6 + $0x98] sm:$0xff] %vm9054, %v9041
    %9075 = vst.msk [vmem:[%s6 + $0xa0] sm:$0xff] %vm9054, %v9042
    %9076 = vst.msk [vmem:[%s6 + $0xa8] sm:$0xff] %vm9054, %v9043
    %9077 = vst.msk [vmem:[%s6 + $0xb0] sm:$0xff] %vm9054, %v9044
    %9078 = vst.msk [vmem:[%s6 + $0xb8] sm:$0xff] %vm9054, %v9045
    %9079 = vst.msk [vmem:[%s6 + $0xc0] sm:$0xff] %vm9054, %v9046
    %9080 = vst.msk [vmem:[%s6 + $0xc8] sm:$0xff] %vm9054, %v9047
    %9081 = vst.msk [vmem:[%s6 + $0xd0] sm:$0xff] %vm9054, %v9048
    %9082 = vst.msk [vmem:[%s6 + $0xd8] sm:$0xff] %vm9054, %v9049
    %9083 = vst.msk [vmem:[%s6 + $0xe0] sm:$0xff] %vm9054, %v9050
    %9084 = vst.msk [vmem:[%s6 + $0xe8] sm:$0xff] %vm9054, %v9051
    %9085 = vst.msk [vmem:[%s6 + $0xf0] sm:$0xff] %vm9054, %v9052
    %9086 = vst.msk [vmem:[%s6 + $0xf8] sm:$0xff] %vm9054, %v9053
    // Predicated region
    $region94: #{actor_forward.1} parent=1 // pred_check
      _
    $region95: #{actor_forward.1} parent=1 // pred_check_branch
      %9088 = sbr.rel (0) target = $region97
    $region96: #{actor_forward.1} parent=1 // pred_region
      _
    $region97: #{actor_forward.1} parent=1 // pred_fallthru
      _
    // Predicated region
    $region98: #{actor_forward.1} parent=1 // pred_check
      _
    $region99: #{actor_forward.1} parent=1 // pred_check_branch
      %9090 = sbr.rel (0) target = $region101
    $region100: #{actor_forward.1} parent=1 // pred_region
      _
    $region101: #{actor_forward.1} parent=1 // pred_fallthru
      _
    %9091 = vsyncpa [#allocation8], 1
    %9092 = vsyncpa [#allocation10], 1
  %9093 = vsyncmov [#allocation6]
  %s9094 = vpop.sfrf %9093
  %p9095 = scmp.eq.s32.totalorder %s9094, 0
  %p9096 = pneg %p9095
  %9098 = shalt.err (%p9096)
  %s9099 = scalar_lea.sflag [#allocation6], 1
  %9100 = vsyncmov %s9099
  %s9101 = vpop.sfrf %9100
  %p9102 = scmp.eq.s32.totalorder %s9101, 0
  %p9103 = pneg %p9102
  %9105 = shalt.err (%p9103)
  %s9106 = scalar_lea.sflag [#allocation6], 2
  %9107 = vsyncmov %s9106
  %s9108 = vpop.sfrf %9107
  %p9109 = scmp.eq.s32.totalorder %s9108, 0
  %p9110 = pneg %p9109
  %9112 = shalt.err (%p9110)
  %s9113 = scalar_lea.sflag [#allocation6], 3
  %9114 = vsyncmov %s9113
  %s9115 = vpop.sfrf %9114
  %p9116 = scmp.eq.s32.totalorder %s9115, 0
  %p9117 = pneg %p9116
  %9119 = shalt.err (%p9117)

</llo_original>
